<compile_context>
chip_gen: v5e
topology: v5e:2x2
jax: 0.10.0
libtpu: 0.0.40
codegen_flags: <defaults>
</compile_context>

<pallas_src>
import math
import functools

import jax
import jax.numpy as jnp
from jax.experimental import pallas as pl
from jax.experimental.pallas import tpu as pltpu

_VMEM = pl.BlockSpec(memory_space=pltpu.MemorySpace.VMEM)


# -----------------------------------------------------------------------------
# Kernel
# -----------------------------------------------------------------------------

def _layer_norm(v, gamma, beta, eps=1e-6):
    mu = jnp.mean(v, axis=-1, keepdims=True)
    var = jnp.mean((v - mu) ** 2, axis=-1, keepdims=True)
    return gamma * (v - mu) * jax.lax.rsqrt(var + eps) + beta


def _fused_forward_kernel(
        # data
        two_d_ref, three_d_ref, audio_ref, lens_ref,
        # packed weights
        emb_w_ref,        # [2F + D + A, D] bf16 : [W_2d | W_3d | W_out(pad) | W_audio]
        attn_w_ref,       # [NL, D, 4D] bf16     : [Wq | Wk | Wv | Wo]
        ffn_w1_ref,       # [NL, D, FF] bf16
        ffn_w2_ref,       # [NL, FF, D] bf16
        layer_vec_ref,    # [NL, 8, 128] f32     : bqkv, bo, b1, b2, g1, be1, g2, be2
        misc_ref,         # [8, 128]   f32       : b_2d, b_3d, b_au, gF, beF, out_b
        # output
        o_ref,            # [B, C] f32
        *, num_heads, batch):
    f32, bf16 = jnp.float32, jnp.bfloat16
    B, H = batch, num_heads
    N2, F = two_d_ref.shape
    N3, _ = three_d_ref.shape
    Na, A = audio_ref.shape
    L2, L3, La = N2 // B, N3 // B, Na // B
    L = L2 + L3 + La
    N = B * L
    NL, D, _ = attn_w_ref.shape
    FF = ffn_w1_ref.shape[2]
    C = o_ref.shape[1]
    dk = D // H
    scale = 1.0 / math.sqrt(dk)

    # ---- validity masks built in-kernel from per-modality lengths -----------
    lens = lens_ref[...]                                    # [B, 3] int32
    pos = jax.lax.broadcasted_iota(jnp.int32, (B, L), 1)    # [B, L]
    valid = ((pos < lens[:, 0:1])
             | ((pos >= L2) & (pos < L2 + lens[:, 1:2]))
             | ((pos >= L2 + L3) & (pos < L2 + L3 + lens[:, 2:3])))
    mask = jnp.where(valid, 1.0, 0.0)                       # [B, L] f32
    neg_bias = jnp.where(valid, 0.0, -1e9)[:, None, :]      # [B, 1, L] additive key mask

    # ---- modality embeddings: Linear + ReLU (Dropout == identity, eval) -----
    def emb(x_flat, w, b):
        y = jnp.dot(x_flat, w, preferred_element_type=f32) + b
        return jnp.maximum(y, 0.0)

    e2 = emb(two_d_ref[...], emb_w_ref[0:F, :], misc_ref[0:1, 0:D])           # [B*L2, D]
    e3 = emb(three_d_ref[...], emb_w_ref[F:2 * F, :], misc_ref[1:2, 0:D])     # [B*L3, D]
    ea = emb(audio_ref[...], emb_w_ref[2 * F + D:2 * F + D + A, :],
             misc_ref[2:3, 0:D])                                              # [B*La, D]

    # torch.cat([two_d | three_d | audio], dim=1), flattened to [N, D]; stays in
    # registers (no scratch round-trip).
    parts = []
    for b in range(B):
        parts += [e2[b * L2:(b + 1) * L2, :],
                  e3[b * L3:(b + 1) * L3, :],
                  ea[b * La:(b + 1) * La, :]]
    x = jnp.concatenate(parts, axis=0)                      # [N, D] f32

    # ---- encoder layers (unrolled; module forces N_enc = 4) -----------------
    for l in range(NL):
        vec = layer_vec_ref[l]                              # [8, 128] f32
        b_qkv, b_o = vec[0:1, 0:3 * D], vec[1:2, 0:D]
        b_1, b_2 = vec[2:3, 0:FF], vec[3:4, 0:D]
        g1, be1 = vec[4:5, 0:D], vec[5:6, 0:D]
        g2, be2 = vec[6:7, 0:D], vec[7:8, 0:D]
        w_attn = attn_w_ref[l]                              # [D, 4D] bf16
        w_qkv, w_o = w_attn[:, 0:3 * D], w_attn[:, 3 * D:4 * D]

        # -- sublayer 1: pre-LN multi-head self-attention + residual ----------
        h = _layer_norm(x, g1, be1)                         # [N, D] f32
        qkv = jnp.dot(h.astype(bf16), w_qkv,
                      preferred_element_type=f32) + b_qkv   # [N, 3D] f32
        qkv = qkv.astype(bf16)

        ctx_parts = []
        for hh in range(H):                                 # head split: lane slices
            q = qkv[:, hh * dk:(hh + 1) * dk].reshape(B, L, dk)
            k = qkv[:, D + hh * dk:D + (hh + 1) * dk].reshape(B, L, dk)
            v = qkv[:, 2 * D + hh * dk:2 * D + (hh + 1) * dk].reshape(B, L, dk)
            s = jnp.einsum('bqd,bkd->bqk', q, k,
                           preferred_element_type=f32) * scale + neg_bias
            s = s - jnp.max(s, axis=-1, keepdims=True)
            p = jnp.exp(s)
            p = p * pl.reciprocal(jnp.sum(p, axis=-1, keepdims=True), approx=True)
            c = jnp.einsum('bqk,bkd->bqd', p.astype(bf16), v,
                           preferred_element_type=f32)      # [B, L, dk] f32
            ctx_parts.append(c.reshape(N, dk))
        ctx = jnp.concatenate(ctx_parts, axis=-1)           # [N, D]
        attn = jnp.dot(ctx.astype(bf16), w_o,
                       preferred_element_type=f32) + b_o    # head-sum done in MXU
        x = x + attn                                        # residual (dropout = id)

        # -- sublayer 2: pre-LN position-wise FFN + residual ------------------
        h2 = _layer_norm(x, g2, be2)
        f = jnp.dot(h2.astype(bf16), ffn_w1_ref[l],
                    preferred_element_type=f32) + b_1
        f = jnp.maximum(f, 0.0)
        f = jnp.dot(f.astype(bf16), ffn_w2_ref[l],
                    preferred_element_type=f32) + b_2
        x = x + f

    # ---- encoder final LayerNorm + masked mean pooling + classifier ---------
    hf = _layer_norm(x, misc_ref[3:4, 0:D], misc_ref[4:5, 0:D])   # [N, D]
    h3 = hf.reshape(B, L, D)
    pooled = jnp.sum(h3 * mask[:, :, None], axis=1)         # [B, D]
    denom = jnp.sum(mask, axis=-1, keepdims=True)           # [B, 1] (lengths >= 1)
    pooled = pooled * pl.reciprocal(denom, approx=True)
    w_out = emb_w_ref[2 * F:2 * F + D, 0:C].astype(f32)     # [D, C]
    o_ref[...] = (jnp.dot(pooled, w_out, preferred_element_type=f32)
                  + misc_ref[5:6, 0:C])


# -----------------------------------------------------------------------------
# Parameter construction (deterministic, torch-Linear-like uniform init)
# -----------------------------------------------------------------------------

def _init_linear(key, fan_in, fan_out):
    kw, kb = jax.random.split(key)
    bound = 1.0 / math.sqrt(fan_in)
    w = jax.random.uniform(kw, (fan_in, fan_out), jnp.float32, -bound, bound)
    b = jax.random.uniform(kb, (fan_out,), jnp.float32, -bound, bound)
    return w, b


def build_params(key, settings, num_categories):
    D, F, A, FF = (settings["d_model"], settings["fc_feat_dim"],
                   settings["audio_feat_dim"], settings["d_ff"])
    keys = jax.random.split(key, 64)
    ki = iter(keys)
    p = {}
    p["emb_2d_w"], p["emb_2d_b"] = _init_linear(next(ki), F, D)
    p["emb_3d_w"], p["emb_3d_b"] = _init_linear(next(ki), F, D)
    p["emb_au_w"], p["emb_au_b"] = _init_linear(next(ki), A, D)
    layers = []
    for _ in range(4):                 # the module forces settings['N_enc'] = 4
        lp = {}
        for name in ("wq", "wk", "wv", "wo"):
            lp[name], lp["b" + name[1]] = _init_linear(next(ki), D, D)
        lp["w1"], lp["b1"] = _init_linear(next(ki), D, FF)
        lp["w2"], lp["b2"] = _init_linear(next(ki), FF, D)
        lp["ln1_g"] = jnp.ones((D,), jnp.float32)
        lp["ln1_b"] = jnp.zeros((D,), jnp.float32)
        lp["ln2_g"] = jnp.ones((D,), jnp.float32)
        lp["ln2_b"] = jnp.zeros((D,), jnp.float32)
        layers.append(lp)
    p["layers"] = layers
    p["final_ln_g"] = jnp.ones((D,), jnp.float32)
    p["final_ln_b"] = jnp.zeros((D,), jnp.float32)
    p["out_w"], p["out_b"] = _init_linear(next(ki), D, num_categories)
    return p


# -----------------------------------------------------------------------------
# Wrapper: pack weights into a few lane-dense slabs and call the kernel
# -----------------------------------------------------------------------------

def _pad128(v):
    return jnp.pad(v, (0, 128 - v.shape[0]))


def _pack_params(params):
    bf16 = jnp.bfloat16
    D = params["emb_2d_w"].shape[1]
    C = params["out_w"].shape[1]
    layers = params["layers"]

    # Embedding + classifier weight slab (bf16): [W_2d | W_3d | W_out(pad) | W_au]
    emb_w = jnp.concatenate(
        [params["emb_2d_w"], params["emb_3d_w"],
         jnp.pad(params["out_w"], ((0, 0), (0, D - C))),
         params["emb_au_w"]], axis=0).astype(bf16)

    # Attention weight slab [NL, D, 4D] (128 lanes, fully dense) bf16.
    attn_w = jnp.stack([jnp.concatenate([lp["wq"], lp["wk"], lp["wv"], lp["wo"]],
                                        axis=1) for lp in layers]).astype(bf16)
    ffn_w1 = jnp.stack([lp["w1"] for lp in layers]).astype(bf16)   # [NL, D, FF]
    ffn_w2 = jnp.stack([lp["w2"] for lp in layers]).astype(bf16)   # [NL, FF, D]

    # Per-layer bias / LayerNorm row-vector slab [NL, 8, 128] f32.
    layer_vec = jnp.stack([
        jnp.stack([_pad128(jnp.concatenate([lp["bq"], lp["bk"], lp["bv"]])),
                   _pad128(lp["bo"]), _pad128(lp["b1"]), _pad128(lp["b2"]),
                   _pad128(lp["ln1_g"]), _pad128(lp["ln1_b"]),
                   _pad128(lp["ln2_g"]), _pad128(lp["ln2_b"])])
        for lp in layers])

    # Misc row-vector slab [8, 128] f32.
    zero = jnp.zeros((128,), jnp.float32)
    misc = jnp.stack([_pad128(params["emb_2d_b"]), _pad128(params["emb_3d_b"]),
                      _pad128(params["emb_au_b"]),
                      _pad128(params["final_ln_g"]), _pad128(params["final_ln_b"]),
                      _pad128(params["out_b"]), zero, zero])

    return emb_w, attn_w, ffn_w1, ffn_w2, layer_vec, misc


def video_sentiment_forward(params, settings,
                            two_d, two_d_len, three_d, three_d_len,
                            audio, audio_len):
    B, L2, F = two_d.shape
    _, L3, _ = three_d.shape
    _, La, A = audio.shape
    L = L2 + L3 + La
    D = settings["d_model"]
    H = settings["h"]
    C = params["out_w"].shape[1]
    # Sublane-alignment guards (keep in-kernel reshapes layout-free).
    assert L % 8 == 0, "concatenated sequence length must be a multiple of 8"
    assert D % H == 0 and C <= D and C <= 128

    bf16 = jnp.bfloat16
    lens = jnp.stack([jnp.asarray(two_d_len, jnp.int32),
                      jnp.asarray(three_d_len, jnp.int32),
                      jnp.asarray(audio_len, jnp.int32)], axis=-1)   # [B, 3]

    packed = _pack_params(params)
    args = (two_d.reshape(B * L2, F).astype(bf16),
            three_d.reshape(B * L3, F).astype(bf16),
            audio.reshape(B * La, A).astype(bf16),
            lens) + packed

    return pl.pallas_call(
        functools.partial(_fused_forward_kernel, num_heads=H, batch=B),
        out_shape=jax.ShapeDtypeStruct((B, C), jnp.float32),
        in_specs=[_VMEM] * len(args),
        out_specs=_VMEM,
    )(*args)


# -----------------------------------------------------------------------------
# Main
# -----------------------------------------------------------------------------

if __name__ == "__main__":
    sentiment_categories = ["positive", "negative", "neutral"]
    settings = dict(fc_feat_dim=48, audio_feat_dim=24, d_model=32,
                    d_ff=64, h=4, N_enc=2, dropout_p=0.1)

    key = jax.random.PRNGKey(0)
    kp, k2, k3, ka = jax.random.split(key, 4)
    params = build_params(kp, settings, len(sentiment_categories))

    B = 2
    two_d = jax.random.normal(k2, (B, 8, settings["fc_feat_dim"]), jnp.float32)
    three_d = jax.random.normal(k3, (B, 6, settings["fc_feat_dim"]), jnp.float32)
    audio = jax.random.normal(ka, (B, 10, settings["audio_feat_dim"]), jnp.float32)
    two_d_len = [8, 5]
    three_d_len = [6, 4]
    audio_len = [10, 7]

    logits = video_sentiment_forward(params, settings,
                                     two_d, two_d_len, three_d, three_d_len,
                                     audio, audio_len)
    logits = jax.block_until_ready(logits)
    assert logits.shape == (B, len(sentiment_categories))
    assert bool(jnp.all(jnp.isfinite(logits)))
    print("KERNEL_OK")
</pallas_src>

<mosaic_0001>
module attributes {stable_mosaic.version = 11 : i64} {
  func.func @_fused_forward_kernel(%arg0: memref<16x48xbf16, #tpu.memory_space<vmem>>, %arg1: memref<12x48xbf16, #tpu.memory_space<vmem>>, %arg2: memref<20x24xbf16, #tpu.memory_space<vmem>>, %arg3: memref<2x3xi32, #tpu.memory_space<vmem>>, %arg4: memref<152x32xbf16, #tpu.memory_space<vmem>>, %arg5: memref<4x32x128xbf16, #tpu.memory_space<vmem>>, %arg6: memref<4x32x64xbf16, #tpu.memory_space<vmem>>, %arg7: memref<4x64x32xbf16, #tpu.memory_space<vmem>>, %arg8: memref<4x8x128xf32, #tpu.memory_space<vmem>>, %arg9: memref<8x128xf32, #tpu.memory_space<vmem>>, %arg10: memref<2x3xf32, #tpu.memory_space<vmem>>) attributes {dimension_semantics = [], scalar_prefetch = 0 : i64, scratch_operands = 0 : i64, tpu.core_type = #tpu.core_type<tc>} {
    %c0 = arith.constant 0 : index
    %c0_0 = arith.constant 0 : index
    %0 = vector.load %arg3[%c0, %c0_0] : memref<2x3xi32, #tpu.memory_space<vmem>>, vector<2x3xi32>
    %1 = tpu.iota {dimensions = array<i32: 1>} : vector<2x24xi32>
    %2 = vector.extract_strided_slice %0 {offsets = [0, 0], sizes = [2, 1], strides = [1, 1]} : vector<2x3xi32> to vector<2x1xi32>
    %3 = vector.broadcast %2 : vector<2x1xi32> to vector<2x24xi32>
    %4 = arith.cmpi slt, %1, %3 : vector<2x24xi32>
    %c8_i32 = arith.constant 8 : i32
    %5 = vector.broadcast %c8_i32 : i32 to vector<2x24xi32>
    %6 = arith.cmpi sge, %1, %5 : vector<2x24xi32>
    %7 = vector.extract_strided_slice %0 {offsets = [0, 1], sizes = [2, 1], strides = [1, 1]} : vector<2x3xi32> to vector<2x1xi32>
    %c8_i32_1 = arith.constant 8 : i32
    %8 = vector.broadcast %c8_i32_1 : i32 to vector<2x1xi32>
    %9 = arith.addi %8, %7 : vector<2x1xi32>
    %10 = vector.broadcast %9 : vector<2x1xi32> to vector<2x24xi32>
    %11 = arith.cmpi slt, %1, %10 : vector<2x24xi32>
    %12 = arith.andi %6, %11 : vector<2x24xi1>
    %13 = arith.ori %4, %12 : vector<2x24xi1>
    %c14_i32 = arith.constant 14 : i32
    %14 = vector.broadcast %c14_i32 : i32 to vector<2x24xi32>
    %15 = arith.cmpi sge, %1, %14 : vector<2x24xi32>
    %16 = vector.extract_strided_slice %0 {offsets = [0, 2], sizes = [2, 1], strides = [1, 1]} : vector<2x3xi32> to vector<2x1xi32>
    %c14_i32_2 = arith.constant 14 : i32
    %17 = vector.broadcast %c14_i32_2 : i32 to vector<2x1xi32>
    %18 = arith.addi %17, %16 : vector<2x1xi32>
    %19 = vector.broadcast %18 : vector<2x1xi32> to vector<2x24xi32>
    %20 = arith.cmpi slt, %1, %19 : vector<2x24xi32>
    %21 = arith.andi %15, %20 : vector<2x24xi1>
    %22 = arith.ori %13, %21 : vector<2x24xi1>
    %cst = arith.constant 1.000000e+00 : f32
    %cst_3 = arith.constant 0.000000e+00 : f32
    %23 = vector.broadcast %cst : f32 to vector<2x24xf32>
    %24 = vector.broadcast %cst_3 : f32 to vector<2x24xf32>
    %25 = arith.select %22, %23, %24 : vector<2x24xi1>, vector<2x24xf32>
    %cst_4 = arith.constant 0.000000e+00 : f32
    %cst_5 = arith.constant -1.000000e+09 : f32
    %26 = vector.broadcast %cst_4 : f32 to vector<2x24xf32>
    %27 = vector.broadcast %cst_5 : f32 to vector<2x24xf32>
    %28 = arith.select %22, %26, %27 : vector<2x24xi1>, vector<2x24xf32>
    %29 = vector.shape_cast %28 : vector<2x24xf32> to vector<2x1x24xf32>
    %c0_6 = arith.constant 0 : index
    %c0_7 = arith.constant 0 : index
    %30 = vector.load %arg0[%c0_6, %c0_7] : memref<16x48xbf16, #tpu.memory_space<vmem>>, vector<16x48xbf16>
    %c0_8 = arith.constant 0 : index
    %c0_9 = arith.constant 0 : index
    %31 = vector.load %arg4[%c0_8, %c0_9] : memref<152x32xbf16, #tpu.memory_space<vmem>>, vector<48x32xbf16>
    %c0_10 = arith.constant 0 : index
    %c0_11 = arith.constant 0 : index
    %32 = vector.load %arg9[%c0_10, %c0_11] : memref<8x128xf32, #tpu.memory_space<vmem>>, vector<1x32xf32>
    %cst_12 = arith.constant dense<0.000000e+00> : vector<16x32xf32>
    %33 = tpu.matmul %30, %31, %cst_12 {dimension_numbers = #tpu.dot_dimension_numbers<[1], [0], [0], [1], [0, 0, 1, 1], [], []>} : vector<16x48xbf16>, vector<48x32xbf16>, vector<16x32xf32> -> vector<16x32xf32>
    %34 = vector.broadcast %32 : vector<1x32xf32> to vector<16x32xf32>
    %35 = arith.addf %33, %34 : vector<16x32xf32>
    %cst_13 = arith.constant 0.000000e+00 : f32
    %36 = vector.broadcast %cst_13 : f32 to vector<16x32xf32>
    %37 = arith.maximumf %35, %36 : vector<16x32xf32>
    %c0_14 = arith.constant 0 : index
    %c0_15 = arith.constant 0 : index
    %38 = vector.load %arg1[%c0_14, %c0_15] : memref<12x48xbf16, #tpu.memory_space<vmem>>, vector<12x48xbf16>
    %c48 = arith.constant 48 : index
    %c0_16 = arith.constant 0 : index
    %39 = vector.load %arg4[%c48, %c0_16] : memref<152x32xbf16, #tpu.memory_space<vmem>>, vector<48x32xbf16>
    %c1 = arith.constant 1 : index
    %c0_17 = arith.constant 0 : index
    %40 = vector.load %arg9[%c1, %c0_17] : memref<8x128xf32, #tpu.memory_space<vmem>>, vector<1x32xf32>
    %cst_18 = arith.constant dense<0.000000e+00> : vector<12x32xf32>
    %41 = tpu.matmul %38, %39, %cst_18 {dimension_numbers = #tpu.dot_dimension_numbers<[1], [0], [0], [1], [0, 0, 1, 1], [], []>} : vector<12x48xbf16>, vector<48x32xbf16>, vector<12x32xf32> -> vector<12x32xf32>
    %42 = vector.broadcast %40 : vector<1x32xf32> to vector<12x32xf32>
    %43 = arith.addf %41, %42 : vector<12x32xf32>
    %cst_19 = arith.constant 0.000000e+00 : f32
    %44 = vector.broadcast %cst_19 : f32 to vector<12x32xf32>
    %45 = arith.maximumf %43, %44 : vector<12x32xf32>
    %c0_20 = arith.constant 0 : index
    %c0_21 = arith.constant 0 : index
    %46 = vector.load %arg2[%c0_20, %c0_21] : memref<20x24xbf16, #tpu.memory_space<vmem>>, vector<20x24xbf16>
    %c128 = arith.constant 128 : index
    %c0_22 = arith.constant 0 : index
    %47 = vector.load %arg4[%c128, %c0_22] : memref<152x32xbf16, #tpu.memory_space<vmem>>, vector<24x32xbf16>
    %c2 = arith.constant 2 : index
    %c0_23 = arith.constant 0 : index
    %48 = vector.load %arg9[%c2, %c0_23] : memref<8x128xf32, #tpu.memory_space<vmem>>, vector<1x32xf32>
    %cst_24 = arith.constant dense<0.000000e+00> : vector<20x32xf32>
    %49 = tpu.matmul %46, %47, %cst_24 {dimension_numbers = #tpu.dot_dimension_numbers<[1], [0], [0], [1], [0, 0, 1, 1], [], []>} : vector<20x24xbf16>, vector<24x32xbf16>, vector<20x32xf32> -> vector<20x32xf32>
    %50 = vector.broadcast %48 : vector<1x32xf32> to vector<20x32xf32>
    %51 = arith.addf %49, %50 : vector<20x32xf32>
    %cst_25 = arith.constant 0.000000e+00 : f32
    %52 = vector.broadcast %cst_25 : f32 to vector<20x32xf32>
    %53 = arith.maximumf %51, %52 : vector<20x32xf32>
    %54 = vector.extract_strided_slice %37 {offsets = [0, 0], sizes = [8, 32], strides = [1, 1]} : vector<16x32xf32> to vector<8x32xf32>
    %55 = vector.extract_strided_slice %45 {offsets = [0, 0], sizes = [6, 32], strides = [1, 1]} : vector<12x32xf32> to vector<6x32xf32>
    %56 = vector.extract_strided_slice %53 {offsets = [0, 0], sizes = [10, 32], strides = [1, 1]} : vector<20x32xf32> to vector<10x32xf32>
    %57 = vector.extract_strided_slice %37 {offsets = [8, 0], sizes = [8, 32], strides = [1, 1]} : vector<16x32xf32> to vector<8x32xf32>
    %58 = vector.extract_strided_slice %45 {offsets = [6, 0], sizes = [6, 32], strides = [1, 1]} : vector<12x32xf32> to vector<6x32xf32>
    %59 = vector.extract_strided_slice %53 {offsets = [10, 0], sizes = [10, 32], strides = [1, 1]} : vector<20x32xf32> to vector<10x32xf32>
    %60 = tpu.concatenate %54, %55, %56, %57, %58, %59 in 0 : vector<8x32xf32>, vector<6x32xf32>, vector<10x32xf32>, vector<8x32xf32>, vector<6x32xf32>, vector<10x32xf32> -> vector<48x32xf32>
    %c0_26 = arith.constant 0 : index
    %c0_27 = arith.constant 0 : index
    %c0_28 = arith.constant 0 : index
    %61 = vector.load %arg8[%c0_26, %c0_27, %c0_28] : memref<4x8x128xf32, #tpu.memory_space<vmem>>, vector<1x8x128xf32>
    %62 = vector.shape_cast %61 : vector<1x8x128xf32> to vector<8x128xf32>
    %63 = vector.extract_strided_slice %62 {offsets = [0, 0], sizes = [1, 96], strides = [1, 1]} : vector<8x128xf32> to vector<1x96xf32>
    %64 = vector.extract_strided_slice %62 {offsets = [1, 0], sizes = [1, 32], strides = [1, 1]} : vector<8x128xf32> to vector<1x32xf32>
    %65 = vector.extract_strided_slice %62 {offsets = [2, 0], sizes = [1, 64], strides = [1, 1]} : vector<8x128xf32> to vector<1x64xf32>
    %66 = vector.extract_strided_slice %62 {offsets = [3, 0], sizes = [1, 32], strides = [1, 1]} : vector<8x128xf32> to vector<1x32xf32>
    %67 = vector.extract_strided_slice %62 {offsets = [4, 0], sizes = [1, 32], strides = [1, 1]} : vector<8x128xf32> to vector<1x32xf32>
    %68 = vector.extract_strided_slice %62 {offsets = [5, 0], sizes = [1, 32], strides = [1, 1]} : vector<8x128xf32> to vector<1x32xf32>
    %69 = vector.extract_strided_slice %62 {offsets = [6, 0], sizes = [1, 32], strides = [1, 1]} : vector<8x128xf32> to vector<1x32xf32>
    %70 = vector.extract_strided_slice %62 {offsets = [7, 0], sizes = [1, 32], strides = [1, 1]} : vector<8x128xf32> to vector<1x32xf32>
    %c0_29 = arith.constant 0 : index
    %c0_30 = arith.constant 0 : index
    %c0_31 = arith.constant 0 : index
    %71 = vector.load %arg5[%c0_29, %c0_30, %c0_31] : memref<4x32x128xbf16, #tpu.memory_space<vmem>>, vector<1x32x128xbf16>
    %72 = vector.shape_cast %71 : vector<1x32x128xbf16> to vector<32x128xbf16>
    %73 = vector.extract_strided_slice %72 {offsets = [0, 0], sizes = [32, 96], strides = [1, 1]} : vector<32x128xbf16> to vector<32x96xbf16>
    %74 = vector.extract_strided_slice %72 {offsets = [0, 96], sizes = [32, 32], strides = [1, 1]} : vector<32x128xbf16> to vector<32x32xbf16>
    %cst_32 = arith.constant dense<0.000000e+00> : vector<48xf32>
    %75 = vector.multi_reduction <add>, %60, %cst_32 [1] : vector<48x32xf32> to vector<48xf32>
    %76 = vector.shape_cast %75 : vector<48xf32> to vector<48x1xf32>
    %cst_33 = arith.constant 3.200000e+01 : f32
    %77 = vector.broadcast %cst_33 : f32 to vector<48x1xf32>
    %78 = arith.divf %76, %77 : vector<48x1xf32>
    %79 = vector.broadcast %78 : vector<48x1xf32> to vector<48x32xf32>
    %80 = arith.subf %60, %79 : vector<48x32xf32>
    %81 = arith.mulf %80, %80 : vector<48x32xf32>
    %cst_34 = arith.constant dense<0.000000e+00> : vector<48xf32>
    %82 = vector.multi_reduction <add>, %81, %cst_34 [1] : vector<48x32xf32> to vector<48xf32>
    %83 = vector.shape_cast %82 : vector<48xf32> to vector<48x1xf32>
    %cst_35 = arith.constant 3.200000e+01 : f32
    %84 = vector.broadcast %cst_35 : f32 to vector<48x1xf32>
    %85 = arith.divf %83, %84 : vector<48x1xf32>
    %86 = vector.broadcast %78 : vector<48x1xf32> to vector<48x32xf32>
    %87 = arith.subf %60, %86 : vector<48x32xf32>
    %88 = vector.broadcast %67 : vector<1x32xf32> to vector<48x32xf32>
    %89 = arith.mulf %88, %87 : vector<48x32xf32>
    %cst_36 = arith.constant 9.99999997E-7 : f32
    %90 = vector.broadcast %cst_36 : f32 to vector<48x1xf32>
    %91 = arith.addf %85, %90 : vector<48x1xf32>
    %92 = math.rsqrt %91 : vector<48x1xf32>
    %93 = vector.broadcast %92 : vector<48x1xf32> to vector<48x32xf32>
    %94 = arith.mulf %89, %93 : vector<48x32xf32>
    %95 = vector.broadcast %68 : vector<1x32xf32> to vector<48x32xf32>
    %96 = arith.addf %94, %95 : vector<48x32xf32>
    %97 = arith.truncf %96 : vector<48x32xf32> to vector<48x32xbf16>
    %cst_37 = arith.constant dense<0.000000e+00> : vector<48x96xf32>
    %98 = tpu.matmul %97, %73, %cst_37 {dimension_numbers = #tpu.dot_dimension_numbers<[1], [0], [0], [1], [0, 0, 1, 1], [], []>} : vector<48x32xbf16>, vector<32x96xbf16>, vector<48x96xf32> -> vector<48x96xf32>
    %99 = vector.broadcast %63 : vector<1x96xf32> to vector<48x96xf32>
    %100 = arith.addf %98, %99 : vector<48x96xf32>
    %101 = arith.truncf %100 : vector<48x96xf32> to vector<48x96xbf16>
    %102 = vector.extract_strided_slice %101 {offsets = [0, 0], sizes = [48, 8], strides = [1, 1]} : vector<48x96xbf16> to vector<48x8xbf16>
    %103 = vector.shape_cast %102 : vector<48x8xbf16> to vector<2x24x8xbf16>
    %104 = vector.extract_strided_slice %101 {offsets = [0, 32], sizes = [48, 8], strides = [1, 1]} : vector<48x96xbf16> to vector<48x8xbf16>
    %105 = vector.shape_cast %104 : vector<48x8xbf16> to vector<2x24x8xbf16>
    %106 = vector.extract_strided_slice %101 {offsets = [0, 64], sizes = [48, 8], strides = [1, 1]} : vector<48x96xbf16> to vector<48x8xbf16>
    %107 = vector.shape_cast %106 : vector<48x8xbf16> to vector<2x24x8xbf16>
    "tpu.trace_start"() <{level = 10 : i32, message = "bqd,bkd->bqk"}> : () -> ()
    %cst_38 = arith.constant dense<0.000000e+00> : vector<2x24x24xf32>
    %108 = tpu.matmul %103, %105, %cst_38 {dimension_numbers = #tpu.dot_dimension_numbers<[2], [2], [1], [1], [0, 0, 0, 1, 1, 1], [0], [0]>} : vector<2x24x8xbf16>, vector<2x24x8xbf16>, vector<2x24x24xf32> -> vector<2x24x24xf32>
    "tpu.trace_stop"() : () -> ()
    %cst_39 = arith.constant 0.353553385 : f32
    %109 = vector.broadcast %cst_39 : f32 to vector<2x24x24xf32>
    %110 = arith.mulf %108, %109 : vector<2x24x24xf32>
    %111 = vector.broadcast %29 : vector<2x1x24xf32> to vector<2x24x24xf32>
    %112 = arith.addf %110, %111 : vector<2x24x24xf32>
    %cst_40 = arith.constant dense<0xFF800000> : vector<2x24xf32>
    %113 = vector.multi_reduction <maximumf>, %112, %cst_40 [2] : vector<2x24x24xf32> to vector<2x24xf32>
    %114 = vector.shape_cast %113 : vector<2x24xf32> to vector<2x24x1xf32>
    %115 = vector.broadcast %114 : vector<2x24x1xf32> to vector<2x24x24xf32>
    %116 = arith.subf %112, %115 : vector<2x24x24xf32>
    %117 = math.exp %116 : vector<2x24x24xf32>
    %cst_41 = arith.constant dense<0.000000e+00> : vector<2x24xf32>
    %118 = vector.multi_reduction <add>, %117, %cst_41 [2] : vector<2x24x24xf32> to vector<2x24xf32>
    %119 = vector.shape_cast %118 : vector<2x24xf32> to vector<2x24x1xf32>
    %120 = tpu.reciprocal %119 {approx = true} : vector<2x24x1xf32> -> vector<2x24x1xf32>
    %121 = vector.broadcast %120 : vector<2x24x1xf32> to vector<2x24x24xf32>
    %122 = arith.mulf %117, %121 : vector<2x24x24xf32>
    %123 = arith.truncf %122 : vector<2x24x24xf32> to vector<2x24x24xbf16>
    "tpu.trace_start"() <{level = 10 : i32, message = "bqk,bkd->bqd"}> : () -> ()
    %cst_42 = arith.constant dense<0.000000e+00> : vector<2x24x8xf32>
    %124 = tpu.matmul %123, %107, %cst_42 {dimension_numbers = #tpu.dot_dimension_numbers<[2], [1], [1], [2], [0, 0, 0, 1, 1, 2], [0], [0]>} : vector<2x24x24xbf16>, vector<2x24x8xbf16>, vector<2x24x8xf32> -> vector<2x24x8xf32>
    "tpu.trace_stop"() : () -> ()
    %125 = vector.shape_cast %124 : vector<2x24x8xf32> to vector<48x8xf32>
    %126 = vector.extract_strided_slice %101 {offsets = [0, 8], sizes = [48, 8], strides = [1, 1]} : vector<48x96xbf16> to vector<48x8xbf16>
    %127 = vector.shape_cast %126 : vector<48x8xbf16> to vector<2x24x8xbf16>
    %128 = vector.extract_strided_slice %101 {offsets = [0, 40], sizes = [48, 8], strides = [1, 1]} : vector<48x96xbf16> to vector<48x8xbf16>
    %129 = vector.shape_cast %128 : vector<48x8xbf16> to vector<2x24x8xbf16>
    %130 = vector.extract_strided_slice %101 {offsets = [0, 72], sizes = [48, 8], strides = [1, 1]} : vector<48x96xbf16> to vector<48x8xbf16>
    %131 = vector.shape_cast %130 : vector<48x8xbf16> to vector<2x24x8xbf16>
    "tpu.trace_start"() <{level = 10 : i32, message = "bqd,bkd->bqk"}> : () -> ()
    %cst_43 = arith.constant dense<0.000000e+00> : vector<2x24x24xf32>
    %132 = tpu.matmul %127, %129, %cst_43 {dimension_numbers = #tpu.dot_dimension_numbers<[2], [2], [1], [1], [0, 0, 0, 1, 1, 1], [0], [0]>} : vector<2x24x8xbf16>, vector<2x24x8xbf16>, vector<2x24x24xf32> -> vector<2x24x24xf32>
    "tpu.trace_stop"() : () -> ()
    %cst_44 = arith.constant 0.353553385 : f32
    %133 = vector.broadcast %cst_44 : f32 to vector<2x24x24xf32>
    %134 = arith.mulf %132, %133 : vector<2x24x24xf32>
    %135 = vector.broadcast %29 : vector<2x1x24xf32> to vector<2x24x24xf32>
    %136 = arith.addf %134, %135 : vector<2x24x24xf32>
    %cst_45 = arith.constant dense<0xFF800000> : vector<2x24xf32>
    %137 = vector.multi_reduction <maximumf>, %136, %cst_45 [2] : vector<2x24x24xf32> to vector<2x24xf32>
    %138 = vector.shape_cast %137 : vector<2x24xf32> to vector<2x24x1xf32>
    %139 = vector.broadcast %138 : vector<2x24x1xf32> to vector<2x24x24xf32>
    %140 = arith.subf %136, %139 : vector<2x24x24xf32>
    %141 = math.exp %140 : vector<2x24x24xf32>
    %cst_46 = arith.constant dense<0.000000e+00> : vector<2x24xf32>
    %142 = vector.multi_reduction <add>, %141, %cst_46 [2] : vector<2x24x24xf32> to vector<2x24xf32>
    %143 = vector.shape_cast %142 : vector<2x24xf32> to vector<2x24x1xf32>
    %144 = tpu.reciprocal %143 {approx = true} : vector<2x24x1xf32> -> vector<2x24x1xf32>
    %145 = vector.broadcast %144 : vector<2x24x1xf32> to vector<2x24x24xf32>
    %146 = arith.mulf %141, %145 : vector<2x24x24xf32>
    %147 = arith.truncf %146 : vector<2x24x24xf32> to vector<2x24x24xbf16>
    "tpu.trace_start"() <{level = 10 : i32, message = "bqk,bkd->bqd"}> : () -> ()
    %cst_47 = arith.constant dense<0.000000e+00> : vector<2x24x8xf32>
    %148 = tpu.matmul %147, %131, %cst_47 {dimension_numbers = #tpu.dot_dimension_numbers<[2], [1], [1], [2], [0, 0, 0, 1, 1, 2], [0], [0]>} : vector<2x24x24xbf16>, vector<2x24x8xbf16>, vector<2x24x8xf32> -> vector<2x24x8xf32>
    "tpu.trace_stop"() : () -> ()
    %149 = vector.shape_cast %148 : vector<2x24x8xf32> to vector<48x8xf32>
    %150 = vector.extract_strided_slice %101 {offsets = [0, 16], sizes = [48, 8], strides = [1, 1]} : vector<48x96xbf16> to vector<48x8xbf16>
    %151 = vector.shape_cast %150 : vector<48x8xbf16> to vector<2x24x8xbf16>
    %152 = vector.extract_strided_slice %101 {offsets = [0, 48], sizes = [48, 8], strides = [1, 1]} : vector<48x96xbf16> to vector<48x8xbf16>
    %153 = vector.shape_cast %152 : vector<48x8xbf16> to vector<2x24x8xbf16>
    %154 = vector.extract_strided_slice %101 {offsets = [0, 80], sizes = [48, 8], strides = [1, 1]} : vector<48x96xbf16> to vector<48x8xbf16>
    %155 = vector.shape_cast %154 : vector<48x8xbf16> to vector<2x24x8xbf16>
    "tpu.trace_start"() <{level = 10 : i32, message = "bqd,bkd->bqk"}> : () -> ()
    %cst_48 = arith.constant dense<0.000000e+00> : vector<2x24x24xf32>
    %156 = tpu.matmul %151, %153, %cst_48 {dimension_numbers = #tpu.dot_dimension_numbers<[2], [2], [1], [1], [0, 0, 0, 1, 1, 1], [0], [0]>} : vector<2x24x8xbf16>, vector<2x24x8xbf16>, vector<2x24x24xf32> -> vector<2x24x24xf32>
    "tpu.trace_stop"() : () -> ()
    %cst_49 = arith.constant 0.353553385 : f32
    %157 = vector.broadcast %cst_49 : f32 to vector<2x24x24xf32>
    %158 = arith.mulf %156, %157 : vector<2x24x24xf32>
    %159 = vector.broadcast %29 : vector<2x1x24xf32> to vector<2x24x24xf32>
    %160 = arith.addf %158, %159 : vector<2x24x24xf32>
    %cst_50 = arith.constant dense<0xFF800000> : vector<2x24xf32>
    %161 = vector.multi_reduction <maximumf>, %160, %cst_50 [2] : vector<2x24x24xf32> to vector<2x24xf32>
    %162 = vector.shape_cast %161 : vector<2x24xf32> to vector<2x24x1xf32>
    %163 = vector.broadcast %162 : vector<2x24x1xf32> to vector<2x24x24xf32>
    %164 = arith.subf %160, %163 : vector<2x24x24xf32>
    %165 = math.exp %164 : vector<2x24x24xf32>
    %cst_51 = arith.constant dense<0.000000e+00> : vector<2x24xf32>
    %166 = vector.multi_reduction <add>, %165, %cst_51 [2] : vector<2x24x24xf32> to vector<2x24xf32>
    %167 = vector.shape_cast %166 : vector<2x24xf32> to vector<2x24x1xf32>
    %168 = tpu.reciprocal %167 {approx = true} : vector<2x24x1xf32> -> vector<2x24x1xf32>
    %169 = vector.broadcast %168 : vector<2x24x1xf32> to vector<2x24x24xf32>
    %170 = arith.mulf %165, %169 : vector<2x24x24xf32>
    %171 = arith.truncf %170 : vector<2x24x24xf32> to vector<2x24x24xbf16>
    "tpu.trace_start"() <{level = 10 : i32, message = "bqk,bkd->bqd"}> : () -> ()
    %cst_52 = arith.constant dense<0.000000e+00> : vector<2x24x8xf32>
    %172 = tpu.matmul %171, %155, %cst_52 {dimension_numbers = #tpu.dot_dimension_numbers<[2], [1], [1], [2], [0, 0, 0, 1, 1, 2], [0], [0]>} : vector<2x24x24xbf16>, vector<2x24x8xbf16>, vector<2x24x8xf32> -> vector<2x24x8xf32>
    "tpu.trace_stop"() : () -> ()
    %173 = vector.shape_cast %172 : vector<2x24x8xf32> to vector<48x8xf32>
    %174 = vector.extract_strided_slice %101 {offsets = [0, 24], sizes = [48, 8], strides = [1, 1]} : vector<48x96xbf16> to vector<48x8xbf16>
    %175 = vector.shape_cast %174 : vector<48x8xbf16> to vector<2x24x8xbf16>
    %176 = vector.extract_strided_slice %101 {offsets = [0, 56], sizes = [48, 8], strides = [1, 1]} : vector<48x96xbf16> to vector<48x8xbf16>
    %177 = vector.shape_cast %176 : vector<48x8xbf16> to vector<2x24x8xbf16>
    %178 = vector.extract_strided_slice %101 {offsets = [0, 88], sizes = [48, 8], strides = [1, 1]} : vector<48x96xbf16> to vector<48x8xbf16>
    %179 = vector.shape_cast %178 : vector<48x8xbf16> to vector<2x24x8xbf16>
    "tpu.trace_start"() <{level = 10 : i32, message = "bqd,bkd->bqk"}> : () -> ()
    %cst_53 = arith.constant dense<0.000000e+00> : vector<2x24x24xf32>
    %180 = tpu.matmul %175, %177, %cst_53 {dimension_numbers = #tpu.dot_dimension_numbers<[2], [2], [1], [1], [0, 0, 0, 1, 1, 1], [0], [0]>} : vector<2x24x8xbf16>, vector<2x24x8xbf16>, vector<2x24x24xf32> -> vector<2x24x24xf32>
    "tpu.trace_stop"() : () -> ()
    %cst_54 = arith.constant 0.353553385 : f32
    %181 = vector.broadcast %cst_54 : f32 to vector<2x24x24xf32>
    %182 = arith.mulf %180, %181 : vector<2x24x24xf32>
    %183 = vector.broadcast %29 : vector<2x1x24xf32> to vector<2x24x24xf32>
    %184 = arith.addf %182, %183 : vector<2x24x24xf32>
    %cst_55 = arith.constant dense<0xFF800000> : vector<2x24xf32>
    %185 = vector.multi_reduction <maximumf>, %184, %cst_55 [2] : vector<2x24x24xf32> to vector<2x24xf32>
    %186 = vector.shape_cast %185 : vector<2x24xf32> to vector<2x24x1xf32>
    %187 = vector.broadcast %186 : vector<2x24x1xf32> to vector<2x24x24xf32>
    %188 = arith.subf %184, %187 : vector<2x24x24xf32>
    %189 = math.exp %188 : vector<2x24x24xf32>
    %cst_56 = arith.constant dense<0.000000e+00> : vector<2x24xf32>
    %190 = vector.multi_reduction <add>, %189, %cst_56 [2] : vector<2x24x24xf32> to vector<2x24xf32>
    %191 = vector.shape_cast %190 : vector<2x24xf32> to vector<2x24x1xf32>
    %192 = tpu.reciprocal %191 {approx = true} : vector<2x24x1xf32> -> vector<2x24x1xf32>
    %193 = vector.broadcast %192 : vector<2x24x1xf32> to vector<2x24x24xf32>
    %194 = arith.mulf %189, %193 : vector<2x24x24xf32>
    %195 = arith.truncf %194 : vector<2x24x24xf32> to vector<2x24x24xbf16>
    "tpu.trace_start"() <{level = 10 : i32, message = "bqk,bkd->bqd"}> : () -> ()
    %cst_57 = arith.constant dense<0.000000e+00> : vector<2x24x8xf32>
    %196 = tpu.matmul %195, %179, %cst_57 {dimension_numbers = #tpu.dot_dimension_numbers<[2], [1], [1], [2], [0, 0, 0, 1, 1, 2], [0], [0]>} : vector<2x24x24xbf16>, vector<2x24x8xbf16>, vector<2x24x8xf32> -> vector<2x24x8xf32>
    "tpu.trace_stop"() : () -> ()
    %197 = vector.shape_cast %196 : vector<2x24x8xf32> to vector<48x8xf32>
    %198 = tpu.concatenate %125, %149, %173, %197 in 1 : vector<48x8xf32>, vector<48x8xf32>, vector<48x8xf32>, vector<48x8xf32> -> vector<48x32xf32>
    %199 = arith.truncf %198 : vector<48x32xf32> to vector<48x32xbf16>
    %cst_58 = arith.constant dense<0.000000e+00> : vector<48x32xf32>
    %200 = tpu.matmul %199, %74, %cst_58 {dimension_numbers = #tpu.dot_dimension_numbers<[1], [0], [0], [1], [0, 0, 1, 1], [], []>} : vector<48x32xbf16>, vector<32x32xbf16>, vector<48x32xf32> -> vector<48x32xf32>
    %201 = vector.broadcast %64 : vector<1x32xf32> to vector<48x32xf32>
    %202 = arith.addf %200, %201 : vector<48x32xf32>
    %203 = arith.addf %60, %202 : vector<48x32xf32>
    %cst_59 = arith.constant dense<0.000000e+00> : vector<48xf32>
    %204 = vector.multi_reduction <add>, %203, %cst_59 [1] : vector<48x32xf32> to vector<48xf32>
    %205 = vector.shape_cast %204 : vector<48xf32> to vector<48x1xf32>
    %cst_60 = arith.constant 3.200000e+01 : f32
    %206 = vector.broadcast %cst_60 : f32 to vector<48x1xf32>
    %207 = arith.divf %205, %206 : vector<48x1xf32>
    %208 = vector.broadcast %207 : vector<48x1xf32> to vector<48x32xf32>
    %209 = arith.subf %203, %208 : vector<48x32xf32>
    %210 = arith.mulf %209, %209 : vector<48x32xf32>
    %cst_61 = arith.constant dense<0.000000e+00> : vector<48xf32>
    %211 = vector.multi_reduction <add>, %210, %cst_61 [1] : vector<48x32xf32> to vector<48xf32>
    %212 = vector.shape_cast %211 : vector<48xf32> to vector<48x1xf32>
    %cst_62 = arith.constant 3.200000e+01 : f32
    %213 = vector.broadcast %cst_62 : f32 to vector<48x1xf32>
    %214 = arith.divf %212, %213 : vector<48x1xf32>
    %215 = vector.broadcast %207 : vector<48x1xf32> to vector<48x32xf32>
    %216 = arith.subf %203, %215 : vector<48x32xf32>
    %217 = vector.broadcast %69 : vector<1x32xf32> to vector<48x32xf32>
    %218 = arith.mulf %217, %216 : vector<48x32xf32>
    %cst_63 = arith.constant 9.99999997E-7 : f32
    %219 = vector.broadcast %cst_63 : f32 to vector<48x1xf32>
    %220 = arith.addf %214, %219 : vector<48x1xf32>
    %221 = math.rsqrt %220 : vector<48x1xf32>
    %222 = vector.broadcast %221 : vector<48x1xf32> to vector<48x32xf32>
    %223 = arith.mulf %218, %222 : vector<48x32xf32>
    %224 = vector.broadcast %70 : vector<1x32xf32> to vector<48x32xf32>
    %225 = arith.addf %223, %224 : vector<48x32xf32>
    %226 = arith.truncf %225 : vector<48x32xf32> to vector<48x32xbf16>
    %c0_64 = arith.constant 0 : index
    %c0_65 = arith.constant 0 : index
    %c0_66 = arith.constant 0 : index
    %227 = vector.load %arg6[%c0_64, %c0_65, %c0_66] : memref<4x32x64xbf16, #tpu.memory_space<vmem>>, vector<1x32x64xbf16>
    %228 = vector.shape_cast %227 : vector<1x32x64xbf16> to vector<32x64xbf16>
    %cst_67 = arith.constant dense<0.000000e+00> : vector<48x64xf32>
    %229 = tpu.matmul %226, %228, %cst_67 {dimension_numbers = #tpu.dot_dimension_numbers<[1], [0], [0], [1], [0, 0, 1, 1], [], []>} : vector<48x32xbf16>, vector<32x64xbf16>, vector<48x64xf32> -> vector<48x64xf32>
    %230 = vector.broadcast %65 : vector<1x64xf32> to vector<48x64xf32>
    %231 = arith.addf %229, %230 : vector<48x64xf32>
    %cst_68 = arith.constant 0.000000e+00 : f32
    %232 = vector.broadcast %cst_68 : f32 to vector<48x64xf32>
    %233 = arith.maximumf %231, %232 : vector<48x64xf32>
    %234 = arith.truncf %233 : vector<48x64xf32> to vector<48x64xbf16>
    %c0_69 = arith.constant 0 : index
    %c0_70 = arith.constant 0 : index
    %c0_71 = arith.constant 0 : index
    %235 = vector.load %arg7[%c0_69, %c0_70, %c0_71] : memref<4x64x32xbf16, #tpu.memory_space<vmem>>, vector<1x64x32xbf16>
    %236 = vector.shape_cast %235 : vector<1x64x32xbf16> to vector<64x32xbf16>
    %cst_72 = arith.constant dense<0.000000e+00> : vector<48x32xf32>
    %237 = tpu.matmul %234, %236, %cst_72 {dimension_numbers = #tpu.dot_dimension_numbers<[1], [0], [0], [1], [0, 0, 1, 1], [], []>} : vector<48x64xbf16>, vector<64x32xbf16>, vector<48x32xf32> -> vector<48x32xf32>
    %238 = vector.broadcast %66 : vector<1x32xf32> to vector<48x32xf32>
    %239 = arith.addf %237, %238 : vector<48x32xf32>
    %240 = arith.addf %203, %239 : vector<48x32xf32>
    %c1_73 = arith.constant 1 : index
    %c0_74 = arith.constant 0 : index
    %c0_75 = arith.constant 0 : index
    %241 = vector.load %arg8[%c1_73, %c0_74, %c0_75] : memref<4x8x128xf32, #tpu.memory_space<vmem>>, vector<1x8x128xf32>
    %242 = vector.shape_cast %241 : vector<1x8x128xf32> to vector<8x128xf32>
    %243 = vector.extract_strided_slice %242 {offsets = [0, 0], sizes = [1, 96], strides = [1, 1]} : vector<8x128xf32> to vector<1x96xf32>
    %244 = vector.extract_strided_slice %242 {offsets = [1, 0], sizes = [1, 32], strides = [1, 1]} : vector<8x128xf32> to vector<1x32xf32>
    %245 = vector.extract_strided_slice %242 {offsets = [2, 0], sizes = [1, 64], strides = [1, 1]} : vector<8x128xf32> to vector<1x64xf32>
    %246 = vector.extract_strided_slice %242 {offsets = [3, 0], sizes = [1, 32], strides = [1, 1]} : vector<8x128xf32> to vector<1x32xf32>
    %247 = vector.extract_strided_slice %242 {offsets = [4, 0], sizes = [1, 32], strides = [1, 1]} : vector<8x128xf32> to vector<1x32xf32>
    %248 = vector.extract_strided_slice %242 {offsets = [5, 0], sizes = [1, 32], strides = [1, 1]} : vector<8x128xf32> to vector<1x32xf32>
    %249 = vector.extract_strided_slice %242 {offsets = [6, 0], sizes = [1, 32], strides = [1, 1]} : vector<8x128xf32> to vector<1x32xf32>
    %250 = vector.extract_strided_slice %242 {offsets = [7, 0], sizes = [1, 32], strides = [1, 1]} : vector<8x128xf32> to vector<1x32xf32>
    %c1_76 = arith.constant 1 : index
    %c0_77 = arith.constant 0 : index
    %c0_78 = arith.constant 0 : index
    %251 = vector.load %arg5[%c1_76, %c0_77, %c0_78] : memref<4x32x128xbf16, #tpu.memory_space<vmem>>, vector<1x32x128xbf16>
    %252 = vector.shape_cast %251 : vector<1x32x128xbf16> to vector<32x128xbf16>
    %253 = vector.extract_strided_slice %252 {offsets = [0, 0], sizes = [32, 96], strides = [1, 1]} : vector<32x128xbf16> to vector<32x96xbf16>
    %254 = vector.extract_strided_slice %252 {offsets = [0, 96], sizes = [32, 32], strides = [1, 1]} : vector<32x128xbf16> to vector<32x32xbf16>
    %cst_79 = arith.constant dense<0.000000e+00> : vector<48xf32>
    %255 = vector.multi_reduction <add>, %240, %cst_79 [1] : vector<48x32xf32> to vector<48xf32>
    %256 = vector.shape_cast %255 : vector<48xf32> to vector<48x1xf32>
    %cst_80 = arith.constant 3.200000e+01 : f32
    %257 = vector.broadcast %cst_80 : f32 to vector<48x1xf32>
    %258 = arith.divf %256, %257 : vector<48x1xf32>
    %259 = vector.broadcast %258 : vector<48x1xf32> to vector<48x32xf32>
    %260 = arith.subf %240, %259 : vector<48x32xf32>
    %261 = arith.mulf %260, %260 : vector<48x32xf32>
    %cst_81 = arith.constant dense<0.000000e+00> : vector<48xf32>
    %262 = vector.multi_reduction <add>, %261, %cst_81 [1] : vector<48x32xf32> to vector<48xf32>
    %263 = vector.shape_cast %262 : vector<48xf32> to vector<48x1xf32>
    %cst_82 = arith.constant 3.200000e+01 : f32
    %264 = vector.broadcast %cst_82 : f32 to vector<48x1xf32>
    %265 = arith.divf %263, %264 : vector<48x1xf32>
    %266 = vector.broadcast %258 : vector<48x1xf32> to vector<48x32xf32>
    %267 = arith.subf %240, %266 : vector<48x32xf32>
    %268 = vector.broadcast %247 : vector<1x32xf32> to vector<48x32xf32>
    %269 = arith.mulf %268, %267 : vector<48x32xf32>
    %cst_83 = arith.constant 9.99999997E-7 : f32
    %270 = vector.broadcast %cst_83 : f32 to vector<48x1xf32>
    %271 = arith.addf %265, %270 : vector<48x1xf32>
    %272 = math.rsqrt %271 : vector<48x1xf32>
    %273 = vector.broadcast %272 : vector<48x1xf32> to vector<48x32xf32>
    %274 = arith.mulf %269, %273 : vector<48x32xf32>
    %275 = vector.broadcast %248 : vector<1x32xf32> to vector<48x32xf32>
    %276 = arith.addf %274, %275 : vector<48x32xf32>
    %277 = arith.truncf %276 : vector<48x32xf32> to vector<48x32xbf16>
    %cst_84 = arith.constant dense<0.000000e+00> : vector<48x96xf32>
    %278 = tpu.matmul %277, %253, %cst_84 {dimension_numbers = #tpu.dot_dimension_numbers<[1], [0], [0], [1], [0, 0, 1, 1], [], []>} : vector<48x32xbf16>, vector<32x96xbf16>, vector<48x96xf32> -> vector<48x96xf32>
    %279 = vector.broadcast %243 : vector<1x96xf32> to vector<48x96xf32>
    %280 = arith.addf %278, %279 : vector<48x96xf32>
    %281 = arith.truncf %280 : vector<48x96xf32> to vector<48x96xbf16>
    %282 = vector.extract_strided_slice %281 {offsets = [0, 0], sizes = [48, 8], strides = [1, 1]} : vector<48x96xbf16> to vector<48x8xbf16>
    %283 = vector.shape_cast %282 : vector<48x8xbf16> to vector<2x24x8xbf16>
    %284 = vector.extract_strided_slice %281 {offsets = [0, 32], sizes = [48, 8], strides = [1, 1]} : vector<48x96xbf16> to vector<48x8xbf16>
    %285 = vector.shape_cast %284 : vector<48x8xbf16> to vector<2x24x8xbf16>
    %286 = vector.extract_strided_slice %281 {offsets = [0, 64], sizes = [48, 8], strides = [1, 1]} : vector<48x96xbf16> to vector<48x8xbf16>
    %287 = vector.shape_cast %286 : vector<48x8xbf16> to vector<2x24x8xbf16>
    "tpu.trace_start"() <{level = 10 : i32, message = "bqd,bkd->bqk"}> : () -> ()
    %cst_85 = arith.constant dense<0.000000e+00> : vector<2x24x24xf32>
    %288 = tpu.matmul %283, %285, %cst_85 {dimension_numbers = #tpu.dot_dimension_numbers<[2], [2], [1], [1], [0, 0, 0, 1, 1, 1], [0], [0]>} : vector<2x24x8xbf16>, vector<2x24x8xbf16>, vector<2x24x24xf32> -> vector<2x24x24xf32>
    "tpu.trace_stop"() : () -> ()
    %cst_86 = arith.constant 0.353553385 : f32
    %289 = vector.broadcast %cst_86 : f32 to vector<2x24x24xf32>
    %290 = arith.mulf %288, %289 : vector<2x24x24xf32>
    %291 = vector.broadcast %29 : vector<2x1x24xf32> to vector<2x24x24xf32>
    %292 = arith.addf %290, %291 : vector<2x24x24xf32>
    %cst_87 = arith.constant dense<0xFF800000> : vector<2x24xf32>
    %293 = vector.multi_reduction <maximumf>, %292, %cst_87 [2] : vector<2x24x24xf32> to vector<2x24xf32>
    %294 = vector.shape_cast %293 : vector<2x24xf32> to vector<2x24x1xf32>
    %295 = vector.broadcast %294 : vector<2x24x1xf32> to vector<2x24x24xf32>
    %296 = arith.subf %292, %295 : vector<2x24x24xf32>
    %297 = math.exp %296 : vector<2x24x24xf32>
    %cst_88 = arith.constant dense<0.000000e+00> : vector<2x24xf32>
    %298 = vector.multi_reduction <add>, %297, %cst_88 [2] : vector<2x24x24xf32> to vector<2x24xf32>
    %299 = vector.shape_cast %298 : vector<2x24xf32> to vector<2x24x1xf32>
    %300 = tpu.reciprocal %299 {approx = true} : vector<2x24x1xf32> -> vector<2x24x1xf32>
    %301 = vector.broadcast %300 : vector<2x24x1xf32> to vector<2x24x24xf32>
    %302 = arith.mulf %297, %301 : vector<2x24x24xf32>
    %303 = arith.truncf %302 : vector<2x24x24xf32> to vector<2x24x24xbf16>
    "tpu.trace_start"() <{level = 10 : i32, message = "bqk,bkd->bqd"}> : () -> ()
    %cst_89 = arith.constant dense<0.000000e+00> : vector<2x24x8xf32>
    %304 = tpu.matmul %303, %287, %cst_89 {dimension_numbers = #tpu.dot_dimension_numbers<[2], [1], [1], [2], [0, 0, 0, 1, 1, 2], [0], [0]>} : vector<2x24x24xbf16>, vector<2x24x8xbf16>, vector<2x24x8xf32> -> vector<2x24x8xf32>
    "tpu.trace_stop"() : () -> ()
    %305 = vector.shape_cast %304 : vector<2x24x8xf32> to vector<48x8xf32>
    %306 = vector.extract_strided_slice %281 {offsets = [0, 8], sizes = [48, 8], strides = [1, 1]} : vector<48x96xbf16> to vector<48x8xbf16>
    %307 = vector.shape_cast %306 : vector<48x8xbf16> to vector<2x24x8xbf16>
    %308 = vector.extract_strided_slice %281 {offsets = [0, 40], sizes = [48, 8], strides = [1, 1]} : vector<48x96xbf16> to vector<48x8xbf16>
    %309 = vector.shape_cast %308 : vector<48x8xbf16> to vector<2x24x8xbf16>
    %310 = vector.extract_strided_slice %281 {offsets = [0, 72], sizes = [48, 8], strides = [1, 1]} : vector<48x96xbf16> to vector<48x8xbf16>
    %311 = vector.shape_cast %310 : vector<48x8xbf16> to vector<2x24x8xbf16>
    "tpu.trace_start"() <{level = 10 : i32, message = "bqd,bkd->bqk"}> : () -> ()
    %cst_90 = arith.constant dense<0.000000e+00> : vector<2x24x24xf32>
    %312 = tpu.matmul %307, %309, %cst_90 {dimension_numbers = #tpu.dot_dimension_numbers<[2], [2], [1], [1], [0, 0, 0, 1, 1, 1], [0], [0]>} : vector<2x24x8xbf16>, vector<2x24x8xbf16>, vector<2x24x24xf32> -> vector<2x24x24xf32>
    "tpu.trace_stop"() : () -> ()
    %cst_91 = arith.constant 0.353553385 : f32
    %313 = vector.broadcast %cst_91 : f32 to vector<2x24x24xf32>
    %314 = arith.mulf %312, %313 : vector<2x24x24xf32>
    %315 = vector.broadcast %29 : vector<2x1x24xf32> to vector<2x24x24xf32>
    %316 = arith.addf %314, %315 : vector<2x24x24xf32>
    %cst_92 = arith.constant dense<0xFF800000> : vector<2x24xf32>
    %317 = vector.multi_reduction <maximumf>, %316, %cst_92 [2] : vector<2x24x24xf32> to vector<2x24xf32>
    %318 = vector.shape_cast %317 : vector<2x24xf32> to vector<2x24x1xf32>
    %319 = vector.broadcast %318 : vector<2x24x1xf32> to vector<2x24x24xf32>
    %320 = arith.subf %316, %319 : vector<2x24x24xf32>
    %321 = math.exp %320 : vector<2x24x24xf32>
    %cst_93 = arith.constant dense<0.000000e+00> : vector<2x24xf32>
    %322 = vector.multi_reduction <add>, %321, %cst_93 [2] : vector<2x24x24xf32> to vector<2x24xf32>
    %323 = vector.shape_cast %322 : vector<2x24xf32> to vector<2x24x1xf32>
    %324 = tpu.reciprocal %323 {approx = true} : vector<2x24x1xf32> -> vector<2x24x1xf32>
    %325 = vector.broadcast %324 : vector<2x24x1xf32> to vector<2x24x24xf32>
    %326 = arith.mulf %321, %325 : vector<2x24x24xf32>
    %327 = arith.truncf %326 : vector<2x24x24xf32> to vector<2x24x24xbf16>
    "tpu.trace_start"() <{level = 10 : i32, message = "bqk,bkd->bqd"}> : () -> ()
    %cst_94 = arith.constant dense<0.000000e+00> : vector<2x24x8xf32>
    %328 = tpu.matmul %327, %311, %cst_94 {dimension_numbers = #tpu.dot_dimension_numbers<[2], [1], [1], [2], [0, 0, 0, 1, 1, 2], [0], [0]>} : vector<2x24x24xbf16>, vector<2x24x8xbf16>, vector<2x24x8xf32> -> vector<2x24x8xf32>
    "tpu.trace_stop"() : () -> ()
    %329 = vector.shape_cast %328 : vector<2x24x8xf32> to vector<48x8xf32>
    %330 = vector.extract_strided_slice %281 {offsets = [0, 16], sizes = [48, 8], strides = [1, 1]} : vector<48x96xbf16> to vector<48x8xbf16>
    %331 = vector.shape_cast %330 : vector<48x8xbf16> to vector<2x24x8xbf16>
    %332 = vector.extract_strided_slice %281 {offsets = [0, 48], sizes = [48, 8], strides = [1, 1]} : vector<48x96xbf16> to vector<48x8xbf16>
    %333 = vector.shape_cast %332 : vector<48x8xbf16> to vector<2x24x8xbf16>
    %334 = vector.extract_strided_slice %281 {offsets = [0, 80], sizes = [48, 8], strides = [1, 1]} : vector<48x96xbf16> to vector<48x8xbf16>
    %335 = vector.shape_cast %334 : vector<48x8xbf16> to vector<2x24x8xbf16>
    "tpu.trace_start"() <{level = 10 : i32, message = "bqd,bkd->bqk"}> : () -> ()
    %cst_95 = arith.constant dense<0.000000e+00> : vector<2x24x24xf32>
    %336 = tpu.matmul %331, %333, %cst_95 {dimension_numbers = #tpu.dot_dimension_numbers<[2], [2], [1], [1], [0, 0, 0, 1, 1, 1], [0], [0]>} : vector<2x24x8xbf16>, vector<2x24x8xbf16>, vector<2x24x24xf32> -> vector<2x24x24xf32>
    "tpu.trace_stop"() : () -> ()
    %cst_96 = arith.constant 0.353553385 : f32
    %337 = vector.broadcast %cst_96 : f32 to vector<2x24x24xf32>
    %338 = arith.mulf %336, %337 : vector<2x24x24xf32>
    %339 = vector.broadcast %29 : vector<2x1x24xf32> to vector<2x24x24xf32>
    %340 = arith.addf %338, %339 : vector<2x24x24xf32>
    %cst_97 = arith.constant dense<0xFF800000> : vector<2x24xf32>
    %341 = vector.multi_reduction <maximumf>, %340, %cst_97 [2] : vector<2x24x24xf32> to vector<2x24xf32>
    %342 = vector.shape_cast %341 : vector<2x24xf32> to vector<2x24x1xf32>
    %343 = vector.broadcast %342 : vector<2x24x1xf32> to vector<2x24x24xf32>
    %344 = arith.subf %340, %343 : vector<2x24x24xf32>
    %345 = math.exp %344 : vector<2x24x24xf32>
    %cst_98 = arith.constant dense<0.000000e+00> : vector<2x24xf32>
    %346 = vector.multi_reduction <add>, %345, %cst_98 [2] : vector<2x24x24xf32> to vector<2x24xf32>
    %347 = vector.shape_cast %346 : vector<2x24xf32> to vector<2x24x1xf32>
    %348 = tpu.reciprocal %347 {approx = true} : vector<2x24x1xf32> -> vector<2x24x1xf32>
    %349 = vector.broadcast %348 : vector<2x24x1xf32> to vector<2x24x24xf32>
    %350 = arith.mulf %345, %349 : vector<2x24x24xf32>
    %351 = arith.truncf %350 : vector<2x24x24xf32> to vector<2x24x24xbf16>
    "tpu.trace_start"() <{level = 10 : i32, message = "bqk,bkd->bqd"}> : () -> ()
    %cst_99 = arith.constant dense<0.000000e+00> : vector<2x24x8xf32>
    %352 = tpu.matmul %351, %335, %cst_99 {dimension_numbers = #tpu.dot_dimension_numbers<[2], [1], [1], [2], [0, 0, 0, 1, 1, 2], [0], [0]>} : vector<2x24x24xbf16>, vector<2x24x8xbf16>, vector<2x24x8xf32> -> vector<2x24x8xf32>
    "tpu.trace_stop"() : () -> ()
    %353 = vector.shape_cast %352 : vector<2x24x8xf32> to vector<48x8xf32>
    %354 = vector.extract_strided_slice %281 {offsets = [0, 24], sizes = [48, 8], strides = [1, 1]} : vector<48x96xbf16> to vector<48x8xbf16>
    %355 = vector.shape_cast %354 : vector<48x8xbf16> to vector<2x24x8xbf16>
    %356 = vector.extract_strided_slice %281 {offsets = [0, 56], sizes = [48, 8], strides = [1, 1]} : vector<48x96xbf16> to vector<48x8xbf16>
    %357 = vector.shape_cast %356 : vector<48x8xbf16> to vector<2x24x8xbf16>
    %358 = vector.extract_strided_slice %281 {offsets = [0, 88], sizes = [48, 8], strides = [1, 1]} : vector<48x96xbf16> to vector<48x8xbf16>
    %359 = vector.shape_cast %358 : vector<48x8xbf16> to vector<2x24x8xbf16>
    "tpu.trace_start"() <{level = 10 : i32, message = "bqd,bkd->bqk"}> : () -> ()
    %cst_100 = arith.constant dense<0.000000e+00> : vector<2x24x24xf32>
    %360 = tpu.matmul %355, %357, %cst_100 {dimension_numbers = #tpu.dot_dimension_numbers<[2], [2], [1], [1], [0, 0, 0, 1, 1, 1], [0], [0]>} : vector<2x24x8xbf16>, vector<2x24x8xbf16>, vector<2x24x24xf32> -> vector<2x24x24xf32>
    "tpu.trace_stop"() : () -> ()
    %cst_101 = arith.constant 0.353553385 : f32
    %361 = vector.broadcast %cst_101 : f32 to vector<2x24x24xf32>
    %362 = arith.mulf %360, %361 : vector<2x24x24xf32>
    %363 = vector.broadcast %29 : vector<2x1x24xf32> to vector<2x24x24xf32>
    %364 = arith.addf %362, %363 : vector<2x24x24xf32>
    %cst_102 = arith.constant dense<0xFF800000> : vector<2x24xf32>
    %365 = vector.multi_reduction <maximumf>, %364, %cst_102 [2] : vector<2x24x24xf32> to vector<2x24xf32>
    %366 = vector.shape_cast %365 : vector<2x24xf32> to vector<2x24x1xf32>
    %367 = vector.broadcast %366 : vector<2x24x1xf32> to vector<2x24x24xf32>
    %368 = arith.subf %364, %367 : vector<2x24x24xf32>
    %369 = math.exp %368 : vector<2x24x24xf32>
    %cst_103 = arith.constant dense<0.000000e+00> : vector<2x24xf32>
    %370 = vector.multi_reduction <add>, %369, %cst_103 [2] : vector<2x24x24xf32> to vector<2x24xf32>
    %371 = vector.shape_cast %370 : vector<2x24xf32> to vector<2x24x1xf32>
    %372 = tpu.reciprocal %371 {approx = true} : vector<2x24x1xf32> -> vector<2x24x1xf32>
    %373 = vector.broadcast %372 : vector<2x24x1xf32> to vector<2x24x24xf32>
    %374 = arith.mulf %369, %373 : vector<2x24x24xf32>
    %375 = arith.truncf %374 : vector<2x24x24xf32> to vector<2x24x24xbf16>
    "tpu.trace_start"() <{level = 10 : i32, message = "bqk,bkd->bqd"}> : () -> ()
    %cst_104 = arith.constant dense<0.000000e+00> : vector<2x24x8xf32>
    %376 = tpu.matmul %375, %359, %cst_104 {dimension_numbers = #tpu.dot_dimension_numbers<[2], [1], [1], [2], [0, 0, 0, 1, 1, 2], [0], [0]>} : vector<2x24x24xbf16>, vector<2x24x8xbf16>, vector<2x24x8xf32> -> vector<2x24x8xf32>
    "tpu.trace_stop"() : () -> ()
    %377 = vector.shape_cast %376 : vector<2x24x8xf32> to vector<48x8xf32>
    %378 = tpu.concatenate %305, %329, %353, %377 in 1 : vector<48x8xf32>, vector<48x8xf32>, vector<48x8xf32>, vector<48x8xf32> -> vector<48x32xf32>
    %379 = arith.truncf %378 : vector<48x32xf32> to vector<48x32xbf16>
    %cst_105 = arith.constant dense<0.000000e+00> : vector<48x32xf32>
    %380 = tpu.matmul %379, %254, %cst_105 {dimension_numbers = #tpu.dot_dimension_numbers<[1], [0], [0], [1], [0, 0, 1, 1], [], []>} : vector<48x32xbf16>, vector<32x32xbf16>, vector<48x32xf32> -> vector<48x32xf32>
    %381 = vector.broadcast %244 : vector<1x32xf32> to vector<48x32xf32>
    %382 = arith.addf %380, %381 : vector<48x32xf32>
    %383 = arith.addf %240, %382 : vector<48x32xf32>
    %cst_106 = arith.constant dense<0.000000e+00> : vector<48xf32>
    %384 = vector.multi_reduction <add>, %383, %cst_106 [1] : vector<48x32xf32> to vector<48xf32>
    %385 = vector.shape_cast %384 : vector<48xf32> to vector<48x1xf32>
    %cst_107 = arith.constant 3.200000e+01 : f32
    %386 = vector.broadcast %cst_107 : f32 to vector<48x1xf32>
    %387 = arith.divf %385, %386 : vector<48x1xf32>
    %388 = vector.broadcast %387 : vector<48x1xf32> to vector<48x32xf32>
    %389 = arith.subf %383, %388 : vector<48x32xf32>
    %390 = arith.mulf %389, %389 : vector<48x32xf32>
    %cst_108 = arith.constant dense<0.000000e+00> : vector<48xf32>
    %391 = vector.multi_reduction <add>, %390, %cst_108 [1] : vector<48x32xf32> to vector<48xf32>
    %392 = vector.shape_cast %391 : vector<48xf32> to vector<48x1xf32>
    %cst_109 = arith.constant 3.200000e+01 : f32
    %393 = vector.broadcast %cst_109 : f32 to vector<48x1xf32>
    %394 = arith.divf %392, %393 : vector<48x1xf32>
    %395 = vector.broadcast %387 : vector<48x1xf32> to vector<48x32xf32>
    %396 = arith.subf %383, %395 : vector<48x32xf32>
    %397 = vector.broadcast %249 : vector<1x32xf32> to vector<48x32xf32>
    %398 = arith.mulf %397, %396 : vector<48x32xf32>
    %cst_110 = arith.constant 9.99999997E-7 : f32
    %399 = vector.broadcast %cst_110 : f32 to vector<48x1xf32>
    %400 = arith.addf %394, %399 : vector<48x1xf32>
    %401 = math.rsqrt %400 : vector<48x1xf32>
    %402 = vector.broadcast %401 : vector<48x1xf32> to vector<48x32xf32>
    %403 = arith.mulf %398, %402 : vector<48x32xf32>
    %404 = vector.broadcast %250 : vector<1x32xf32> to vector<48x32xf32>
    %405 = arith.addf %403, %404 : vector<48x32xf32>
    %406 = arith.truncf %405 : vector<48x32xf32> to vector<48x32xbf16>
    %c1_111 = arith.constant 1 : index
    %c0_112 = arith.constant 0 : index
    %c0_113 = arith.constant 0 : index
    %407 = vector.load %arg6[%c1_111, %c0_112, %c0_113] : memref<4x32x64xbf16, #tpu.memory_space<vmem>>, vector<1x32x64xbf16>
    %408 = vector.shape_cast %407 : vector<1x32x64xbf16> to vector<32x64xbf16>
    %cst_114 = arith.constant dense<0.000000e+00> : vector<48x64xf32>
    %409 = tpu.matmul %406, %408, %cst_114 {dimension_numbers = #tpu.dot_dimension_numbers<[1], [0], [0], [1], [0, 0, 1, 1], [], []>} : vector<48x32xbf16>, vector<32x64xbf16>, vector<48x64xf32> -> vector<48x64xf32>
    %410 = vector.broadcast %245 : vector<1x64xf32> to vector<48x64xf32>
    %411 = arith.addf %409, %410 : vector<48x64xf32>
    %cst_115 = arith.constant 0.000000e+00 : f32
    %412 = vector.broadcast %cst_115 : f32 to vector<48x64xf32>
    %413 = arith.maximumf %411, %412 : vector<48x64xf32>
    %414 = arith.truncf %413 : vector<48x64xf32> to vector<48x64xbf16>
    %c1_116 = arith.constant 1 : index
    %c0_117 = arith.constant 0 : index
    %c0_118 = arith.constant 0 : index
    %415 = vector.load %arg7[%c1_116, %c0_117, %c0_118] : memref<4x64x32xbf16, #tpu.memory_space<vmem>>, vector<1x64x32xbf16>
    %416 = vector.shape_cast %415 : vector<1x64x32xbf16> to vector<64x32xbf16>
    %cst_119 = arith.constant dense<0.000000e+00> : vector<48x32xf32>
    %417 = tpu.matmul %414, %416, %cst_119 {dimension_numbers = #tpu.dot_dimension_numbers<[1], [0], [0], [1], [0, 0, 1, 1], [], []>} : vector<48x64xbf16>, vector<64x32xbf16>, vector<48x32xf32> -> vector<48x32xf32>
    %418 = vector.broadcast %246 : vector<1x32xf32> to vector<48x32xf32>
    %419 = arith.addf %417, %418 : vector<48x32xf32>
    %420 = arith.addf %383, %419 : vector<48x32xf32>
    %c2_120 = arith.constant 2 : index
    %c0_121 = arith.constant 0 : index
    %c0_122 = arith.constant 0 : index
    %421 = vector.load %arg8[%c2_120, %c0_121, %c0_122] : memref<4x8x128xf32, #tpu.memory_space<vmem>>, vector<1x8x128xf32>
    %422 = vector.shape_cast %421 : vector<1x8x128xf32> to vector<8x128xf32>
    %423 = vector.extract_strided_slice %422 {offsets = [0, 0], sizes = [1, 96], strides = [1, 1]} : vector<8x128xf32> to vector<1x96xf32>
    %424 = vector.extract_strided_slice %422 {offsets = [1, 0], sizes = [1, 32], strides = [1, 1]} : vector<8x128xf32> to vector<1x32xf32>
    %425 = vector.extract_strided_slice %422 {offsets = [2, 0], sizes = [1, 64], strides = [1, 1]} : vector<8x128xf32> to vector<1x64xf32>
    %426 = vector.extract_strided_slice %422 {offsets = [3, 0], sizes = [1, 32], strides = [1, 1]} : vector<8x128xf32> to vector<1x32xf32>
    %427 = vector.extract_strided_slice %422 {offsets = [4, 0], sizes = [1, 32], strides = [1, 1]} : vector<8x128xf32> to vector<1x32xf32>
    %428 = vector.extract_strided_slice %422 {offsets = [5, 0], sizes = [1, 32], strides = [1, 1]} : vector<8x128xf32> to vector<1x32xf32>
    %429 = vector.extract_strided_slice %422 {offsets = [6, 0], sizes = [1, 32], strides = [1, 1]} : vector<8x128xf32> to vector<1x32xf32>
    %430 = vector.extract_strided_slice %422 {offsets = [7, 0], sizes = [1, 32], strides = [1, 1]} : vector<8x128xf32> to vector<1x32xf32>
    %c2_123 = arith.constant 2 : index
    %c0_124 = arith.constant 0 : index
    %c0_125 = arith.constant 0 : index
    %431 = vector.load %arg5[%c2_123, %c0_124, %c0_125] : memref<4x32x128xbf16, #tpu.memory_space<vmem>>, vector<1x32x128xbf16>
    %432 = vector.shape_cast %431 : vector<1x32x128xbf16> to vector<32x128xbf16>
    %433 = vector.extract_strided_slice %432 {offsets = [0, 0], sizes = [32, 96], strides = [1, 1]} : vector<32x128xbf16> to vector<32x96xbf16>
    %434 = vector.extract_strided_slice %432 {offsets = [0, 96], sizes = [32, 32], strides = [1, 1]} : vector<32x128xbf16> to vector<32x32xbf16>
    %cst_126 = arith.constant dense<0.000000e+00> : vector<48xf32>
    %435 = vector.multi_reduction <add>, %420, %cst_126 [1] : vector<48x32xf32> to vector<48xf32>
    %436 = vector.shape_cast %435 : vector<48xf32> to vector<48x1xf32>
    %cst_127 = arith.constant 3.200000e+01 : f32
    %437 = vector.broadcast %cst_127 : f32 to vector<48x1xf32>
    %438 = arith.divf %436, %437 : vector<48x1xf32>
    %439 = vector.broadcast %438 : vector<48x1xf32> to vector<48x32xf32>
    %440 = arith.subf %420, %439 : vector<48x32xf32>
    %441 = arith.mulf %440, %440 : vector<48x32xf32>
    %cst_128 = arith.constant dense<0.000000e+00> : vector<48xf32>
    %442 = vector.multi_reduction <add>, %441, %cst_128 [1] : vector<48x32xf32> to vector<48xf32>
    %443 = vector.shape_cast %442 : vector<48xf32> to vector<48x1xf32>
    %cst_129 = arith.constant 3.200000e+01 : f32
    %444 = vector.broadcast %cst_129 : f32 to vector<48x1xf32>
    %445 = arith.divf %443, %444 : vector<48x1xf32>
    %446 = vector.broadcast %438 : vector<48x1xf32> to vector<48x32xf32>
    %447 = arith.subf %420, %446 : vector<48x32xf32>
    %448 = vector.broadcast %427 : vector<1x32xf32> to vector<48x32xf32>
    %449 = arith.mulf %448, %447 : vector<48x32xf32>
    %cst_130 = arith.constant 9.99999997E-7 : f32
    %450 = vector.broadcast %cst_130 : f32 to vector<48x1xf32>
    %451 = arith.addf %445, %450 : vector<48x1xf32>
    %452 = math.rsqrt %451 : vector<48x1xf32>
    %453 = vector.broadcast %452 : vector<48x1xf32> to vector<48x32xf32>
    %454 = arith.mulf %449, %453 : vector<48x32xf32>
    %455 = vector.broadcast %428 : vector<1x32xf32> to vector<48x32xf32>
    %456 = arith.addf %454, %455 : vector<48x32xf32>
    %457 = arith.truncf %456 : vector<48x32xf32> to vector<48x32xbf16>
    %cst_131 = arith.constant dense<0.000000e+00> : vector<48x96xf32>
    %458 = tpu.matmul %457, %433, %cst_131 {dimension_numbers = #tpu.dot_dimension_numbers<[1], [0], [0], [1], [0, 0, 1, 1], [], []>} : vector<48x32xbf16>, vector<32x96xbf16>, vector<48x96xf32> -> vector<48x96xf32>
    %459 = vector.broadcast %423 : vector<1x96xf32> to vector<48x96xf32>
    %460 = arith.addf %458, %459 : vector<48x96xf32>
    %461 = arith.truncf %460 : vector<48x96xf32> to vector<48x96xbf16>
    %462 = vector.extract_strided_slice %461 {offsets = [0, 0], sizes = [48, 8], strides = [1, 1]} : vector<48x96xbf16> to vector<48x8xbf16>
    %463 = vector.shape_cast %462 : vector<48x8xbf16> to vector<2x24x8xbf16>
    %464 = vector.extract_strided_slice %461 {offsets = [0, 32], sizes = [48, 8], strides = [1, 1]} : vector<48x96xbf16> to vector<48x8xbf16>
    %465 = vector.shape_cast %464 : vector<48x8xbf16> to vector<2x24x8xbf16>
    %466 = vector.extract_strided_slice %461 {offsets = [0, 64], sizes = [48, 8], strides = [1, 1]} : vector<48x96xbf16> to vector<48x8xbf16>
    %467 = vector.shape_cast %466 : vector<48x8xbf16> to vector<2x24x8xbf16>
    "tpu.trace_start"() <{level = 10 : i32, message = "bqd,bkd->bqk"}> : () -> ()
    %cst_132 = arith.constant dense<0.000000e+00> : vector<2x24x24xf32>
    %468 = tpu.matmul %463, %465, %cst_132 {dimension_numbers = #tpu.dot_dimension_numbers<[2], [2], [1], [1], [0, 0, 0, 1, 1, 1], [0], [0]>} : vector<2x24x8xbf16>, vector<2x24x8xbf16>, vector<2x24x24xf32> -> vector<2x24x24xf32>
    "tpu.trace_stop"() : () -> ()
    %cst_133 = arith.constant 0.353553385 : f32
    %469 = vector.broadcast %cst_133 : f32 to vector<2x24x24xf32>
    %470 = arith.mulf %468, %469 : vector<2x24x24xf32>
    %471 = vector.broadcast %29 : vector<2x1x24xf32> to vector<2x24x24xf32>
    %472 = arith.addf %470, %471 : vector<2x24x24xf32>
    %cst_134 = arith.constant dense<0xFF800000> : vector<2x24xf32>
    %473 = vector.multi_reduction <maximumf>, %472, %cst_134 [2] : vector<2x24x24xf32> to vector<2x24xf32>
    %474 = vector.shape_cast %473 : vector<2x24xf32> to vector<2x24x1xf32>
    %475 = vector.broadcast %474 : vector<2x24x1xf32> to vector<2x24x24xf32>
    %476 = arith.subf %472, %475 : vector<2x24x24xf32>
    %477 = math.exp %476 : vector<2x24x24xf32>
    %cst_135 = arith.constant dense<0.000000e+00> : vector<2x24xf32>
    %478 = vector.multi_reduction <add>, %477, %cst_135 [2] : vector<2x24x24xf32> to vector<2x24xf32>
    %479 = vector.shape_cast %478 : vector<2x24xf32> to vector<2x24x1xf32>
    %480 = tpu.reciprocal %479 {approx = true} : vector<2x24x1xf32> -> vector<2x24x1xf32>
    %481 = vector.broadcast %480 : vector<2x24x1xf32> to vector<2x24x24xf32>
    %482 = arith.mulf %477, %481 : vector<2x24x24xf32>
    %483 = arith.truncf %482 : vector<2x24x24xf32> to vector<2x24x24xbf16>
    "tpu.trace_start"() <{level = 10 : i32, message = "bqk,bkd->bqd"}> : () -> ()
    %cst_136 = arith.constant dense<0.000000e+00> : vector<2x24x8xf32>
    %484 = tpu.matmul %483, %467, %cst_136 {dimension_numbers = #tpu.dot_dimension_numbers<[2], [1], [1], [2], [0, 0, 0, 1, 1, 2], [0], [0]>} : vector<2x24x24xbf16>, vector<2x24x8xbf16>, vector<2x24x8xf32> -> vector<2x24x8xf32>
    "tpu.trace_stop"() : () -> ()
    %485 = vector.shape_cast %484 : vector<2x24x8xf32> to vector<48x8xf32>
    %486 = vector.extract_strided_slice %461 {offsets = [0, 8], sizes = [48, 8], strides = [1, 1]} : vector<48x96xbf16> to vector<48x8xbf16>
    %487 = vector.shape_cast %486 : vector<48x8xbf16> to vector<2x24x8xbf16>
    %488 = vector.extract_strided_slice %461 {offsets = [0, 40], sizes = [48, 8], strides = [1, 1]} : vector<48x96xbf16> to vector<48x8xbf16>
    %489 = vector.shape_cast %488 : vector<48x8xbf16> to vector<2x24x8xbf16>
    %490 = vector.extract_strided_slice %461 {offsets = [0, 72], sizes = [48, 8], strides = [1, 1]} : vector<48x96xbf16> to vector<48x8xbf16>
    %491 = vector.shape_cast %490 : vector<48x8xbf16> to vector<2x24x8xbf16>
    "tpu.trace_start"() <{level = 10 : i32, message = "bqd,bkd->bqk"}> : () -> ()
    %cst_137 = arith.constant dense<0.000000e+00> : vector<2x24x24xf32>
    %492 = tpu.matmul %487, %489, %cst_137 {dimension_numbers = #tpu.dot_dimension_numbers<[2], [2], [1], [1], [0, 0, 0, 1, 1, 1], [0], [0]>} : vector<2x24x8xbf16>, vector<2x24x8xbf16>, vector<2x24x24xf32> -> vector<2x24x24xf32>
    "tpu.trace_stop"() : () -> ()
    %cst_138 = arith.constant 0.353553385 : f32
    %493 = vector.broadcast %cst_138 : f32 to vector<2x24x24xf32>
    %494 = arith.mulf %492, %493 : vector<2x24x24xf32>
    %495 = vector.broadcast %29 : vector<2x1x24xf32> to vector<2x24x24xf32>
    %496 = arith.addf %494, %495 : vector<2x24x24xf32>
    %cst_139 = arith.constant dense<0xFF800000> : vector<2x24xf32>
    %497 = vector.multi_reduction <maximumf>, %496, %cst_139 [2] : vector<2x24x24xf32> to vector<2x24xf32>
    %498 = vector.shape_cast %497 : vector<2x24xf32> to vector<2x24x1xf32>
    %499 = vector.broadcast %498 : vector<2x24x1xf32> to vector<2x24x24xf32>
    %500 = arith.subf %496, %499 : vector<2x24x24xf32>
    %501 = math.exp %500 : vector<2x24x24xf32>
    %cst_140 = arith.constant dense<0.000000e+00> : vector<2x24xf32>
    %502 = vector.multi_reduction <add>, %501, %cst_140 [2] : vector<2x24x24xf32> to vector<2x24xf32>
    %503 = vector.shape_cast %502 : vector<2x24xf32> to vector<2x24x1xf32>
    %504 = tpu.reciprocal %503 {approx = true} : vector<2x24x1xf32> -> vector<2x24x1xf32>
    %505 = vector.broadcast %504 : vector<2x24x1xf32> to vector<2x24x24xf32>
    %506 = arith.mulf %501, %505 : vector<2x24x24xf32>
    %507 = arith.truncf %506 : vector<2x24x24xf32> to vector<2x24x24xbf16>
    "tpu.trace_start"() <{level = 10 : i32, message = "bqk,bkd->bqd"}> : () -> ()
    %cst_141 = arith.constant dense<0.000000e+00> : vector<2x24x8xf32>
    %508 = tpu.matmul %507, %491, %cst_141 {dimension_numbers = #tpu.dot_dimension_numbers<[2], [1], [1], [2], [0, 0, 0, 1, 1, 2], [0], [0]>} : vector<2x24x24xbf16>, vector<2x24x8xbf16>, vector<2x24x8xf32> -> vector<2x24x8xf32>
    "tpu.trace_stop"() : () -> ()
    %509 = vector.shape_cast %508 : vector<2x24x8xf32> to vector<48x8xf32>
    %510 = vector.extract_strided_slice %461 {offsets = [0, 16], sizes = [48, 8], strides = [1, 1]} : vector<48x96xbf16> to vector<48x8xbf16>
    %511 = vector.shape_cast %510 : vector<48x8xbf16> to vector<2x24x8xbf16>
    %512 = vector.extract_strided_slice %461 {offsets = [0, 48], sizes = [48, 8], strides = [1, 1]} : vector<48x96xbf16> to vector<48x8xbf16>
    %513 = vector.shape_cast %512 : vector<48x8xbf16> to vector<2x24x8xbf16>
    %514 = vector.extract_strided_slice %461 {offsets = [0, 80], sizes = [48, 8], strides = [1, 1]} : vector<48x96xbf16> to vector<48x8xbf16>
    %515 = vector.shape_cast %514 : vector<48x8xbf16> to vector<2x24x8xbf16>
    "tpu.trace_start"() <{level = 10 : i32, message = "bqd,bkd->bqk"}> : () -> ()
    %cst_142 = arith.constant dense<0.000000e+00> : vector<2x24x24xf32>
    %516 = tpu.matmul %511, %513, %cst_142 {dimension_numbers = #tpu.dot_dimension_numbers<[2], [2], [1], [1], [0, 0, 0, 1, 1, 1], [0], [0]>} : vector<2x24x8xbf16>, vector<2x24x8xbf16>, vector<2x24x24xf32> -> vector<2x24x24xf32>
    "tpu.trace_stop"() : () -> ()
    %cst_143 = arith.constant 0.353553385 : f32
    %517 = vector.broadcast %cst_143 : f32 to vector<2x24x24xf32>
    %518 = arith.mulf %516, %517 : vector<2x24x24xf32>
    %519 = vector.broadcast %29 : vector<2x1x24xf32> to vector<2x24x24xf32>
    %520 = arith.addf %518, %519 : vector<2x24x24xf32>
    %cst_144 = arith.constant dense<0xFF800000> : vector<2x24xf32>
    %521 = vector.multi_reduction <maximumf>, %520, %cst_144 [2] : vector<2x24x24xf32> to vector<2x24xf32>
    %522 = vector.shape_cast %521 : vector<2x24xf32> to vector<2x24x1xf32>
    %523 = vector.broadcast %522 : vector<2x24x1xf32> to vector<2x24x24xf32>
    %524 = arith.subf %520, %523 : vector<2x24x24xf32>
    %525 = math.exp %524 : vector<2x24x24xf32>
    %cst_145 = arith.constant dense<0.000000e+00> : vector<2x24xf32>
    %526 = vector.multi_reduction <add>, %525, %cst_145 [2] : vector<2x24x24xf32> to vector<2x24xf32>
    %527 = vector.shape_cast %526 : vector<2x24xf32> to vector<2x24x1xf32>
    %528 = tpu.reciprocal %527 {approx = true} : vector<2x24x1xf32> -> vector<2x24x1xf32>
    %529 = vector.broadcast %528 : vector<2x24x1xf32> to vector<2x24x24xf32>
    %530 = arith.mulf %525, %529 : vector<2x24x24xf32>
    %531 = arith.truncf %530 : vector<2x24x24xf32> to vector<2x24x24xbf16>
    "tpu.trace_start"() <{level = 10 : i32, message = "bqk,bkd->bqd"}> : () -> ()
    %cst_146 = arith.constant dense<0.000000e+00> : vector<2x24x8xf32>
    %532 = tpu.matmul %531, %515, %cst_146 {dimension_numbers = #tpu.dot_dimension_numbers<[2], [1], [1], [2], [0, 0, 0, 1, 1, 2], [0], [0]>} : vector<2x24x24xbf16>, vector<2x24x8xbf16>, vector<2x24x8xf32> -> vector<2x24x8xf32>
    "tpu.trace_stop"() : () -> ()
    %533 = vector.shape_cast %532 : vector<2x24x8xf32> to vector<48x8xf32>
    %534 = vector.extract_strided_slice %461 {offsets = [0, 24], sizes = [48, 8], strides = [1, 1]} : vector<48x96xbf16> to vector<48x8xbf16>
    %535 = vector.shape_cast %534 : vector<48x8xbf16> to vector<2x24x8xbf16>
    %536 = vector.extract_strided_slice %461 {offsets = [0, 56], sizes = [48, 8], strides = [1, 1]} : vector<48x96xbf16> to vector<48x8xbf16>
    %537 = vector.shape_cast %536 : vector<48x8xbf16> to vector<2x24x8xbf16>
    %538 = vector.extract_strided_slice %461 {offsets = [0, 88], sizes = [48, 8], strides = [1, 1]} : vector<48x96xbf16> to vector<48x8xbf16>
    %539 = vector.shape_cast %538 : vector<48x8xbf16> to vector<2x24x8xbf16>
    "tpu.trace_start"() <{level = 10 : i32, message = "bqd,bkd->bqk"}> : () -> ()
    %cst_147 = arith.constant dense<0.000000e+00> : vector<2x24x24xf32>
    %540 = tpu.matmul %535, %537, %cst_147 {dimension_numbers = #tpu.dot_dimension_numbers<[2], [2], [1], [1], [0, 0, 0, 1, 1, 1], [0], [0]>} : vector<2x24x8xbf16>, vector<2x24x8xbf16>, vector<2x24x24xf32> -> vector<2x24x24xf32>
    "tpu.trace_stop"() : () -> ()
    %cst_148 = arith.constant 0.353553385 : f32
    %541 = vector.broadcast %cst_148 : f32 to vector<2x24x24xf32>
    %542 = arith.mulf %540, %541 : vector<2x24x24xf32>
    %543 = vector.broadcast %29 : vector<2x1x24xf32> to vector<2x24x24xf32>
    %544 = arith.addf %542, %543 : vector<2x24x24xf32>
    %cst_149 = arith.constant dense<0xFF800000> : vector<2x24xf32>
    %545 = vector.multi_reduction <maximumf>, %544, %cst_149 [2] : vector<2x24x24xf32> to vector<2x24xf32>
    %546 = vector.shape_cast %545 : vector<2x24xf32> to vector<2x24x1xf32>
    %547 = vector.broadcast %546 : vector<2x24x1xf32> to vector<2x24x24xf32>
    %548 = arith.subf %544, %547 : vector<2x24x24xf32>
    %549 = math.exp %548 : vector<2x24x24xf32>
    %cst_150 = arith.constant dense<0.000000e+00> : vector<2x24xf32>
    %550 = vector.multi_reduction <add>, %549, %cst_150 [2] : vector<2x24x24xf32> to vector<2x24xf32>
    %551 = vector.shape_cast %550 : vector<2x24xf32> to vector<2x24x1xf32>
    %552 = tpu.reciprocal %551 {approx = true} : vector<2x24x1xf32> -> vector<2x24x1xf32>
    %553 = vector.broadcast %552 : vector<2x24x1xf32> to vector<2x24x24xf32>
    %554 = arith.mulf %549, %553 : vector<2x24x24xf32>
    %555 = arith.truncf %554 : vector<2x24x24xf32> to vector<2x24x24xbf16>
    "tpu.trace_start"() <{level = 10 : i32, message = "bqk,bkd->bqd"}> : () -> ()
    %cst_151 = arith.constant dense<0.000000e+00> : vector<2x24x8xf32>
    %556 = tpu.matmul %555, %539, %cst_151 {dimension_numbers = #tpu.dot_dimension_numbers<[2], [1], [1], [2], [0, 0, 0, 1, 1, 2], [0], [0]>} : vector<2x24x24xbf16>, vector<2x24x8xbf16>, vector<2x24x8xf32> -> vector<2x24x8xf32>
    "tpu.trace_stop"() : () -> ()
    %557 = vector.shape_cast %556 : vector<2x24x8xf32> to vector<48x8xf32>
    %558 = tpu.concatenate %485, %509, %533, %557 in 1 : vector<48x8xf32>, vector<48x8xf32>, vector<48x8xf32>, vector<48x8xf32> -> vector<48x32xf32>
    %559 = arith.truncf %558 : vector<48x32xf32> to vector<48x32xbf16>
    %cst_152 = arith.constant dense<0.000000e+00> : vector<48x32xf32>
    %560 = tpu.matmul %559, %434, %cst_152 {dimension_numbers = #tpu.dot_dimension_numbers<[1], [0], [0], [1], [0, 0, 1, 1], [], []>} : vector<48x32xbf16>, vector<32x32xbf16>, vector<48x32xf32> -> vector<48x32xf32>
    %561 = vector.broadcast %424 : vector<1x32xf32> to vector<48x32xf32>
    %562 = arith.addf %560, %561 : vector<48x32xf32>
    %563 = arith.addf %420, %562 : vector<48x32xf32>
    %cst_153 = arith.constant dense<0.000000e+00> : vector<48xf32>
    %564 = vector.multi_reduction <add>, %563, %cst_153 [1] : vector<48x32xf32> to vector<48xf32>
    %565 = vector.shape_cast %564 : vector<48xf32> to vector<48x1xf32>
    %cst_154 = arith.constant 3.200000e+01 : f32
    %566 = vector.broadcast %cst_154 : f32 to vector<48x1xf32>
    %567 = arith.divf %565, %566 : vector<48x1xf32>
    %568 = vector.broadcast %567 : vector<48x1xf32> to vector<48x32xf32>
    %569 = arith.subf %563, %568 : vector<48x32xf32>
    %570 = arith.mulf %569, %569 : vector<48x32xf32>
    %cst_155 = arith.constant dense<0.000000e+00> : vector<48xf32>
    %571 = vector.multi_reduction <add>, %570, %cst_155 [1] : vector<48x32xf32> to vector<48xf32>
    %572 = vector.shape_cast %571 : vector<48xf32> to vector<48x1xf32>
    %cst_156 = arith.constant 3.200000e+01 : f32
    %573 = vector.broadcast %cst_156 : f32 to vector<48x1xf32>
    %574 = arith.divf %572, %573 : vector<48x1xf32>
    %575 = vector.broadcast %567 : vector<48x1xf32> to vector<48x32xf32>
    %576 = arith.subf %563, %575 : vector<48x32xf32>
    %577 = vector.broadcast %429 : vector<1x32xf32> to vector<48x32xf32>
    %578 = arith.mulf %577, %576 : vector<48x32xf32>
    %cst_157 = arith.constant 9.99999997E-7 : f32
    %579 = vector.broadcast %cst_157 : f32 to vector<48x1xf32>
    %580 = arith.addf %574, %579 : vector<48x1xf32>
    %581 = math.rsqrt %580 : vector<48x1xf32>
    %582 = vector.broadcast %581 : vector<48x1xf32> to vector<48x32xf32>
    %583 = arith.mulf %578, %582 : vector<48x32xf32>
    %584 = vector.broadcast %430 : vector<1x32xf32> to vector<48x32xf32>
    %585 = arith.addf %583, %584 : vector<48x32xf32>
    %586 = arith.truncf %585 : vector<48x32xf32> to vector<48x32xbf16>
    %c2_158 = arith.constant 2 : index
    %c0_159 = arith.constant 0 : index
    %c0_160 = arith.constant 0 : index
    %587 = vector.load %arg6[%c2_158, %c0_159, %c0_160] : memref<4x32x64xbf16, #tpu.memory_space<vmem>>, vector<1x32x64xbf16>
    %588 = vector.shape_cast %587 : vector<1x32x64xbf16> to vector<32x64xbf16>
    %cst_161 = arith.constant dense<0.000000e+00> : vector<48x64xf32>
    %589 = tpu.matmul %586, %588, %cst_161 {dimension_numbers = #tpu.dot_dimension_numbers<[1], [0], [0], [1], [0, 0, 1, 1], [], []>} : vector<48x32xbf16>, vector<32x64xbf16>, vector<48x64xf32> -> vector<48x64xf32>
    %590 = vector.broadcast %425 : vector<1x64xf32> to vector<48x64xf32>
    %591 = arith.addf %589, %590 : vector<48x64xf32>
    %cst_162 = arith.constant 0.000000e+00 : f32
    %592 = vector.broadcast %cst_162 : f32 to vector<48x64xf32>
    %593 = arith.maximumf %591, %592 : vector<48x64xf32>
    %594 = arith.truncf %593 : vector<48x64xf32> to vector<48x64xbf16>
    %c2_163 = arith.constant 2 : index
    %c0_164 = arith.constant 0 : index
    %c0_165 = arith.constant 0 : index
    %595 = vector.load %arg7[%c2_163, %c0_164, %c0_165] : memref<4x64x32xbf16, #tpu.memory_space<vmem>>, vector<1x64x32xbf16>
    %596 = vector.shape_cast %595 : vector<1x64x32xbf16> to vector<64x32xbf16>
    %cst_166 = arith.constant dense<0.000000e+00> : vector<48x32xf32>
    %597 = tpu.matmul %594, %596, %cst_166 {dimension_numbers = #tpu.dot_dimension_numbers<[1], [0], [0], [1], [0, 0, 1, 1], [], []>} : vector<48x64xbf16>, vector<64x32xbf16>, vector<48x32xf32> -> vector<48x32xf32>
    %598 = vector.broadcast %426 : vector<1x32xf32> to vector<48x32xf32>
    %599 = arith.addf %597, %598 : vector<48x32xf32>
    %600 = arith.addf %563, %599 : vector<48x32xf32>
    %c3 = arith.constant 3 : index
    %c0_167 = arith.constant 0 : index
    %c0_168 = arith.constant 0 : index
    %601 = vector.load %arg8[%c3, %c0_167, %c0_168] : memref<4x8x128xf32, #tpu.memory_space<vmem>>, vector<1x8x128xf32>
    %602 = vector.shape_cast %601 : vector<1x8x128xf32> to vector<8x128xf32>
    %603 = vector.extract_strided_slice %602 {offsets = [0, 0], sizes = [1, 96], strides = [1, 1]} : vector<8x128xf32> to vector<1x96xf32>
    %604 = vector.extract_strided_slice %602 {offsets = [1, 0], sizes = [1, 32], strides = [1, 1]} : vector<8x128xf32> to vector<1x32xf32>
    %605 = vector.extract_strided_slice %602 {offsets = [2, 0], sizes = [1, 64], strides = [1, 1]} : vector<8x128xf32> to vector<1x64xf32>
    %606 = vector.extract_strided_slice %602 {offsets = [3, 0], sizes = [1, 32], strides = [1, 1]} : vector<8x128xf32> to vector<1x32xf32>
    %607 = vector.extract_strided_slice %602 {offsets = [4, 0], sizes = [1, 32], strides = [1, 1]} : vector<8x128xf32> to vector<1x32xf32>
    %608 = vector.extract_strided_slice %602 {offsets = [5, 0], sizes = [1, 32], strides = [1, 1]} : vector<8x128xf32> to vector<1x32xf32>
    %609 = vector.extract_strided_slice %602 {offsets = [6, 0], sizes = [1, 32], strides = [1, 1]} : vector<8x128xf32> to vector<1x32xf32>
    %610 = vector.extract_strided_slice %602 {offsets = [7, 0], sizes = [1, 32], strides = [1, 1]} : vector<8x128xf32> to vector<1x32xf32>
    %c3_169 = arith.constant 3 : index
    %c0_170 = arith.constant 0 : index
    %c0_171 = arith.constant 0 : index
    %611 = vector.load %arg5[%c3_169, %c0_170, %c0_171] : memref<4x32x128xbf16, #tpu.memory_space<vmem>>, vector<1x32x128xbf16>
    %612 = vector.shape_cast %611 : vector<1x32x128xbf16> to vector<32x128xbf16>
    %613 = vector.extract_strided_slice %612 {offsets = [0, 0], sizes = [32, 96], strides = [1, 1]} : vector<32x128xbf16> to vector<32x96xbf16>
    %614 = vector.extract_strided_slice %612 {offsets = [0, 96], sizes = [32, 32], strides = [1, 1]} : vector<32x128xbf16> to vector<32x32xbf16>
    %cst_172 = arith.constant dense<0.000000e+00> : vector<48xf32>
    %615 = vector.multi_reduction <add>, %600, %cst_172 [1] : vector<48x32xf32> to vector<48xf32>
    %616 = vector.shape_cast %615 : vector<48xf32> to vector<48x1xf32>
    %cst_173 = arith.constant 3.200000e+01 : f32
    %617 = vector.broadcast %cst_173 : f32 to vector<48x1xf32>
    %618 = arith.divf %616, %617 : vector<48x1xf32>
    %619 = vector.broadcast %618 : vector<48x1xf32> to vector<48x32xf32>
    %620 = arith.subf %600, %619 : vector<48x32xf32>
    %621 = arith.mulf %620, %620 : vector<48x32xf32>
    %cst_174 = arith.constant dense<0.000000e+00> : vector<48xf32>
    %622 = vector.multi_reduction <add>, %621, %cst_174 [1] : vector<48x32xf32> to vector<48xf32>
    %623 = vector.shape_cast %622 : vector<48xf32> to vector<48x1xf32>
    %cst_175 = arith.constant 3.200000e+01 : f32
    %624 = vector.broadcast %cst_175 : f32 to vector<48x1xf32>
    %625 = arith.divf %623, %624 : vector<48x1xf32>
    %626 = vector.broadcast %618 : vector<48x1xf32> to vector<48x32xf32>
    %627 = arith.subf %600, %626 : vector<48x32xf32>
    %628 = vector.broadcast %607 : vector<1x32xf32> to vector<48x32xf32>
    %629 = arith.mulf %628, %627 : vector<48x32xf32>
    %cst_176 = arith.constant 9.99999997E-7 : f32
    %630 = vector.broadcast %cst_176 : f32 to vector<48x1xf32>
    %631 = arith.addf %625, %630 : vector<48x1xf32>
    %632 = math.rsqrt %631 : vector<48x1xf32>
    %633 = vector.broadcast %632 : vector<48x1xf32> to vector<48x32xf32>
    %634 = arith.mulf %629, %633 : vector<48x32xf32>
    %635 = vector.broadcast %608 : vector<1x32xf32> to vector<48x32xf32>
    %636 = arith.addf %634, %635 : vector<48x32xf32>
    %637 = arith.truncf %636 : vector<48x32xf32> to vector<48x32xbf16>
    %cst_177 = arith.constant dense<0.000000e+00> : vector<48x96xf32>
    %638 = tpu.matmul %637, %613, %cst_177 {dimension_numbers = #tpu.dot_dimension_numbers<[1], [0], [0], [1], [0, 0, 1, 1], [], []>} : vector<48x32xbf16>, vector<32x96xbf16>, vector<48x96xf32> -> vector<48x96xf32>
    %639 = vector.broadcast %603 : vector<1x96xf32> to vector<48x96xf32>
    %640 = arith.addf %638, %639 : vector<48x96xf32>
    %641 = arith.truncf %640 : vector<48x96xf32> to vector<48x96xbf16>
    %642 = vector.extract_strided_slice %641 {offsets = [0, 0], sizes = [48, 8], strides = [1, 1]} : vector<48x96xbf16> to vector<48x8xbf16>
    %643 = vector.shape_cast %642 : vector<48x8xbf16> to vector<2x24x8xbf16>
    %644 = vector.extract_strided_slice %641 {offsets = [0, 32], sizes = [48, 8], strides = [1, 1]} : vector<48x96xbf16> to vector<48x8xbf16>
    %645 = vector.shape_cast %644 : vector<48x8xbf16> to vector<2x24x8xbf16>
    %646 = vector.extract_strided_slice %641 {offsets = [0, 64], sizes = [48, 8], strides = [1, 1]} : vector<48x96xbf16> to vector<48x8xbf16>
    %647 = vector.shape_cast %646 : vector<48x8xbf16> to vector<2x24x8xbf16>
    "tpu.trace_start"() <{level = 10 : i32, message = "bqd,bkd->bqk"}> : () -> ()
    %cst_178 = arith.constant dense<0.000000e+00> : vector<2x24x24xf32>
    %648 = tpu.matmul %643, %645, %cst_178 {dimension_numbers = #tpu.dot_dimension_numbers<[2], [2], [1], [1], [0, 0, 0, 1, 1, 1], [0], [0]>} : vector<2x24x8xbf16>, vector<2x24x8xbf16>, vector<2x24x24xf32> -> vector<2x24x24xf32>
    "tpu.trace_stop"() : () -> ()
    %cst_179 = arith.constant 0.353553385 : f32
    %649 = vector.broadcast %cst_179 : f32 to vector<2x24x24xf32>
    %650 = arith.mulf %648, %649 : vector<2x24x24xf32>
    %651 = vector.broadcast %29 : vector<2x1x24xf32> to vector<2x24x24xf32>
    %652 = arith.addf %650, %651 : vector<2x24x24xf32>
    %cst_180 = arith.constant dense<0xFF800000> : vector<2x24xf32>
    %653 = vector.multi_reduction <maximumf>, %652, %cst_180 [2] : vector<2x24x24xf32> to vector<2x24xf32>
    %654 = vector.shape_cast %653 : vector<2x24xf32> to vector<2x24x1xf32>
    %655 = vector.broadcast %654 : vector<2x24x1xf32> to vector<2x24x24xf32>
    %656 = arith.subf %652, %655 : vector<2x24x24xf32>
    %657 = math.exp %656 : vector<2x24x24xf32>
    %cst_181 = arith.constant dense<0.000000e+00> : vector<2x24xf32>
    %658 = vector.multi_reduction <add>, %657, %cst_181 [2] : vector<2x24x24xf32> to vector<2x24xf32>
    %659 = vector.shape_cast %658 : vector<2x24xf32> to vector<2x24x1xf32>
    %660 = tpu.reciprocal %659 {approx = true} : vector<2x24x1xf32> -> vector<2x24x1xf32>
    %661 = vector.broadcast %660 : vector<2x24x1xf32> to vector<2x24x24xf32>
    %662 = arith.mulf %657, %661 : vector<2x24x24xf32>
    %663 = arith.truncf %662 : vector<2x24x24xf32> to vector<2x24x24xbf16>
    "tpu.trace_start"() <{level = 10 : i32, message = "bqk,bkd->bqd"}> : () -> ()
    %cst_182 = arith.constant dense<0.000000e+00> : vector<2x24x8xf32>
    %664 = tpu.matmul %663, %647, %cst_182 {dimension_numbers = #tpu.dot_dimension_numbers<[2], [1], [1], [2], [0, 0, 0, 1, 1, 2], [0], [0]>} : vector<2x24x24xbf16>, vector<2x24x8xbf16>, vector<2x24x8xf32> -> vector<2x24x8xf32>
    "tpu.trace_stop"() : () -> ()
    %665 = vector.shape_cast %664 : vector<2x24x8xf32> to vector<48x8xf32>
    %666 = vector.extract_strided_slice %641 {offsets = [0, 8], sizes = [48, 8], strides = [1, 1]} : vector<48x96xbf16> to vector<48x8xbf16>
    %667 = vector.shape_cast %666 : vector<48x8xbf16> to vector<2x24x8xbf16>
    %668 = vector.extract_strided_slice %641 {offsets = [0, 40], sizes = [48, 8], strides = [1, 1]} : vector<48x96xbf16> to vector<48x8xbf16>
    %669 = vector.shape_cast %668 : vector<48x8xbf16> to vector<2x24x8xbf16>
    %670 = vector.extract_strided_slice %641 {offsets = [0, 72], sizes = [48, 8], strides = [1, 1]} : vector<48x96xbf16> to vector<48x8xbf16>
    %671 = vector.shape_cast %670 : vector<48x8xbf16> to vector<2x24x8xbf16>
    "tpu.trace_start"() <{level = 10 : i32, message = "bqd,bkd->bqk"}> : () -> ()
    %cst_183 = arith.constant dense<0.000000e+00> : vector<2x24x24xf32>
    %672 = tpu.matmul %667, %669, %cst_183 {dimension_numbers = #tpu.dot_dimension_numbers<[2], [2], [1], [1], [0, 0, 0, 1, 1, 1], [0], [0]>} : vector<2x24x8xbf16>, vector<2x24x8xbf16>, vector<2x24x24xf32> -> vector<2x24x24xf32>
    "tpu.trace_stop"() : () -> ()
    %cst_184 = arith.constant 0.353553385 : f32
    %673 = vector.broadcast %cst_184 : f32 to vector<2x24x24xf32>
    %674 = arith.mulf %672, %673 : vector<2x24x24xf32>
    %675 = vector.broadcast %29 : vector<2x1x24xf32> to vector<2x24x24xf32>
    %676 = arith.addf %674, %675 : vector<2x24x24xf32>
    %cst_185 = arith.constant dense<0xFF800000> : vector<2x24xf32>
    %677 = vector.multi_reduction <maximumf>, %676, %cst_185 [2] : vector<2x24x24xf32> to vector<2x24xf32>
    %678 = vector.shape_cast %677 : vector<2x24xf32> to vector<2x24x1xf32>
    %679 = vector.broadcast %678 : vector<2x24x1xf32> to vector<2x24x24xf32>
    %680 = arith.subf %676, %679 : vector<2x24x24xf32>
    %681 = math.exp %680 : vector<2x24x24xf32>
    %cst_186 = arith.constant dense<0.000000e+00> : vector<2x24xf32>
    %682 = vector.multi_reduction <add>, %681, %cst_186 [2] : vector<2x24x24xf32> to vector<2x24xf32>
    %683 = vector.shape_cast %682 : vector<2x24xf32> to vector<2x24x1xf32>
    %684 = tpu.reciprocal %683 {approx = true} : vector<2x24x1xf32> -> vector<2x24x1xf32>
    %685 = vector.broadcast %684 : vector<2x24x1xf32> to vector<2x24x24xf32>
    %686 = arith.mulf %681, %685 : vector<2x24x24xf32>
    %687 = arith.truncf %686 : vector<2x24x24xf32> to vector<2x24x24xbf16>
    "tpu.trace_start"() <{level = 10 : i32, message = "bqk,bkd->bqd"}> : () -> ()
    %cst_187 = arith.constant dense<0.000000e+00> : vector<2x24x8xf32>
    %688 = tpu.matmul %687, %671, %cst_187 {dimension_numbers = #tpu.dot_dimension_numbers<[2], [1], [1], [2], [0, 0, 0, 1, 1, 2], [0], [0]>} : vector<2x24x24xbf16>, vector<2x24x8xbf16>, vector<2x24x8xf32> -> vector<2x24x8xf32>
    "tpu.trace_stop"() : () -> ()
    %689 = vector.shape_cast %688 : vector<2x24x8xf32> to vector<48x8xf32>
    %690 = vector.extract_strided_slice %641 {offsets = [0, 16], sizes = [48, 8], strides = [1, 1]} : vector<48x96xbf16> to vector<48x8xbf16>
    %691 = vector.shape_cast %690 : vector<48x8xbf16> to vector<2x24x8xbf16>
    %692 = vector.extract_strided_slice %641 {offsets = [0, 48], sizes = [48, 8], strides = [1, 1]} : vector<48x96xbf16> to vector<48x8xbf16>
    %693 = vector.shape_cast %692 : vector<48x8xbf16> to vector<2x24x8xbf16>
    %694 = vector.extract_strided_slice %641 {offsets = [0, 80], sizes = [48, 8], strides = [1, 1]} : vector<48x96xbf16> to vector<48x8xbf16>
    %695 = vector.shape_cast %694 : vector<48x8xbf16> to vector<2x24x8xbf16>
    "tpu.trace_start"() <{level = 10 : i32, message = "bqd,bkd->bqk"}> : () -> ()
    %cst_188 = arith.constant dense<0.000000e+00> : vector<2x24x24xf32>
    %696 = tpu.matmul %691, %693, %cst_188 {dimension_numbers = #tpu.dot_dimension_numbers<[2], [2], [1], [1], [0, 0, 0, 1, 1, 1], [0], [0]>} : vector<2x24x8xbf16>, vector<2x24x8xbf16>, vector<2x24x24xf32> -> vector<2x24x24xf32>
    "tpu.trace_stop"() : () -> ()
    %cst_189 = arith.constant 0.353553385 : f32
    %697 = vector.broadcast %cst_189 : f32 to vector<2x24x24xf32>
    %698 = arith.mulf %696, %697 : vector<2x24x24xf32>
    %699 = vector.broadcast %29 : vector<2x1x24xf32> to vector<2x24x24xf32>
    %700 = arith.addf %698, %699 : vector<2x24x24xf32>
    %cst_190 = arith.constant dense<0xFF800000> : vector<2x24xf32>
    %701 = vector.multi_reduction <maximumf>, %700, %cst_190 [2] : vector<2x24x24xf32> to vector<2x24xf32>
    %702 = vector.shape_cast %701 : vector<2x24xf32> to vector<2x24x1xf32>
    %703 = vector.broadcast %702 : vector<2x24x1xf32> to vector<2x24x24xf32>
    %704 = arith.subf %700, %703 : vector<2x24x24xf32>
    %705 = math.exp %704 : vector<2x24x24xf32>
    %cst_191 = arith.constant dense<0.000000e+00> : vector<2x24xf32>
    %706 = vector.multi_reduction <add>, %705, %cst_191 [2] : vector<2x24x24xf32> to vector<2x24xf32>
    %707 = vector.shape_cast %706 : vector<2x24xf32> to vector<2x24x1xf32>
    %708 = tpu.reciprocal %707 {approx = true} : vector<2x24x1xf32> -> vector<2x24x1xf32>
    %709 = vector.broadcast %708 : vector<2x24x1xf32> to vector<2x24x24xf32>
    %710 = arith.mulf %705, %709 : vector<2x24x24xf32>
    %711 = arith.truncf %710 : vector<2x24x24xf32> to vector<2x24x24xbf16>
    "tpu.trace_start"() <{level = 10 : i32, message = "bqk,bkd->bqd"}> : () -> ()
    %cst_192 = arith.constant dense<0.000000e+00> : vector<2x24x8xf32>
    %712 = tpu.matmul %711, %695, %cst_192 {dimension_numbers = #tpu.dot_dimension_numbers<[2], [1], [1], [2], [0, 0, 0, 1, 1, 2], [0], [0]>} : vector<2x24x24xbf16>, vector<2x24x8xbf16>, vector<2x24x8xf32> -> vector<2x24x8xf32>
    "tpu.trace_stop"() : () -> ()
    %713 = vector.shape_cast %712 : vector<2x24x8xf32> to vector<48x8xf32>
    %714 = vector.extract_strided_slice %641 {offsets = [0, 24], sizes = [48, 8], strides = [1, 1]} : vector<48x96xbf16> to vector<48x8xbf16>
    %715 = vector.shape_cast %714 : vector<48x8xbf16> to vector<2x24x8xbf16>
    %716 = vector.extract_strided_slice %641 {offsets = [0, 56], sizes = [48, 8], strides = [1, 1]} : vector<48x96xbf16> to vector<48x8xbf16>
    %717 = vector.shape_cast %716 : vector<48x8xbf16> to vector<2x24x8xbf16>
    %718 = vector.extract_strided_slice %641 {offsets = [0, 88], sizes = [48, 8], strides = [1, 1]} : vector<48x96xbf16> to vector<48x8xbf16>
    %719 = vector.shape_cast %718 : vector<48x8xbf16> to vector<2x24x8xbf16>
    "tpu.trace_start"() <{level = 10 : i32, message = "bqd,bkd->bqk"}> : () -> ()
    %cst_193 = arith.constant dense<0.000000e+00> : vector<2x24x24xf32>
    %720 = tpu.matmul %715, %717, %cst_193 {dimension_numbers = #tpu.dot_dimension_numbers<[2], [2], [1], [1], [0, 0, 0, 1, 1, 1], [0], [0]>} : vector<2x24x8xbf16>, vector<2x24x8xbf16>, vector<2x24x24xf32> -> vector<2x24x24xf32>
    "tpu.trace_stop"() : () -> ()
    %cst_194 = arith.constant 0.353553385 : f32
    %721 = vector.broadcast %cst_194 : f32 to vector<2x24x24xf32>
    %722 = arith.mulf %720, %721 : vector<2x24x24xf32>
    %723 = vector.broadcast %29 : vector<2x1x24xf32> to vector<2x24x24xf32>
    %724 = arith.addf %722, %723 : vector<2x24x24xf32>
    %cst_195 = arith.constant dense<0xFF800000> : vector<2x24xf32>
    %725 = vector.multi_reduction <maximumf>, %724, %cst_195 [2] : vector<2x24x24xf32> to vector<2x24xf32>
    %726 = vector.shape_cast %725 : vector<2x24xf32> to vector<2x24x1xf32>
    %727 = vector.broadcast %726 : vector<2x24x1xf32> to vector<2x24x24xf32>
    %728 = arith.subf %724, %727 : vector<2x24x24xf32>
    %729 = math.exp %728 : vector<2x24x24xf32>
    %cst_196 = arith.constant dense<0.000000e+00> : vector<2x24xf32>
    %730 = vector.multi_reduction <add>, %729, %cst_196 [2] : vector<2x24x24xf32> to vector<2x24xf32>
    %731 = vector.shape_cast %730 : vector<2x24xf32> to vector<2x24x1xf32>
    %732 = tpu.reciprocal %731 {approx = true} : vector<2x24x1xf32> -> vector<2x24x1xf32>
    %733 = vector.broadcast %732 : vector<2x24x1xf32> to vector<2x24x24xf32>
    %734 = arith.mulf %729, %733 : vector<2x24x24xf32>
    %735 = arith.truncf %734 : vector<2x24x24xf32> to vector<2x24x24xbf16>
    "tpu.trace_start"() <{level = 10 : i32, message = "bqk,bkd->bqd"}> : () -> ()
    %cst_197 = arith.constant dense<0.000000e+00> : vector<2x24x8xf32>
    %736 = tpu.matmul %735, %719, %cst_197 {dimension_numbers = #tpu.dot_dimension_numbers<[2], [1], [1], [2], [0, 0, 0, 1, 1, 2], [0], [0]>} : vector<2x24x24xbf16>, vector<2x24x8xbf16>, vector<2x24x8xf32> -> vector<2x24x8xf32>
    "tpu.trace_stop"() : () -> ()
    %737 = vector.shape_cast %736 : vector<2x24x8xf32> to vector<48x8xf32>
    %738 = tpu.concatenate %665, %689, %713, %737 in 1 : vector<48x8xf32>, vector<48x8xf32>, vector<48x8xf32>, vector<48x8xf32> -> vector<48x32xf32>
    %739 = arith.truncf %738 : vector<48x32xf32> to vector<48x32xbf16>
    %cst_198 = arith.constant dense<0.000000e+00> : vector<48x32xf32>
    %740 = tpu.matmul %739, %614, %cst_198 {dimension_numbers = #tpu.dot_dimension_numbers<[1], [0], [0], [1], [0, 0, 1, 1], [], []>} : vector<48x32xbf16>, vector<32x32xbf16>, vector<48x32xf32> -> vector<48x32xf32>
    %741 = vector.broadcast %604 : vector<1x32xf32> to vector<48x32xf32>
    %742 = arith.addf %740, %741 : vector<48x32xf32>
    %743 = arith.addf %600, %742 : vector<48x32xf32>
    %cst_199 = arith.constant dense<0.000000e+00> : vector<48xf32>
    %744 = vector.multi_reduction <add>, %743, %cst_199 [1] : vector<48x32xf32> to vector<48xf32>
    %745 = vector.shape_cast %744 : vector<48xf32> to vector<48x1xf32>
    %cst_200 = arith.constant 3.200000e+01 : f32
    %746 = vector.broadcast %cst_200 : f32 to vector<48x1xf32>
    %747 = arith.divf %745, %746 : vector<48x1xf32>
    %748 = vector.broadcast %747 : vector<48x1xf32> to vector<48x32xf32>
    %749 = arith.subf %743, %748 : vector<48x32xf32>
    %750 = arith.mulf %749, %749 : vector<48x32xf32>
    %cst_201 = arith.constant dense<0.000000e+00> : vector<48xf32>
    %751 = vector.multi_reduction <add>, %750, %cst_201 [1] : vector<48x32xf32> to vector<48xf32>
    %752 = vector.shape_cast %751 : vector<48xf32> to vector<48x1xf32>
    %cst_202 = arith.constant 3.200000e+01 : f32
    %753 = vector.broadcast %cst_202 : f32 to vector<48x1xf32>
    %754 = arith.divf %752, %753 : vector<48x1xf32>
    %755 = vector.broadcast %747 : vector<48x1xf32> to vector<48x32xf32>
    %756 = arith.subf %743, %755 : vector<48x32xf32>
    %757 = vector.broadcast %609 : vector<1x32xf32> to vector<48x32xf32>
    %758 = arith.mulf %757, %756 : vector<48x32xf32>
    %cst_203 = arith.constant 9.99999997E-7 : f32
    %759 = vector.broadcast %cst_203 : f32 to vector<48x1xf32>
    %760 = arith.addf %754, %759 : vector<48x1xf32>
    %761 = math.rsqrt %760 : vector<48x1xf32>
    %762 = vector.broadcast %761 : vector<48x1xf32> to vector<48x32xf32>
    %763 = arith.mulf %758, %762 : vector<48x32xf32>
    %764 = vector.broadcast %610 : vector<1x32xf32> to vector<48x32xf32>
    %765 = arith.addf %763, %764 : vector<48x32xf32>
    %766 = arith.truncf %765 : vector<48x32xf32> to vector<48x32xbf16>
    %c3_204 = arith.constant 3 : index
    %c0_205 = arith.constant 0 : index
    %c0_206 = arith.constant 0 : index
    %767 = vector.load %arg6[%c3_204, %c0_205, %c0_206] : memref<4x32x64xbf16, #tpu.memory_space<vmem>>, vector<1x32x64xbf16>
    %768 = vector.shape_cast %767 : vector<1x32x64xbf16> to vector<32x64xbf16>
    %cst_207 = arith.constant dense<0.000000e+00> : vector<48x64xf32>
    %769 = tpu.matmul %766, %768, %cst_207 {dimension_numbers = #tpu.dot_dimension_numbers<[1], [0], [0], [1], [0, 0, 1, 1], [], []>} : vector<48x32xbf16>, vector<32x64xbf16>, vector<48x64xf32> -> vector<48x64xf32>
    %770 = vector.broadcast %605 : vector<1x64xf32> to vector<48x64xf32>
    %771 = arith.addf %769, %770 : vector<48x64xf32>
    %cst_208 = arith.constant 0.000000e+00 : f32
    %772 = vector.broadcast %cst_208 : f32 to vector<48x64xf32>
    %773 = arith.maximumf %771, %772 : vector<48x64xf32>
    %774 = arith.truncf %773 : vector<48x64xf32> to vector<48x64xbf16>
    %c3_209 = arith.constant 3 : index
    %c0_210 = arith.constant 0 : index
    %c0_211 = arith.constant 0 : index
    %775 = vector.load %arg7[%c3_209, %c0_210, %c0_211] : memref<4x64x32xbf16, #tpu.memory_space<vmem>>, vector<1x64x32xbf16>
    %776 = vector.shape_cast %775 : vector<1x64x32xbf16> to vector<64x32xbf16>
    %cst_212 = arith.constant dense<0.000000e+00> : vector<48x32xf32>
    %777 = tpu.matmul %774, %776, %cst_212 {dimension_numbers = #tpu.dot_dimension_numbers<[1], [0], [0], [1], [0, 0, 1, 1], [], []>} : vector<48x64xbf16>, vector<64x32xbf16>, vector<48x32xf32> -> vector<48x32xf32>
    %778 = vector.broadcast %606 : vector<1x32xf32> to vector<48x32xf32>
    %779 = arith.addf %777, %778 : vector<48x32xf32>
    %780 = arith.addf %743, %779 : vector<48x32xf32>
    %c3_213 = arith.constant 3 : index
    %c0_214 = arith.constant 0 : index
    %781 = vector.load %arg9[%c3_213, %c0_214] : memref<8x128xf32, #tpu.memory_space<vmem>>, vector<1x32xf32>
    %c4 = arith.constant 4 : index
    %c0_215 = arith.constant 0 : index
    %782 = vector.load %arg9[%c4, %c0_215] : memref<8x128xf32, #tpu.memory_space<vmem>>, vector<1x32xf32>
    %cst_216 = arith.constant dense<0.000000e+00> : vector<48xf32>
    %783 = vector.multi_reduction <add>, %780, %cst_216 [1] : vector<48x32xf32> to vector<48xf32>
    %784 = vector.shape_cast %783 : vector<48xf32> to vector<48x1xf32>
    %cst_217 = arith.constant 3.200000e+01 : f32
    %785 = vector.broadcast %cst_217 : f32 to vector<48x1xf32>
    %786 = arith.divf %784, %785 : vector<48x1xf32>
    %787 = vector.broadcast %786 : vector<48x1xf32> to vector<48x32xf32>
    %788 = arith.subf %780, %787 : vector<48x32xf32>
    %789 = arith.mulf %788, %788 : vector<48x32xf32>
    %cst_218 = arith.constant dense<0.000000e+00> : vector<48xf32>
    %790 = vector.multi_reduction <add>, %789, %cst_218 [1] : vector<48x32xf32> to vector<48xf32>
    %791 = vector.shape_cast %790 : vector<48xf32> to vector<48x1xf32>
    %cst_219 = arith.constant 3.200000e+01 : f32
    %792 = vector.broadcast %cst_219 : f32 to vector<48x1xf32>
    %793 = arith.divf %791, %792 : vector<48x1xf32>
    %794 = vector.broadcast %786 : vector<48x1xf32> to vector<48x32xf32>
    %795 = arith.subf %780, %794 : vector<48x32xf32>
    %796 = vector.broadcast %781 : vector<1x32xf32> to vector<48x32xf32>
    %797 = arith.mulf %796, %795 : vector<48x32xf32>
    %cst_220 = arith.constant 9.99999997E-7 : f32
    %798 = vector.broadcast %cst_220 : f32 to vector<48x1xf32>
    %799 = arith.addf %793, %798 : vector<48x1xf32>
    %800 = math.rsqrt %799 : vector<48x1xf32>
    %801 = vector.broadcast %800 : vector<48x1xf32> to vector<48x32xf32>
    %802 = arith.mulf %797, %801 : vector<48x32xf32>
    %803 = vector.broadcast %782 : vector<1x32xf32> to vector<48x32xf32>
    %804 = arith.addf %802, %803 : vector<48x32xf32>
    %805 = vector.shape_cast %804 : vector<48x32xf32> to vector<2x24x32xf32>
    %806 = vector.shape_cast %25 : vector<2x24xf32> to vector<2x24x1xf32>
    %807 = vector.broadcast %806 : vector<2x24x1xf32> to vector<2x24x32xf32>
    %808 = arith.mulf %805, %807 : vector<2x24x32xf32>
    %cst_221 = arith.constant dense<0.000000e+00> : vector<2x32xf32>
    %809 = vector.multi_reduction <add>, %808, %cst_221 [1] : vector<2x24x32xf32> to vector<2x32xf32>
    %cst_222 = arith.constant dense<0.000000e+00> : vector<2xf32>
    %810 = vector.multi_reduction <add>, %25, %cst_222 [1] : vector<2x24xf32> to vector<2xf32>
    %811 = vector.shape_cast %810 : vector<2xf32> to vector<2x1xf32>
    %812 = tpu.reciprocal %811 {approx = true} : vector<2x1xf32> -> vector<2x1xf32>
    %813 = vector.broadcast %812 : vector<2x1xf32> to vector<2x32xf32>
    %814 = arith.mulf %809, %813 : vector<2x32xf32>
    %c96 = arith.constant 96 : index
    %c0_223 = arith.constant 0 : index
    %815 = vector.load %arg4[%c96, %c0_223] : memref<152x32xbf16, #tpu.memory_space<vmem>>, vector<32x3xbf16>
    %816 = arith.extf %815 : vector<32x3xbf16> to vector<32x3xf32>
    %cst_224 = arith.constant dense<0.000000e+00> : vector<2x3xf32>
    %817 = tpu.matmul %814, %816, %cst_224 {dimension_numbers = #tpu.dot_dimension_numbers<[1], [0], [0], [1], [0, 0, 1, 1], [], []>} : vector<2x32xf32>, vector<32x3xf32>, vector<2x3xf32> -> vector<2x3xf32>
    %c5 = arith.constant 5 : index
    %c0_225 = arith.constant 0 : index
    %818 = vector.load %arg9[%c5, %c0_225] : memref<8x128xf32, #tpu.memory_space<vmem>>, vector<1x3xf32>
    %819 = vector.broadcast %818 : vector<1x3xf32> to vector<2x3xf32>
    %820 = arith.addf %817, %819 : vector<2x3xf32>
    %c0_226 = arith.constant 0 : index
    %c0_227 = arith.constant 0 : index
    %821 = vector.load %arg10[%c0_226, %c0_227] : memref<2x3xf32, #tpu.memory_space<vmem>>, vector<2x3xf32>
    tpu.vector_store %arg10[%c0_226, %c0_227], %820 {strides = array<i32>} : memref<2x3xf32, #tpu.memory_space<vmem>>, vector<2x3xf32>,
    return
  }
}

</mosaic_0001>

<llo_original>
// kernel: tpu_custom_call.1
$region0: #{tpu_custom_call.1}
  #allocation0 [shape = 'u32[]', space=smem, size = 0x4, offset = 0x4, fixed_abs, tag = 'smem constant byte address 0x4 - core index']
  #allocation1 [shape = 'u32[72,128]{1,0:T(1,128)}', space=vmem, size = 0x9000, scoped, tag = 'internal scratch']
  %s0 = inlined_call_operand.vmem [shape: bf16[16,48], index: 0, kind: input, shape index: {}]
  %s1 = inlined_call_operand.vmem [shape: bf16[12,48], index: 1, kind: input, shape index: {}]
  %s2 = inlined_call_operand.vmem [shape: bf16[20,24], index: 2, kind: input, shape index: {}]
  %s3 = inlined_call_operand.vmem [shape: s32[2,3], index: 3, kind: input, shape index: {}]
  %s4 = inlined_call_operand.vmem [shape: bf16[152,32], index: 4, kind: input, shape index: {}]
  %s5 = inlined_call_operand.vmem [shape: bf16[4,32,128], index: 5, kind: input, shape index: {}]
  %s6 = inlined_call_operand.vmem [shape: bf16[4,32,64], index: 6, kind: input, shape index: {}]
  %s7 = inlined_call_operand.vmem [shape: bf16[4,64,32], index: 7, kind: input, shape index: {}]
  %s8 = inlined_call_operand.vmem [shape: f32[4,8,128], index: 8, kind: input, shape index: {}]
  %s9 = inlined_call_operand.vmem [shape: f32[8,128], index: 9, kind: input, shape index: {}]
  %s10 = inlined_call_operand.hbm [shape: f32[2,3], index: 10, kind: output, shape index: {}]
  %s11 = sld [smem:[#allocation0]]
  $region50: #{tpu_custom_call.1} parent=0
    _
  %s13 = ssub.s32 1, %s11
  %s14 = scalar_select 0, %s13, %s11
  $region1: #{tpu_custom_call.1} parent=0
    #allocation2 [shape = 'u8[1024]{0}', space=vmem, size = 0x400, scoped, tag = 'output window, operand 0, single buffered']
    #allocation3 [shape = 's32[1]{0}', space=sflag, size = 0x4, scoped, tag = 'scoped memory for tpu_custom_call.1']
    %15 = vsyncpa [#allocation3], 0
    // Predicated region
    $region2: #{tpu_custom_call.1} parent=1 // pred_check
      _
    $region3: #{tpu_custom_call.1} parent=1 // pred_check_branch
      %17 = sbr.rel (0) target = $region5
    $region4: #{tpu_custom_call.1} parent=1 // pred_region
      _
    $region5: #{tpu_custom_call.1} parent=1 // pred_fallthru
      _
    // Predicated region
    $region6: #{tpu_custom_call.1} parent=1 // pred_check
      _
    $region7: #{tpu_custom_call.1} parent=1 // pred_check_branch
      %19 = sbr.rel (0) target = $region9
    $region8: #{tpu_custom_call.1} parent=1 // pred_region
      _
    $region9: #{tpu_custom_call.1} parent=1 // pred_fallthru
      _
    // Predicated region
    $region10: #{tpu_custom_call.1} parent=1 // pred_check
      _
    $region11: #{tpu_custom_call.1} parent=1 // pred_check_branch
      %21 = sbr.rel (0) target = $region13
    $region12: #{tpu_custom_call.1} parent=1 // pred_region
      _
    $region13: #{tpu_custom_call.1} parent=1 // pred_fallthru
      _
    // Predicated region
    $region14: #{tpu_custom_call.1} parent=1 // pred_check
      _
    $region15: #{tpu_custom_call.1} parent=1 // pred_check_branch
      %23 = sbr.rel (0) target = $region17
    $region16: #{tpu_custom_call.1} parent=1 // pred_region
      _
    $region17: #{tpu_custom_call.1} parent=1 // pred_fallthru
      _
    // Predicated region
    $region18: #{tpu_custom_call.1} parent=1 // pred_check
      _
    $region19: #{tpu_custom_call.1} parent=1 // pred_check_branch
      %25 = sbr.rel (0) target = $region21
    $region20: #{tpu_custom_call.1} parent=1 // pred_region
      _
    $region21: #{tpu_custom_call.1} parent=1 // pred_fallthru
      _
    // Predicated region
    $region22: #{tpu_custom_call.1} parent=1 // pred_check
      _
    $region23: #{tpu_custom_call.1} parent=1 // pred_check_branch
      %27 = sbr.rel (0) target = $region25
    $region24: #{tpu_custom_call.1} parent=1 // pred_region
      _
    $region25: #{tpu_custom_call.1} parent=1 // pred_fallthru
      _
    // Predicated region
    $region26: #{tpu_custom_call.1} parent=1 // pred_check
      _
    $region27: #{tpu_custom_call.1} parent=1 // pred_check_branch
      %29 = sbr.rel (0) target = $region29
    $region28: #{tpu_custom_call.1} parent=1 // pred_region
      _
    $region29: #{tpu_custom_call.1} parent=1 // pred_fallthru
      _
    // Predicated region
    $region30: #{tpu_custom_call.1} parent=1 // pred_check
      _
    $region31: #{tpu_custom_call.1} parent=1 // pred_check_branch
      %31 = sbr.rel (0) target = $region33
    $region32: #{tpu_custom_call.1} parent=1 // pred_region
      _
    $region33: #{tpu_custom_call.1} parent=1 // pred_fallthru
      _
    // Predicated region
    $region34: #{tpu_custom_call.1} parent=1 // pred_check
      _
    $region35: #{tpu_custom_call.1} parent=1 // pred_check_branch
      %33 = sbr.rel (0) target = $region37
    $region36: #{tpu_custom_call.1} parent=1 // pred_region
      _
    $region37: #{tpu_custom_call.1} parent=1 // pred_fallthru
      _
    // Predicated region
    $region38: #{tpu_custom_call.1} parent=1 // pred_check
      _
    $region39: #{tpu_custom_call.1} parent=1 // pred_check_branch
      %35 = sbr.rel (0) target = $region41
    $region40: #{tpu_custom_call.1} parent=1 // pred_region
      _
    $region41: #{tpu_custom_call.1} parent=1 // pred_fallthru
      _
    %v37 = vld [vmem:[%s3] sm:$0x3]
    %v38 = vlaneseq
    %v39 = vand.u32 %v38, 127
    %40 = vset.pattern.permute.xlu0 0
    %41 = vperm.xlu0 %40, %v37
    %v42 = vpop.permute.xlu0 %41
    %vm43 = vcmp.lt.s32.totalorder %v39, %v42
    %vm44 = vcmp.ge.s32.totalorder %v39, 8
    %v45 = vadd.s32 %v37, 8
    %46 = vset.pattern.permute.xlu0 1
    %47 = vperm.xlu0 %46, %v45
    %v48 = vpop.permute.xlu0 %47
    %vm49 = vcmp.lt.s32.totalorder %v39, %v48
    %vm50 = vmand %vm44, %vm49
    %vm51 = vmor %vm43, %vm50
    %vm52 = vcmp.ge.s32.totalorder %v39, 14
    %v53 = vadd.s32 %v37, 14
    %54 = vset.pattern.permute.xlu0 2
    %55 = vperm.xlu0 %54, %v53
    %v56 = vpop.permute.xlu0 %55
    %vm57 = vcmp.lt.s32.totalorder %v39, %v56
    %vm58 = vmand %vm52, %vm57
    %vm59 = vmor %vm51, %vm58
    %v60 = vsel %vm59, 1.0, 0.0
    %v61 = vsel %vm59, 0.0, -1e+09
    %v63 = vrot.slane %v61, 1
    %v64 = vld [vmem:[%s0] sm:$0xf]
    %v65 = vld [vmem:[%s0 + $0x4] sm:$0xf]
    %v66 = vld [vmem:[%s4] sm:$0xf]
    %v67 = vld [vmem:[%s4 + $0x4] sm:$0xf]
    %v68 = vld [vmem:[%s4 + $0x8] sm:$0xf]
    %v69 = vld [vmem:[%s4 + $0xc] sm:$0xf]
    %v70 = vld [vmem:[%s4 + $0x10] sm:$0xf]
    %v71 = vld [vmem:[%s4 + $0x14] sm:$0xf]
    %v72 = vld [vmem:[%s9] sm:$0x1]
    %v73 = vperm.slane %v72, 0
    %v76 = vunpack.c.l.b16 %v64
    %v77 = vunpack.c.l.b16 %v65
    %v78 = vpack.c.b16 %v77, %v76
    %v85 = vunpack.c.l.b16 %v66
    %v86 = vunpack.c.l.b16 %v67
    %v87 = vunpack.c.l.b16 %v68
    %v88 = vunpack.c.l.b16 %v69
    %v89 = vunpack.c.l.b16 %v70
    %v90 = vunpack.c.l.b16 %v71
    %v91 = vpack.c.b16 %v86, %v85
    %v92 = vpack.c.b16 %v88, %v87
    %v93 = vpack.c.b16 %v90, %v89
    %vm97 = vcmask 392192
    %v99 = vsel %vm97, %v78, 0
    %101 = vmatpush.bf16.msra.mxu0 0
    %102 = vmatpush.bf16.msra.mxu0 0
    %103 = vmatpush.bf16.msra.mxu0 0
    %104 = vmatpush.bf16.msra.mxu0 0
    %105 = vmatpush.bf16.msra.mxu0 0
    %106 = vmatpush.bf16.msra.mxu0 %v93
    %107 = vmatpush.bf16.msra.mxu0 %v92
    %108 = vmatpush.bf16.msra.mxu0 %v91
    %109 = vmatmul.bf16.gmra.mxu0 %v99
    %v110 = vpop.f32.mrf.mxu0
    %v111 = vadd.f32 %v73, %v110
    %v112 = vpop.f32.mrf.mxu0
    %v113 = vadd.f32 %v73, %v112
    %114 = vdwg.mxu0
    %v115 = vmax.f32 %v111, 0.0
    %v116 = vmax.f32 %v113, 0.0
    %v117 = vld [vmem:[%s1] sm:$0xf]
    %v118 = vld [vmem:[%s1 + $0x4] sm:$0x3]
    %v119 = vld [vmem:[%s4 + $0x18] sm:$0xf]
    %v120 = vld [vmem:[%s4 + $0x1c] sm:$0xf]
    %v121 = vld [vmem:[%s4 + $0x20] sm:$0xf]
    %v122 = vld [vmem:[%s4 + $0x24] sm:$0xf]
    %v123 = vld [vmem:[%s4 + $0x28] sm:$0xf]
    %v124 = vld [vmem:[%s4 + $0x2c] sm:$0xf]
    %v125 = vld [vmem:[%s9 + $0x1] sm:$0x1]
    %v126 = vperm.slane %v125, 0
    %v129 = vunpack.c.l.b16 %v117
    %v130 = vunpack.c.l.b16 %v118
    %v131 = vpack.c.b16 %v130, %v129
    %v138 = vunpack.c.l.b16 %v119
    %v139 = vunpack.c.l.b16 %v120
    %v140 = vunpack.c.l.b16 %v121
    %v141 = vunpack.c.l.b16 %v122
    %v142 = vunpack.c.l.b16 %v123
    %v143 = vunpack.c.l.b16 %v124
    %v144 = vpack.c.b16 %v139, %v138
    %v145 = vpack.c.b16 %v141, %v140
    %v146 = vpack.c.b16 %v143, %v142
    %v151 = vsel %vm97, %v131, 0
    %153 = vmatpush.bf16.msra.mxu0 0
    %154 = vmatpush.bf16.msra.mxu0 0
    %155 = vmatpush.bf16.msra.mxu0 0
    %156 = vmatpush.bf16.msra.mxu0 0
    %157 = vmatpush.bf16.msra.mxu0 0
    %158 = vmatpush.bf16.msra.mxu0 %v146
    %159 = vmatpush.bf16.msra.mxu0 %v145
    %160 = vmatpush.bf16.msra.mxu0 %v144
    %161 = vmatmul.bf16.gmra.mxu0 %v151
    %v162 = vpop.f32.mrf.mxu0
    %v163 = vadd.f32 %v126, %v162
    %v164 = vpop.f32.mrf.mxu0
    %v165 = vadd.f32 %v126, %v164
    %166 = vdwg.mxu0
    %v167 = vmax.f32 %v163, 0.0
    %v168 = vmax.f32 %v165, 0.0
    %v169 = vld [vmem:[%s2] sm:$0xf]
    %v170 = vld [vmem:[%s2 + $0x4] sm:$0xf]
    %v171 = vld [vmem:[%s2 + $0x8] sm:$0x3]
    %v172 = vld [vmem:[%s4 + $0x40] sm:$0xf]
    %v173 = vld [vmem:[%s4 + $0x44] sm:$0xf]
    %v174 = vld [vmem:[%s4 + $0x48] sm:$0xf]
    %v175 = vld [vmem:[%s9 + $0x2] sm:$0x1]
    %v176 = vperm.slane %v175, 0
    %v180 = vunpack.c.l.b16 %v169
    %v181 = vunpack.c.l.b16 %v170
    %v182 = vunpack.c.l.b16 %v171
    %v183 = vpack.c.b16 %v181, %v180
    %v184 = vpack.c.b16 %v182, %v182
    %v188 = vunpack.c.l.b16 %v172
    %v189 = vunpack.c.l.b16 %v173
    %v190 = vunpack.c.l.b16 %v174
    %v191 = vpack.c.b16 %v189, %v188
    %v192 = vpack.c.b16 %v190, %v190
    %vm194 = vcmask 195584
    %v196 = vsel %vm194, %v183, 0
    %v199 = vsel %vm194, %v184, 0
    %vm201 = vcmask 1043456
    %v203 = vsel %vm201, %v192, 0
    %205 = vmatpush.bf16.msra.mxu0 0
    %206 = vmatpush.bf16.msra.mxu0 0
    %207 = vmatpush.bf16.msra.mxu0 0
    %208 = vmatpush.bf16.msra.mxu0 0
    %209 = vmatpush.bf16.msra.mxu0 0
    %210 = vmatpush.bf16.msra.mxu0 0
    %211 = vmatpush.bf16.msra.mxu0 %v203
    %212 = vmatpush.bf16.msra.mxu0 %v191
    %213 = vmatmul.bf16.gmra.mxu0 %v196
    %v214 = vpop.f32.mrf.mxu0
    %v215 = vadd.f32 %v176, %v214
    %v216 = vpop.f32.mrf.mxu0
    %v217 = vadd.f32 %v176, %v216
    %218 = vmatmul.bf16.gmra.mxu0 %v199
    %v219 = vpop.f32.mrf.mxu0
    %v220 = vadd.f32 %v176, %v219
    %v221 = vpop.f32.mrf.mxu0
    %222 = vdwg.mxu0
    %v223 = vmax.f32 %v215, 0.0
    %v224 = vmax.f32 %v217, 0.0
    %v225 = vmax.f32 %v220, 0.0
    %vm228 = vcmask 1045504
    %v229 = vrot.slane %v223, 2
    %v230 = vrot.slane %v224, 2
    %v231 = vsel %vm228, %v229, %v230
    %vm236 = vcmask 1041408
    %v237 = vrot.slane %v167, 6
    %v238 = vrot.slane %v168, 6
    %v239 = vsel %vm236, %v237, %v238
    %v242 = vrot.slane %v224, 4
    %v243 = vrot.slane %v225, 4
    %v244 = vsel %vm201, %v242, %v243
    %v247 = vsel %vm228, %v167, %v229
    %v248 = vsel %vm228, %v239, %v242
    %v249 = vld [vmem:[%s8] sm:$0xff]
    %v250 = vld [vmem:[%s5] sm:$0xf]
    %v251 = vld [vmem:[%s5 + $0x4] sm:$0xf]
    %v252 = vld [vmem:[%s5 + $0x8] sm:$0xf]
    %v253 = vld [vmem:[%s5 + $0xc] sm:$0xf]
    %vm254 = vcmask 261120
    %v255 = vsel %vm254, %v115, 0.0
    %256 = vadd.xlane.f32.xlu0 %v255
    %v257 = vpop.xlane.xlu0 %256
    %v258 = vsel %vm254, %v247, 0.0
    %259 = vadd.xlane.f32.xlu0 %v258
    %v260 = vpop.xlane.xlu0 %259
    %v261 = vsel %vm254, %v231, 0.0
    %262 = vadd.xlane.f32.xlu0 %v261
    %v263 = vpop.xlane.xlu0 %262
    %v264 = vsel %vm254, %v116, 0.0
    %265 = vadd.xlane.f32.xlu0 %v264
    %v266 = vpop.xlane.xlu0 %265
    %v267 = vsel %vm254, %v248, 0.0
    %268 = vadd.xlane.f32.xlu0 %v267
    %v269 = vpop.xlane.xlu0 %268
    %v270 = vsel %vm254, %v244, 0.0
    %271 = vadd.xlane.f32.xlu0 %v270
    %v272 = vpop.xlane.xlu0 %271
    %v273 = vrcp.pop 32.0
    %v274 = vmul.f32 32.0, %v273
    %v275 = vsub.f32 1.0, %v274
    %v276 = vmul.f32 %v273, %v275
    %v277 = vadd.f32 %v273, %v276
    %vm278 = vweird.f32 %v273
    %v279 = vsel %vm278, %v273, %v277
    %v280 = vmul.f32 %v257, %v279
    %v281 = vmul.f32 %v260, %v279
    %v282 = vmul.f32 %v263, %v279
    %v283 = vmul.f32 %v266, %v279
    %v284 = vmul.f32 %v269, %v279
    %v285 = vmul.f32 %v272, %v279
    %v286 = vsub.f32 %v115, %v280
    %v287 = vsub.f32 %v247, %v281
    %v288 = vsub.f32 %v231, %v282
    %v289 = vsub.f32 %v116, %v283
    %v290 = vsub.f32 %v248, %v284
    %v291 = vsub.f32 %v244, %v285
    %v292 = vmul.f32 %v286, %v286
    %v293 = vmul.f32 %v287, %v287
    %v294 = vmul.f32 %v288, %v288
    %v295 = vmul.f32 %v289, %v289
    %v296 = vmul.f32 %v290, %v290
    %v297 = vmul.f32 %v291, %v291
    %v298 = vsel %vm254, %v292, 0.0
    %299 = vadd.xlane.f32.xlu0 %v298
    %v300 = vpop.xlane.xlu0 %299
    %v301 = vsel %vm254, %v293, 0.0
    %302 = vadd.xlane.f32.xlu0 %v301
    %v303 = vpop.xlane.xlu0 %302
    %v304 = vsel %vm254, %v294, 0.0
    %305 = vadd.xlane.f32.xlu0 %v304
    %v306 = vpop.xlane.xlu0 %305
    %v307 = vsel %vm254, %v295, 0.0
    %308 = vadd.xlane.f32.xlu0 %v307
    %v309 = vpop.xlane.xlu0 %308
    %v310 = vsel %vm254, %v296, 0.0
    %311 = vadd.xlane.f32.xlu0 %v310
    %v312 = vpop.xlane.xlu0 %311
    %v313 = vsel %vm254, %v297, 0.0
    %314 = vadd.xlane.f32.xlu0 %v313
    %v315 = vpop.xlane.xlu0 %314
    %v316 = vmul.f32 %v300, %v279
    %v317 = vmul.f32 %v303, %v279
    %v318 = vmul.f32 %v306, %v279
    %v319 = vmul.f32 %v309, %v279
    %v320 = vmul.f32 %v312, %v279
    %v321 = vmul.f32 %v315, %v279
    %v322 = vperm.slane %v249, 4
    %v323 = vmul.f32 %v322, %v286
    %v324 = vmul.f32 %v322, %v287
    %v325 = vmul.f32 %v322, %v288
    %v326 = vmul.f32 %v322, %v289
    %v327 = vmul.f32 %v322, %v290
    %v328 = vmul.f32 %v322, %v291
    %v329 = vadd.f32 %v316, 1e-06
    %v330 = vadd.f32 %v317, 1e-06
    %v331 = vadd.f32 %v318, 1e-06
    %v332 = vadd.f32 %v319, 1e-06
    %v333 = vadd.f32 %v320, 1e-06
    %v334 = vadd.f32 %v321, 1e-06
    %v335 = vrsqrt.pop %v329
    %v336 = vmul.f32 %v335, %v329
    %v337 = vmul.f32 %v336, %v335
    %v338 = vmul.f32 0.5, %v337
    %v339 = vsub.f32 1.5, %v338
    %v340 = vmul.f32 %v335, %v339
    %vm341 = vweird.f32 %v329
    %vm342 = vweird.f32 %v335
    %vm343 = vmor %vm341, %vm342
    %v344 = vsel %vm343, %v335, %v340
    %v345 = vrsqrt.pop %v330
    %v346 = vmul.f32 %v345, %v330
    %v347 = vmul.f32 %v346, %v345
    %v348 = vmul.f32 0.5, %v347
    %v349 = vsub.f32 1.5, %v348
    %v350 = vmul.f32 %v345, %v349
    %vm351 = vweird.f32 %v330
    %vm352 = vweird.f32 %v345
    %vm353 = vmor %vm351, %vm352
    %v354 = vsel %vm353, %v345, %v350
    %v355 = vrsqrt.pop %v331
    %v356 = vmul.f32 %v355, %v331
    %v357 = vmul.f32 %v356, %v355
    %v358 = vmul.f32 0.5, %v357
    %v359 = vsub.f32 1.5, %v358
    %v360 = vmul.f32 %v355, %v359
    %vm361 = vweird.f32 %v331
    %vm362 = vweird.f32 %v355
    %vm363 = vmor %vm361, %vm362
    %v364 = vsel %vm363, %v355, %v360
    %v365 = vrsqrt.pop %v332
    %v366 = vmul.f32 %v365, %v332
    %v367 = vmul.f32 %v366, %v365
    %v368 = vmul.f32 0.5, %v367
    %v369 = vsub.f32 1.5, %v368
    %v370 = vmul.f32 %v365, %v369
    %vm371 = vweird.f32 %v332
    %vm372 = vweird.f32 %v365
    %vm373 = vmor %vm371, %vm372
    %v374 = vsel %vm373, %v365, %v370
    %v375 = vrsqrt.pop %v333
    %v376 = vmul.f32 %v375, %v333
    %v377 = vmul.f32 %v376, %v375
    %v378 = vmul.f32 0.5, %v377
    %v379 = vsub.f32 1.5, %v378
    %v380 = vmul.f32 %v375, %v379
    %vm381 = vweird.f32 %v333
    %vm382 = vweird.f32 %v375
    %vm383 = vmor %vm381, %vm382
    %v384 = vsel %vm383, %v375, %v380
    %v385 = vrsqrt.pop %v334
    %v386 = vmul.f32 %v385, %v334
    %v387 = vmul.f32 %v386, %v385
    %v388 = vmul.f32 0.5, %v387
    %v389 = vsub.f32 1.5, %v388
    %v390 = vmul.f32 %v385, %v389
    %vm391 = vweird.f32 %v334
    %vm392 = vweird.f32 %v385
    %vm393 = vmor %vm391, %vm392
    %v394 = vsel %vm393, %v385, %v390
    %v395 = vmul.f32 %v323, %v344
    %v396 = vmul.f32 %v324, %v354
    %v397 = vmul.f32 %v325, %v364
    %v398 = vmul.f32 %v326, %v374
    %v399 = vmul.f32 %v327, %v384
    %v400 = vmul.f32 %v328, %v394
    %v401 = vperm.slane %v249, 5
    %v402 = vadd.f32 %v395, %v401
    %v403 = vadd.f32 %v396, %v401
    %v404 = vadd.f32 %v397, %v401
    %v405 = vadd.f32 %v398, %v401
    %v406 = vadd.f32 %v399, %v401
    %v407 = vadd.f32 %v400, %v401
    %v408 = vpack.c.bf16 %v403, %v402
    %v409 = vpack.c.bf16 %v405, %v404
    %v410 = vpack.c.bf16 %v407, %v406
    %v411 = vperm.slane %v249, 0
    %v416 = vunpack.c.l.b16 %v250
    %v417 = vunpack.c.l.b16 %v251
    %v418 = vunpack.c.l.b16 %v252
    %v419 = vunpack.c.l.b16 %v253
    %v420 = vpack.c.b16 %v417, %v416
    %v421 = vpack.c.b16 %v419, %v418
    %v425 = vsel %vm254, %v408, 0
    %v428 = vsel %vm254, %v409, 0
    %v431 = vsel %vm254, %v410, 0
    %433 = vmatpush.bf16.msra.mxu0 0
    %434 = vmatpush.bf16.msra.mxu0 0
    %435 = vmatpush.bf16.msra.mxu0 0
    %436 = vmatpush.bf16.msra.mxu0 0
    %437 = vmatpush.bf16.msra.mxu0 0
    %438 = vmatpush.bf16.msra.mxu0 0
    %439 = vmatpush.bf16.msra.mxu0 %v421
    %440 = vmatpush.bf16.msra.mxu0 %v420
    %441 = vmatmul.bf16.gmra.mxu0 %v425
    %v442 = vpop.f32.mrf.mxu0
    %v443 = vadd.f32 %v411, %v442
    %v444 = vpop.f32.mrf.mxu0
    %v445 = vadd.f32 %v411, %v444
    %446 = vmatmul.bf16.gmra.mxu0 %v428
    %v447 = vpop.f32.mrf.mxu0
    %v448 = vadd.f32 %v411, %v447
    %v449 = vpop.f32.mrf.mxu0
    %v450 = vadd.f32 %v411, %v449
    %451 = vmatmul.bf16.gmra.mxu0 %v431
    %v452 = vpop.f32.mrf.mxu0
    %v453 = vadd.f32 %v411, %v452
    %v454 = vpop.f32.mrf.mxu0
    %v455 = vadd.f32 %v411, %v454
    %456 = vdwg.mxu0
    %v457 = vpack.c.bf16 %v443, %v443
    %v458 = vpack.c.bf16 %v445, %v445
    %v459 = vpack.c.bf16 %v448, %v448
    %v460 = vpack.c.bf16 %v450, %v450
    %v461 = vpack.c.bf16 %v453, %v453
    %v462 = vpack.c.bf16 %v455, %v455
    %v466 = vunpack.c.l.b16 %v457
    %v467 = vunpack.c.l.b16 %v458
    %v468 = vunpack.c.l.b16 %v459
    %v469 = vpack.c.b16 %v467, %v466
    %v470 = vpack.c.b16 %v468, %v468
    %471 = vrot.lane.b32.xlu0 %v469, 96
    %v472 = vpop.permute.xlu0 %471
    %473 = vrot.lane.b32.xlu0 %v470, 96
    %v474 = vpop.permute.xlu0 %473
    %vm475 = vcmask 64512
    %v477 = vsel %vm475, %v469, 0
    %v480 = vsel %vm475, %v470, 0
    %v483 = vsel %vm475, %v472, 0
    %v486 = vsel %vm475, %v474, 0
    %488 = vmatpush.bf16.xpose.msra.mxu0 0
    %489 = vmatpush.bf16.xpose.msra.mxu0 0
    %490 = vmatpush.bf16.xpose.msra.mxu0 0
    %491 = vmatpush.bf16.xpose.msra.mxu0 0
    %492 = vmatpush.bf16.xpose.msra.mxu0 0
    %493 = vmatpush.bf16.xpose.msra.mxu0 0
    %494 = vmatpush.bf16.xpose.msra.mxu0 %v486
    %495 = vmatpush.bf16.xpose.msra.mxu0 %v483
    %496 = vmatmul.bf16.gmra.mxu0 %v477
    %v497 = vpop.f32.mrf.mxu0
    %v498 = vadd.f32 0.0, %v497
    %v499 = vpop.f32.mrf.mxu0
    %v500 = vadd.f32 0.0, %v499
    %501 = vmatmul.bf16.gmra.mxu0 %v480
    %v502 = vpop.f32.mrf.mxu0
    %v503 = vadd.f32 0.0, %v502
    %v504 = vpop.f32.mrf.mxu0
    %505 = vdwg.mxu0
    %v509 = vunpack.c.l.b16 %v460
    %v510 = vunpack.c.l.b16 %v461
    %v511 = vunpack.c.l.b16 %v462
    %v512 = vpack.c.b16 %v510, %v509
    %v513 = vpack.c.b16 %v511, %v511
    %514 = vrot.lane.b32.xlu0 %v512, 96
    %v515 = vpop.permute.xlu0 %514
    %516 = vrot.lane.b32.xlu0 %v513, 96
    %v517 = vpop.permute.xlu0 %516
    %v519 = vsel %vm475, %v512, 0
    %v522 = vsel %vm475, %v513, 0
    %v525 = vsel %vm475, %v515, 0
    %v528 = vsel %vm475, %v517, 0
    %530 = vmatpush.bf16.xpose.msra.mxu0 0
    %531 = vmatpush.bf16.xpose.msra.mxu0 0
    %532 = vmatpush.bf16.xpose.msra.mxu0 0
    %533 = vmatpush.bf16.xpose.msra.mxu0 0
    %534 = vmatpush.bf16.xpose.msra.mxu0 0
    %535 = vmatpush.bf16.xpose.msra.mxu0 0
    %536 = vmatpush.bf16.xpose.msra.mxu0 %v528
    %537 = vmatpush.bf16.xpose.msra.mxu0 %v525
    %538 = vmatmul.bf16.gmra.mxu0 %v519
    %v539 = vpop.f32.mrf.mxu0
    %v540 = vadd.f32 0.0, %v539
    %v541 = vpop.f32.mrf.mxu0
    %v542 = vadd.f32 0.0, %v541
    %543 = vmatmul.bf16.gmra.mxu0 %v522
    %v544 = vpop.f32.mrf.mxu0
    %v545 = vadd.f32 0.0, %v544
    %v546 = vpop.f32.mrf.mxu0
    %547 = vdwg.mxu0
    %v548 = vmul.f32 %v498, 0.35355338
    %v549 = vmul.f32 %v500, 0.35355338
    %v550 = vmul.f32 %v503, 0.35355338
    %v551 = vmul.f32 %v540, 0.35355338
    %v552 = vmul.f32 %v542, 0.35355338
    %v553 = vmul.f32 %v545, 0.35355338
    %v554 = vperm.slane %v61, 0
    %v555 = vperm.slane %v63, 0
    %v558 = vadd.f32 %v548, %v554
    %v559 = vadd.f32 %v549, %v554
    %v560 = vadd.f32 %v550, %v554
    %v561 = vadd.f32 %v551, %v555
    %v562 = vadd.f32 %v552, %v555
    %v563 = vadd.f32 %v553, %v555
    %v564 = vsel %vm194, %v558, -inf
    %565 = vmax.xlane.f32.xlu0 %v564
    %v566 = vpop.xlane.xlu0 %565
    %v567 = vsel %vm194, %v559, -inf
    %568 = vmax.xlane.f32.xlu0 %v567
    %v569 = vpop.xlane.xlu0 %568
    %v570 = vsel %vm194, %v560, -inf
    %571 = vmax.xlane.f32.xlu0 %v570
    %v572 = vpop.xlane.xlu0 %571
    %v573 = vsel %vm194, %v561, -inf
    %574 = vmax.xlane.f32.xlu0 %v573
    %v575 = vpop.xlane.xlu0 %574
    %v576 = vsel %vm194, %v562, -inf
    %577 = vmax.xlane.f32.xlu0 %v576
    %v578 = vpop.xlane.xlu0 %577
    %v579 = vsel %vm194, %v563, -inf
    %580 = vmax.xlane.f32.xlu0 %v579
    %v581 = vpop.xlane.xlu0 %580
    %v582 = vsub.f32 %v558, %v566
    %v583 = vsub.f32 %v559, %v569
    %v584 = vsub.f32 %v560, %v572
    %v585 = vsub.f32 %v561, %v575
    %v586 = vsub.f32 %v562, %v578
    %v587 = vsub.f32 %v563, %v581
    %v588 = vmul.f32 %v582, 1.442695
    %v589 = vpow.pop %v588
    %v590 = vmul.f32 %v583, 1.442695
    %v591 = vpow.pop %v590
    %v592 = vmul.f32 %v584, 1.442695
    %v593 = vpow.pop %v592
    %v594 = vmul.f32 %v585, 1.442695
    %v595 = vpow.pop %v594
    %v596 = vmul.f32 %v586, 1.442695
    %v597 = vpow.pop %v596
    %v598 = vmul.f32 %v587, 1.442695
    %v599 = vpow.pop %v598
    %v600 = vsel %vm194, %v589, 0.0
    %601 = vadd.xlane.f32.xlu0 %v600
    %v602 = vpop.xlane.xlu0 %601
    %v603 = vsel %vm194, %v591, 0.0
    %604 = vadd.xlane.f32.xlu0 %v603
    %v605 = vpop.xlane.xlu0 %604
    %v606 = vsel %vm194, %v593, 0.0
    %607 = vadd.xlane.f32.xlu0 %v606
    %v608 = vpop.xlane.xlu0 %607
    %v609 = vsel %vm194, %v595, 0.0
    %610 = vadd.xlane.f32.xlu0 %v609
    %v611 = vpop.xlane.xlu0 %610
    %v612 = vsel %vm194, %v597, 0.0
    %613 = vadd.xlane.f32.xlu0 %v612
    %v614 = vpop.xlane.xlu0 %613
    %v615 = vsel %vm194, %v599, 0.0
    %616 = vadd.xlane.f32.xlu0 %v615
    %v617 = vpop.xlane.xlu0 %616
    %v618 = vrcp.pop %v602
    %v619 = vrcp.pop %v605
    %v620 = vrcp.pop %v608
    %v621 = vrcp.pop %v611
    %v622 = vrcp.pop %v614
    %v623 = vrcp.pop %v617
    %v624 = vmul.f32 %v589, %v618
    %v625 = vmul.f32 %v591, %v619
    %v626 = vmul.f32 %v593, %v620
    %v627 = vmul.f32 %v595, %v621
    %v628 = vmul.f32 %v597, %v622
    %v629 = vmul.f32 %v599, %v623
    %v630 = vpack.c.bf16 %v624, %v624
    %v631 = vpack.c.bf16 %v625, %v625
    %v632 = vpack.c.bf16 %v626, %v626
    %v633 = vpack.c.bf16 %v627, %v627
    %v634 = vpack.c.bf16 %v628, %v628
    %v635 = vpack.c.bf16 %v629, %v629
    %v639 = vunpack.c.l.b16 %v630
    %v640 = vunpack.c.l.b16 %v631
    %v641 = vunpack.c.l.b16 %v632
    %v642 = vpack.c.b16 %v640, %v639
    %v643 = vpack.c.b16 %v641, %v641
    %644 = vrot.lane.b32.xlu0 %v469, 64
    %v645 = vpop.permute.xlu0 %644
    %646 = vrot.lane.b32.xlu0 %v470, 64
    %v647 = vpop.permute.xlu0 %646
    %v650 = vsel %vm194, %v642, 0
    %v653 = vsel %vm194, %v643, 0
    %v656 = vsel %vm201, %v647, 0
    %658 = vmatpush.bf16.msra.mxu0 0
    %659 = vmatpush.bf16.msra.mxu0 0
    %660 = vmatpush.bf16.msra.mxu0 0
    %661 = vmatpush.bf16.msra.mxu0 0
    %662 = vmatpush.bf16.msra.mxu0 0
    %663 = vmatpush.bf16.msra.mxu0 0
    %664 = vmatpush.bf16.msra.mxu0 %v656
    %665 = vmatpush.bf16.msra.mxu0 %v645
    %666 = vmatmul.bf16.gmra.mxu0 %v650
    %v667 = vpop.f32.mrf.mxu0
    %v668 = vadd.f32 0.0, %v667
    %v669 = vpop.f32.mrf.mxu0
    %v670 = vadd.f32 0.0, %v669
    %671 = vmatmul.bf16.gmra.mxu0 %v653
    %v672 = vpop.f32.mrf.mxu0
    %v673 = vadd.f32 0.0, %v672
    %v674 = vpop.f32.mrf.mxu0
    %675 = vdwg.mxu0
    %v679 = vunpack.c.l.b16 %v633
    %v680 = vunpack.c.l.b16 %v634
    %v681 = vunpack.c.l.b16 %v635
    %v682 = vpack.c.b16 %v680, %v679
    %v683 = vpack.c.b16 %v681, %v681
    %684 = vrot.lane.b32.xlu0 %v512, 64
    %v685 = vpop.permute.xlu0 %684
    %686 = vrot.lane.b32.xlu0 %v513, 64
    %v687 = vpop.permute.xlu0 %686
    %v690 = vsel %vm194, %v682, 0
    %v693 = vsel %vm194, %v683, 0
    %v696 = vsel %vm201, %v687, 0
    %698 = vmatpush.bf16.msra.mxu0 0
    %699 = vmatpush.bf16.msra.mxu0 0
    %700 = vmatpush.bf16.msra.mxu0 0
    %701 = vmatpush.bf16.msra.mxu0 0
    %702 = vmatpush.bf16.msra.mxu0 0
    %703 = vmatpush.bf16.msra.mxu0 0
    %704 = vmatpush.bf16.msra.mxu0 %v696
    %705 = vmatpush.bf16.msra.mxu0 %v685
    %706 = vmatmul.bf16.gmra.mxu0 %v690
    %v707 = vpop.f32.mrf.mxu0
    %v708 = vadd.f32 0.0, %v707
    %v709 = vpop.f32.mrf.mxu0
    %v710 = vadd.f32 0.0, %v709
    %711 = vmatmul.bf16.gmra.mxu0 %v693
    %v712 = vpop.f32.mrf.mxu0
    %v713 = vadd.f32 0.0, %v712
    %v714 = vpop.f32.mrf.mxu0
    %715 = vdwg.mxu0
    %716 = vrot.lane.b32.xlu0 %v469, 120
    %v717 = vpop.permute.xlu0 %716
    %718 = vrot.lane.b32.xlu0 %v470, 120
    %v719 = vpop.permute.xlu0 %718
    %720 = vrot.lane.b32.xlu0 %v469, 88
    %v721 = vpop.permute.xlu0 %720
    %722 = vrot.lane.b32.xlu0 %v470, 88
    %v723 = vpop.permute.xlu0 %722
    %v725 = vsel %vm475, %v717, 0
    %v728 = vsel %vm475, %v719, 0
    %v731 = vsel %vm475, %v721, 0
    %v734 = vsel %vm475, %v723, 0
    %736 = vmatpush.bf16.xpose.msra.mxu0 0
    %737 = vmatpush.bf16.xpose.msra.mxu0 0
    %738 = vmatpush.bf16.xpose.msra.mxu0 0
    %739 = vmatpush.bf16.xpose.msra.mxu0 0
    %740 = vmatpush.bf16.xpose.msra.mxu0 0
    %741 = vmatpush.bf16.xpose.msra.mxu0 0
    %742 = vmatpush.bf16.xpose.msra.mxu0 %v734
    %743 = vmatpush.bf16.xpose.msra.mxu0 %v731
    %744 = vmatmul.bf16.gmra.mxu0 %v725
    %v745 = vpop.f32.mrf.mxu0
    %v746 = vadd.f32 0.0, %v745
    %v747 = vpop.f32.mrf.mxu0
    %v748 = vadd.f32 0.0, %v747
    %749 = vmatmul.bf16.gmra.mxu0 %v728
    %v750 = vpop.f32.mrf.mxu0
    %v751 = vadd.f32 0.0, %v750
    %v752 = vpop.f32.mrf.mxu0
    %753 = vdwg.mxu0
    %754 = vrot.lane.b32.xlu0 %v512, 120
    %v755 = vpop.permute.xlu0 %754
    %756 = vrot.lane.b32.xlu0 %v513, 120
    %v757 = vpop.permute.xlu0 %756
    %758 = vrot.lane.b32.xlu0 %v512, 88
    %v759 = vpop.permute.xlu0 %758
    %760 = vrot.lane.b32.xlu0 %v513, 88
    %v761 = vpop.permute.xlu0 %760
    %v763 = vsel %vm475, %v755, 0
    %v766 = vsel %vm475, %v757, 0
    %v769 = vsel %vm475, %v759, 0
    %v772 = vsel %vm475, %v761, 0
    %774 = vmatpush.bf16.xpose.msra.mxu0 0
    %775 = vmatpush.bf16.xpose.msra.mxu0 0
    %776 = vmatpush.bf16.xpose.msra.mxu0 0
    %777 = vmatpush.bf16.xpose.msra.mxu0 0
    %778 = vmatpush.bf16.xpose.msra.mxu0 0
    %779 = vmatpush.bf16.xpose.msra.mxu0 0
    %780 = vmatpush.bf16.xpose.msra.mxu0 %v772
    %781 = vmatpush.bf16.xpose.msra.mxu0 %v769
    %782 = vmatmul.bf16.gmra.mxu0 %v763
    %v783 = vpop.f32.mrf.mxu0
    %v784 = vadd.f32 0.0, %v783
    %v785 = vpop.f32.mrf.mxu0
    %v786 = vadd.f32 0.0, %v785
    %787 = vmatmul.bf16.gmra.mxu0 %v766
    %v788 = vpop.f32.mrf.mxu0
    %v789 = vadd.f32 0.0, %v788
    %v790 = vpop.f32.mrf.mxu0
    %791 = vdwg.mxu0
    %v792 = vmul.f32 %v746, 0.35355338
    %v793 = vmul.f32 %v748, 0.35355338
    %v794 = vmul.f32 %v751, 0.35355338
    %v795 = vmul.f32 %v784, 0.35355338
    %v796 = vmul.f32 %v786, 0.35355338
    %v797 = vmul.f32 %v789, 0.35355338
    %v798 = vadd.f32 %v792, %v554
    %v799 = vadd.f32 %v793, %v554
    %v800 = vadd.f32 %v794, %v554
    %v801 = vadd.f32 %v795, %v555
    %v802 = vadd.f32 %v796, %v555
    %v803 = vadd.f32 %v797, %v555
    %v804 = vsel %vm194, %v798, -inf
    %805 = vmax.xlane.f32.xlu0 %v804
    %v806 = vpop.xlane.xlu0 %805
    %v807 = vsel %vm194, %v799, -inf
    %808 = vmax.xlane.f32.xlu0 %v807
    %v809 = vpop.xlane.xlu0 %808
    %v810 = vsel %vm194, %v800, -inf
    %811 = vmax.xlane.f32.xlu0 %v810
    %v812 = vpop.xlane.xlu0 %811
    %v813 = vsel %vm194, %v801, -inf
    %814 = vmax.xlane.f32.xlu0 %v813
    %v815 = vpop.xlane.xlu0 %814
    %v816 = vsel %vm194, %v802, -inf
    %817 = vmax.xlane.f32.xlu0 %v816
    %v818 = vpop.xlane.xlu0 %817
    %v819 = vsel %vm194, %v803, -inf
    %820 = vmax.xlane.f32.xlu0 %v819
    %v821 = vpop.xlane.xlu0 %820
    %v822 = vsub.f32 %v798, %v806
    %v823 = vsub.f32 %v799, %v809
    %v824 = vsub.f32 %v800, %v812
    %v825 = vsub.f32 %v801, %v815
    %v826 = vsub.f32 %v802, %v818
    %v827 = vsub.f32 %v803, %v821
    %v828 = vmul.f32 %v822, 1.442695
    %v829 = vpow.pop %v828
    %v830 = vmul.f32 %v823, 1.442695
    %v831 = vpow.pop %v830
    %v832 = vmul.f32 %v824, 1.442695
    %v833 = vpow.pop %v832
    %v834 = vmul.f32 %v825, 1.442695
    %v835 = vpow.pop %v834
    %v836 = vmul.f32 %v826, 1.442695
    %v837 = vpow.pop %v836
    %v838 = vmul.f32 %v827, 1.442695
    %v839 = vpow.pop %v838
    %v840 = vsel %vm194, %v829, 0.0
    %841 = vadd.xlane.f32.xlu0 %v840
    %v842 = vpop.xlane.xlu0 %841
    %v843 = vsel %vm194, %v831, 0.0
    %844 = vadd.xlane.f32.xlu0 %v843
    %v845 = vpop.xlane.xlu0 %844
    %v846 = vsel %vm194, %v833, 0.0
    %847 = vadd.xlane.f32.xlu0 %v846
    %v848 = vpop.xlane.xlu0 %847
    %v849 = vsel %vm194, %v835, 0.0
    %850 = vadd.xlane.f32.xlu0 %v849
    %v851 = vpop.xlane.xlu0 %850
    %v852 = vsel %vm194, %v837, 0.0
    %853 = vadd.xlane.f32.xlu0 %v852
    %v854 = vpop.xlane.xlu0 %853
    %v855 = vsel %vm194, %v839, 0.0
    %856 = vadd.xlane.f32.xlu0 %v855
    %v857 = vpop.xlane.xlu0 %856
    %v858 = vrcp.pop %v842
    %v859 = vrcp.pop %v845
    %v860 = vrcp.pop %v848
    %v861 = vrcp.pop %v851
    %v862 = vrcp.pop %v854
    %v863 = vrcp.pop %v857
    %v864 = vmul.f32 %v829, %v858
    %v865 = vmul.f32 %v831, %v859
    %v866 = vmul.f32 %v833, %v860
    %v867 = vmul.f32 %v835, %v861
    %v868 = vmul.f32 %v837, %v862
    %v869 = vmul.f32 %v839, %v863
    %v870 = vpack.c.bf16 %v864, %v864
    %v871 = vpack.c.bf16 %v865, %v865
    %v872 = vpack.c.bf16 %v866, %v866
    %v873 = vpack.c.bf16 %v867, %v867
    %v874 = vpack.c.bf16 %v868, %v868
    %v875 = vpack.c.bf16 %v869, %v869
    %v879 = vunpack.c.l.b16 %v870
    %v880 = vunpack.c.l.b16 %v871
    %v881 = vunpack.c.l.b16 %v872
    %v882 = vpack.c.b16 %v880, %v879
    %v883 = vpack.c.b16 %v881, %v881
    %884 = vrot.lane.b32.xlu0 %v469, 56
    %v885 = vpop.permute.xlu0 %884
    %886 = vrot.lane.b32.xlu0 %v470, 56
    %v887 = vpop.permute.xlu0 %886
    %v890 = vsel %vm194, %v882, 0
    %v893 = vsel %vm194, %v883, 0
    %v896 = vsel %vm201, %v887, 0
    %898 = vmatpush.bf16.msra.mxu0 0
    %899 = vmatpush.bf16.msra.mxu0 0
    %900 = vmatpush.bf16.msra.mxu0 0
    %901 = vmatpush.bf16.msra.mxu0 0
    %902 = vmatpush.bf16.msra.mxu0 0
    %903 = vmatpush.bf16.msra.mxu0 0
    %904 = vmatpush.bf16.msra.mxu0 %v896
    %905 = vmatpush.bf16.msra.mxu0 %v885
    %906 = vmatmul.bf16.gmra.mxu0 %v890
    %v907 = vpop.f32.mrf.mxu0
    %v908 = vadd.f32 0.0, %v907
    %v909 = vpop.f32.mrf.mxu0
    %v910 = vadd.f32 0.0, %v909
    %911 = vmatmul.bf16.gmra.mxu0 %v893
    %v912 = vpop.f32.mrf.mxu0
    %v913 = vadd.f32 0.0, %v912
    %v914 = vpop.f32.mrf.mxu0
    %915 = vdwg.mxu0
    %v919 = vunpack.c.l.b16 %v873
    %v920 = vunpack.c.l.b16 %v874
    %v921 = vunpack.c.l.b16 %v875
    %v922 = vpack.c.b16 %v920, %v919
    %v923 = vpack.c.b16 %v921, %v921
    %924 = vrot.lane.b32.xlu0 %v512, 56
    %v925 = vpop.permute.xlu0 %924
    %926 = vrot.lane.b32.xlu0 %v513, 56
    %v927 = vpop.permute.xlu0 %926
    %v930 = vsel %vm194, %v922, 0
    %v933 = vsel %vm194, %v923, 0
    %v936 = vsel %vm201, %v927, 0
    %938 = vmatpush.bf16.msra.mxu0 0
    %939 = vmatpush.bf16.msra.mxu0 0
    %940 = vmatpush.bf16.msra.mxu0 0
    %941 = vmatpush.bf16.msra.mxu0 0
    %942 = vmatpush.bf16.msra.mxu0 0
    %943 = vmatpush.bf16.msra.mxu0 0
    %944 = vmatpush.bf16.msra.mxu0 %v936
    %945 = vmatpush.bf16.msra.mxu0 %v925
    %946 = vmatmul.bf16.gmra.mxu0 %v930
    %v947 = vpop.f32.mrf.mxu0
    %v948 = vadd.f32 0.0, %v947
    %v949 = vpop.f32.mrf.mxu0
    %v950 = vadd.f32 0.0, %v949
    %951 = vmatmul.bf16.gmra.mxu0 %v933
    %v952 = vpop.f32.mrf.mxu0
    %v953 = vadd.f32 0.0, %v952
    %v954 = vpop.f32.mrf.mxu0
    %955 = vdwg.mxu0
    %956 = vrot.lane.b32.xlu0 %v469, 112
    %v957 = vpop.permute.xlu0 %956
    %958 = vrot.lane.b32.xlu0 %v470, 112
    %v959 = vpop.permute.xlu0 %958
    %960 = vrot.lane.b32.xlu0 %v469, 80
    %v961 = vpop.permute.xlu0 %960
    %962 = vrot.lane.b32.xlu0 %v470, 80
    %v963 = vpop.permute.xlu0 %962
    %v965 = vsel %vm475, %v957, 0
    %v968 = vsel %vm475, %v959, 0
    %v971 = vsel %vm475, %v961, 0
    %v974 = vsel %vm475, %v963, 0
    %976 = vmatpush.bf16.xpose.msra.mxu0 0
    %977 = vmatpush.bf16.xpose.msra.mxu0 0
    %978 = vmatpush.bf16.xpose.msra.mxu0 0
    %979 = vmatpush.bf16.xpose.msra.mxu0 0
    %980 = vmatpush.bf16.xpose.msra.mxu0 0
    %981 = vmatpush.bf16.xpose.msra.mxu0 0
    %982 = vmatpush.bf16.xpose.msra.mxu0 %v974
    %983 = vmatpush.bf16.xpose.msra.mxu0 %v971
    %984 = vmatmul.bf16.gmra.mxu0 %v965
    %v985 = vpop.f32.mrf.mxu0
    %v986 = vadd.f32 0.0, %v985
    %v987 = vpop.f32.mrf.mxu0
    %v988 = vadd.f32 0.0, %v987
    %989 = vmatmul.bf16.gmra.mxu0 %v968
    %v990 = vpop.f32.mrf.mxu0
    %v991 = vadd.f32 0.0, %v990
    %v992 = vpop.f32.mrf.mxu0
    %993 = vdwg.mxu0
    %994 = vrot.lane.b32.xlu0 %v512, 112
    %v995 = vpop.permute.xlu0 %994
    %996 = vrot.lane.b32.xlu0 %v513, 112
    %v997 = vpop.permute.xlu0 %996
    %998 = vrot.lane.b32.xlu0 %v512, 80
    %v999 = vpop.permute.xlu0 %998
    %1000 = vrot.lane.b32.xlu0 %v513, 80
    %v1001 = vpop.permute.xlu0 %1000
    %v1003 = vsel %vm475, %v995, 0
    %v1006 = vsel %vm475, %v997, 0
    %v1009 = vsel %vm475, %v999, 0
    %v1012 = vsel %vm475, %v1001, 0
    %1014 = vmatpush.bf16.xpose.msra.mxu0 0
    %1015 = vmatpush.bf16.xpose.msra.mxu0 0
    %1016 = vmatpush.bf16.xpose.msra.mxu0 0
    %1017 = vmatpush.bf16.xpose.msra.mxu0 0
    %1018 = vmatpush.bf16.xpose.msra.mxu0 0
    %1019 = vmatpush.bf16.xpose.msra.mxu0 0
    %1020 = vmatpush.bf16.xpose.msra.mxu0 %v1012
    %1021 = vmatpush.bf16.xpose.msra.mxu0 %v1009
    %1022 = vmatmul.bf16.gmra.mxu0 %v1003
    %v1023 = vpop.f32.mrf.mxu0
    %v1024 = vadd.f32 0.0, %v1023
    %v1025 = vpop.f32.mrf.mxu0
    %v1026 = vadd.f32 0.0, %v1025
    %1027 = vmatmul.bf16.gmra.mxu0 %v1006
    %v1028 = vpop.f32.mrf.mxu0
    %v1029 = vadd.f32 0.0, %v1028
    %v1030 = vpop.f32.mrf.mxu0
    %1031 = vdwg.mxu0
    %v1032 = vmul.f32 %v986, 0.35355338
    %v1033 = vmul.f32 %v988, 0.35355338
    %v1034 = vmul.f32 %v991, 0.35355338
    %v1035 = vmul.f32 %v1024, 0.35355338
    %v1036 = vmul.f32 %v1026, 0.35355338
    %v1037 = vmul.f32 %v1029, 0.35355338
    %v1038 = vadd.f32 %v1032, %v554
    %v1039 = vadd.f32 %v1033, %v554
    %v1040 = vadd.f32 %v1034, %v554
    %v1041 = vadd.f32 %v1035, %v555
    %v1042 = vadd.f32 %v1036, %v555
    %v1043 = vadd.f32 %v1037, %v555
    %v1044 = vsel %vm194, %v1038, -inf
    %1045 = vmax.xlane.f32.xlu0 %v1044
    %v1046 = vpop.xlane.xlu0 %1045
    %v1047 = vsel %vm194, %v1039, -inf
    %1048 = vmax.xlane.f32.xlu0 %v1047
    %v1049 = vpop.xlane.xlu0 %1048
    %v1050 = vsel %vm194, %v1040, -inf
    %1051 = vmax.xlane.f32.xlu0 %v1050
    %v1052 = vpop.xlane.xlu0 %1051
    %v1053 = vsel %vm194, %v1041, -inf
    %1054 = vmax.xlane.f32.xlu0 %v1053
    %v1055 = vpop.xlane.xlu0 %1054
    %v1056 = vsel %vm194, %v1042, -inf
    %1057 = vmax.xlane.f32.xlu0 %v1056
    %v1058 = vpop.xlane.xlu0 %1057
    %v1059 = vsel %vm194, %v1043, -inf
    %1060 = vmax.xlane.f32.xlu0 %v1059
    %v1061 = vpop.xlane.xlu0 %1060
    %v1062 = vsub.f32 %v1038, %v1046
    %v1063 = vsub.f32 %v1039, %v1049
    %v1064 = vsub.f32 %v1040, %v1052
    %v1065 = vsub.f32 %v1041, %v1055
    %v1066 = vsub.f32 %v1042, %v1058
    %v1067 = vsub.f32 %v1043, %v1061
    %v1068 = vmul.f32 %v1062, 1.442695
    %v1069 = vpow.pop %v1068
    %v1070 = vmul.f32 %v1063, 1.442695
    %v1071 = vpow.pop %v1070
    %v1072 = vmul.f32 %v1064, 1.442695
    %v1073 = vpow.pop %v1072
    %v1074 = vmul.f32 %v1065, 1.442695
    %v1075 = vpow.pop %v1074
    %v1076 = vmul.f32 %v1066, 1.442695
    %v1077 = vpow.pop %v1076
    %v1078 = vmul.f32 %v1067, 1.442695
    %v1079 = vpow.pop %v1078
    %v1080 = vsel %vm194, %v1069, 0.0
    %1081 = vadd.xlane.f32.xlu0 %v1080
    %v1082 = vpop.xlane.xlu0 %1081
    %v1083 = vsel %vm194, %v1071, 0.0
    %1084 = vadd.xlane.f32.xlu0 %v1083
    %v1085 = vpop.xlane.xlu0 %1084
    %v1086 = vsel %vm194, %v1073, 0.0
    %1087 = vadd.xlane.f32.xlu0 %v1086
    %v1088 = vpop.xlane.xlu0 %1087
    %v1089 = vsel %vm194, %v1075, 0.0
    %1090 = vadd.xlane.f32.xlu0 %v1089
    %v1091 = vpop.xlane.xlu0 %1090
    %v1092 = vsel %vm194, %v1077, 0.0
    %1093 = vadd.xlane.f32.xlu0 %v1092
    %v1094 = vpop.xlane.xlu0 %1093
    %v1095 = vsel %vm194, %v1079, 0.0
    %1096 = vadd.xlane.f32.xlu0 %v1095
    %v1097 = vpop.xlane.xlu0 %1096
    %v1098 = vrcp.pop %v1082
    %v1099 = vrcp.pop %v1085
    %v1100 = vrcp.pop %v1088
    %v1101 = vrcp.pop %v1091
    %v1102 = vrcp.pop %v1094
    %v1103 = vrcp.pop %v1097
    %v1104 = vmul.f32 %v1069, %v1098
    %v1105 = vmul.f32 %v1071, %v1099
    %v1106 = vmul.f32 %v1073, %v1100
    %v1107 = vmul.f32 %v1075, %v1101
    %v1108 = vmul.f32 %v1077, %v1102
    %v1109 = vmul.f32 %v1079, %v1103
    %v1110 = vpack.c.bf16 %v1104, %v1104
    %v1111 = vpack.c.bf16 %v1105, %v1105
    %v1112 = vpack.c.bf16 %v1106, %v1106
    %v1113 = vpack.c.bf16 %v1107, %v1107
    %v1114 = vpack.c.bf16 %v1108, %v1108
    %v1115 = vpack.c.bf16 %v1109, %v1109
    %v1119 = vunpack.c.l.b16 %v1110
    %v1120 = vunpack.c.l.b16 %v1111
    %v1121 = vunpack.c.l.b16 %v1112
    %v1122 = vpack.c.b16 %v1120, %v1119
    %v1123 = vpack.c.b16 %v1121, %v1121
    %1124 = vrot.lane.b32.xlu0 %v469, 48
    %v1125 = vpop.permute.xlu0 %1124
    %1126 = vrot.lane.b32.xlu0 %v470, 48
    %v1127 = vpop.permute.xlu0 %1126
    %v1130 = vsel %vm194, %v1122, 0
    %v1133 = vsel %vm194, %v1123, 0
    %v1136 = vsel %vm201, %v1127, 0
    %1138 = vmatpush.bf16.msra.mxu0 0
    %1139 = vmatpush.bf16.msra.mxu0 0
    %1140 = vmatpush.bf16.msra.mxu0 0
    %1141 = vmatpush.bf16.msra.mxu0 0
    %1142 = vmatpush.bf16.msra.mxu0 0
    %1143 = vmatpush.bf16.msra.mxu0 0
    %1144 = vmatpush.bf16.msra.mxu0 %v1136
    %1145 = vmatpush.bf16.msra.mxu0 %v1125
    %1146 = vmatmul.bf16.gmra.mxu0 %v1130
    %v1147 = vpop.f32.mrf.mxu0
    %v1148 = vadd.f32 0.0, %v1147
    %v1149 = vpop.f32.mrf.mxu0
    %v1150 = vadd.f32 0.0, %v1149
    %1151 = vmatmul.bf16.gmra.mxu0 %v1133
    %v1152 = vpop.f32.mrf.mxu0
    %v1153 = vadd.f32 0.0, %v1152
    %v1154 = vpop.f32.mrf.mxu0
    %1155 = vdwg.mxu0
    %v1159 = vunpack.c.l.b16 %v1113
    %v1160 = vunpack.c.l.b16 %v1114
    %v1161 = vunpack.c.l.b16 %v1115
    %v1162 = vpack.c.b16 %v1160, %v1159
    %v1163 = vpack.c.b16 %v1161, %v1161
    %1164 = vrot.lane.b32.xlu0 %v512, 48
    %v1165 = vpop.permute.xlu0 %1164
    %1166 = vrot.lane.b32.xlu0 %v513, 48
    %v1167 = vpop.permute.xlu0 %1166
    %v1170 = vsel %vm194, %v1162, 0
    %v1173 = vsel %vm194, %v1163, 0
    %v1176 = vsel %vm201, %v1167, 0
    %1178 = vmatpush.bf16.msra.mxu0 0
    %1179 = vmatpush.bf16.msra.mxu0 0
    %1180 = vmatpush.bf16.msra.mxu0 0
    %1181 = vmatpush.bf16.msra.mxu0 0
    %1182 = vmatpush.bf16.msra.mxu0 0
    %1183 = vmatpush.bf16.msra.mxu0 0
    %1184 = vmatpush.bf16.msra.mxu0 %v1176
    %1185 = vmatpush.bf16.msra.mxu0 %v1165
    %1186 = vmatmul.bf16.gmra.mxu0 %v1170
    %v1187 = vpop.f32.mrf.mxu0
    %v1188 = vadd.f32 0.0, %v1187
    %v1189 = vpop.f32.mrf.mxu0
    %v1190 = vadd.f32 0.0, %v1189
    %1191 = vmatmul.bf16.gmra.mxu0 %v1173
    %v1192 = vpop.f32.mrf.mxu0
    %v1193 = vadd.f32 0.0, %v1192
    %v1194 = vpop.f32.mrf.mxu0
    %1195 = vdwg.mxu0
    %1196 = vrot.lane.b32.xlu0 %v469, 104
    %v1197 = vpop.permute.xlu0 %1196
    %1198 = vrot.lane.b32.xlu0 %v470, 104
    %v1199 = vpop.permute.xlu0 %1198
    %1200 = vrot.lane.b32.xlu0 %v469, 72
    %v1201 = vpop.permute.xlu0 %1200
    %1202 = vrot.lane.b32.xlu0 %v470, 72
    %v1203 = vpop.permute.xlu0 %1202
    %v1205 = vsel %vm475, %v1197, 0
    %v1208 = vsel %vm475, %v1199, 0
    %v1211 = vsel %vm475, %v1201, 0
    %v1214 = vsel %vm475, %v1203, 0
    %1216 = vmatpush.bf16.xpose.msra.mxu0 0
    %1217 = vmatpush.bf16.xpose.msra.mxu0 0
    %1218 = vmatpush.bf16.xpose.msra.mxu0 0
    %1219 = vmatpush.bf16.xpose.msra.mxu0 0
    %1220 = vmatpush.bf16.xpose.msra.mxu0 0
    %1221 = vmatpush.bf16.xpose.msra.mxu0 0
    %1222 = vmatpush.bf16.xpose.msra.mxu0 %v1214
    %1223 = vmatpush.bf16.xpose.msra.mxu0 %v1211
    %1224 = vmatmul.bf16.gmra.mxu0 %v1205
    %v1225 = vpop.f32.mrf.mxu0
    %v1226 = vadd.f32 0.0, %v1225
    %v1227 = vpop.f32.mrf.mxu0
    %v1228 = vadd.f32 0.0, %v1227
    %1229 = vmatmul.bf16.gmra.mxu0 %v1208
    %v1230 = vpop.f32.mrf.mxu0
    %v1231 = vadd.f32 0.0, %v1230
    %v1232 = vpop.f32.mrf.mxu0
    %1233 = vdwg.mxu0
    %1234 = vrot.lane.b32.xlu0 %v512, 104
    %v1235 = vpop.permute.xlu0 %1234
    %1236 = vrot.lane.b32.xlu0 %v513, 104
    %v1237 = vpop.permute.xlu0 %1236
    %1238 = vrot.lane.b32.xlu0 %v512, 72
    %v1239 = vpop.permute.xlu0 %1238
    %1240 = vrot.lane.b32.xlu0 %v513, 72
    %v1241 = vpop.permute.xlu0 %1240
    %v1243 = vsel %vm475, %v1235, 0
    %v1246 = vsel %vm475, %v1237, 0
    %v1249 = vsel %vm475, %v1239, 0
    %v1252 = vsel %vm475, %v1241, 0
    %1254 = vmatpush.bf16.xpose.msra.mxu0 0
    %1255 = vmatpush.bf16.xpose.msra.mxu0 0
    %1256 = vmatpush.bf16.xpose.msra.mxu0 0
    %1257 = vmatpush.bf16.xpose.msra.mxu0 0
    %1258 = vmatpush.bf16.xpose.msra.mxu0 0
    %1259 = vmatpush.bf16.xpose.msra.mxu0 0
    %1260 = vmatpush.bf16.xpose.msra.mxu0 %v1252
    %1261 = vmatpush.bf16.xpose.msra.mxu0 %v1249
    %1262 = vmatmul.bf16.gmra.mxu0 %v1243
    %v1263 = vpop.f32.mrf.mxu0
    %v1264 = vadd.f32 0.0, %v1263
    %v1265 = vpop.f32.mrf.mxu0
    %v1266 = vadd.f32 0.0, %v1265
    %1267 = vmatmul.bf16.gmra.mxu0 %v1246
    %v1268 = vpop.f32.mrf.mxu0
    %v1269 = vadd.f32 0.0, %v1268
    %v1270 = vpop.f32.mrf.mxu0
    %1271 = vdwg.mxu0
    %v1272 = vmul.f32 %v1226, 0.35355338
    %v1273 = vmul.f32 %v1228, 0.35355338
    %v1274 = vmul.f32 %v1231, 0.35355338
    %v1275 = vmul.f32 %v1264, 0.35355338
    %v1276 = vmul.f32 %v1266, 0.35355338
    %v1277 = vmul.f32 %v1269, 0.35355338
    %v1278 = vadd.f32 %v1272, %v554
    %v1279 = vadd.f32 %v1273, %v554
    %v1280 = vadd.f32 %v1274, %v554
    %v1281 = vadd.f32 %v1275, %v555
    %v1282 = vadd.f32 %v1276, %v555
    %v1283 = vadd.f32 %v1277, %v555
    %v1284 = vsel %vm194, %v1278, -inf
    %1285 = vmax.xlane.f32.xlu0 %v1284
    %v1286 = vpop.xlane.xlu0 %1285
    %v1287 = vsel %vm194, %v1279, -inf
    %1288 = vmax.xlane.f32.xlu0 %v1287
    %v1289 = vpop.xlane.xlu0 %1288
    %v1290 = vsel %vm194, %v1280, -inf
    %1291 = vmax.xlane.f32.xlu0 %v1290
    %v1292 = vpop.xlane.xlu0 %1291
    %v1293 = vsel %vm194, %v1281, -inf
    %1294 = vmax.xlane.f32.xlu0 %v1293
    %v1295 = vpop.xlane.xlu0 %1294
    %v1296 = vsel %vm194, %v1282, -inf
    %1297 = vmax.xlane.f32.xlu0 %v1296
    %v1298 = vpop.xlane.xlu0 %1297
    %v1299 = vsel %vm194, %v1283, -inf
    %1300 = vmax.xlane.f32.xlu0 %v1299
    %v1301 = vpop.xlane.xlu0 %1300
    %v1302 = vsub.f32 %v1278, %v1286
    %v1303 = vsub.f32 %v1279, %v1289
    %v1304 = vsub.f32 %v1280, %v1292
    %v1305 = vsub.f32 %v1281, %v1295
    %v1306 = vsub.f32 %v1282, %v1298
    %v1307 = vsub.f32 %v1283, %v1301
    %v1308 = vmul.f32 %v1302, 1.442695
    %v1309 = vpow.pop %v1308
    %v1310 = vmul.f32 %v1303, 1.442695
    %v1311 = vpow.pop %v1310
    %v1312 = vmul.f32 %v1304, 1.442695
    %v1313 = vpow.pop %v1312
    %v1314 = vmul.f32 %v1305, 1.442695
    %v1315 = vpow.pop %v1314
    %v1316 = vmul.f32 %v1306, 1.442695
    %v1317 = vpow.pop %v1316
    %v1318 = vmul.f32 %v1307, 1.442695
    %v1319 = vpow.pop %v1318
    %v1320 = vsel %vm194, %v1309, 0.0
    %1321 = vadd.xlane.f32.xlu0 %v1320
    %v1322 = vpop.xlane.xlu0 %1321
    %v1323 = vsel %vm194, %v1311, 0.0
    %1324 = vadd.xlane.f32.xlu0 %v1323
    %v1325 = vpop.xlane.xlu0 %1324
    %v1326 = vsel %vm194, %v1313, 0.0
    %1327 = vadd.xlane.f32.xlu0 %v1326
    %v1328 = vpop.xlane.xlu0 %1327
    %v1329 = vsel %vm194, %v1315, 0.0
    %1330 = vadd.xlane.f32.xlu0 %v1329
    %v1331 = vpop.xlane.xlu0 %1330
    %v1332 = vsel %vm194, %v1317, 0.0
    %1333 = vadd.xlane.f32.xlu0 %v1332
    %v1334 = vpop.xlane.xlu0 %1333
    %v1335 = vsel %vm194, %v1319, 0.0
    %1336 = vadd.xlane.f32.xlu0 %v1335
    %v1337 = vpop.xlane.xlu0 %1336
    %v1338 = vrcp.pop %v1322
    %v1339 = vrcp.pop %v1325
    %v1340 = vrcp.pop %v1328
    %v1341 = vrcp.pop %v1331
    %v1342 = vrcp.pop %v1334
    %v1343 = vrcp.pop %v1337
    %v1344 = vmul.f32 %v1309, %v1338
    %v1345 = vmul.f32 %v1311, %v1339
    %v1346 = vmul.f32 %v1313, %v1340
    %v1347 = vmul.f32 %v1315, %v1341
    %v1348 = vmul.f32 %v1317, %v1342
    %v1349 = vmul.f32 %v1319, %v1343
    %v1350 = vpack.c.bf16 %v1344, %v1344
    %v1351 = vpack.c.bf16 %v1345, %v1345
    %v1352 = vpack.c.bf16 %v1346, %v1346
    %v1353 = vpack.c.bf16 %v1347, %v1347
    %v1354 = vpack.c.bf16 %v1348, %v1348
    %v1355 = vpack.c.bf16 %v1349, %v1349
    %v1359 = vunpack.c.l.b16 %v1350
    %v1360 = vunpack.c.l.b16 %v1351
    %v1361 = vunpack.c.l.b16 %v1352
    %v1362 = vpack.c.b16 %v1360, %v1359
    %v1363 = vpack.c.b16 %v1361, %v1361
    %1364 = vrot.lane.b32.xlu0 %v469, 40
    %v1365 = vpop.permute.xlu0 %1364
    %1366 = vrot.lane.b32.xlu0 %v470, 40
    %v1367 = vpop.permute.xlu0 %1366
    %v1370 = vsel %vm194, %v1362, 0
    %v1373 = vsel %vm194, %v1363, 0
    %v1376 = vsel %vm201, %v1367, 0
    %1378 = vmatpush.bf16.msra.mxu0 0
    %1379 = vmatpush.bf16.msra.mxu0 0
    %1380 = vmatpush.bf16.msra.mxu0 0
    %1381 = vmatpush.bf16.msra.mxu0 0
    %1382 = vmatpush.bf16.msra.mxu0 0
    %1383 = vmatpush.bf16.msra.mxu0 0
    %1384 = vmatpush.bf16.msra.mxu0 %v1376
    %1385 = vmatpush.bf16.msra.mxu0 %v1365
    %1386 = vmatmul.bf16.gmra.mxu0 %v1370
    %v1387 = vpop.f32.mrf.mxu0
    %v1388 = vadd.f32 0.0, %v1387
    %v1389 = vpop.f32.mrf.mxu0
    %v1390 = vadd.f32 0.0, %v1389
    %1391 = vmatmul.bf16.gmra.mxu0 %v1373
    %v1392 = vpop.f32.mrf.mxu0
    %v1393 = vadd.f32 0.0, %v1392
    %v1394 = vpop.f32.mrf.mxu0
    %1395 = vdwg.mxu0
    %v1399 = vunpack.c.l.b16 %v1353
    %v1400 = vunpack.c.l.b16 %v1354
    %v1401 = vunpack.c.l.b16 %v1355
    %v1402 = vpack.c.b16 %v1400, %v1399
    %v1403 = vpack.c.b16 %v1401, %v1401
    %1404 = vrot.lane.b32.xlu0 %v512, 40
    %v1405 = vpop.permute.xlu0 %1404
    %1406 = vrot.lane.b32.xlu0 %v513, 40
    %v1407 = vpop.permute.xlu0 %1406
    %v1410 = vsel %vm194, %v1402, 0
    %v1413 = vsel %vm194, %v1403, 0
    %v1416 = vsel %vm201, %v1407, 0
    %1418 = vmatpush.bf16.msra.mxu0 0
    %1419 = vmatpush.bf16.msra.mxu0 0
    %1420 = vmatpush.bf16.msra.mxu0 0
    %1421 = vmatpush.bf16.msra.mxu0 0
    %1422 = vmatpush.bf16.msra.mxu0 0
    %1423 = vmatpush.bf16.msra.mxu0 0
    %1424 = vmatpush.bf16.msra.mxu0 %v1416
    %1425 = vmatpush.bf16.msra.mxu0 %v1405
    %1426 = vmatmul.bf16.gmra.mxu0 %v1410
    %v1427 = vpop.f32.mrf.mxu0
    %v1428 = vadd.f32 0.0, %v1427
    %v1429 = vpop.f32.mrf.mxu0
    %v1430 = vadd.f32 0.0, %v1429
    %1431 = vmatmul.bf16.gmra.mxu0 %v1413
    %v1432 = vpop.f32.mrf.mxu0
    %v1433 = vadd.f32 0.0, %v1432
    %v1434 = vpop.f32.mrf.mxu0
    %1435 = vdwg.mxu0
    %1442 = vrot.lane.b32.xlu0 %v908, 8
    %v1443 = vpop.permute.xlu0 %1442
    %1444 = vrot.lane.b32.xlu0 %v910, 8
    %v1445 = vpop.permute.xlu0 %1444
    %1446 = vrot.lane.b32.xlu0 %v913, 8
    %v1447 = vpop.permute.xlu0 %1446
    %1448 = vrot.lane.b32.xlu0 %v948, 8
    %v1449 = vpop.permute.xlu0 %1448
    %1450 = vrot.lane.b32.xlu0 %v950, 8
    %v1451 = vpop.permute.xlu0 %1450
    %1452 = vrot.lane.b32.xlu0 %v953, 8
    %v1453 = vpop.permute.xlu0 %1452
    %1466 = vrot.lane.b32.xlu0 %v1148, 16
    %v1467 = vpop.permute.xlu0 %1466
    %1468 = vrot.lane.b32.xlu0 %v1150, 16
    %v1469 = vpop.permute.xlu0 %1468
    %1470 = vrot.lane.b32.xlu0 %v1153, 16
    %v1471 = vpop.permute.xlu0 %1470
    %1472 = vrot.lane.b32.xlu0 %v1188, 16
    %v1473 = vpop.permute.xlu0 %1472
    %1474 = vrot.lane.b32.xlu0 %v1190, 16
    %v1475 = vpop.permute.xlu0 %1474
    %1476 = vrot.lane.b32.xlu0 %v1193, 16
    %v1477 = vpop.permute.xlu0 %1476
    %1490 = vrot.lane.b32.xlu0 %v1388, 24
    %v1491 = vpop.permute.xlu0 %1490
    %1492 = vrot.lane.b32.xlu0 %v1390, 24
    %v1493 = vpop.permute.xlu0 %1492
    %1494 = vrot.lane.b32.xlu0 %v1393, 24
    %v1495 = vpop.permute.xlu0 %1494
    %1496 = vrot.lane.b32.xlu0 %v1428, 24
    %v1497 = vpop.permute.xlu0 %1496
    %1498 = vrot.lane.b32.xlu0 %v1430, 24
    %v1499 = vpop.permute.xlu0 %1498
    %1500 = vrot.lane.b32.xlu0 %v1433, 24
    %v1501 = vpop.permute.xlu0 %1500
    %v1508 = vsel %vm475, %v668, %v1443
    %v1509 = vsel %vm475, %v670, %v1445
    %v1510 = vsel %vm475, %v673, %v1447
    %v1511 = vsel %vm475, %v708, %v1449
    %v1512 = vsel %vm475, %v710, %v1451
    %v1513 = vsel %vm475, %v713, %v1453
    %vm1514 = vcmask 130048
    %v1515 = vsel %vm1514, %v1508, %v1467
    %v1516 = vsel %vm1514, %v1509, %v1469
    %v1517 = vsel %vm1514, %v1510, %v1471
    %v1518 = vsel %vm1514, %v1511, %v1473
    %v1519 = vsel %vm1514, %v1512, %v1475
    %v1520 = vsel %vm1514, %v1513, %v1477
    %v1521 = vsel %vm194, %v1515, %v1491
    %v1522 = vsel %vm194, %v1516, %v1493
    %v1523 = vsel %vm194, %v1517, %v1495
    %v1524 = vsel %vm194, %v1518, %v1497
    %v1525 = vsel %vm194, %v1519, %v1499
    %v1526 = vsel %vm194, %v1520, %v1501
    %v1527 = vpack.c.bf16 %v1522, %v1521
    %v1528 = vpack.c.bf16 %v1524, %v1523
    %v1529 = vpack.c.bf16 %v1526, %v1525
    %v1530 = vperm.slane %v249, 1
    %1531 = vrot.lane.b32.xlu0 %v420, 32
    %v1532 = vpop.permute.xlu0 %1531
    %1533 = vrot.lane.b32.xlu0 %v421, 32
    %v1534 = vpop.permute.xlu0 %1533
    %v1538 = vsel %vm254, %v1527, 0
    %v1541 = vsel %vm254, %v1528, 0
    %v1544 = vsel %vm254, %v1529, 0
    %1546 = vmatpush.bf16.msra.mxu0 0
    %1547 = vmatpush.bf16.msra.mxu0 0
    %1548 = vmatpush.bf16.msra.mxu0 0
    %1549 = vmatpush.bf16.msra.mxu0 0
    %1550 = vmatpush.bf16.msra.mxu0 0
    %1551 = vmatpush.bf16.msra.mxu0 0
    %1552 = vmatpush.bf16.msra.mxu0 %v1534
    %1553 = vmatpush.bf16.msra.mxu0 %v1532
    %1554 = vmatmul.bf16.gmra.mxu0 %v1538
    %v1555 = vpop.f32.mrf.mxu0
    %v1556 = vadd.f32 %v1530, %v1555
    %v1557 = vpop.f32.mrf.mxu0
    %v1558 = vadd.f32 %v1530, %v1557
    %1559 = vmatmul.bf16.gmra.mxu0 %v1541
    %v1560 = vpop.f32.mrf.mxu0
    %v1561 = vadd.f32 %v1530, %v1560
    %v1562 = vpop.f32.mrf.mxu0
    %v1563 = vadd.f32 %v1530, %v1562
    %1564 = vmatmul.bf16.gmra.mxu0 %v1544
    %v1565 = vpop.f32.mrf.mxu0
    %v1566 = vadd.f32 %v1530, %v1565
    %v1567 = vpop.f32.mrf.mxu0
    %v1568 = vadd.f32 %v1530, %v1567
    %1569 = vdwg.mxu0
    %v1570 = vadd.f32 %v115, %v1556
    %v1571 = vadd.f32 %v247, %v1558
    %v1572 = vadd.f32 %v231, %v1561
    %v1573 = vadd.f32 %v116, %v1563
    %v1574 = vadd.f32 %v248, %v1566
    %v1575 = vadd.f32 %v244, %v1568
    %v1576 = vsel %vm254, %v1570, 0.0
    %1577 = vadd.xlane.f32.xlu0 %v1576
    %v1578 = vpop.xlane.xlu0 %1577
    %v1579 = vsel %vm254, %v1571, 0.0
    %1580 = vadd.xlane.f32.xlu0 %v1579
    %v1581 = vpop.xlane.xlu0 %1580
    %v1582 = vsel %vm254, %v1572, 0.0
    %1583 = vadd.xlane.f32.xlu0 %v1582
    %v1584 = vpop.xlane.xlu0 %1583
    %v1585 = vsel %vm254, %v1573, 0.0
    %1586 = vadd.xlane.f32.xlu0 %v1585
    %v1587 = vpop.xlane.xlu0 %1586
    %v1588 = vsel %vm254, %v1574, 0.0
    %1589 = vadd.xlane.f32.xlu0 %v1588
    %v1590 = vpop.xlane.xlu0 %1589
    %v1591 = vsel %vm254, %v1575, 0.0
    %1592 = vadd.xlane.f32.xlu0 %v1591
    %v1593 = vpop.xlane.xlu0 %1592
    %v1594 = vmul.f32 %v1578, %v279
    %v1595 = vmul.f32 %v1581, %v279
    %v1596 = vmul.f32 %v1584, %v279
    %v1597 = vmul.f32 %v1587, %v279
    %v1598 = vmul.f32 %v1590, %v279
    %v1599 = vmul.f32 %v1593, %v279
    %v1600 = vsub.f32 %v1570, %v1594
    %v1601 = vsub.f32 %v1571, %v1595
    %v1602 = vsub.f32 %v1572, %v1596
    %v1603 = vsub.f32 %v1573, %v1597
    %v1604 = vsub.f32 %v1574, %v1598
    %v1605 = vsub.f32 %v1575, %v1599
    %v1606 = vmul.f32 %v1600, %v1600
    %v1607 = vmul.f32 %v1601, %v1601
    %v1608 = vmul.f32 %v1602, %v1602
    %v1609 = vmul.f32 %v1603, %v1603
    %v1610 = vmul.f32 %v1604, %v1604
    %v1611 = vmul.f32 %v1605, %v1605
    %v1612 = vsel %vm254, %v1606, 0.0
    %1613 = vadd.xlane.f32.xlu0 %v1612
    %v1614 = vpop.xlane.xlu0 %1613
    %v1615 = vsel %vm254, %v1607, 0.0
    %1616 = vadd.xlane.f32.xlu0 %v1615
    %v1617 = vpop.xlane.xlu0 %1616
    %v1618 = vsel %vm254, %v1608, 0.0
    %1619 = vadd.xlane.f32.xlu0 %v1618
    %v1620 = vpop.xlane.xlu0 %1619
    %v1621 = vsel %vm254, %v1609, 0.0
    %1622 = vadd.xlane.f32.xlu0 %v1621
    %v1623 = vpop.xlane.xlu0 %1622
    %v1624 = vsel %vm254, %v1610, 0.0
    %1625 = vadd.xlane.f32.xlu0 %v1624
    %v1626 = vpop.xlane.xlu0 %1625
    %v1627 = vsel %vm254, %v1611, 0.0
    %1628 = vadd.xlane.f32.xlu0 %v1627
    %v1629 = vpop.xlane.xlu0 %1628
    %v1630 = vmul.f32 %v1614, %v279
    %v1631 = vmul.f32 %v1617, %v279
    %v1632 = vmul.f32 %v1620, %v279
    %v1633 = vmul.f32 %v1623, %v279
    %v1634 = vmul.f32 %v1626, %v279
    %v1635 = vmul.f32 %v1629, %v279
    %v1636 = vperm.slane %v249, 6
    %v1637 = vmul.f32 %v1636, %v1600
    %v1638 = vmul.f32 %v1636, %v1601
    %v1639 = vmul.f32 %v1636, %v1602
    %v1640 = vmul.f32 %v1636, %v1603
    %v1641 = vmul.f32 %v1636, %v1604
    %v1642 = vmul.f32 %v1636, %v1605
    %v1643 = vadd.f32 %v1630, 1e-06
    %v1644 = vadd.f32 %v1631, 1e-06
    %v1645 = vadd.f32 %v1632, 1e-06
    %v1646 = vadd.f32 %v1633, 1e-06
    %v1647 = vadd.f32 %v1634, 1e-06
    %v1648 = vadd.f32 %v1635, 1e-06
    %v1649 = vrsqrt.pop %v1643
    %v1650 = vmul.f32 %v1649, %v1643
    %v1651 = vmul.f32 %v1650, %v1649
    %v1652 = vmul.f32 0.5, %v1651
    %v1653 = vsub.f32 1.5, %v1652
    %v1654 = vmul.f32 %v1649, %v1653
    %vm1655 = vweird.f32 %v1643
    %vm1656 = vweird.f32 %v1649
    %vm1657 = vmor %vm1655, %vm1656
    %v1658 = vsel %vm1657, %v1649, %v1654
    %v1659 = vrsqrt.pop %v1644
    %v1660 = vmul.f32 %v1659, %v1644
    %v1661 = vmul.f32 %v1660, %v1659
    %v1662 = vmul.f32 0.5, %v1661
    %v1663 = vsub.f32 1.5, %v1662
    %v1664 = vmul.f32 %v1659, %v1663
    %vm1665 = vweird.f32 %v1644
    %vm1666 = vweird.f32 %v1659
    %vm1667 = vmor %vm1665, %vm1666
    %v1668 = vsel %vm1667, %v1659, %v1664
    %v1669 = vrsqrt.pop %v1645
    %v1670 = vmul.f32 %v1669, %v1645
    %v1671 = vmul.f32 %v1670, %v1669
    %v1672 = vmul.f32 0.5, %v1671
    %v1673 = vsub.f32 1.5, %v1672
    %v1674 = vmul.f32 %v1669, %v1673
    %vm1675 = vweird.f32 %v1645
    %vm1676 = vweird.f32 %v1669
    %vm1677 = vmor %vm1675, %vm1676
    %v1678 = vsel %vm1677, %v1669, %v1674
    %v1679 = vrsqrt.pop %v1646
    %v1680 = vmul.f32 %v1679, %v1646
    %v1681 = vmul.f32 %v1680, %v1679
    %v1682 = vmul.f32 0.5, %v1681
    %v1683 = vsub.f32 1.5, %v1682
    %v1684 = vmul.f32 %v1679, %v1683
    %vm1685 = vweird.f32 %v1646
    %vm1686 = vweird.f32 %v1679
    %vm1687 = vmor %vm1685, %vm1686
    %v1688 = vsel %vm1687, %v1679, %v1684
    %v1689 = vrsqrt.pop %v1647
    %v1690 = vmul.f32 %v1689, %v1647
    %v1691 = vmul.f32 %v1690, %v1689
    %v1692 = vmul.f32 0.5, %v1691
    %v1693 = vsub.f32 1.5, %v1692
    %v1694 = vmul.f32 %v1689, %v1693
    %vm1695 = vweird.f32 %v1647
    %vm1696 = vweird.f32 %v1689
    %vm1697 = vmor %vm1695, %vm1696
    %v1698 = vsel %vm1697, %v1689, %v1694
    %v1699 = vrsqrt.pop %v1648
    %v1700 = vmul.f32 %v1699, %v1648
    %v1701 = vmul.f32 %v1700, %v1699
    %v1702 = vmul.f32 0.5, %v1701
    %v1703 = vsub.f32 1.5, %v1702
    %v1704 = vmul.f32 %v1699, %v1703
    %vm1705 = vweird.f32 %v1648
    %vm1706 = vweird.f32 %v1699
    %vm1707 = vmor %vm1705, %vm1706
    %v1708 = vsel %vm1707, %v1699, %v1704
    %v1709 = vmul.f32 %v1637, %v1658
    %v1710 = vmul.f32 %v1638, %v1668
    %v1711 = vmul.f32 %v1639, %v1678
    %v1712 = vmul.f32 %v1640, %v1688
    %v1713 = vmul.f32 %v1641, %v1698
    %v1714 = vmul.f32 %v1642, %v1708
    %v1715 = vperm.slane %v249, 7
    %v1716 = vadd.f32 %v1709, %v1715
    %v1717 = vadd.f32 %v1710, %v1715
    %v1718 = vadd.f32 %v1711, %v1715
    %v1719 = vadd.f32 %v1712, %v1715
    %v1720 = vadd.f32 %v1713, %v1715
    %v1721 = vadd.f32 %v1714, %v1715
    %v1722 = vpack.c.bf16 %v1717, %v1716
    %v1723 = vpack.c.bf16 %v1719, %v1718
    %v1724 = vpack.c.bf16 %v1721, %v1720
    %v1725 = vld [vmem:[%s6] sm:$0xf]
    %v1726 = vld [vmem:[%s6 + $0x4] sm:$0xf]
    %v1727 = vld [vmem:[%s6 + $0x8] sm:$0xf]
    %v1728 = vld [vmem:[%s6 + $0xc] sm:$0xf]
    %v1729 = vperm.slane %v249, 2
    %v1734 = vunpack.c.l.b16 %v1725
    %v1735 = vunpack.c.l.b16 %v1726
    %v1736 = vunpack.c.l.b16 %v1727
    %v1737 = vunpack.c.l.b16 %v1728
    %v1738 = vpack.c.b16 %v1735, %v1734
    %v1739 = vpack.c.b16 %v1737, %v1736
    %v1743 = vsel %vm254, %v1722, 0
    %v1746 = vsel %vm254, %v1723, 0
    %v1749 = vsel %vm254, %v1724, 0
    %1751 = vmatpush.bf16.msra.mxu0 0
    %1752 = vmatpush.bf16.msra.mxu0 0
    %1753 = vmatpush.bf16.msra.mxu0 0
    %1754 = vmatpush.bf16.msra.mxu0 0
    %1755 = vmatpush.bf16.msra.mxu0 0
    %1756 = vmatpush.bf16.msra.mxu0 0
    %1757 = vmatpush.bf16.msra.mxu0 %v1739
    %1758 = vmatpush.bf16.msra.mxu0 %v1738
    %1759 = vmatmul.bf16.gmra.mxu0 %v1743
    %v1760 = vpop.f32.mrf.mxu0
    %v1761 = vadd.f32 %v1729, %v1760
    %v1762 = vpop.f32.mrf.mxu0
    %v1763 = vadd.f32 %v1729, %v1762
    %1764 = vmatmul.bf16.gmra.mxu0 %v1746
    %v1765 = vpop.f32.mrf.mxu0
    %v1766 = vadd.f32 %v1729, %v1765
    %v1767 = vpop.f32.mrf.mxu0
    %v1768 = vadd.f32 %v1729, %v1767
    %1769 = vmatmul.bf16.gmra.mxu0 %v1749
    %v1770 = vpop.f32.mrf.mxu0
    %v1771 = vadd.f32 %v1729, %v1770
    %v1772 = vpop.f32.mrf.mxu0
    %v1773 = vadd.f32 %v1729, %v1772
    %1774 = vdwg.mxu0
    %v1775 = vmax.f32 %v1761, 0.0
    %v1776 = vmax.f32 %v1763, 0.0
    %v1777 = vmax.f32 %v1766, 0.0
    %v1778 = vmax.f32 %v1768, 0.0
    %v1779 = vmax.f32 %v1771, 0.0
    %v1780 = vmax.f32 %v1773, 0.0
    %v1781 = vpack.c.bf16 %v1776, %v1775
    %v1782 = vpack.c.bf16 %v1778, %v1777
    %v1783 = vpack.c.bf16 %v1780, %v1779
    %v1784 = vld [vmem:[%s7] sm:$0xf]
    %v1785 = vld [vmem:[%s7 + $0x4] sm:$0xf]
    %v1786 = vld [vmem:[%s7 + $0x8] sm:$0xf]
    %v1787 = vld [vmem:[%s7 + $0xc] sm:$0xf]
    %v1788 = vld [vmem:[%s7 + $0x10] sm:$0xf]
    %v1789 = vld [vmem:[%s7 + $0x14] sm:$0xf]
    %v1790 = vld [vmem:[%s7 + $0x18] sm:$0xf]
    %v1791 = vld [vmem:[%s7 + $0x1c] sm:$0xf]
    %v1792 = vperm.slane %v249, 3
    %v1801 = vunpack.c.l.b16 %v1784
    %v1802 = vunpack.c.l.b16 %v1785
    %v1803 = vunpack.c.l.b16 %v1786
    %v1804 = vunpack.c.l.b16 %v1787
    %v1805 = vunpack.c.l.b16 %v1788
    %v1806 = vunpack.c.l.b16 %v1789
    %v1807 = vunpack.c.l.b16 %v1790
    %v1808 = vunpack.c.l.b16 %v1791
    %v1809 = vpack.c.b16 %v1802, %v1801
    %v1810 = vpack.c.b16 %v1804, %v1803
    %v1811 = vpack.c.b16 %v1806, %v1805
    %v1812 = vpack.c.b16 %v1808, %v1807
    %vm1817 = vcmask 523264
    %v1819 = vsel %vm1817, %v1781, 0
    %v1822 = vsel %vm1817, %v1782, 0
    %v1825 = vsel %vm1817, %v1783, 0
    %1827 = vmatpush.bf16.msra.mxu0 0
    %1828 = vmatpush.bf16.msra.mxu0 0
    %1829 = vmatpush.bf16.msra.mxu0 0
    %1830 = vmatpush.bf16.msra.mxu0 0
    %1831 = vmatpush.bf16.msra.mxu0 %v1812
    %1832 = vmatpush.bf16.msra.mxu0 %v1811
    %1833 = vmatpush.bf16.msra.mxu0 %v1810
    %1834 = vmatpush.bf16.msra.mxu0 %v1809
    %1835 = vmatmul.bf16.gmra.mxu0 %v1819
    %v1836 = vpop.f32.mrf.mxu0
    %v1837 = vadd.f32 %v1792, %v1836
    %v1838 = vpop.f32.mrf.mxu0
    %v1839 = vadd.f32 %v1792, %v1838
    %1840 = vmatmul.bf16.gmra.mxu0 %v1822
    %v1841 = vpop.f32.mrf.mxu0
    %v1842 = vadd.f32 %v1792, %v1841
    %v1843 = vpop.f32.mrf.mxu0
    %v1844 = vadd.f32 %v1792, %v1843
    %1845 = vmatmul.bf16.gmra.mxu0 %v1825
    %v1846 = vpop.f32.mrf.mxu0
    %v1847 = vadd.f32 %v1792, %v1846
    %v1848 = vpop.f32.mrf.mxu0
    %v1849 = vadd.f32 %v1792, %v1848
    %1850 = vdwg.mxu0
    %v1851 = vadd.f32 %v1570, %v1837
    %v1852 = vadd.f32 %v1571, %v1839
    %v1853 = vadd.f32 %v1572, %v1842
    %v1854 = vadd.f32 %v1573, %v1844
    %v1855 = vadd.f32 %v1574, %v1847
    %v1856 = vadd.f32 %v1575, %v1849
    %s1857 = scalar_lea.vmem %s8, 8
    %v1858 = vld [vmem:[%s1857] sm:$0xff]
    %s1859 = scalar_lea.vmem %s5, 16
    %v1860 = vld [vmem:[%s1859] sm:$0xf]
    %v1861 = vld [vmem:[%s1859 + $0x4] sm:$0xf]
    %v1862 = vld [vmem:[%s1859 + $0x8] sm:$0xf]
    %v1863 = vld [vmem:[%s1859 + $0xc] sm:$0xf]
    %v1864 = vsel %vm254, %v1851, 0.0
    %1865 = vadd.xlane.f32.xlu0 %v1864
    %v1866 = vpop.xlane.xlu0 %1865
    %v1867 = vsel %vm254, %v1852, 0.0
    %1868 = vadd.xlane.f32.xlu0 %v1867
    %v1869 = vpop.xlane.xlu0 %1868
    %v1870 = vsel %vm254, %v1853, 0.0
    %1871 = vadd.xlane.f32.xlu0 %v1870
    %v1872 = vpop.xlane.xlu0 %1871
    %v1873 = vsel %vm254, %v1854, 0.0
    %1874 = vadd.xlane.f32.xlu0 %v1873
    %v1875 = vpop.xlane.xlu0 %1874
    %v1876 = vsel %vm254, %v1855, 0.0
    %1877 = vadd.xlane.f32.xlu0 %v1876
    %v1878 = vpop.xlane.xlu0 %1877
    %v1879 = vsel %vm254, %v1856, 0.0
    %1880 = vadd.xlane.f32.xlu0 %v1879
    %v1881 = vpop.xlane.xlu0 %1880
    %v1882 = vmul.f32 %v1866, %v279
    %v1883 = vmul.f32 %v1869, %v279
    %v1884 = vmul.f32 %v1872, %v279
    %v1885 = vmul.f32 %v1875, %v279
    %v1886 = vmul.f32 %v1878, %v279
    %v1887 = vmul.f32 %v1881, %v279
    %v1888 = vsub.f32 %v1851, %v1882
    %v1889 = vsub.f32 %v1852, %v1883
    %v1890 = vsub.f32 %v1853, %v1884
    %v1891 = vsub.f32 %v1854, %v1885
    %v1892 = vsub.f32 %v1855, %v1886
    %v1893 = vsub.f32 %v1856, %v1887
    %v1894 = vmul.f32 %v1888, %v1888
    %v1895 = vmul.f32 %v1889, %v1889
    %v1896 = vmul.f32 %v1890, %v1890
    %v1897 = vmul.f32 %v1891, %v1891
    %v1898 = vmul.f32 %v1892, %v1892
    %v1899 = vmul.f32 %v1893, %v1893
    %v1900 = vsel %vm254, %v1894, 0.0
    %1901 = vadd.xlane.f32.xlu0 %v1900
    %v1902 = vpop.xlane.xlu0 %1901
    %v1903 = vsel %vm254, %v1895, 0.0
    %1904 = vadd.xlane.f32.xlu0 %v1903
    %v1905 = vpop.xlane.xlu0 %1904
    %v1906 = vsel %vm254, %v1896, 0.0
    %1907 = vadd.xlane.f32.xlu0 %v1906
    %v1908 = vpop.xlane.xlu0 %1907
    %v1909 = vsel %vm254, %v1897, 0.0
    %1910 = vadd.xlane.f32.xlu0 %v1909
    %v1911 = vpop.xlane.xlu0 %1910
    %v1912 = vsel %vm254, %v1898, 0.0
    %1913 = vadd.xlane.f32.xlu0 %v1912
    %v1914 = vpop.xlane.xlu0 %1913
    %v1915 = vsel %vm254, %v1899, 0.0
    %1916 = vadd.xlane.f32.xlu0 %v1915
    %v1917 = vpop.xlane.xlu0 %1916
    %v1918 = vmul.f32 %v1902, %v279
    %v1919 = vmul.f32 %v1905, %v279
    %v1920 = vmul.f32 %v1908, %v279
    %v1921 = vmul.f32 %v1911, %v279
    %v1922 = vmul.f32 %v1914, %v279
    %v1923 = vmul.f32 %v1917, %v279
    %v1924 = vperm.slane %v1858, 4
    %v1925 = vmul.f32 %v1924, %v1888
    %v1926 = vmul.f32 %v1924, %v1889
    %v1927 = vmul.f32 %v1924, %v1890
    %v1928 = vmul.f32 %v1924, %v1891
    %v1929 = vmul.f32 %v1924, %v1892
    %v1930 = vmul.f32 %v1924, %v1893
    %v1931 = vadd.f32 %v1918, 1e-06
    %v1932 = vadd.f32 %v1919, 1e-06
    %v1933 = vadd.f32 %v1920, 1e-06
    %v1934 = vadd.f32 %v1921, 1e-06
    %v1935 = vadd.f32 %v1922, 1e-06
    %v1936 = vadd.f32 %v1923, 1e-06
    %v1937 = vrsqrt.pop %v1931
    %v1938 = vmul.f32 %v1937, %v1931
    %v1939 = vmul.f32 %v1938, %v1937
    %v1940 = vmul.f32 0.5, %v1939
    %v1941 = vsub.f32 1.5, %v1940
    %v1942 = vmul.f32 %v1937, %v1941
    %vm1943 = vweird.f32 %v1931
    %vm1944 = vweird.f32 %v1937
    %vm1945 = vmor %vm1943, %vm1944
    %v1946 = vsel %vm1945, %v1937, %v1942
    %v1947 = vrsqrt.pop %v1932
    %v1948 = vmul.f32 %v1947, %v1932
    %v1949 = vmul.f32 %v1948, %v1947
    %v1950 = vmul.f32 0.5, %v1949
    %v1951 = vsub.f32 1.5, %v1950
    %v1952 = vmul.f32 %v1947, %v1951
    %vm1953 = vweird.f32 %v1932
    %vm1954 = vweird.f32 %v1947
    %vm1955 = vmor %vm1953, %vm1954
    %v1956 = vsel %vm1955, %v1947, %v1952
    %v1957 = vrsqrt.pop %v1933
    %v1958 = vmul.f32 %v1957, %v1933
    %v1959 = vmul.f32 %v1958, %v1957
    %v1960 = vmul.f32 0.5, %v1959
    %v1961 = vsub.f32 1.5, %v1960
    %v1962 = vmul.f32 %v1957, %v1961
    %vm1963 = vweird.f32 %v1933
    %vm1964 = vweird.f32 %v1957
    %vm1965 = vmor %vm1963, %vm1964
    %v1966 = vsel %vm1965, %v1957, %v1962
    %v1967 = vrsqrt.pop %v1934
    %v1968 = vmul.f32 %v1967, %v1934
    %v1969 = vmul.f32 %v1968, %v1967
    %v1970 = vmul.f32 0.5, %v1969
    %v1971 = vsub.f32 1.5, %v1970
    %v1972 = vmul.f32 %v1967, %v1971
    %vm1973 = vweird.f32 %v1934
    %vm1974 = vweird.f32 %v1967
    %vm1975 = vmor %vm1973, %vm1974
    %v1976 = vsel %vm1975, %v1967, %v1972
    %v1977 = vrsqrt.pop %v1935
    %v1978 = vmul.f32 %v1977, %v1935
    %v1979 = vmul.f32 %v1978, %v1977
    %v1980 = vmul.f32 0.5, %v1979
    %v1981 = vsub.f32 1.5, %v1980
    %v1982 = vmul.f32 %v1977, %v1981
    %vm1983 = vweird.f32 %v1935
    %vm1984 = vweird.f32 %v1977
    %vm1985 = vmor %vm1983, %vm1984
    %v1986 = vsel %vm1985, %v1977, %v1982
    %v1987 = vrsqrt.pop %v1936
    %v1988 = vmul.f32 %v1987, %v1936
    %v1989 = vmul.f32 %v1988, %v1987
    %v1990 = vmul.f32 0.5, %v1989
    %v1991 = vsub.f32 1.5, %v1990
    %v1992 = vmul.f32 %v1987, %v1991
    %vm1993 = vweird.f32 %v1936
    %vm1994 = vweird.f32 %v1987
    %vm1995 = vmor %vm1993, %vm1994
    %v1996 = vsel %vm1995, %v1987, %v1992
    %v1997 = vmul.f32 %v1925, %v1946
    %v1998 = vmul.f32 %v1926, %v1956
    %v1999 = vmul.f32 %v1927, %v1966
    %v2000 = vmul.f32 %v1928, %v1976
    %v2001 = vmul.f32 %v1929, %v1986
    %v2002 = vmul.f32 %v1930, %v1996
    %v2003 = vperm.slane %v1858, 5
    %v2004 = vadd.f32 %v1997, %v2003
    %v2005 = vadd.f32 %v1998, %v2003
    %v2006 = vadd.f32 %v1999, %v2003
    %v2007 = vadd.f32 %v2000, %v2003
    %v2008 = vadd.f32 %v2001, %v2003
    %v2009 = vadd.f32 %v2002, %v2003
    %v2010 = vpack.c.bf16 %v2005, %v2004
    %v2011 = vpack.c.bf16 %v2007, %v2006
    %v2012 = vpack.c.bf16 %v2009, %v2008
    %v2013 = vperm.slane %v1858, 0
    %v2018 = vunpack.c.l.b16 %v1860
    %v2019 = vunpack.c.l.b16 %v1861
    %v2020 = vunpack.c.l.b16 %v1862
    %v2021 = vunpack.c.l.b16 %v1863
    %v2022 = vpack.c.b16 %v2019, %v2018
    %v2023 = vpack.c.b16 %v2021, %v2020
    %v2027 = vsel %vm254, %v2010, 0
    %v2030 = vsel %vm254, %v2011, 0
    %v2033 = vsel %vm254, %v2012, 0
    %2035 = vmatpush.bf16.msra.mxu0 0
    %2036 = vmatpush.bf16.msra.mxu0 0
    %2037 = vmatpush.bf16.msra.mxu0 0
    %2038 = vmatpush.bf16.msra.mxu0 0
    %2039 = vmatpush.bf16.msra.mxu0 0
    %2040 = vmatpush.bf16.msra.mxu0 0
    %2041 = vmatpush.bf16.msra.mxu0 %v2023
    %2042 = vmatpush.bf16.msra.mxu0 %v2022
    %2043 = vmatmul.bf16.gmra.mxu0 %v2027
    %v2044 = vpop.f32.mrf.mxu0
    %v2045 = vadd.f32 %v2013, %v2044
    %v2046 = vpop.f32.mrf.mxu0
    %v2047 = vadd.f32 %v2013, %v2046
    %2048 = vmatmul.bf16.gmra.mxu0 %v2030
    %v2049 = vpop.f32.mrf.mxu0
    %v2050 = vadd.f32 %v2013, %v2049
    %v2051 = vpop.f32.mrf.mxu0
    %v2052 = vadd.f32 %v2013, %v2051
    %2053 = vmatmul.bf16.gmra.mxu0 %v2033
    %v2054 = vpop.f32.mrf.mxu0
    %v2055 = vadd.f32 %v2013, %v2054
    %v2056 = vpop.f32.mrf.mxu0
    %v2057 = vadd.f32 %v2013, %v2056
    %2058 = vdwg.mxu0
    %v2059 = vpack.c.bf16 %v2045, %v2045
    %v2060 = vpack.c.bf16 %v2047, %v2047
    %v2061 = vpack.c.bf16 %v2050, %v2050
    %v2062 = vpack.c.bf16 %v2052, %v2052
    %v2063 = vpack.c.bf16 %v2055, %v2055
    %v2064 = vpack.c.bf16 %v2057, %v2057
    %v2068 = vunpack.c.l.b16 %v2059
    %v2069 = vunpack.c.l.b16 %v2060
    %v2070 = vunpack.c.l.b16 %v2061
    %v2071 = vpack.c.b16 %v2069, %v2068
    %v2072 = vpack.c.b16 %v2070, %v2070
    %2073 = vrot.lane.b32.xlu0 %v2071, 96
    %v2074 = vpop.permute.xlu0 %2073
    %2075 = vrot.lane.b32.xlu0 %v2072, 96
    %v2076 = vpop.permute.xlu0 %2075
    %v2078 = vsel %vm475, %v2071, 0
    %v2081 = vsel %vm475, %v2072, 0
    %v2084 = vsel %vm475, %v2074, 0
    %v2087 = vsel %vm475, %v2076, 0
    %2089 = vmatpush.bf16.xpose.msra.mxu0 0
    %2090 = vmatpush.bf16.xpose.msra.mxu0 0
    %2091 = vmatpush.bf16.xpose.msra.mxu0 0
    %2092 = vmatpush.bf16.xpose.msra.mxu0 0
    %2093 = vmatpush.bf16.xpose.msra.mxu0 0
    %2094 = vmatpush.bf16.xpose.msra.mxu0 0
    %2095 = vmatpush.bf16.xpose.msra.mxu0 %v2087
    %2096 = vmatpush.bf16.xpose.msra.mxu0 %v2084
    %2097 = vmatmul.bf16.gmra.mxu0 %v2078
    %v2098 = vpop.f32.mrf.mxu0
    %v2099 = vadd.f32 0.0, %v2098
    %v2100 = vpop.f32.mrf.mxu0
    %v2101 = vadd.f32 0.0, %v2100
    %2102 = vmatmul.bf16.gmra.mxu0 %v2081
    %v2103 = vpop.f32.mrf.mxu0
    %v2104 = vadd.f32 0.0, %v2103
    %v2105 = vpop.f32.mrf.mxu0
    %2106 = vdwg.mxu0
    %v2110 = vunpack.c.l.b16 %v2062
    %v2111 = vunpack.c.l.b16 %v2063
    %v2112 = vunpack.c.l.b16 %v2064
    %v2113 = vpack.c.b16 %v2111, %v2110
    %v2114 = vpack.c.b16 %v2112, %v2112
    %2115 = vrot.lane.b32.xlu0 %v2113, 96
    %v2116 = vpop.permute.xlu0 %2115
    %2117 = vrot.lane.b32.xlu0 %v2114, 96
    %v2118 = vpop.permute.xlu0 %2117
    %v2120 = vsel %vm475, %v2113, 0
    %v2123 = vsel %vm475, %v2114, 0
    %v2126 = vsel %vm475, %v2116, 0
    %v2129 = vsel %vm475, %v2118, 0
    %2131 = vmatpush.bf16.xpose.msra.mxu0 0
    %2132 = vmatpush.bf16.xpose.msra.mxu0 0
    %2133 = vmatpush.bf16.xpose.msra.mxu0 0
    %2134 = vmatpush.bf16.xpose.msra.mxu0 0
    %2135 = vmatpush.bf16.xpose.msra.mxu0 0
    %2136 = vmatpush.bf16.xpose.msra.mxu0 0
    %2137 = vmatpush.bf16.xpose.msra.mxu0 %v2129
    %2138 = vmatpush.bf16.xpose.msra.mxu0 %v2126
    %2139 = vmatmul.bf16.gmra.mxu0 %v2120
    %v2140 = vpop.f32.mrf.mxu0
    %v2141 = vadd.f32 0.0, %v2140
    %v2142 = vpop.f32.mrf.mxu0
    %v2143 = vadd.f32 0.0, %v2142
    %2144 = vmatmul.bf16.gmra.mxu0 %v2123
    %v2145 = vpop.f32.mrf.mxu0
    %v2146 = vadd.f32 0.0, %v2145
    %v2147 = vpop.f32.mrf.mxu0
    %2148 = vdwg.mxu0
    %v2149 = vmul.f32 %v2099, 0.35355338
    %v2150 = vmul.f32 %v2101, 0.35355338
    %v2151 = vmul.f32 %v2104, 0.35355338
    %v2152 = vmul.f32 %v2141, 0.35355338
    %v2153 = vmul.f32 %v2143, 0.35355338
    %v2154 = vmul.f32 %v2146, 0.35355338
    %v2155 = vadd.f32 %v2149, %v554
    %v2156 = vadd.f32 %v2150, %v554
    %v2157 = vadd.f32 %v2151, %v554
    %v2158 = vadd.f32 %v2152, %v555
    %v2159 = vadd.f32 %v2153, %v555
    %v2160 = vadd.f32 %v2154, %v555
    %v2161 = vsel %vm194, %v2155, -inf
    %2162 = vmax.xlane.f32.xlu0 %v2161
    %v2163 = vpop.xlane.xlu0 %2162
    %v2164 = vsel %vm194, %v2156, -inf
    %2165 = vmax.xlane.f32.xlu0 %v2164
    %v2166 = vpop.xlane.xlu0 %2165
    %v2167 = vsel %vm194, %v2157, -inf
    %2168 = vmax.xlane.f32.xlu0 %v2167
    %v2169 = vpop.xlane.xlu0 %2168
    %v2170 = vsel %vm194, %v2158, -inf
    %2171 = vmax.xlane.f32.xlu0 %v2170
    %v2172 = vpop.xlane.xlu0 %2171
    %v2173 = vsel %vm194, %v2159, -inf
    %2174 = vmax.xlane.f32.xlu0 %v2173
    %v2175 = vpop.xlane.xlu0 %2174
    %v2176 = vsel %vm194, %v2160, -inf
    %2177 = vmax.xlane.f32.xlu0 %v2176
    %v2178 = vpop.xlane.xlu0 %2177
    %v2179 = vsub.f32 %v2155, %v2163
    %v2180 = vsub.f32 %v2156, %v2166
    %v2181 = vsub.f32 %v2157, %v2169
    %v2182 = vsub.f32 %v2158, %v2172
    %v2183 = vsub.f32 %v2159, %v2175
    %v2184 = vsub.f32 %v2160, %v2178
    %v2185 = vmul.f32 %v2179, 1.442695
    %v2186 = vpow.pop %v2185
    %v2187 = vmul.f32 %v2180, 1.442695
    %v2188 = vpow.pop %v2187
    %v2189 = vmul.f32 %v2181, 1.442695
    %v2190 = vpow.pop %v2189
    %v2191 = vmul.f32 %v2182, 1.442695
    %v2192 = vpow.pop %v2191
    %v2193 = vmul.f32 %v2183, 1.442695
    %v2194 = vpow.pop %v2193
    %v2195 = vmul.f32 %v2184, 1.442695
    %v2196 = vpow.pop %v2195
    %v2197 = vsel %vm194, %v2186, 0.0
    %2198 = vadd.xlane.f32.xlu0 %v2197
    %v2199 = vpop.xlane.xlu0 %2198
    %v2200 = vsel %vm194, %v2188, 0.0
    %2201 = vadd.xlane.f32.xlu0 %v2200
    %v2202 = vpop.xlane.xlu0 %2201
    %v2203 = vsel %vm194, %v2190, 0.0
    %2204 = vadd.xlane.f32.xlu0 %v2203
    %v2205 = vpop.xlane.xlu0 %2204
    %v2206 = vsel %vm194, %v2192, 0.0
    %2207 = vadd.xlane.f32.xlu0 %v2206
    %v2208 = vpop.xlane.xlu0 %2207
    %v2209 = vsel %vm194, %v2194, 0.0
    %2210 = vadd.xlane.f32.xlu0 %v2209
    %v2211 = vpop.xlane.xlu0 %2210
    %v2212 = vsel %vm194, %v2196, 0.0
    %2213 = vadd.xlane.f32.xlu0 %v2212
    %v2214 = vpop.xlane.xlu0 %2213
    %v2215 = vrcp.pop %v2199
    %v2216 = vrcp.pop %v2202
    %v2217 = vrcp.pop %v2205
    %v2218 = vrcp.pop %v2208
    %v2219 = vrcp.pop %v2211
    %v2220 = vrcp.pop %v2214
    %v2221 = vmul.f32 %v2186, %v2215
    %v2222 = vmul.f32 %v2188, %v2216
    %v2223 = vmul.f32 %v2190, %v2217
    %v2224 = vmul.f32 %v2192, %v2218
    %v2225 = vmul.f32 %v2194, %v2219
    %v2226 = vmul.f32 %v2196, %v2220
    %v2227 = vpack.c.bf16 %v2221, %v2221
    %v2228 = vpack.c.bf16 %v2222, %v2222
    %v2229 = vpack.c.bf16 %v2223, %v2223
    %v2230 = vpack.c.bf16 %v2224, %v2224
    %v2231 = vpack.c.bf16 %v2225, %v2225
    %v2232 = vpack.c.bf16 %v2226, %v2226
    %v2236 = vunpack.c.l.b16 %v2227
    %v2237 = vunpack.c.l.b16 %v2228
    %v2238 = vunpack.c.l.b16 %v2229
    %v2239 = vpack.c.b16 %v2237, %v2236
    %v2240 = vpack.c.b16 %v2238, %v2238
    %2241 = vrot.lane.b32.xlu0 %v2071, 64
    %v2242 = vpop.permute.xlu0 %2241
    %2243 = vrot.lane.b32.xlu0 %v2072, 64
    %v2244 = vpop.permute.xlu0 %2243
    %v2247 = vsel %vm194, %v2239, 0
    %v2250 = vsel %vm194, %v2240, 0
    %v2253 = vsel %vm201, %v2244, 0
    %2255 = vmatpush.bf16.msra.mxu0 0
    %2256 = vmatpush.bf16.msra.mxu0 0
    %2257 = vmatpush.bf16.msra.mxu0 0
    %2258 = vmatpush.bf16.msra.mxu0 0
    %2259 = vmatpush.bf16.msra.mxu0 0
    %2260 = vmatpush.bf16.msra.mxu0 0
    %2261 = vmatpush.bf16.msra.mxu0 %v2253
    %2262 = vmatpush.bf16.msra.mxu0 %v2242
    %2263 = vmatmul.bf16.gmra.mxu0 %v2247
    %v2264 = vpop.f32.mrf.mxu0
    %v2265 = vadd.f32 0.0, %v2264
    %v2266 = vpop.f32.mrf.mxu0
    %v2267 = vadd.f32 0.0, %v2266
    %2268 = vmatmul.bf16.gmra.mxu0 %v2250
    %v2269 = vpop.f32.mrf.mxu0
    %v2270 = vadd.f32 0.0, %v2269
    %v2271 = vpop.f32.mrf.mxu0
    %2272 = vdwg.mxu0
    %v2276 = vunpack.c.l.b16 %v2230
    %v2277 = vunpack.c.l.b16 %v2231
    %v2278 = vunpack.c.l.b16 %v2232
    %v2279 = vpack.c.b16 %v2277, %v2276
    %v2280 = vpack.c.b16 %v2278, %v2278
    %2281 = vrot.lane.b32.xlu0 %v2113, 64
    %v2282 = vpop.permute.xlu0 %2281
    %2283 = vrot.lane.b32.xlu0 %v2114, 64
    %v2284 = vpop.permute.xlu0 %2283
    %v2287 = vsel %vm194, %v2279, 0
    %v2290 = vsel %vm194, %v2280, 0
    %v2293 = vsel %vm201, %v2284, 0
    %2295 = vmatpush.bf16.msra.mxu0 0
    %2296 = vmatpush.bf16.msra.mxu0 0
    %2297 = vmatpush.bf16.msra.mxu0 0
    %2298 = vmatpush.bf16.msra.mxu0 0
    %2299 = vmatpush.bf16.msra.mxu0 0
    %2300 = vmatpush.bf16.msra.mxu0 0
    %2301 = vmatpush.bf16.msra.mxu0 %v2293
    %2302 = vmatpush.bf16.msra.mxu0 %v2282
    %2303 = vmatmul.bf16.gmra.mxu0 %v2287
    %v2304 = vpop.f32.mrf.mxu0
    %v2305 = vadd.f32 0.0, %v2304
    %v2306 = vpop.f32.mrf.mxu0
    %v2307 = vadd.f32 0.0, %v2306
    %2308 = vmatmul.bf16.gmra.mxu0 %v2290
    %v2309 = vpop.f32.mrf.mxu0
    %v2310 = vadd.f32 0.0, %v2309
    %v2311 = vpop.f32.mrf.mxu0
    %2312 = vdwg.mxu0
    %2313 = vrot.lane.b32.xlu0 %v2071, 120
    %v2314 = vpop.permute.xlu0 %2313
    %2315 = vrot.lane.b32.xlu0 %v2072, 120
    %v2316 = vpop.permute.xlu0 %2315
    %2317 = vrot.lane.b32.xlu0 %v2071, 88
    %v2318 = vpop.permute.xlu0 %2317
    %2319 = vrot.lane.b32.xlu0 %v2072, 88
    %v2320 = vpop.permute.xlu0 %2319
    %v2322 = vsel %vm475, %v2314, 0
    %v2325 = vsel %vm475, %v2316, 0
    %v2328 = vsel %vm475, %v2318, 0
    %v2331 = vsel %vm475, %v2320, 0
    %2333 = vmatpush.bf16.xpose.msra.mxu0 0
    %2334 = vmatpush.bf16.xpose.msra.mxu0 0
    %2335 = vmatpush.bf16.xpose.msra.mxu0 0
    %2336 = vmatpush.bf16.xpose.msra.mxu0 0
    %2337 = vmatpush.bf16.xpose.msra.mxu0 0
    %2338 = vmatpush.bf16.xpose.msra.mxu0 0
    %2339 = vmatpush.bf16.xpose.msra.mxu0 %v2331
    %2340 = vmatpush.bf16.xpose.msra.mxu0 %v2328
    %2341 = vmatmul.bf16.gmra.mxu0 %v2322
    %v2342 = vpop.f32.mrf.mxu0
    %v2343 = vadd.f32 0.0, %v2342
    %v2344 = vpop.f32.mrf.mxu0
    %v2345 = vadd.f32 0.0, %v2344
    %2346 = vmatmul.bf16.gmra.mxu0 %v2325
    %v2347 = vpop.f32.mrf.mxu0
    %v2348 = vadd.f32 0.0, %v2347
    %v2349 = vpop.f32.mrf.mxu0
    %2350 = vdwg.mxu0
    %2351 = vrot.lane.b32.xlu0 %v2113, 120
    %v2352 = vpop.permute.xlu0 %2351
    %2353 = vrot.lane.b32.xlu0 %v2114, 120
    %v2354 = vpop.permute.xlu0 %2353
    %2355 = vrot.lane.b32.xlu0 %v2113, 88
    %v2356 = vpop.permute.xlu0 %2355
    %2357 = vrot.lane.b32.xlu0 %v2114, 88
    %v2358 = vpop.permute.xlu0 %2357
    %v2360 = vsel %vm475, %v2352, 0
    %v2363 = vsel %vm475, %v2354, 0
    %v2366 = vsel %vm475, %v2356, 0
    %v2369 = vsel %vm475, %v2358, 0
    %2371 = vmatpush.bf16.xpose.msra.mxu0 0
    %2372 = vmatpush.bf16.xpose.msra.mxu0 0
    %2373 = vmatpush.bf16.xpose.msra.mxu0 0
    %2374 = vmatpush.bf16.xpose.msra.mxu0 0
    %2375 = vmatpush.bf16.xpose.msra.mxu0 0
    %2376 = vmatpush.bf16.xpose.msra.mxu0 0
    %2377 = vmatpush.bf16.xpose.msra.mxu0 %v2369
    %2378 = vmatpush.bf16.xpose.msra.mxu0 %v2366
    %2379 = vmatmul.bf16.gmra.mxu0 %v2360
    %v2380 = vpop.f32.mrf.mxu0
    %v2381 = vadd.f32 0.0, %v2380
    %v2382 = vpop.f32.mrf.mxu0
    %v2383 = vadd.f32 0.0, %v2382
    %2384 = vmatmul.bf16.gmra.mxu0 %v2363
    %v2385 = vpop.f32.mrf.mxu0
    %v2386 = vadd.f32 0.0, %v2385
    %v2387 = vpop.f32.mrf.mxu0
    %2388 = vdwg.mxu0
    %v2389 = vmul.f32 %v2343, 0.35355338
    %v2390 = vmul.f32 %v2345, 0.35355338
    %v2391 = vmul.f32 %v2348, 0.35355338
    %v2392 = vmul.f32 %v2381, 0.35355338
    %v2393 = vmul.f32 %v2383, 0.35355338
    %v2394 = vmul.f32 %v2386, 0.35355338
    %v2395 = vadd.f32 %v2389, %v554
    %v2396 = vadd.f32 %v2390, %v554
    %v2397 = vadd.f32 %v2391, %v554
    %v2398 = vadd.f32 %v2392, %v555
    %v2399 = vadd.f32 %v2393, %v555
    %v2400 = vadd.f32 %v2394, %v555
    %v2401 = vsel %vm194, %v2395, -inf
    %2402 = vmax.xlane.f32.xlu0 %v2401
    %v2403 = vpop.xlane.xlu0 %2402
    %v2404 = vsel %vm194, %v2396, -inf
    %2405 = vmax.xlane.f32.xlu0 %v2404
    %v2406 = vpop.xlane.xlu0 %2405
    %v2407 = vsel %vm194, %v2397, -inf
    %2408 = vmax.xlane.f32.xlu0 %v2407
    %v2409 = vpop.xlane.xlu0 %2408
    %v2410 = vsel %vm194, %v2398, -inf
    %2411 = vmax.xlane.f32.xlu0 %v2410
    %v2412 = vpop.xlane.xlu0 %2411
    %v2413 = vsel %vm194, %v2399, -inf
    %2414 = vmax.xlane.f32.xlu0 %v2413
    %v2415 = vpop.xlane.xlu0 %2414
    %v2416 = vsel %vm194, %v2400, -inf
    %2417 = vmax.xlane.f32.xlu0 %v2416
    %v2418 = vpop.xlane.xlu0 %2417
    %v2419 = vsub.f32 %v2395, %v2403
    %v2420 = vsub.f32 %v2396, %v2406
    %v2421 = vsub.f32 %v2397, %v2409
    %v2422 = vsub.f32 %v2398, %v2412
    %v2423 = vsub.f32 %v2399, %v2415
    %v2424 = vsub.f32 %v2400, %v2418
    %v2425 = vmul.f32 %v2419, 1.442695
    %v2426 = vpow.pop %v2425
    %v2427 = vmul.f32 %v2420, 1.442695
    %v2428 = vpow.pop %v2427
    %v2429 = vmul.f32 %v2421, 1.442695
    %v2430 = vpow.pop %v2429
    %v2431 = vmul.f32 %v2422, 1.442695
    %v2432 = vpow.pop %v2431
    %v2433 = vmul.f32 %v2423, 1.442695
    %v2434 = vpow.pop %v2433
    %v2435 = vmul.f32 %v2424, 1.442695
    %v2436 = vpow.pop %v2435
    %v2437 = vsel %vm194, %v2426, 0.0
    %2438 = vadd.xlane.f32.xlu0 %v2437
    %v2439 = vpop.xlane.xlu0 %2438
    %v2440 = vsel %vm194, %v2428, 0.0
    %2441 = vadd.xlane.f32.xlu0 %v2440
    %v2442 = vpop.xlane.xlu0 %2441
    %v2443 = vsel %vm194, %v2430, 0.0
    %2444 = vadd.xlane.f32.xlu0 %v2443
    %v2445 = vpop.xlane.xlu0 %2444
    %v2446 = vsel %vm194, %v2432, 0.0
    %2447 = vadd.xlane.f32.xlu0 %v2446
    %v2448 = vpop.xlane.xlu0 %2447
    %v2449 = vsel %vm194, %v2434, 0.0
    %2450 = vadd.xlane.f32.xlu0 %v2449
    %v2451 = vpop.xlane.xlu0 %2450
    %v2452 = vsel %vm194, %v2436, 0.0
    %2453 = vadd.xlane.f32.xlu0 %v2452
    %v2454 = vpop.xlane.xlu0 %2453
    %v2455 = vrcp.pop %v2439
    %v2456 = vrcp.pop %v2442
    %v2457 = vrcp.pop %v2445
    %v2458 = vrcp.pop %v2448
    %v2459 = vrcp.pop %v2451
    %v2460 = vrcp.pop %v2454
    %v2461 = vmul.f32 %v2426, %v2455
    %v2462 = vmul.f32 %v2428, %v2456
    %v2463 = vmul.f32 %v2430, %v2457
    %v2464 = vmul.f32 %v2432, %v2458
    %v2465 = vmul.f32 %v2434, %v2459
    %v2466 = vmul.f32 %v2436, %v2460
    %v2467 = vpack.c.bf16 %v2461, %v2461
    %v2468 = vpack.c.bf16 %v2462, %v2462
    %v2469 = vpack.c.bf16 %v2463, %v2463
    %v2470 = vpack.c.bf16 %v2464, %v2464
    %v2471 = vpack.c.bf16 %v2465, %v2465
    %v2472 = vpack.c.bf16 %v2466, %v2466
    %v2476 = vunpack.c.l.b16 %v2467
    %v2477 = vunpack.c.l.b16 %v2468
    %v2478 = vunpack.c.l.b16 %v2469
    %v2479 = vpack.c.b16 %v2477, %v2476
    %v2480 = vpack.c.b16 %v2478, %v2478
    %2481 = vrot.lane.b32.xlu0 %v2071, 56
    %v2482 = vpop.permute.xlu0 %2481
    %2483 = vrot.lane.b32.xlu0 %v2072, 56
    %v2484 = vpop.permute.xlu0 %2483
    %v2487 = vsel %vm194, %v2479, 0
    %v2490 = vsel %vm194, %v2480, 0
    %v2493 = vsel %vm201, %v2484, 0
    %2495 = vmatpush.bf16.msra.mxu0 0
    %2496 = vmatpush.bf16.msra.mxu0 0
    %2497 = vmatpush.bf16.msra.mxu0 0
    %2498 = vmatpush.bf16.msra.mxu0 0
    %2499 = vmatpush.bf16.msra.mxu0 0
    %2500 = vmatpush.bf16.msra.mxu0 0
    %2501 = vmatpush.bf16.msra.mxu0 %v2493
    %2502 = vmatpush.bf16.msra.mxu0 %v2482
    %2503 = vmatmul.bf16.gmra.mxu0 %v2487
    %v2504 = vpop.f32.mrf.mxu0
    %v2505 = vadd.f32 0.0, %v2504
    %v2506 = vpop.f32.mrf.mxu0
    %v2507 = vadd.f32 0.0, %v2506
    %2508 = vmatmul.bf16.gmra.mxu0 %v2490
    %v2509 = vpop.f32.mrf.mxu0
    %v2510 = vadd.f32 0.0, %v2509
    %v2511 = vpop.f32.mrf.mxu0
    %2512 = vdwg.mxu0
    %v2516 = vunpack.c.l.b16 %v2470
    %v2517 = vunpack.c.l.b16 %v2471
    %v2518 = vunpack.c.l.b16 %v2472
    %v2519 = vpack.c.b16 %v2517, %v2516
    %v2520 = vpack.c.b16 %v2518, %v2518
    %2521 = vrot.lane.b32.xlu0 %v2113, 56
    %v2522 = vpop.permute.xlu0 %2521
    %2523 = vrot.lane.b32.xlu0 %v2114, 56
    %v2524 = vpop.permute.xlu0 %2523
    %v2527 = vsel %vm194, %v2519, 0
    %v2530 = vsel %vm194, %v2520, 0
    %v2533 = vsel %vm201, %v2524, 0
    %2535 = vmatpush.bf16.msra.mxu0 0
    %2536 = vmatpush.bf16.msra.mxu0 0
    %2537 = vmatpush.bf16.msra.mxu0 0
    %2538 = vmatpush.bf16.msra.mxu0 0
    %2539 = vmatpush.bf16.msra.mxu0 0
    %2540 = vmatpush.bf16.msra.mxu0 0
    %2541 = vmatpush.bf16.msra.mxu0 %v2533
    %2542 = vmatpush.bf16.msra.mxu0 %v2522
    %2543 = vmatmul.bf16.gmra.mxu0 %v2527
    %v2544 = vpop.f32.mrf.mxu0
    %v2545 = vadd.f32 0.0, %v2544
    %v2546 = vpop.f32.mrf.mxu0
    %v2547 = vadd.f32 0.0, %v2546
    %2548 = vmatmul.bf16.gmra.mxu0 %v2530
    %v2549 = vpop.f32.mrf.mxu0
    %v2550 = vadd.f32 0.0, %v2549
    %v2551 = vpop.f32.mrf.mxu0
    %2552 = vdwg.mxu0
    %2553 = vrot.lane.b32.xlu0 %v2071, 112
    %v2554 = vpop.permute.xlu0 %2553
    %2555 = vrot.lane.b32.xlu0 %v2072, 112
    %v2556 = vpop.permute.xlu0 %2555
    %2557 = vrot.lane.b32.xlu0 %v2071, 80
    %v2558 = vpop.permute.xlu0 %2557
    %2559 = vrot.lane.b32.xlu0 %v2072, 80
    %v2560 = vpop.permute.xlu0 %2559
    %v2562 = vsel %vm475, %v2554, 0
    %v2565 = vsel %vm475, %v2556, 0
    %v2568 = vsel %vm475, %v2558, 0
    %v2571 = vsel %vm475, %v2560, 0
    %2573 = vmatpush.bf16.xpose.msra.mxu0 0
    %2574 = vmatpush.bf16.xpose.msra.mxu0 0
    %2575 = vmatpush.bf16.xpose.msra.mxu0 0
    %2576 = vmatpush.bf16.xpose.msra.mxu0 0
    %2577 = vmatpush.bf16.xpose.msra.mxu0 0
    %2578 = vmatpush.bf16.xpose.msra.mxu0 0
    %2579 = vmatpush.bf16.xpose.msra.mxu0 %v2571
    %2580 = vmatpush.bf16.xpose.msra.mxu0 %v2568
    %2581 = vmatmul.bf16.gmra.mxu0 %v2562
    %v2582 = vpop.f32.mrf.mxu0
    %v2583 = vadd.f32 0.0, %v2582
    %v2584 = vpop.f32.mrf.mxu0
    %v2585 = vadd.f32 0.0, %v2584
    %2586 = vmatmul.bf16.gmra.mxu0 %v2565
    %v2587 = vpop.f32.mrf.mxu0
    %v2588 = vadd.f32 0.0, %v2587
    %v2589 = vpop.f32.mrf.mxu0
    %2590 = vdwg.mxu0
    %2591 = vrot.lane.b32.xlu0 %v2113, 112
    %v2592 = vpop.permute.xlu0 %2591
    %2593 = vrot.lane.b32.xlu0 %v2114, 112
    %v2594 = vpop.permute.xlu0 %2593
    %2595 = vrot.lane.b32.xlu0 %v2113, 80
    %v2596 = vpop.permute.xlu0 %2595
    %2597 = vrot.lane.b32.xlu0 %v2114, 80
    %v2598 = vpop.permute.xlu0 %2597
    %v2600 = vsel %vm475, %v2592, 0
    %v2603 = vsel %vm475, %v2594, 0
    %v2606 = vsel %vm475, %v2596, 0
    %v2609 = vsel %vm475, %v2598, 0
    %2611 = vmatpush.bf16.xpose.msra.mxu0 0
    %2612 = vmatpush.bf16.xpose.msra.mxu0 0
    %2613 = vmatpush.bf16.xpose.msra.mxu0 0
    %2614 = vmatpush.bf16.xpose.msra.mxu0 0
    %2615 = vmatpush.bf16.xpose.msra.mxu0 0
    %2616 = vmatpush.bf16.xpose.msra.mxu0 0
    %2617 = vmatpush.bf16.xpose.msra.mxu0 %v2609
    %2618 = vmatpush.bf16.xpose.msra.mxu0 %v2606
    %2619 = vmatmul.bf16.gmra.mxu0 %v2600
    %v2620 = vpop.f32.mrf.mxu0
    %v2621 = vadd.f32 0.0, %v2620
    %v2622 = vpop.f32.mrf.mxu0
    %v2623 = vadd.f32 0.0, %v2622
    %2624 = vmatmul.bf16.gmra.mxu0 %v2603
    %v2625 = vpop.f32.mrf.mxu0
    %v2626 = vadd.f32 0.0, %v2625
    %v2627 = vpop.f32.mrf.mxu0
    %2628 = vdwg.mxu0
    %v2629 = vmul.f32 %v2583, 0.35355338
    %v2630 = vmul.f32 %v2585, 0.35355338
    %v2631 = vmul.f32 %v2588, 0.35355338
    %v2632 = vmul.f32 %v2621, 0.35355338
    %v2633 = vmul.f32 %v2623, 0.35355338
    %v2634 = vmul.f32 %v2626, 0.35355338
    %v2635 = vadd.f32 %v2629, %v554
    %v2636 = vadd.f32 %v2630, %v554
    %v2637 = vadd.f32 %v2631, %v554
    %v2638 = vadd.f32 %v2632, %v555
    %v2639 = vadd.f32 %v2633, %v555
    %v2640 = vadd.f32 %v2634, %v555
    %v2641 = vsel %vm194, %v2635, -inf
    %2642 = vmax.xlane.f32.xlu0 %v2641
    %v2643 = vpop.xlane.xlu0 %2642
    %v2644 = vsel %vm194, %v2636, -inf
    %2645 = vmax.xlane.f32.xlu0 %v2644
    %v2646 = vpop.xlane.xlu0 %2645
    %v2647 = vsel %vm194, %v2637, -inf
    %2648 = vmax.xlane.f32.xlu0 %v2647
    %v2649 = vpop.xlane.xlu0 %2648
    %v2650 = vsel %vm194, %v2638, -inf
    %2651 = vmax.xlane.f32.xlu0 %v2650
    %v2652 = vpop.xlane.xlu0 %2651
    %v2653 = vsel %vm194, %v2639, -inf
    %2654 = vmax.xlane.f32.xlu0 %v2653
    %v2655 = vpop.xlane.xlu0 %2654
    %v2656 = vsel %vm194, %v2640, -inf
    %2657 = vmax.xlane.f32.xlu0 %v2656
    %v2658 = vpop.xlane.xlu0 %2657
    %v2659 = vsub.f32 %v2635, %v2643
    %v2660 = vsub.f32 %v2636, %v2646
    %v2661 = vsub.f32 %v2637, %v2649
    %v2662 = vsub.f32 %v2638, %v2652
    %v2663 = vsub.f32 %v2639, %v2655
    %v2664 = vsub.f32 %v2640, %v2658
    %v2665 = vmul.f32 %v2659, 1.442695
    %v2666 = vpow.pop %v2665
    %v2667 = vmul.f32 %v2660, 1.442695
    %v2668 = vpow.pop %v2667
    %v2669 = vmul.f32 %v2661, 1.442695
    %v2670 = vpow.pop %v2669
    %v2671 = vmul.f32 %v2662, 1.442695
    %v2672 = vpow.pop %v2671
    %v2673 = vmul.f32 %v2663, 1.442695
    %v2674 = vpow.pop %v2673
    %v2675 = vmul.f32 %v2664, 1.442695
    %v2676 = vpow.pop %v2675
    %v2677 = vsel %vm194, %v2666, 0.0
    %2678 = vadd.xlane.f32.xlu0 %v2677
    %v2679 = vpop.xlane.xlu0 %2678
    %v2680 = vsel %vm194, %v2668, 0.0
    %2681 = vadd.xlane.f32.xlu0 %v2680
    %v2682 = vpop.xlane.xlu0 %2681
    %v2683 = vsel %vm194, %v2670, 0.0
    %2684 = vadd.xlane.f32.xlu0 %v2683
    %v2685 = vpop.xlane.xlu0 %2684
    %v2686 = vsel %vm194, %v2672, 0.0
    %2687 = vadd.xlane.f32.xlu0 %v2686
    %v2688 = vpop.xlane.xlu0 %2687
    %v2689 = vsel %vm194, %v2674, 0.0
    %2690 = vadd.xlane.f32.xlu0 %v2689
    %v2691 = vpop.xlane.xlu0 %2690
    %v2692 = vsel %vm194, %v2676, 0.0
    %2693 = vadd.xlane.f32.xlu0 %v2692
    %v2694 = vpop.xlane.xlu0 %2693
    %v2695 = vrcp.pop %v2679
    %v2696 = vrcp.pop %v2682
    %v2697 = vrcp.pop %v2685
    %v2698 = vrcp.pop %v2688
    %v2699 = vrcp.pop %v2691
    %v2700 = vrcp.pop %v2694
    %v2701 = vmul.f32 %v2666, %v2695
    %v2702 = vmul.f32 %v2668, %v2696
    %v2703 = vmul.f32 %v2670, %v2697
    %v2704 = vmul.f32 %v2672, %v2698
    %v2705 = vmul.f32 %v2674, %v2699
    %v2706 = vmul.f32 %v2676, %v2700
    %v2707 = vpack.c.bf16 %v2701, %v2701
    %v2708 = vpack.c.bf16 %v2702, %v2702
    %v2709 = vpack.c.bf16 %v2703, %v2703
    %v2710 = vpack.c.bf16 %v2704, %v2704
    %v2711 = vpack.c.bf16 %v2705, %v2705
    %v2712 = vpack.c.bf16 %v2706, %v2706
    %v2716 = vunpack.c.l.b16 %v2707
    %v2717 = vunpack.c.l.b16 %v2708
    %v2718 = vunpack.c.l.b16 %v2709
    %v2719 = vpack.c.b16 %v2717, %v2716
    %v2720 = vpack.c.b16 %v2718, %v2718
    %2721 = vrot.lane.b32.xlu0 %v2071, 48
    %v2722 = vpop.permute.xlu0 %2721
    %2723 = vrot.lane.b32.xlu0 %v2072, 48
    %v2724 = vpop.permute.xlu0 %2723
    %v2727 = vsel %vm194, %v2719, 0
    %v2730 = vsel %vm194, %v2720, 0
    %v2733 = vsel %vm201, %v2724, 0
    %2735 = vmatpush.bf16.msra.mxu0 0
    %2736 = vmatpush.bf16.msra.mxu0 0
    %2737 = vmatpush.bf16.msra.mxu0 0
    %2738 = vmatpush.bf16.msra.mxu0 0
    %2739 = vmatpush.bf16.msra.mxu0 0
    %2740 = vmatpush.bf16.msra.mxu0 0
    %2741 = vmatpush.bf16.msra.mxu0 %v2733
    %2742 = vmatpush.bf16.msra.mxu0 %v2722
    %2743 = vmatmul.bf16.gmra.mxu0 %v2727
    %v2744 = vpop.f32.mrf.mxu0
    %v2745 = vadd.f32 0.0, %v2744
    %v2746 = vpop.f32.mrf.mxu0
    %v2747 = vadd.f32 0.0, %v2746
    %2748 = vmatmul.bf16.gmra.mxu0 %v2730
    %v2749 = vpop.f32.mrf.mxu0
    %v2750 = vadd.f32 0.0, %v2749
    %v2751 = vpop.f32.mrf.mxu0
    %2752 = vdwg.mxu0
    %v2756 = vunpack.c.l.b16 %v2710
    %v2757 = vunpack.c.l.b16 %v2711
    %v2758 = vunpack.c.l.b16 %v2712
    %v2759 = vpack.c.b16 %v2757, %v2756
    %v2760 = vpack.c.b16 %v2758, %v2758
    %2761 = vrot.lane.b32.xlu0 %v2113, 48
    %v2762 = vpop.permute.xlu0 %2761
    %2763 = vrot.lane.b32.xlu0 %v2114, 48
    %v2764 = vpop.permute.xlu0 %2763
    %v2767 = vsel %vm194, %v2759, 0
    %v2770 = vsel %vm194, %v2760, 0
    %v2773 = vsel %vm201, %v2764, 0
    %2775 = vmatpush.bf16.msra.mxu0 0
    %2776 = vmatpush.bf16.msra.mxu0 0
    %2777 = vmatpush.bf16.msra.mxu0 0
    %2778 = vmatpush.bf16.msra.mxu0 0
    %2779 = vmatpush.bf16.msra.mxu0 0
    %2780 = vmatpush.bf16.msra.mxu0 0
    %2781 = vmatpush.bf16.msra.mxu0 %v2773
    %2782 = vmatpush.bf16.msra.mxu0 %v2762
    %2783 = vmatmul.bf16.gmra.mxu0 %v2767
    %v2784 = vpop.f32.mrf.mxu0
    %v2785 = vadd.f32 0.0, %v2784
    %v2786 = vpop.f32.mrf.mxu0
    %v2787 = vadd.f32 0.0, %v2786
    %2788 = vmatmul.bf16.gmra.mxu0 %v2770
    %v2789 = vpop.f32.mrf.mxu0
    %v2790 = vadd.f32 0.0, %v2789
    %v2791 = vpop.f32.mrf.mxu0
    %2792 = vdwg.mxu0
    %2793 = vrot.lane.b32.xlu0 %v2071, 104
    %v2794 = vpop.permute.xlu0 %2793
    %2795 = vrot.lane.b32.xlu0 %v2072, 104
    %v2796 = vpop.permute.xlu0 %2795
    %2797 = vrot.lane.b32.xlu0 %v2071, 72
    %v2798 = vpop.permute.xlu0 %2797
    %2799 = vrot.lane.b32.xlu0 %v2072, 72
    %v2800 = vpop.permute.xlu0 %2799
    %v2802 = vsel %vm475, %v2794, 0
    %v2805 = vsel %vm475, %v2796, 0
    %v2808 = vsel %vm475, %v2798, 0
    %v2811 = vsel %vm475, %v2800, 0
    %2813 = vmatpush.bf16.xpose.msra.mxu0 0
    %2814 = vmatpush.bf16.xpose.msra.mxu0 0
    %2815 = vmatpush.bf16.xpose.msra.mxu0 0
    %2816 = vmatpush.bf16.xpose.msra.mxu0 0
    %2817 = vmatpush.bf16.xpose.msra.mxu0 0
    %2818 = vmatpush.bf16.xpose.msra.mxu0 0
    %2819 = vmatpush.bf16.xpose.msra.mxu0 %v2811
    %2820 = vmatpush.bf16.xpose.msra.mxu0 %v2808
    %2821 = vmatmul.bf16.gmra.mxu0 %v2802
    %v2822 = vpop.f32.mrf.mxu0
    %v2823 = vadd.f32 0.0, %v2822
    %v2824 = vpop.f32.mrf.mxu0
    %v2825 = vadd.f32 0.0, %v2824
    %2826 = vmatmul.bf16.gmra.mxu0 %v2805
    %v2827 = vpop.f32.mrf.mxu0
    %v2828 = vadd.f32 0.0, %v2827
    %v2829 = vpop.f32.mrf.mxu0
    %2830 = vdwg.mxu0
    %2831 = vrot.lane.b32.xlu0 %v2113, 104
    %v2832 = vpop.permute.xlu0 %2831
    %2833 = vrot.lane.b32.xlu0 %v2114, 104
    %v2834 = vpop.permute.xlu0 %2833
    %2835 = vrot.lane.b32.xlu0 %v2113, 72
    %v2836 = vpop.permute.xlu0 %2835
    %2837 = vrot.lane.b32.xlu0 %v2114, 72
    %v2838 = vpop.permute.xlu0 %2837
    %v2840 = vsel %vm475, %v2832, 0
    %v2843 = vsel %vm475, %v2834, 0
    %v2846 = vsel %vm475, %v2836, 0
    %v2849 = vsel %vm475, %v2838, 0
    %2851 = vmatpush.bf16.xpose.msra.mxu0 0
    %2852 = vmatpush.bf16.xpose.msra.mxu0 0
    %2853 = vmatpush.bf16.xpose.msra.mxu0 0
    %2854 = vmatpush.bf16.xpose.msra.mxu0 0
    %2855 = vmatpush.bf16.xpose.msra.mxu0 0
    %2856 = vmatpush.bf16.xpose.msra.mxu0 0
    %2857 = vmatpush.bf16.xpose.msra.mxu0 %v2849
    %2858 = vmatpush.bf16.xpose.msra.mxu0 %v2846
    %2859 = vmatmul.bf16.gmra.mxu0 %v2840
    %v2860 = vpop.f32.mrf.mxu0
    %v2861 = vadd.f32 0.0, %v2860
    %v2862 = vpop.f32.mrf.mxu0
    %v2863 = vadd.f32 0.0, %v2862
    %2864 = vmatmul.bf16.gmra.mxu0 %v2843
    %v2865 = vpop.f32.mrf.mxu0
    %v2866 = vadd.f32 0.0, %v2865
    %v2867 = vpop.f32.mrf.mxu0
    %2868 = vdwg.mxu0
    %v2869 = vmul.f32 %v2823, 0.35355338
    %v2870 = vmul.f32 %v2825, 0.35355338
    %v2871 = vmul.f32 %v2828, 0.35355338
    %v2872 = vmul.f32 %v2861, 0.35355338
    %v2873 = vmul.f32 %v2863, 0.35355338
    %v2874 = vmul.f32 %v2866, 0.35355338
    %v2875 = vadd.f32 %v2869, %v554
    %v2876 = vadd.f32 %v2870, %v554
    %v2877 = vadd.f32 %v2871, %v554
    %v2878 = vadd.f32 %v2872, %v555
    %v2879 = vadd.f32 %v2873, %v555
    %v2880 = vadd.f32 %v2874, %v555
    %v2881 = vsel %vm194, %v2875, -inf
    %2882 = vmax.xlane.f32.xlu0 %v2881
    %v2883 = vpop.xlane.xlu0 %2882
    %v2884 = vsel %vm194, %v2876, -inf
    %2885 = vmax.xlane.f32.xlu0 %v2884
    %v2886 = vpop.xlane.xlu0 %2885
    %v2887 = vsel %vm194, %v2877, -inf
    %2888 = vmax.xlane.f32.xlu0 %v2887
    %v2889 = vpop.xlane.xlu0 %2888
    %v2890 = vsel %vm194, %v2878, -inf
    %2891 = vmax.xlane.f32.xlu0 %v2890
    %v2892 = vpop.xlane.xlu0 %2891
    %v2893 = vsel %vm194, %v2879, -inf
    %2894 = vmax.xlane.f32.xlu0 %v2893
    %v2895 = vpop.xlane.xlu0 %2894
    %v2896 = vsel %vm194, %v2880, -inf
    %2897 = vmax.xlane.f32.xlu0 %v2896
    %v2898 = vpop.xlane.xlu0 %2897
    %v2899 = vsub.f32 %v2875, %v2883
    %v2900 = vsub.f32 %v2876, %v2886
    %v2901 = vsub.f32 %v2877, %v2889
    %v2902 = vsub.f32 %v2878, %v2892
    %v2903 = vsub.f32 %v2879, %v2895
    %v2904 = vsub.f32 %v2880, %v2898
    %v2905 = vmul.f32 %v2899, 1.442695
    %v2906 = vpow.pop %v2905
    %v2907 = vmul.f32 %v2900, 1.442695
    %v2908 = vpow.pop %v2907
    %v2909 = vmul.f32 %v2901, 1.442695
    %v2910 = vpow.pop %v2909
    %v2911 = vmul.f32 %v2902, 1.442695
    %v2912 = vpow.pop %v2911
    %v2913 = vmul.f32 %v2903, 1.442695
    %v2914 = vpow.pop %v2913
    %v2915 = vmul.f32 %v2904, 1.442695
    %v2916 = vpow.pop %v2915
    %v2917 = vsel %vm194, %v2906, 0.0
    %2918 = vadd.xlane.f32.xlu0 %v2917
    %v2919 = vpop.xlane.xlu0 %2918
    %v2920 = vsel %vm194, %v2908, 0.0
    %2921 = vadd.xlane.f32.xlu0 %v2920
    %v2922 = vpop.xlane.xlu0 %2921
    %v2923 = vsel %vm194, %v2910, 0.0
    %2924 = vadd.xlane.f32.xlu0 %v2923
    %v2925 = vpop.xlane.xlu0 %2924
    %v2926 = vsel %vm194, %v2912, 0.0
    %2927 = vadd.xlane.f32.xlu0 %v2926
    %v2928 = vpop.xlane.xlu0 %2927
    %v2929 = vsel %vm194, %v2914, 0.0
    %2930 = vadd.xlane.f32.xlu0 %v2929
    %v2931 = vpop.xlane.xlu0 %2930
    %v2932 = vsel %vm194, %v2916, 0.0
    %2933 = vadd.xlane.f32.xlu0 %v2932
    %v2934 = vpop.xlane.xlu0 %2933
    %v2935 = vrcp.pop %v2919
    %v2936 = vrcp.pop %v2922
    %v2937 = vrcp.pop %v2925
    %v2938 = vrcp.pop %v2928
    %v2939 = vrcp.pop %v2931
    %v2940 = vrcp.pop %v2934
    %v2941 = vmul.f32 %v2906, %v2935
    %v2942 = vmul.f32 %v2908, %v2936
    %v2943 = vmul.f32 %v2910, %v2937
    %v2944 = vmul.f32 %v2912, %v2938
    %v2945 = vmul.f32 %v2914, %v2939
    %v2946 = vmul.f32 %v2916, %v2940
    %v2947 = vpack.c.bf16 %v2941, %v2941
    %v2948 = vpack.c.bf16 %v2942, %v2942
    %v2949 = vpack.c.bf16 %v2943, %v2943
    %v2950 = vpack.c.bf16 %v2944, %v2944
    %v2951 = vpack.c.bf16 %v2945, %v2945
    %v2952 = vpack.c.bf16 %v2946, %v2946
    %v2956 = vunpack.c.l.b16 %v2947
    %v2957 = vunpack.c.l.b16 %v2948
    %v2958 = vunpack.c.l.b16 %v2949
    %v2959 = vpack.c.b16 %v2957, %v2956
    %v2960 = vpack.c.b16 %v2958, %v2958
    %2961 = vrot.lane.b32.xlu0 %v2071, 40
    %v2962 = vpop.permute.xlu0 %2961
    %2963 = vrot.lane.b32.xlu0 %v2072, 40
    %v2964 = vpop.permute.xlu0 %2963
    %v2967 = vsel %vm194, %v2959, 0
    %v2970 = vsel %vm194, %v2960, 0
    %v2973 = vsel %vm201, %v2964, 0
    %2975 = vmatpush.bf16.msra.mxu0 0
    %2976 = vmatpush.bf16.msra.mxu0 0
    %2977 = vmatpush.bf16.msra.mxu0 0
    %2978 = vmatpush.bf16.msra.mxu0 0
    %2979 = vmatpush.bf16.msra.mxu0 0
    %2980 = vmatpush.bf16.msra.mxu0 0
    %2981 = vmatpush.bf16.msra.mxu0 %v2973
    %2982 = vmatpush.bf16.msra.mxu0 %v2962
    %2983 = vmatmul.bf16.gmra.mxu0 %v2967
    %v2984 = vpop.f32.mrf.mxu0
    %v2985 = vadd.f32 0.0, %v2984
    %v2986 = vpop.f32.mrf.mxu0
    %v2987 = vadd.f32 0.0, %v2986
    %2988 = vmatmul.bf16.gmra.mxu0 %v2970
    %v2989 = vpop.f32.mrf.mxu0
    %v2990 = vadd.f32 0.0, %v2989
    %v2991 = vpop.f32.mrf.mxu0
    %2992 = vdwg.mxu0
    %v2996 = vunpack.c.l.b16 %v2950
    %v2997 = vunpack.c.l.b16 %v2951
    %v2998 = vunpack.c.l.b16 %v2952
    %v2999 = vpack.c.b16 %v2997, %v2996
    %v3000 = vpack.c.b16 %v2998, %v2998
    %3001 = vrot.lane.b32.xlu0 %v2113, 40
    %v3002 = vpop.permute.xlu0 %3001
    %3003 = vrot.lane.b32.xlu0 %v2114, 40
    %v3004 = vpop.permute.xlu0 %3003
    %v3007 = vsel %vm194, %v2999, 0
    %v3010 = vsel %vm194, %v3000, 0
    %v3013 = vsel %vm201, %v3004, 0
    %3015 = vmatpush.bf16.msra.mxu0 0
    %3016 = vmatpush.bf16.msra.mxu0 0
    %3017 = vmatpush.bf16.msra.mxu0 0
    %3018 = vmatpush.bf16.msra.mxu0 0
    %3019 = vmatpush.bf16.msra.mxu0 0
    %3020 = vmatpush.bf16.msra.mxu0 0
    %3021 = vmatpush.bf16.msra.mxu0 %v3013
    %3022 = vmatpush.bf16.msra.mxu0 %v3002
    %3023 = vmatmul.bf16.gmra.mxu0 %v3007
    %v3024 = vpop.f32.mrf.mxu0
    %v3025 = vadd.f32 0.0, %v3024
    %v3026 = vpop.f32.mrf.mxu0
    %v3027 = vadd.f32 0.0, %v3026
    %3028 = vmatmul.bf16.gmra.mxu0 %v3010
    %v3029 = vpop.f32.mrf.mxu0
    %v3030 = vadd.f32 0.0, %v3029
    %v3031 = vpop.f32.mrf.mxu0
    %3032 = vdwg.mxu0
    %3039 = vrot.lane.b32.xlu0 %v2505, 8
    %v3040 = vpop.permute.xlu0 %3039
    %3041 = vrot.lane.b32.xlu0 %v2507, 8
    %v3042 = vpop.permute.xlu0 %3041
    %3043 = vrot.lane.b32.xlu0 %v2510, 8
    %v3044 = vpop.permute.xlu0 %3043
    %3045 = vrot.lane.b32.xlu0 %v2545, 8
    %v3046 = vpop.permute.xlu0 %3045
    %3047 = vrot.lane.b32.xlu0 %v2547, 8
    %v3048 = vpop.permute.xlu0 %3047
    %3049 = vrot.lane.b32.xlu0 %v2550, 8
    %v3050 = vpop.permute.xlu0 %3049
    %3063 = vrot.lane.b32.xlu0 %v2745, 16
    %v3064 = vpop.permute.xlu0 %3063
    %3065 = vrot.lane.b32.xlu0 %v2747, 16
    %v3066 = vpop.permute.xlu0 %3065
    %3067 = vrot.lane.b32.xlu0 %v2750, 16
    %v3068 = vpop.permute.xlu0 %3067
    %3069 = vrot.lane.b32.xlu0 %v2785, 16
    %v3070 = vpop.permute.xlu0 %3069
    %3071 = vrot.lane.b32.xlu0 %v2787, 16
    %v3072 = vpop.permute.xlu0 %3071
    %3073 = vrot.lane.b32.xlu0 %v2790, 16
    %v3074 = vpop.permute.xlu0 %3073
    %3087 = vrot.lane.b32.xlu0 %v2985, 24
    %v3088 = vpop.permute.xlu0 %3087
    %3089 = vrot.lane.b32.xlu0 %v2987, 24
    %v3090 = vpop.permute.xlu0 %3089
    %3091 = vrot.lane.b32.xlu0 %v2990, 24
    %v3092 = vpop.permute.xlu0 %3091
    %3093 = vrot.lane.b32.xlu0 %v3025, 24
    %v3094 = vpop.permute.xlu0 %3093
    %3095 = vrot.lane.b32.xlu0 %v3027, 24
    %v3096 = vpop.permute.xlu0 %3095
    %3097 = vrot.lane.b32.xlu0 %v3030, 24
    %v3098 = vpop.permute.xlu0 %3097
    %v3105 = vsel %vm475, %v2265, %v3040
    %v3106 = vsel %vm475, %v2267, %v3042
    %v3107 = vsel %vm475, %v2270, %v3044
    %v3108 = vsel %vm475, %v2305, %v3046
    %v3109 = vsel %vm475, %v2307, %v3048
    %v3110 = vsel %vm475, %v2310, %v3050
    %v3111 = vsel %vm1514, %v3105, %v3064
    %v3112 = vsel %vm1514, %v3106, %v3066
    %v3113 = vsel %vm1514, %v3107, %v3068
    %v3114 = vsel %vm1514, %v3108, %v3070
    %v3115 = vsel %vm1514, %v3109, %v3072
    %v3116 = vsel %vm1514, %v3110, %v3074
    %v3117 = vsel %vm194, %v3111, %v3088
    %v3118 = vsel %vm194, %v3112, %v3090
    %v3119 = vsel %vm194, %v3113, %v3092
    %v3120 = vsel %vm194, %v3114, %v3094
    %v3121 = vsel %vm194, %v3115, %v3096
    %v3122 = vsel %vm194, %v3116, %v3098
    %v3123 = vpack.c.bf16 %v3118, %v3117
    %v3124 = vpack.c.bf16 %v3120, %v3119
    %v3125 = vpack.c.bf16 %v3122, %v3121
    %v3126 = vperm.slane %v1858, 1
    %3127 = vrot.lane.b32.xlu0 %v2022, 32
    %v3128 = vpop.permute.xlu0 %3127
    %3129 = vrot.lane.b32.xlu0 %v2023, 32
    %v3130 = vpop.permute.xlu0 %3129
    %v3134 = vsel %vm254, %v3123, 0
    %v3137 = vsel %vm254, %v3124, 0
    %v3140 = vsel %vm254, %v3125, 0
    %3142 = vmatpush.bf16.msra.mxu0 0
    %3143 = vmatpush.bf16.msra.mxu0 0
    %3144 = vmatpush.bf16.msra.mxu0 0
    %3145 = vmatpush.bf16.msra.mxu0 0
    %3146 = vmatpush.bf16.msra.mxu0 0
    %3147 = vmatpush.bf16.msra.mxu0 0
    %3148 = vmatpush.bf16.msra.mxu0 %v3130
    %3149 = vmatpush.bf16.msra.mxu0 %v3128
    %3150 = vmatmul.bf16.gmra.mxu0 %v3134
    %v3151 = vpop.f32.mrf.mxu0
    %v3152 = vadd.f32 %v3126, %v3151
    %v3153 = vpop.f32.mrf.mxu0
    %v3154 = vadd.f32 %v3126, %v3153
    %3155 = vmatmul.bf16.gmra.mxu0 %v3137
    %v3156 = vpop.f32.mrf.mxu0
    %v3157 = vadd.f32 %v3126, %v3156
    %v3158 = vpop.f32.mrf.mxu0
    %v3159 = vadd.f32 %v3126, %v3158
    %3160 = vmatmul.bf16.gmra.mxu0 %v3140
    %v3161 = vpop.f32.mrf.mxu0
    %v3162 = vadd.f32 %v3126, %v3161
    %v3163 = vpop.f32.mrf.mxu0
    %v3164 = vadd.f32 %v3126, %v3163
    %3165 = vdwg.mxu0
    %v3166 = vadd.f32 %v1851, %v3152
    %v3167 = vadd.f32 %v1852, %v3154
    %v3168 = vadd.f32 %v1853, %v3157
    %v3169 = vadd.f32 %v1854, %v3159
    %v3170 = vadd.f32 %v1855, %v3162
    %v3171 = vadd.f32 %v1856, %v3164
    %v3172 = vsel %vm254, %v3166, 0.0
    %3173 = vadd.xlane.f32.xlu0 %v3172
    %v3174 = vpop.xlane.xlu0 %3173
    %v3175 = vsel %vm254, %v3167, 0.0
    %3176 = vadd.xlane.f32.xlu0 %v3175
    %v3177 = vpop.xlane.xlu0 %3176
    %v3178 = vsel %vm254, %v3168, 0.0
    %3179 = vadd.xlane.f32.xlu0 %v3178
    %v3180 = vpop.xlane.xlu0 %3179
    %v3181 = vsel %vm254, %v3169, 0.0
    %3182 = vadd.xlane.f32.xlu0 %v3181
    %v3183 = vpop.xlane.xlu0 %3182
    %v3184 = vsel %vm254, %v3170, 0.0
    %3185 = vadd.xlane.f32.xlu0 %v3184
    %v3186 = vpop.xlane.xlu0 %3185
    %v3187 = vsel %vm254, %v3171, 0.0
    %3188 = vadd.xlane.f32.xlu0 %v3187
    %v3189 = vpop.xlane.xlu0 %3188
    %v3190 = vmul.f32 %v3174, %v279
    %v3191 = vmul.f32 %v3177, %v279
    %v3192 = vmul.f32 %v3180, %v279
    %v3193 = vmul.f32 %v3183, %v279
    %v3194 = vmul.f32 %v3186, %v279
    %v3195 = vmul.f32 %v3189, %v279
    %v3196 = vsub.f32 %v3166, %v3190
    %v3197 = vsub.f32 %v3167, %v3191
    %v3198 = vsub.f32 %v3168, %v3192
    %v3199 = vsub.f32 %v3169, %v3193
    %v3200 = vsub.f32 %v3170, %v3194
    %v3201 = vsub.f32 %v3171, %v3195
    %v3202 = vmul.f32 %v3196, %v3196
    %v3203 = vmul.f32 %v3197, %v3197
    %v3204 = vmul.f32 %v3198, %v3198
    %v3205 = vmul.f32 %v3199, %v3199
    %v3206 = vmul.f32 %v3200, %v3200
    %v3207 = vmul.f32 %v3201, %v3201
    %v3208 = vsel %vm254, %v3202, 0.0
    %3209 = vadd.xlane.f32.xlu0 %v3208
    %v3210 = vpop.xlane.xlu0 %3209
    %v3211 = vsel %vm254, %v3203, 0.0
    %3212 = vadd.xlane.f32.xlu0 %v3211
    %v3213 = vpop.xlane.xlu0 %3212
    %v3214 = vsel %vm254, %v3204, 0.0
    %3215 = vadd.xlane.f32.xlu0 %v3214
    %v3216 = vpop.xlane.xlu0 %3215
    %v3217 = vsel %vm254, %v3205, 0.0
    %3218 = vadd.xlane.f32.xlu0 %v3217
    %v3219 = vpop.xlane.xlu0 %3218
    %v3220 = vsel %vm254, %v3206, 0.0
    %3221 = vadd.xlane.f32.xlu0 %v3220
    %v3222 = vpop.xlane.xlu0 %3221
    %v3223 = vsel %vm254, %v3207, 0.0
    %3224 = vadd.xlane.f32.xlu0 %v3223
    %v3225 = vpop.xlane.xlu0 %3224
    %v3226 = vmul.f32 %v3210, %v279
    %v3227 = vmul.f32 %v3213, %v279
    %v3228 = vmul.f32 %v3216, %v279
    %v3229 = vmul.f32 %v3219, %v279
    %v3230 = vmul.f32 %v3222, %v279
    %v3231 = vmul.f32 %v3225, %v279
    %v3232 = vperm.slane %v1858, 6
    %v3233 = vmul.f32 %v3232, %v3196
    %v3234 = vmul.f32 %v3232, %v3197
    %v3235 = vmul.f32 %v3232, %v3198
    %v3236 = vmul.f32 %v3232, %v3199
    %v3237 = vmul.f32 %v3232, %v3200
    %v3238 = vmul.f32 %v3232, %v3201
    %v3239 = vadd.f32 %v3226, 1e-06
    %v3240 = vadd.f32 %v3227, 1e-06
    %v3241 = vadd.f32 %v3228, 1e-06
    %v3242 = vadd.f32 %v3229, 1e-06
    %v3243 = vadd.f32 %v3230, 1e-06
    %v3244 = vadd.f32 %v3231, 1e-06
    %v3245 = vrsqrt.pop %v3239
    %v3246 = vmul.f32 %v3245, %v3239
    %v3247 = vmul.f32 %v3246, %v3245
    %v3248 = vmul.f32 0.5, %v3247
    %v3249 = vsub.f32 1.5, %v3248
    %v3250 = vmul.f32 %v3245, %v3249
    %vm3251 = vweird.f32 %v3239
    %vm3252 = vweird.f32 %v3245
    %vm3253 = vmor %vm3251, %vm3252
    %v3254 = vsel %vm3253, %v3245, %v3250
    %v3255 = vrsqrt.pop %v3240
    %v3256 = vmul.f32 %v3255, %v3240
    %v3257 = vmul.f32 %v3256, %v3255
    %v3258 = vmul.f32 0.5, %v3257
    %v3259 = vsub.f32 1.5, %v3258
    %v3260 = vmul.f32 %v3255, %v3259
    %vm3261 = vweird.f32 %v3240
    %vm3262 = vweird.f32 %v3255
    %vm3263 = vmor %vm3261, %vm3262
    %v3264 = vsel %vm3263, %v3255, %v3260
    %v3265 = vrsqrt.pop %v3241
    %v3266 = vmul.f32 %v3265, %v3241
    %v3267 = vmul.f32 %v3266, %v3265
    %v3268 = vmul.f32 0.5, %v3267
    %v3269 = vsub.f32 1.5, %v3268
    %v3270 = vmul.f32 %v3265, %v3269
    %vm3271 = vweird.f32 %v3241
    %vm3272 = vweird.f32 %v3265
    %vm3273 = vmor %vm3271, %vm3272
    %v3274 = vsel %vm3273, %v3265, %v3270
    %v3275 = vrsqrt.pop %v3242
    %v3276 = vmul.f32 %v3275, %v3242
    %v3277 = vmul.f32 %v3276, %v3275
    %v3278 = vmul.f32 0.5, %v3277
    %v3279 = vsub.f32 1.5, %v3278
    %v3280 = vmul.f32 %v3275, %v3279
    %vm3281 = vweird.f32 %v3242
    %vm3282 = vweird.f32 %v3275
    %vm3283 = vmor %vm3281, %vm3282
    %v3284 = vsel %vm3283, %v3275, %v3280
    %v3285 = vrsqrt.pop %v3243
    %v3286 = vmul.f32 %v3285, %v3243
    %v3287 = vmul.f32 %v3286, %v3285
    %v3288 = vmul.f32 0.5, %v3287
    %v3289 = vsub.f32 1.5, %v3288
    %v3290 = vmul.f32 %v3285, %v3289
    %vm3291 = vweird.f32 %v3243
    %vm3292 = vweird.f32 %v3285
    %vm3293 = vmor %vm3291, %vm3292
    %v3294 = vsel %vm3293, %v3285, %v3290
    %v3295 = vrsqrt.pop %v3244
    %v3296 = vmul.f32 %v3295, %v3244
    %v3297 = vmul.f32 %v3296, %v3295
    %v3298 = vmul.f32 0.5, %v3297
    %v3299 = vsub.f32 1.5, %v3298
    %v3300 = vmul.f32 %v3295, %v3299
    %vm3301 = vweird.f32 %v3244
    %vm3302 = vweird.f32 %v3295
    %vm3303 = vmor %vm3301, %vm3302
    %v3304 = vsel %vm3303, %v3295, %v3300
    %v3305 = vmul.f32 %v3233, %v3254
    %v3306 = vmul.f32 %v3234, %v3264
    %v3307 = vmul.f32 %v3235, %v3274
    %v3308 = vmul.f32 %v3236, %v3284
    %v3309 = vmul.f32 %v3237, %v3294
    %v3310 = vmul.f32 %v3238, %v3304
    %v3311 = vperm.slane %v1858, 7
    %v3312 = vadd.f32 %v3305, %v3311
    %v3313 = vadd.f32 %v3306, %v3311
    %v3314 = vadd.f32 %v3307, %v3311
    %v3315 = vadd.f32 %v3308, %v3311
    %v3316 = vadd.f32 %v3309, %v3311
    %v3317 = vadd.f32 %v3310, %v3311
    %v3318 = vpack.c.bf16 %v3313, %v3312
    %v3319 = vpack.c.bf16 %v3315, %v3314
    %v3320 = vpack.c.bf16 %v3317, %v3316
    %s3321 = scalar_lea.vmem %s6, 16
    %v3322 = vld [vmem:[%s3321] sm:$0xf]
    %v3323 = vld [vmem:[%s3321 + $0x4] sm:$0xf]
    %v3324 = vld [vmem:[%s3321 + $0x8] sm:$0xf]
    %v3325 = vld [vmem:[%s3321 + $0xc] sm:$0xf]
    %v3326 = vperm.slane %v1858, 2
    %v3331 = vunpack.c.l.b16 %v3322
    %v3332 = vunpack.c.l.b16 %v3323
    %v3333 = vunpack.c.l.b16 %v3324
    %v3334 = vunpack.c.l.b16 %v3325
    %v3335 = vpack.c.b16 %v3332, %v3331
    %v3336 = vpack.c.b16 %v3334, %v3333
    %v3340 = vsel %vm254, %v3318, 0
    %v3343 = vsel %vm254, %v3319, 0
    %v3346 = vsel %vm254, %v3320, 0
    %3348 = vmatpush.bf16.msra.mxu0 0
    %3349 = vmatpush.bf16.msra.mxu0 0
    %3350 = vmatpush.bf16.msra.mxu0 0
    %3351 = vmatpush.bf16.msra.mxu0 0
    %3352 = vmatpush.bf16.msra.mxu0 0
    %3353 = vmatpush.bf16.msra.mxu0 0
    %3354 = vmatpush.bf16.msra.mxu0 %v3336
    %3355 = vmatpush.bf16.msra.mxu0 %v3335
    %3356 = vmatmul.bf16.gmra.mxu0 %v3340
    %v3357 = vpop.f32.mrf.mxu0
    %v3358 = vadd.f32 %v3326, %v3357
    %v3359 = vpop.f32.mrf.mxu0
    %v3360 = vadd.f32 %v3326, %v3359
    %3361 = vmatmul.bf16.gmra.mxu0 %v3343
    %v3362 = vpop.f32.mrf.mxu0
    %v3363 = vadd.f32 %v3326, %v3362
    %v3364 = vpop.f32.mrf.mxu0
    %v3365 = vadd.f32 %v3326, %v3364
    %3366 = vmatmul.bf16.gmra.mxu0 %v3346
    %v3367 = vpop.f32.mrf.mxu0
    %v3368 = vadd.f32 %v3326, %v3367
    %v3369 = vpop.f32.mrf.mxu0
    %v3370 = vadd.f32 %v3326, %v3369
    %3371 = vdwg.mxu0
    %v3372 = vmax.f32 %v3358, 0.0
    %v3373 = vmax.f32 %v3360, 0.0
    %v3374 = vmax.f32 %v3363, 0.0
    %v3375 = vmax.f32 %v3365, 0.0
    %v3376 = vmax.f32 %v3368, 0.0
    %v3377 = vmax.f32 %v3370, 0.0
    %v3378 = vpack.c.bf16 %v3373, %v3372
    %v3379 = vpack.c.bf16 %v3375, %v3374
    %v3380 = vpack.c.bf16 %v3377, %v3376
    %s3381 = scalar_lea.vmem %s7, 32
    %v3382 = vld [vmem:[%s3381] sm:$0xf]
    %v3383 = vld [vmem:[%s3381 + $0x4] sm:$0xf]
    %v3384 = vld [vmem:[%s3381 + $0x8] sm:$0xf]
    %v3385 = vld [vmem:[%s3381 + $0xc] sm:$0xf]
    %v3386 = vld [vmem:[%s3381 + $0x10] sm:$0xf]
    %v3387 = vld [vmem:[%s3381 + $0x14] sm:$0xf]
    %v3388 = vld [vmem:[%s3381 + $0x18] sm:$0xf]
    %v3389 = vld [vmem:[%s3381 + $0x1c] sm:$0xf]
    %v3390 = vperm.slane %v1858, 3
    %v3399 = vunpack.c.l.b16 %v3382
    %v3400 = vunpack.c.l.b16 %v3383
    %v3401 = vunpack.c.l.b16 %v3384
    %v3402 = vunpack.c.l.b16 %v3385
    %v3403 = vunpack.c.l.b16 %v3386
    %v3404 = vunpack.c.l.b16 %v3387
    %v3405 = vunpack.c.l.b16 %v3388
    %v3406 = vunpack.c.l.b16 %v3389
    %v3407 = vpack.c.b16 %v3400, %v3399
    %v3408 = vpack.c.b16 %v3402, %v3401
    %v3409 = vpack.c.b16 %v3404, %v3403
    %v3410 = vpack.c.b16 %v3406, %v3405
    %v3416 = vsel %vm1817, %v3378, 0
    %v3419 = vsel %vm1817, %v3379, 0
    %v3422 = vsel %vm1817, %v3380, 0
    %3424 = vmatpush.bf16.msra.mxu0 0
    %3425 = vmatpush.bf16.msra.mxu0 0
    %3426 = vmatpush.bf16.msra.mxu0 0
    %3427 = vmatpush.bf16.msra.mxu0 0
    %3428 = vmatpush.bf16.msra.mxu0 %v3410
    %3429 = vmatpush.bf16.msra.mxu0 %v3409
    %3430 = vmatpush.bf16.msra.mxu0 %v3408
    %3431 = vmatpush.bf16.msra.mxu0 %v3407
    %3432 = vmatmul.bf16.gmra.mxu0 %v3416
    %v3433 = vpop.f32.mrf.mxu0
    %v3434 = vadd.f32 %v3390, %v3433
    %v3435 = vpop.f32.mrf.mxu0
    %v3436 = vadd.f32 %v3390, %v3435
    %3437 = vmatmul.bf16.gmra.mxu0 %v3419
    %v3438 = vpop.f32.mrf.mxu0
    %v3439 = vadd.f32 %v3390, %v3438
    %v3440 = vpop.f32.mrf.mxu0
    %v3441 = vadd.f32 %v3390, %v3440
    %3442 = vmatmul.bf16.gmra.mxu0 %v3422
    %v3443 = vpop.f32.mrf.mxu0
    %v3444 = vadd.f32 %v3390, %v3443
    %v3445 = vpop.f32.mrf.mxu0
    %v3446 = vadd.f32 %v3390, %v3445
    %3447 = vdwg.mxu0
    %v3448 = vadd.f32 %v3166, %v3434
    %v3449 = vadd.f32 %v3167, %v3436
    %v3450 = vadd.f32 %v3168, %v3439
    %v3451 = vadd.f32 %v3169, %v3441
    %v3452 = vadd.f32 %v3170, %v3444
    %v3453 = vadd.f32 %v3171, %v3446
    %s3454 = scalar_lea.vmem %s8, 16
    %v3455 = vld [vmem:[%s3454] sm:$0xff]
    %s3456 = scalar_lea.vmem %s5, 32
    %v3457 = vld [vmem:[%s3456] sm:$0xf]
    %v3458 = vld [vmem:[%s3456 + $0x4] sm:$0xf]
    %v3459 = vld [vmem:[%s3456 + $0x8] sm:$0xf]
    %v3460 = vld [vmem:[%s3456 + $0xc] sm:$0xf]
    %v3461 = vsel %vm254, %v3448, 0.0
    %3462 = vadd.xlane.f32.xlu0 %v3461
    %v3463 = vpop.xlane.xlu0 %3462
    %v3464 = vsel %vm254, %v3449, 0.0
    %3465 = vadd.xlane.f32.xlu0 %v3464
    %v3466 = vpop.xlane.xlu0 %3465
    %v3467 = vsel %vm254, %v3450, 0.0
    %3468 = vadd.xlane.f32.xlu0 %v3467
    %v3469 = vpop.xlane.xlu0 %3468
    %v3470 = vsel %vm254, %v3451, 0.0
    %3471 = vadd.xlane.f32.xlu0 %v3470
    %v3472 = vpop.xlane.xlu0 %3471
    %v3473 = vsel %vm254, %v3452, 0.0
    %3474 = vadd.xlane.f32.xlu0 %v3473
    %v3475 = vpop.xlane.xlu0 %3474
    %v3476 = vsel %vm254, %v3453, 0.0
    %3477 = vadd.xlane.f32.xlu0 %v3476
    %v3478 = vpop.xlane.xlu0 %3477
    %v3479 = vmul.f32 %v3463, %v279
    %v3480 = vmul.f32 %v3466, %v279
    %v3481 = vmul.f32 %v3469, %v279
    %v3482 = vmul.f32 %v3472, %v279
    %v3483 = vmul.f32 %v3475, %v279
    %v3484 = vmul.f32 %v3478, %v279
    %v3485 = vsub.f32 %v3448, %v3479
    %v3486 = vsub.f32 %v3449, %v3480
    %v3487 = vsub.f32 %v3450, %v3481
    %v3488 = vsub.f32 %v3451, %v3482
    %v3489 = vsub.f32 %v3452, %v3483
    %v3490 = vsub.f32 %v3453, %v3484
    %v3491 = vmul.f32 %v3485, %v3485
    %v3492 = vmul.f32 %v3486, %v3486
    %v3493 = vmul.f32 %v3487, %v3487
    %v3494 = vmul.f32 %v3488, %v3488
    %v3495 = vmul.f32 %v3489, %v3489
    %v3496 = vmul.f32 %v3490, %v3490
    %v3497 = vsel %vm254, %v3491, 0.0
    %3498 = vadd.xlane.f32.xlu0 %v3497
    %v3499 = vpop.xlane.xlu0 %3498
    %v3500 = vsel %vm254, %v3492, 0.0
    %3501 = vadd.xlane.f32.xlu0 %v3500
    %v3502 = vpop.xlane.xlu0 %3501
    %v3503 = vsel %vm254, %v3493, 0.0
    %3504 = vadd.xlane.f32.xlu0 %v3503
    %v3505 = vpop.xlane.xlu0 %3504
    %v3506 = vsel %vm254, %v3494, 0.0
    %3507 = vadd.xlane.f32.xlu0 %v3506
    %v3508 = vpop.xlane.xlu0 %3507
    %v3509 = vsel %vm254, %v3495, 0.0
    %3510 = vadd.xlane.f32.xlu0 %v3509
    %v3511 = vpop.xlane.xlu0 %3510
    %v3512 = vsel %vm254, %v3496, 0.0
    %3513 = vadd.xlane.f32.xlu0 %v3512
    %v3514 = vpop.xlane.xlu0 %3513
    %v3515 = vmul.f32 %v3499, %v279
    %v3516 = vmul.f32 %v3502, %v279
    %v3517 = vmul.f32 %v3505, %v279
    %v3518 = vmul.f32 %v3508, %v279
    %v3519 = vmul.f32 %v3511, %v279
    %v3520 = vmul.f32 %v3514, %v279
    %v3521 = vperm.slane %v3455, 4
    %v3522 = vmul.f32 %v3521, %v3485
    %v3523 = vmul.f32 %v3521, %v3486
    %v3524 = vmul.f32 %v3521, %v3487
    %v3525 = vmul.f32 %v3521, %v3488
    %v3526 = vmul.f32 %v3521, %v3489
    %v3527 = vmul.f32 %v3521, %v3490
    %v3528 = vadd.f32 %v3515, 1e-06
    %v3529 = vadd.f32 %v3516, 1e-06
    %v3530 = vadd.f32 %v3517, 1e-06
    %v3531 = vadd.f32 %v3518, 1e-06
    %v3532 = vadd.f32 %v3519, 1e-06
    %v3533 = vadd.f32 %v3520, 1e-06
    %v3534 = vrsqrt.pop %v3528
    %v3535 = vmul.f32 %v3534, %v3528
    %v3536 = vmul.f32 %v3535, %v3534
    %v3537 = vmul.f32 0.5, %v3536
    %v3538 = vsub.f32 1.5, %v3537
    %v3539 = vmul.f32 %v3534, %v3538
    %vm3540 = vweird.f32 %v3528
    %vm3541 = vweird.f32 %v3534
    %vm3542 = vmor %vm3540, %vm3541
    %v3543 = vsel %vm3542, %v3534, %v3539
    %v3544 = vrsqrt.pop %v3529
    %v3545 = vmul.f32 %v3544, %v3529
    %v3546 = vmul.f32 %v3545, %v3544
    %v3547 = vmul.f32 0.5, %v3546
    %v3548 = vsub.f32 1.5, %v3547
    %v3549 = vmul.f32 %v3544, %v3548
    %vm3550 = vweird.f32 %v3529
    %vm3551 = vweird.f32 %v3544
    %vm3552 = vmor %vm3550, %vm3551
    %v3553 = vsel %vm3552, %v3544, %v3549
    %v3554 = vrsqrt.pop %v3530
    %v3555 = vmul.f32 %v3554, %v3530
    %v3556 = vmul.f32 %v3555, %v3554
    %v3557 = vmul.f32 0.5, %v3556
    %v3558 = vsub.f32 1.5, %v3557
    %v3559 = vmul.f32 %v3554, %v3558
    %vm3560 = vweird.f32 %v3530
    %vm3561 = vweird.f32 %v3554
    %vm3562 = vmor %vm3560, %vm3561
    %v3563 = vsel %vm3562, %v3554, %v3559
    %v3564 = vrsqrt.pop %v3531
    %v3565 = vmul.f32 %v3564, %v3531
    %v3566 = vmul.f32 %v3565, %v3564
    %v3567 = vmul.f32 0.5, %v3566
    %v3568 = vsub.f32 1.5, %v3567
    %v3569 = vmul.f32 %v3564, %v3568
    %vm3570 = vweird.f32 %v3531
    %vm3571 = vweird.f32 %v3564
    %vm3572 = vmor %vm3570, %vm3571
    %v3573 = vsel %vm3572, %v3564, %v3569
    %v3574 = vrsqrt.pop %v3532
    %v3575 = vmul.f32 %v3574, %v3532
    %v3576 = vmul.f32 %v3575, %v3574
    %v3577 = vmul.f32 0.5, %v3576
    %v3578 = vsub.f32 1.5, %v3577
    %v3579 = vmul.f32 %v3574, %v3578
    %vm3580 = vweird.f32 %v3532
    %vm3581 = vweird.f32 %v3574
    %vm3582 = vmor %vm3580, %vm3581
    %v3583 = vsel %vm3582, %v3574, %v3579
    %v3584 = vrsqrt.pop %v3533
    %v3585 = vmul.f32 %v3584, %v3533
    %v3586 = vmul.f32 %v3585, %v3584
    %v3587 = vmul.f32 0.5, %v3586
    %v3588 = vsub.f32 1.5, %v3587
    %v3589 = vmul.f32 %v3584, %v3588
    %vm3590 = vweird.f32 %v3533
    %vm3591 = vweird.f32 %v3584
    %vm3592 = vmor %vm3590, %vm3591
    %v3593 = vsel %vm3592, %v3584, %v3589
    %v3594 = vmul.f32 %v3522, %v3543
    %v3595 = vmul.f32 %v3523, %v3553
    %v3596 = vmul.f32 %v3524, %v3563
    %v3597 = vmul.f32 %v3525, %v3573
    %v3598 = vmul.f32 %v3526, %v3583
    %v3599 = vmul.f32 %v3527, %v3593
    %v3600 = vperm.slane %v3455, 5
    %v3601 = vadd.f32 %v3594, %v3600
    %v3602 = vadd.f32 %v3595, %v3600
    %v3603 = vadd.f32 %v3596, %v3600
    %v3604 = vadd.f32 %v3597, %v3600
    %v3605 = vadd.f32 %v3598, %v3600
    %v3606 = vadd.f32 %v3599, %v3600
    %v3607 = vpack.c.bf16 %v3602, %v3601
    %v3608 = vpack.c.bf16 %v3604, %v3603
    %v3609 = vpack.c.bf16 %v3606, %v3605
    %v3610 = vperm.slane %v3455, 0
    %v3615 = vunpack.c.l.b16 %v3457
    %v3616 = vunpack.c.l.b16 %v3458
    %v3617 = vunpack.c.l.b16 %v3459
    %v3618 = vunpack.c.l.b16 %v3460
    %v3619 = vpack.c.b16 %v3616, %v3615
    %v3620 = vpack.c.b16 %v3618, %v3617
    %v3624 = vsel %vm254, %v3607, 0
    %v3627 = vsel %vm254, %v3608, 0
    %v3630 = vsel %vm254, %v3609, 0
    %3632 = vmatpush.bf16.msra.mxu0 0
    %3633 = vmatpush.bf16.msra.mxu0 0
    %3634 = vmatpush.bf16.msra.mxu0 0
    %3635 = vmatpush.bf16.msra.mxu0 0
    %3636 = vmatpush.bf16.msra.mxu0 0
    %3637 = vmatpush.bf16.msra.mxu0 0
    %3638 = vmatpush.bf16.msra.mxu0 %v3620
    %3639 = vmatpush.bf16.msra.mxu0 %v3619
    %3640 = vmatmul.bf16.gmra.mxu0 %v3624
    %v3641 = vpop.f32.mrf.mxu0
    %v3642 = vadd.f32 %v3610, %v3641
    %v3643 = vpop.f32.mrf.mxu0
    %v3644 = vadd.f32 %v3610, %v3643
    %3645 = vmatmul.bf16.gmra.mxu0 %v3627
    %v3646 = vpop.f32.mrf.mxu0
    %v3647 = vadd.f32 %v3610, %v3646
    %v3648 = vpop.f32.mrf.mxu0
    %v3649 = vadd.f32 %v3610, %v3648
    %3650 = vmatmul.bf16.gmra.mxu0 %v3630
    %v3651 = vpop.f32.mrf.mxu0
    %v3652 = vadd.f32 %v3610, %v3651
    %v3653 = vpop.f32.mrf.mxu0
    %v3654 = vadd.f32 %v3610, %v3653
    %3655 = vdwg.mxu0
    %v3656 = vpack.c.bf16 %v3642, %v3642
    %v3657 = vpack.c.bf16 %v3644, %v3644
    %v3658 = vpack.c.bf16 %v3647, %v3647
    %v3659 = vpack.c.bf16 %v3649, %v3649
    %v3660 = vpack.c.bf16 %v3652, %v3652
    %v3661 = vpack.c.bf16 %v3654, %v3654
    %v3665 = vunpack.c.l.b16 %v3656
    %v3666 = vunpack.c.l.b16 %v3657
    %v3667 = vunpack.c.l.b16 %v3658
    %v3668 = vpack.c.b16 %v3666, %v3665
    %v3669 = vpack.c.b16 %v3667, %v3667
    %3670 = vrot.lane.b32.xlu0 %v3668, 96
    %v3671 = vpop.permute.xlu0 %3670
    %3672 = vrot.lane.b32.xlu0 %v3669, 96
    %v3673 = vpop.permute.xlu0 %3672
    %v3675 = vsel %vm475, %v3668, 0
    %v3678 = vsel %vm475, %v3669, 0
    %v3681 = vsel %vm475, %v3671, 0
    %v3684 = vsel %vm475, %v3673, 0
    %3686 = vmatpush.bf16.xpose.msra.mxu0 0
    %3687 = vmatpush.bf16.xpose.msra.mxu0 0
    %3688 = vmatpush.bf16.xpose.msra.mxu0 0
    %3689 = vmatpush.bf16.xpose.msra.mxu0 0
    %3690 = vmatpush.bf16.xpose.msra.mxu0 0
    %3691 = vmatpush.bf16.xpose.msra.mxu0 0
    %3692 = vmatpush.bf16.xpose.msra.mxu0 %v3684
    %3693 = vmatpush.bf16.xpose.msra.mxu0 %v3681
    %3694 = vmatmul.bf16.gmra.mxu0 %v3675
    %v3695 = vpop.f32.mrf.mxu0
    %v3696 = vadd.f32 0.0, %v3695
    %v3697 = vpop.f32.mrf.mxu0
    %v3698 = vadd.f32 0.0, %v3697
    %3699 = vmatmul.bf16.gmra.mxu0 %v3678
    %v3700 = vpop.f32.mrf.mxu0
    %v3701 = vadd.f32 0.0, %v3700
    %v3702 = vpop.f32.mrf.mxu0
    %3703 = vdwg.mxu0
    %v3707 = vunpack.c.l.b16 %v3659
    %v3708 = vunpack.c.l.b16 %v3660
    %v3709 = vunpack.c.l.b16 %v3661
    %v3710 = vpack.c.b16 %v3708, %v3707
    %v3711 = vpack.c.b16 %v3709, %v3709
    %3712 = vrot.lane.b32.xlu0 %v3710, 96
    %v3713 = vpop.permute.xlu0 %3712
    %3714 = vrot.lane.b32.xlu0 %v3711, 96
    %v3715 = vpop.permute.xlu0 %3714
    %v3717 = vsel %vm475, %v3710, 0
    %v3720 = vsel %vm475, %v3711, 0
    %v3723 = vsel %vm475, %v3713, 0
    %v3726 = vsel %vm475, %v3715, 0
    %3728 = vmatpush.bf16.xpose.msra.mxu0 0
    %3729 = vmatpush.bf16.xpose.msra.mxu0 0
    %3730 = vmatpush.bf16.xpose.msra.mxu0 0
    %3731 = vmatpush.bf16.xpose.msra.mxu0 0
    %3732 = vmatpush.bf16.xpose.msra.mxu0 0
    %3733 = vmatpush.bf16.xpose.msra.mxu0 0
    %3734 = vmatpush.bf16.xpose.msra.mxu0 %v3726
    %3735 = vmatpush.bf16.xpose.msra.mxu0 %v3723
    %3736 = vmatmul.bf16.gmra.mxu0 %v3717
    %v3737 = vpop.f32.mrf.mxu0
    %v3738 = vadd.f32 0.0, %v3737
    %v3739 = vpop.f32.mrf.mxu0
    %v3740 = vadd.f32 0.0, %v3739
    %3741 = vmatmul.bf16.gmra.mxu0 %v3720
    %v3742 = vpop.f32.mrf.mxu0
    %v3743 = vadd.f32 0.0, %v3742
    %v3744 = vpop.f32.mrf.mxu0
    %3745 = vdwg.mxu0
    %v3746 = vmul.f32 %v3696, 0.35355338
    %v3747 = vmul.f32 %v3698, 0.35355338
    %v3748 = vmul.f32 %v3701, 0.35355338
    %v3749 = vmul.f32 %v3738, 0.35355338
    %v3750 = vmul.f32 %v3740, 0.35355338
    %v3751 = vmul.f32 %v3743, 0.35355338
    %v3752 = vadd.f32 %v3746, %v554
    %v3753 = vadd.f32 %v3747, %v554
    %v3754 = vadd.f32 %v3748, %v554
    %v3755 = vadd.f32 %v3749, %v555
    %v3756 = vadd.f32 %v3750, %v555
    %v3757 = vadd.f32 %v3751, %v555
    %v3758 = vsel %vm194, %v3752, -inf
    %3759 = vmax.xlane.f32.xlu0 %v3758
    %v3760 = vpop.xlane.xlu0 %3759
    %v3761 = vsel %vm194, %v3753, -inf
    %3762 = vmax.xlane.f32.xlu0 %v3761
    %v3763 = vpop.xlane.xlu0 %3762
    %v3764 = vsel %vm194, %v3754, -inf
    %3765 = vmax.xlane.f32.xlu0 %v3764
    %v3766 = vpop.xlane.xlu0 %3765
    %v3767 = vsel %vm194, %v3755, -inf
    %3768 = vmax.xlane.f32.xlu0 %v3767
    %v3769 = vpop.xlane.xlu0 %3768
    %v3770 = vsel %vm194, %v3756, -inf
    %3771 = vmax.xlane.f32.xlu0 %v3770
    %v3772 = vpop.xlane.xlu0 %3771
    %v3773 = vsel %vm194, %v3757, -inf
    %3774 = vmax.xlane.f32.xlu0 %v3773
    %v3775 = vpop.xlane.xlu0 %3774
    %v3776 = vsub.f32 %v3752, %v3760
    %v3777 = vsub.f32 %v3753, %v3763
    %v3778 = vsub.f32 %v3754, %v3766
    %v3779 = vsub.f32 %v3755, %v3769
    %v3780 = vsub.f32 %v3756, %v3772
    %v3781 = vsub.f32 %v3757, %v3775
    %v3782 = vmul.f32 %v3776, 1.442695
    %v3783 = vpow.pop %v3782
    %v3784 = vmul.f32 %v3777, 1.442695
    %v3785 = vpow.pop %v3784
    %v3786 = vmul.f32 %v3778, 1.442695
    %v3787 = vpow.pop %v3786
    %v3788 = vmul.f32 %v3779, 1.442695
    %v3789 = vpow.pop %v3788
    %v3790 = vmul.f32 %v3780, 1.442695
    %v3791 = vpow.pop %v3790
    %v3792 = vmul.f32 %v3781, 1.442695
    %v3793 = vpow.pop %v3792
    %v3794 = vsel %vm194, %v3783, 0.0
    %3795 = vadd.xlane.f32.xlu0 %v3794
    %v3796 = vpop.xlane.xlu0 %3795
    %v3797 = vsel %vm194, %v3785, 0.0
    %3798 = vadd.xlane.f32.xlu0 %v3797
    %v3799 = vpop.xlane.xlu0 %3798
    %v3800 = vsel %vm194, %v3787, 0.0
    %3801 = vadd.xlane.f32.xlu0 %v3800
    %v3802 = vpop.xlane.xlu0 %3801
    %v3803 = vsel %vm194, %v3789, 0.0
    %3804 = vadd.xlane.f32.xlu0 %v3803
    %v3805 = vpop.xlane.xlu0 %3804
    %v3806 = vsel %vm194, %v3791, 0.0
    %3807 = vadd.xlane.f32.xlu0 %v3806
    %v3808 = vpop.xlane.xlu0 %3807
    %v3809 = vsel %vm194, %v3793, 0.0
    %3810 = vadd.xlane.f32.xlu0 %v3809
    %v3811 = vpop.xlane.xlu0 %3810
    %v3812 = vrcp.pop %v3796
    %v3813 = vrcp.pop %v3799
    %v3814 = vrcp.pop %v3802
    %v3815 = vrcp.pop %v3805
    %v3816 = vrcp.pop %v3808
    %v3817 = vrcp.pop %v3811
    %v3818 = vmul.f32 %v3783, %v3812
    %v3819 = vmul.f32 %v3785, %v3813
    %v3820 = vmul.f32 %v3787, %v3814
    %v3821 = vmul.f32 %v3789, %v3815
    %v3822 = vmul.f32 %v3791, %v3816
    %v3823 = vmul.f32 %v3793, %v3817
    %v3824 = vpack.c.bf16 %v3818, %v3818
    %v3825 = vpack.c.bf16 %v3819, %v3819
    %v3826 = vpack.c.bf16 %v3820, %v3820
    %v3827 = vpack.c.bf16 %v3821, %v3821
    %v3828 = vpack.c.bf16 %v3822, %v3822
    %v3829 = vpack.c.bf16 %v3823, %v3823
    %v3833 = vunpack.c.l.b16 %v3824
    %v3834 = vunpack.c.l.b16 %v3825
    %v3835 = vunpack.c.l.b16 %v3826
    %v3836 = vpack.c.b16 %v3834, %v3833
    %v3837 = vpack.c.b16 %v3835, %v3835
    %3838 = vrot.lane.b32.xlu0 %v3668, 64
    %v3839 = vpop.permute.xlu0 %3838
    %3840 = vrot.lane.b32.xlu0 %v3669, 64
    %v3841 = vpop.permute.xlu0 %3840
    %v3844 = vsel %vm194, %v3836, 0
    %v3847 = vsel %vm194, %v3837, 0
    %v3850 = vsel %vm201, %v3841, 0
    %3852 = vmatpush.bf16.msra.mxu0 0
    %3853 = vmatpush.bf16.msra.mxu0 0
    %3854 = vmatpush.bf16.msra.mxu0 0
    %3855 = vmatpush.bf16.msra.mxu0 0
    %3856 = vmatpush.bf16.msra.mxu0 0
    %3857 = vmatpush.bf16.msra.mxu0 0
    %3858 = vmatpush.bf16.msra.mxu0 %v3850
    %3859 = vmatpush.bf16.msra.mxu0 %v3839
    %3860 = vmatmul.bf16.gmra.mxu0 %v3844
    %v3861 = vpop.f32.mrf.mxu0
    %v3862 = vadd.f32 0.0, %v3861
    %v3863 = vpop.f32.mrf.mxu0
    %v3864 = vadd.f32 0.0, %v3863
    %3865 = vmatmul.bf16.gmra.mxu0 %v3847
    %v3866 = vpop.f32.mrf.mxu0
    %v3867 = vadd.f32 0.0, %v3866
    %v3868 = vpop.f32.mrf.mxu0
    %3869 = vdwg.mxu0
    %v3873 = vunpack.c.l.b16 %v3827
    %v3874 = vunpack.c.l.b16 %v3828
    %v3875 = vunpack.c.l.b16 %v3829
    %v3876 = vpack.c.b16 %v3874, %v3873
    %v3877 = vpack.c.b16 %v3875, %v3875
    %3878 = vrot.lane.b32.xlu0 %v3710, 64
    %v3879 = vpop.permute.xlu0 %3878
    %3880 = vrot.lane.b32.xlu0 %v3711, 64
    %v3881 = vpop.permute.xlu0 %3880
    %v3884 = vsel %vm194, %v3876, 0
    %v3887 = vsel %vm194, %v3877, 0
    %v3890 = vsel %vm201, %v3881, 0
    %3892 = vmatpush.bf16.msra.mxu0 0
    %3893 = vmatpush.bf16.msra.mxu0 0
    %3894 = vmatpush.bf16.msra.mxu0 0
    %3895 = vmatpush.bf16.msra.mxu0 0
    %3896 = vmatpush.bf16.msra.mxu0 0
    %3897 = vmatpush.bf16.msra.mxu0 0
    %3898 = vmatpush.bf16.msra.mxu0 %v3890
    %3899 = vmatpush.bf16.msra.mxu0 %v3879
    %3900 = vmatmul.bf16.gmra.mxu0 %v3884
    %v3901 = vpop.f32.mrf.mxu0
    %v3902 = vadd.f32 0.0, %v3901
    %v3903 = vpop.f32.mrf.mxu0
    %v3904 = vadd.f32 0.0, %v3903
    %3905 = vmatmul.bf16.gmra.mxu0 %v3887
    %v3906 = vpop.f32.mrf.mxu0
    %v3907 = vadd.f32 0.0, %v3906
    %v3908 = vpop.f32.mrf.mxu0
    %3909 = vdwg.mxu0
    %3910 = vrot.lane.b32.xlu0 %v3668, 120
    %v3911 = vpop.permute.xlu0 %3910
    %3912 = vrot.lane.b32.xlu0 %v3669, 120
    %v3913 = vpop.permute.xlu0 %3912
    %3914 = vrot.lane.b32.xlu0 %v3668, 88
    %v3915 = vpop.permute.xlu0 %3914
    %3916 = vrot.lane.b32.xlu0 %v3669, 88
    %v3917 = vpop.permute.xlu0 %3916
    %v3919 = vsel %vm475, %v3911, 0
    %v3922 = vsel %vm475, %v3913, 0
    %v3925 = vsel %vm475, %v3915, 0
    %v3928 = vsel %vm475, %v3917, 0
    %3930 = vmatpush.bf16.xpose.msra.mxu0 0
    %3931 = vmatpush.bf16.xpose.msra.mxu0 0
    %3932 = vmatpush.bf16.xpose.msra.mxu0 0
    %3933 = vmatpush.bf16.xpose.msra.mxu0 0
    %3934 = vmatpush.bf16.xpose.msra.mxu0 0
    %3935 = vmatpush.bf16.xpose.msra.mxu0 0
    %3936 = vmatpush.bf16.xpose.msra.mxu0 %v3928
    %3937 = vmatpush.bf16.xpose.msra.mxu0 %v3925
    %3938 = vmatmul.bf16.gmra.mxu0 %v3919
    %v3939 = vpop.f32.mrf.mxu0
    %v3940 = vadd.f32 0.0, %v3939
    %v3941 = vpop.f32.mrf.mxu0
    %v3942 = vadd.f32 0.0, %v3941
    %3943 = vmatmul.bf16.gmra.mxu0 %v3922
    %v3944 = vpop.f32.mrf.mxu0
    %v3945 = vadd.f32 0.0, %v3944
    %v3946 = vpop.f32.mrf.mxu0
    %3947 = vdwg.mxu0
    %3948 = vrot.lane.b32.xlu0 %v3710, 120
    %v3949 = vpop.permute.xlu0 %3948
    %3950 = vrot.lane.b32.xlu0 %v3711, 120
    %v3951 = vpop.permute.xlu0 %3950
    %3952 = vrot.lane.b32.xlu0 %v3710, 88
    %v3953 = vpop.permute.xlu0 %3952
    %3954 = vrot.lane.b32.xlu0 %v3711, 88
    %v3955 = vpop.permute.xlu0 %3954
    %v3957 = vsel %vm475, %v3949, 0
    %v3960 = vsel %vm475, %v3951, 0
    %v3963 = vsel %vm475, %v3953, 0
    %v3966 = vsel %vm475, %v3955, 0
    %3968 = vmatpush.bf16.xpose.msra.mxu0 0
    %3969 = vmatpush.bf16.xpose.msra.mxu0 0
    %3970 = vmatpush.bf16.xpose.msra.mxu0 0
    %3971 = vmatpush.bf16.xpose.msra.mxu0 0
    %3972 = vmatpush.bf16.xpose.msra.mxu0 0
    %3973 = vmatpush.bf16.xpose.msra.mxu0 0
    %3974 = vmatpush.bf16.xpose.msra.mxu0 %v3966
    %3975 = vmatpush.bf16.xpose.msra.mxu0 %v3963
    %3976 = vmatmul.bf16.gmra.mxu0 %v3957
    %v3977 = vpop.f32.mrf.mxu0
    %v3978 = vadd.f32 0.0, %v3977
    %v3979 = vpop.f32.mrf.mxu0
    %v3980 = vadd.f32 0.0, %v3979
    %3981 = vmatmul.bf16.gmra.mxu0 %v3960
    %v3982 = vpop.f32.mrf.mxu0
    %v3983 = vadd.f32 0.0, %v3982
    %v3984 = vpop.f32.mrf.mxu0
    %3985 = vdwg.mxu0
    %v3986 = vmul.f32 %v3940, 0.35355338
    %v3987 = vmul.f32 %v3942, 0.35355338
    %v3988 = vmul.f32 %v3945, 0.35355338
    %v3989 = vmul.f32 %v3978, 0.35355338
    %v3990 = vmul.f32 %v3980, 0.35355338
    %v3991 = vmul.f32 %v3983, 0.35355338
    %v3992 = vadd.f32 %v3986, %v554
    %v3993 = vadd.f32 %v3987, %v554
    %v3994 = vadd.f32 %v3988, %v554
    %v3995 = vadd.f32 %v3989, %v555
    %v3996 = vadd.f32 %v3990, %v555
    %v3997 = vadd.f32 %v3991, %v555
    %v3998 = vsel %vm194, %v3992, -inf
    %3999 = vmax.xlane.f32.xlu0 %v3998
    %v4000 = vpop.xlane.xlu0 %3999
    %v4001 = vsel %vm194, %v3993, -inf
    %4002 = vmax.xlane.f32.xlu0 %v4001
    %v4003 = vpop.xlane.xlu0 %4002
    %v4004 = vsel %vm194, %v3994, -inf
    %4005 = vmax.xlane.f32.xlu0 %v4004
    %v4006 = vpop.xlane.xlu0 %4005
    %v4007 = vsel %vm194, %v3995, -inf
    %4008 = vmax.xlane.f32.xlu0 %v4007
    %v4009 = vpop.xlane.xlu0 %4008
    %v4010 = vsel %vm194, %v3996, -inf
    %4011 = vmax.xlane.f32.xlu0 %v4010
    %v4012 = vpop.xlane.xlu0 %4011
    %v4013 = vsel %vm194, %v3997, -inf
    %4014 = vmax.xlane.f32.xlu0 %v4013
    %v4015 = vpop.xlane.xlu0 %4014
    %v4016 = vsub.f32 %v3992, %v4000
    %v4017 = vsub.f32 %v3993, %v4003
    %v4018 = vsub.f32 %v3994, %v4006
    %v4019 = vsub.f32 %v3995, %v4009
    %v4020 = vsub.f32 %v3996, %v4012
    %v4021 = vsub.f32 %v3997, %v4015
    %v4022 = vmul.f32 %v4016, 1.442695
    %v4023 = vpow.pop %v4022
    %v4024 = vmul.f32 %v4017, 1.442695
    %v4025 = vpow.pop %v4024
    %v4026 = vmul.f32 %v4018, 1.442695
    %v4027 = vpow.pop %v4026
    %v4028 = vmul.f32 %v4019, 1.442695
    %v4029 = vpow.pop %v4028
    %v4030 = vmul.f32 %v4020, 1.442695
    %v4031 = vpow.pop %v4030
    %v4032 = vmul.f32 %v4021, 1.442695
    %v4033 = vpow.pop %v4032
    %v4034 = vsel %vm194, %v4023, 0.0
    %4035 = vadd.xlane.f32.xlu0 %v4034
    %v4036 = vpop.xlane.xlu0 %4035
    %v4037 = vsel %vm194, %v4025, 0.0
    %4038 = vadd.xlane.f32.xlu0 %v4037
    %v4039 = vpop.xlane.xlu0 %4038
    %v4040 = vsel %vm194, %v4027, 0.0
    %4041 = vadd.xlane.f32.xlu0 %v4040
    %v4042 = vpop.xlane.xlu0 %4041
    %v4043 = vsel %vm194, %v4029, 0.0
    %4044 = vadd.xlane.f32.xlu0 %v4043
    %v4045 = vpop.xlane.xlu0 %4044
    %v4046 = vsel %vm194, %v4031, 0.0
    %4047 = vadd.xlane.f32.xlu0 %v4046
    %v4048 = vpop.xlane.xlu0 %4047
    %v4049 = vsel %vm194, %v4033, 0.0
    %4050 = vadd.xlane.f32.xlu0 %v4049
    %v4051 = vpop.xlane.xlu0 %4050
    %v4052 = vrcp.pop %v4036
    %v4053 = vrcp.pop %v4039
    %v4054 = vrcp.pop %v4042
    %v4055 = vrcp.pop %v4045
    %v4056 = vrcp.pop %v4048
    %v4057 = vrcp.pop %v4051
    %v4058 = vmul.f32 %v4023, %v4052
    %v4059 = vmul.f32 %v4025, %v4053
    %v4060 = vmul.f32 %v4027, %v4054
    %v4061 = vmul.f32 %v4029, %v4055
    %v4062 = vmul.f32 %v4031, %v4056
    %v4063 = vmul.f32 %v4033, %v4057
    %v4064 = vpack.c.bf16 %v4058, %v4058
    %v4065 = vpack.c.bf16 %v4059, %v4059
    %v4066 = vpack.c.bf16 %v4060, %v4060
    %v4067 = vpack.c.bf16 %v4061, %v4061
    %v4068 = vpack.c.bf16 %v4062, %v4062
    %v4069 = vpack.c.bf16 %v4063, %v4063
    %v4073 = vunpack.c.l.b16 %v4064
    %v4074 = vunpack.c.l.b16 %v4065
    %v4075 = vunpack.c.l.b16 %v4066
    %v4076 = vpack.c.b16 %v4074, %v4073
    %v4077 = vpack.c.b16 %v4075, %v4075
    %4078 = vrot.lane.b32.xlu0 %v3668, 56
    %v4079 = vpop.permute.xlu0 %4078
    %4080 = vrot.lane.b32.xlu0 %v3669, 56
    %v4081 = vpop.permute.xlu0 %4080
    %v4084 = vsel %vm194, %v4076, 0
    %v4087 = vsel %vm194, %v4077, 0
    %v4090 = vsel %vm201, %v4081, 0
    %4092 = vmatpush.bf16.msra.mxu0 0
    %4093 = vmatpush.bf16.msra.mxu0 0
    %4094 = vmatpush.bf16.msra.mxu0 0
    %4095 = vmatpush.bf16.msra.mxu0 0
    %4096 = vmatpush.bf16.msra.mxu0 0
    %4097 = vmatpush.bf16.msra.mxu0 0
    %4098 = vmatpush.bf16.msra.mxu0 %v4090
    %4099 = vmatpush.bf16.msra.mxu0 %v4079
    %4100 = vmatmul.bf16.gmra.mxu0 %v4084
    %v4101 = vpop.f32.mrf.mxu0
    %v4102 = vadd.f32 0.0, %v4101
    %v4103 = vpop.f32.mrf.mxu0
    %v4104 = vadd.f32 0.0, %v4103
    %4105 = vmatmul.bf16.gmra.mxu0 %v4087
    %v4106 = vpop.f32.mrf.mxu0
    %v4107 = vadd.f32 0.0, %v4106
    %v4108 = vpop.f32.mrf.mxu0
    %4109 = vdwg.mxu0
    %v4113 = vunpack.c.l.b16 %v4067
    %v4114 = vunpack.c.l.b16 %v4068
    %v4115 = vunpack.c.l.b16 %v4069
    %v4116 = vpack.c.b16 %v4114, %v4113
    %v4117 = vpack.c.b16 %v4115, %v4115
    %4118 = vrot.lane.b32.xlu0 %v3710, 56
    %v4119 = vpop.permute.xlu0 %4118
    %4120 = vrot.lane.b32.xlu0 %v3711, 56
    %v4121 = vpop.permute.xlu0 %4120
    %v4124 = vsel %vm194, %v4116, 0
    %v4127 = vsel %vm194, %v4117, 0
    %v4130 = vsel %vm201, %v4121, 0
    %4132 = vmatpush.bf16.msra.mxu0 0
    %4133 = vmatpush.bf16.msra.mxu0 0
    %4134 = vmatpush.bf16.msra.mxu0 0
    %4135 = vmatpush.bf16.msra.mxu0 0
    %4136 = vmatpush.bf16.msra.mxu0 0
    %4137 = vmatpush.bf16.msra.mxu0 0
    %4138 = vmatpush.bf16.msra.mxu0 %v4130
    %4139 = vmatpush.bf16.msra.mxu0 %v4119
    %4140 = vmatmul.bf16.gmra.mxu0 %v4124
    %v4141 = vpop.f32.mrf.mxu0
    %v4142 = vadd.f32 0.0, %v4141
    %v4143 = vpop.f32.mrf.mxu0
    %v4144 = vadd.f32 0.0, %v4143
    %4145 = vmatmul.bf16.gmra.mxu0 %v4127
    %v4146 = vpop.f32.mrf.mxu0
    %v4147 = vadd.f32 0.0, %v4146
    %v4148 = vpop.f32.mrf.mxu0
    %4149 = vdwg.mxu0
    %4150 = vrot.lane.b32.xlu0 %v3668, 112
    %v4151 = vpop.permute.xlu0 %4150
    %4152 = vrot.lane.b32.xlu0 %v3669, 112
    %v4153 = vpop.permute.xlu0 %4152
    %4154 = vrot.lane.b32.xlu0 %v3668, 80
    %v4155 = vpop.permute.xlu0 %4154
    %4156 = vrot.lane.b32.xlu0 %v3669, 80
    %v4157 = vpop.permute.xlu0 %4156
    %v4159 = vsel %vm475, %v4151, 0
    %v4162 = vsel %vm475, %v4153, 0
    %v4165 = vsel %vm475, %v4155, 0
    %v4168 = vsel %vm475, %v4157, 0
    %4170 = vmatpush.bf16.xpose.msra.mxu0 0
    %4171 = vmatpush.bf16.xpose.msra.mxu0 0
    %4172 = vmatpush.bf16.xpose.msra.mxu0 0
    %4173 = vmatpush.bf16.xpose.msra.mxu0 0
    %4174 = vmatpush.bf16.xpose.msra.mxu0 0
    %4175 = vmatpush.bf16.xpose.msra.mxu0 0
    %4176 = vmatpush.bf16.xpose.msra.mxu0 %v4168
    %4177 = vmatpush.bf16.xpose.msra.mxu0 %v4165
    %4178 = vmatmul.bf16.gmra.mxu0 %v4159
    %v4179 = vpop.f32.mrf.mxu0
    %v4180 = vadd.f32 0.0, %v4179
    %v4181 = vpop.f32.mrf.mxu0
    %v4182 = vadd.f32 0.0, %v4181
    %4183 = vmatmul.bf16.gmra.mxu0 %v4162
    %v4184 = vpop.f32.mrf.mxu0
    %v4185 = vadd.f32 0.0, %v4184
    %v4186 = vpop.f32.mrf.mxu0
    %4187 = vdwg.mxu0
    %4188 = vrot.lane.b32.xlu0 %v3710, 112
    %v4189 = vpop.permute.xlu0 %4188
    %4190 = vrot.lane.b32.xlu0 %v3711, 112
    %v4191 = vpop.permute.xlu0 %4190
    %4192 = vrot.lane.b32.xlu0 %v3710, 80
    %v4193 = vpop.permute.xlu0 %4192
    %4194 = vrot.lane.b32.xlu0 %v3711, 80
    %v4195 = vpop.permute.xlu0 %4194
    %v4197 = vsel %vm475, %v4189, 0
    %v4200 = vsel %vm475, %v4191, 0
    %v4203 = vsel %vm475, %v4193, 0
    %v4206 = vsel %vm475, %v4195, 0
    %4208 = vmatpush.bf16.xpose.msra.mxu0 0
    %4209 = vmatpush.bf16.xpose.msra.mxu0 0
    %4210 = vmatpush.bf16.xpose.msra.mxu0 0
    %4211 = vmatpush.bf16.xpose.msra.mxu0 0
    %4212 = vmatpush.bf16.xpose.msra.mxu0 0
    %4213 = vmatpush.bf16.xpose.msra.mxu0 0
    %4214 = vmatpush.bf16.xpose.msra.mxu0 %v4206
    %4215 = vmatpush.bf16.xpose.msra.mxu0 %v4203
    %4216 = vmatmul.bf16.gmra.mxu0 %v4197
    %v4217 = vpop.f32.mrf.mxu0
    %v4218 = vadd.f32 0.0, %v4217
    %v4219 = vpop.f32.mrf.mxu0
    %v4220 = vadd.f32 0.0, %v4219
    %4221 = vmatmul.bf16.gmra.mxu0 %v4200
    %v4222 = vpop.f32.mrf.mxu0
    %v4223 = vadd.f32 0.0, %v4222
    %v4224 = vpop.f32.mrf.mxu0
    %4225 = vdwg.mxu0
    %v4226 = vmul.f32 %v4180, 0.35355338
    %v4227 = vmul.f32 %v4182, 0.35355338
    %v4228 = vmul.f32 %v4185, 0.35355338
    %v4229 = vmul.f32 %v4218, 0.35355338
    %v4230 = vmul.f32 %v4220, 0.35355338
    %v4231 = vmul.f32 %v4223, 0.35355338
    %v4232 = vadd.f32 %v4226, %v554
    %v4233 = vadd.f32 %v4227, %v554
    %v4234 = vadd.f32 %v4228, %v554
    %v4235 = vadd.f32 %v4229, %v555
    %v4236 = vadd.f32 %v4230, %v555
    %v4237 = vadd.f32 %v4231, %v555
    %v4238 = vsel %vm194, %v4232, -inf
    %4239 = vmax.xlane.f32.xlu0 %v4238
    %v4240 = vpop.xlane.xlu0 %4239
    %v4241 = vsel %vm194, %v4233, -inf
    %4242 = vmax.xlane.f32.xlu0 %v4241
    %v4243 = vpop.xlane.xlu0 %4242
    %v4244 = vsel %vm194, %v4234, -inf
    %4245 = vmax.xlane.f32.xlu0 %v4244
    %v4246 = vpop.xlane.xlu0 %4245
    %v4247 = vsel %vm194, %v4235, -inf
    %4248 = vmax.xlane.f32.xlu0 %v4247
    %v4249 = vpop.xlane.xlu0 %4248
    %v4250 = vsel %vm194, %v4236, -inf
    %4251 = vmax.xlane.f32.xlu0 %v4250
    %v4252 = vpop.xlane.xlu0 %4251
    %v4253 = vsel %vm194, %v4237, -inf
    %4254 = vmax.xlane.f32.xlu0 %v4253
    %v4255 = vpop.xlane.xlu0 %4254
    %v4256 = vsub.f32 %v4232, %v4240
    %v4257 = vsub.f32 %v4233, %v4243
    %v4258 = vsub.f32 %v4234, %v4246
    %v4259 = vsub.f32 %v4235, %v4249
    %v4260 = vsub.f32 %v4236, %v4252
    %v4261 = vsub.f32 %v4237, %v4255
    %v4262 = vmul.f32 %v4256, 1.442695
    %v4263 = vpow.pop %v4262
    %v4264 = vmul.f32 %v4257, 1.442695
    %v4265 = vpow.pop %v4264
    %v4266 = vmul.f32 %v4258, 1.442695
    %v4267 = vpow.pop %v4266
    %v4268 = vmul.f32 %v4259, 1.442695
    %v4269 = vpow.pop %v4268
    %v4270 = vmul.f32 %v4260, 1.442695
    %v4271 = vpow.pop %v4270
    %v4272 = vmul.f32 %v4261, 1.442695
    %v4273 = vpow.pop %v4272
    %v4274 = vsel %vm194, %v4263, 0.0
    %4275 = vadd.xlane.f32.xlu0 %v4274
    %v4276 = vpop.xlane.xlu0 %4275
    %v4277 = vsel %vm194, %v4265, 0.0
    %4278 = vadd.xlane.f32.xlu0 %v4277
    %v4279 = vpop.xlane.xlu0 %4278
    %v4280 = vsel %vm194, %v4267, 0.0
    %4281 = vadd.xlane.f32.xlu0 %v4280
    %v4282 = vpop.xlane.xlu0 %4281
    %v4283 = vsel %vm194, %v4269, 0.0
    %4284 = vadd.xlane.f32.xlu0 %v4283
    %v4285 = vpop.xlane.xlu0 %4284
    %v4286 = vsel %vm194, %v4271, 0.0
    %4287 = vadd.xlane.f32.xlu0 %v4286
    %v4288 = vpop.xlane.xlu0 %4287
    %v4289 = vsel %vm194, %v4273, 0.0
    %4290 = vadd.xlane.f32.xlu0 %v4289
    %v4291 = vpop.xlane.xlu0 %4290
    %v4292 = vrcp.pop %v4276
    %v4293 = vrcp.pop %v4279
    %v4294 = vrcp.pop %v4282
    %v4295 = vrcp.pop %v4285
    %v4296 = vrcp.pop %v4288
    %v4297 = vrcp.pop %v4291
    %v4298 = vmul.f32 %v4263, %v4292
    %v4299 = vmul.f32 %v4265, %v4293
    %v4300 = vmul.f32 %v4267, %v4294
    %v4301 = vmul.f32 %v4269, %v4295
    %v4302 = vmul.f32 %v4271, %v4296
    %v4303 = vmul.f32 %v4273, %v4297
    %v4304 = vpack.c.bf16 %v4298, %v4298
    %v4305 = vpack.c.bf16 %v4299, %v4299
    %v4306 = vpack.c.bf16 %v4300, %v4300
    %v4307 = vpack.c.bf16 %v4301, %v4301
    %v4308 = vpack.c.bf16 %v4302, %v4302
    %v4309 = vpack.c.bf16 %v4303, %v4303
    %v4313 = vunpack.c.l.b16 %v4304
    %v4314 = vunpack.c.l.b16 %v4305
    %v4315 = vunpack.c.l.b16 %v4306
    %v4316 = vpack.c.b16 %v4314, %v4313
    %v4317 = vpack.c.b16 %v4315, %v4315
    %4318 = vrot.lane.b32.xlu0 %v3668, 48
    %v4319 = vpop.permute.xlu0 %4318
    %4320 = vrot.lane.b32.xlu0 %v3669, 48
    %v4321 = vpop.permute.xlu0 %4320
    %v4324 = vsel %vm194, %v4316, 0
    %v4327 = vsel %vm194, %v4317, 0
    %v4330 = vsel %vm201, %v4321, 0
    %4332 = vmatpush.bf16.msra.mxu0 0
    %4333 = vmatpush.bf16.msra.mxu0 0
    %4334 = vmatpush.bf16.msra.mxu0 0
    %4335 = vmatpush.bf16.msra.mxu0 0
    %4336 = vmatpush.bf16.msra.mxu0 0
    %4337 = vmatpush.bf16.msra.mxu0 0
    %4338 = vmatpush.bf16.msra.mxu0 %v4330
    %4339 = vmatpush.bf16.msra.mxu0 %v4319
    %4340 = vmatmul.bf16.gmra.mxu0 %v4324
    %v4341 = vpop.f32.mrf.mxu0
    %v4342 = vadd.f32 0.0, %v4341
    %v4343 = vpop.f32.mrf.mxu0
    %v4344 = vadd.f32 0.0, %v4343
    %4345 = vmatmul.bf16.gmra.mxu0 %v4327
    %v4346 = vpop.f32.mrf.mxu0
    %v4347 = vadd.f32 0.0, %v4346
    %v4348 = vpop.f32.mrf.mxu0
    %4349 = vdwg.mxu0
    %v4353 = vunpack.c.l.b16 %v4307
    %v4354 = vunpack.c.l.b16 %v4308
    %v4355 = vunpack.c.l.b16 %v4309
    %v4356 = vpack.c.b16 %v4354, %v4353
    %v4357 = vpack.c.b16 %v4355, %v4355
    %4358 = vrot.lane.b32.xlu0 %v3710, 48
    %v4359 = vpop.permute.xlu0 %4358
    %4360 = vrot.lane.b32.xlu0 %v3711, 48
    %v4361 = vpop.permute.xlu0 %4360
    %v4364 = vsel %vm194, %v4356, 0
    %v4367 = vsel %vm194, %v4357, 0
    %v4370 = vsel %vm201, %v4361, 0
    %4372 = vmatpush.bf16.msra.mxu0 0
    %4373 = vmatpush.bf16.msra.mxu0 0
    %4374 = vmatpush.bf16.msra.mxu0 0
    %4375 = vmatpush.bf16.msra.mxu0 0
    %4376 = vmatpush.bf16.msra.mxu0 0
    %4377 = vmatpush.bf16.msra.mxu0 0
    %4378 = vmatpush.bf16.msra.mxu0 %v4370
    %4379 = vmatpush.bf16.msra.mxu0 %v4359
    %4380 = vmatmul.bf16.gmra.mxu0 %v4364
    %v4381 = vpop.f32.mrf.mxu0
    %v4382 = vadd.f32 0.0, %v4381
    %v4383 = vpop.f32.mrf.mxu0
    %v4384 = vadd.f32 0.0, %v4383
    %4385 = vmatmul.bf16.gmra.mxu0 %v4367
    %v4386 = vpop.f32.mrf.mxu0
    %v4387 = vadd.f32 0.0, %v4386
    %v4388 = vpop.f32.mrf.mxu0
    %4389 = vdwg.mxu0
    %4390 = vrot.lane.b32.xlu0 %v3668, 104
    %v4391 = vpop.permute.xlu0 %4390
    %4392 = vrot.lane.b32.xlu0 %v3669, 104
    %v4393 = vpop.permute.xlu0 %4392
    %4394 = vrot.lane.b32.xlu0 %v3668, 72
    %v4395 = vpop.permute.xlu0 %4394
    %4396 = vrot.lane.b32.xlu0 %v3669, 72
    %v4397 = vpop.permute.xlu0 %4396
    %v4399 = vsel %vm475, %v4391, 0
    %v4402 = vsel %vm475, %v4393, 0
    %v4405 = vsel %vm475, %v4395, 0
    %v4408 = vsel %vm475, %v4397, 0
    %4410 = vmatpush.bf16.xpose.msra.mxu0 0
    %4411 = vmatpush.bf16.xpose.msra.mxu0 0
    %4412 = vmatpush.bf16.xpose.msra.mxu0 0
    %4413 = vmatpush.bf16.xpose.msra.mxu0 0
    %4414 = vmatpush.bf16.xpose.msra.mxu0 0
    %4415 = vmatpush.bf16.xpose.msra.mxu0 0
    %4416 = vmatpush.bf16.xpose.msra.mxu0 %v4408
    %4417 = vmatpush.bf16.xpose.msra.mxu0 %v4405
    %4418 = vmatmul.bf16.gmra.mxu0 %v4399
    %v4419 = vpop.f32.mrf.mxu0
    %v4420 = vadd.f32 0.0, %v4419
    %v4421 = vpop.f32.mrf.mxu0
    %v4422 = vadd.f32 0.0, %v4421
    %4423 = vmatmul.bf16.gmra.mxu0 %v4402
    %v4424 = vpop.f32.mrf.mxu0
    %v4425 = vadd.f32 0.0, %v4424
    %v4426 = vpop.f32.mrf.mxu0
    %4427 = vdwg.mxu0
    %4428 = vrot.lane.b32.xlu0 %v3710, 104
    %v4429 = vpop.permute.xlu0 %4428
    %4430 = vrot.lane.b32.xlu0 %v3711, 104
    %v4431 = vpop.permute.xlu0 %4430
    %4432 = vrot.lane.b32.xlu0 %v3710, 72
    %v4433 = vpop.permute.xlu0 %4432
    %4434 = vrot.lane.b32.xlu0 %v3711, 72
    %v4435 = vpop.permute.xlu0 %4434
    %v4437 = vsel %vm475, %v4429, 0
    %v4440 = vsel %vm475, %v4431, 0
    %v4443 = vsel %vm475, %v4433, 0
    %v4446 = vsel %vm475, %v4435, 0
    %4448 = vmatpush.bf16.xpose.msra.mxu0 0
    %4449 = vmatpush.bf16.xpose.msra.mxu0 0
    %4450 = vmatpush.bf16.xpose.msra.mxu0 0
    %4451 = vmatpush.bf16.xpose.msra.mxu0 0
    %4452 = vmatpush.bf16.xpose.msra.mxu0 0
    %4453 = vmatpush.bf16.xpose.msra.mxu0 0
    %4454 = vmatpush.bf16.xpose.msra.mxu0 %v4446
    %4455 = vmatpush.bf16.xpose.msra.mxu0 %v4443
    %4456 = vmatmul.bf16.gmra.mxu0 %v4437
    %v4457 = vpop.f32.mrf.mxu0
    %v4458 = vadd.f32 0.0, %v4457
    %v4459 = vpop.f32.mrf.mxu0
    %v4460 = vadd.f32 0.0, %v4459
    %4461 = vmatmul.bf16.gmra.mxu0 %v4440
    %v4462 = vpop.f32.mrf.mxu0
    %v4463 = vadd.f32 0.0, %v4462
    %v4464 = vpop.f32.mrf.mxu0
    %4465 = vdwg.mxu0
    %v4466 = vmul.f32 %v4420, 0.35355338
    %v4467 = vmul.f32 %v4422, 0.35355338
    %v4468 = vmul.f32 %v4425, 0.35355338
    %v4469 = vmul.f32 %v4458, 0.35355338
    %v4470 = vmul.f32 %v4460, 0.35355338
    %v4471 = vmul.f32 %v4463, 0.35355338
    %v4472 = vadd.f32 %v4466, %v554
    %v4473 = vadd.f32 %v4467, %v554
    %v4474 = vadd.f32 %v4468, %v554
    %v4475 = vadd.f32 %v4469, %v555
    %v4476 = vadd.f32 %v4470, %v555
    %v4477 = vadd.f32 %v4471, %v555
    %v4478 = vsel %vm194, %v4472, -inf
    %4479 = vmax.xlane.f32.xlu0 %v4478
    %v4480 = vpop.xlane.xlu0 %4479
    %v4481 = vsel %vm194, %v4473, -inf
    %4482 = vmax.xlane.f32.xlu0 %v4481
    %v4483 = vpop.xlane.xlu0 %4482
    %v4484 = vsel %vm194, %v4474, -inf
    %4485 = vmax.xlane.f32.xlu0 %v4484
    %v4486 = vpop.xlane.xlu0 %4485
    %v4487 = vsel %vm194, %v4475, -inf
    %4488 = vmax.xlane.f32.xlu0 %v4487
    %v4489 = vpop.xlane.xlu0 %4488
    %v4490 = vsel %vm194, %v4476, -inf
    %4491 = vmax.xlane.f32.xlu0 %v4490
    %v4492 = vpop.xlane.xlu0 %4491
    %v4493 = vsel %vm194, %v4477, -inf
    %4494 = vmax.xlane.f32.xlu0 %v4493
    %v4495 = vpop.xlane.xlu0 %4494
    %v4496 = vsub.f32 %v4472, %v4480
    %v4497 = vsub.f32 %v4473, %v4483
    %v4498 = vsub.f32 %v4474, %v4486
    %v4499 = vsub.f32 %v4475, %v4489
    %v4500 = vsub.f32 %v4476, %v4492
    %v4501 = vsub.f32 %v4477, %v4495
    %v4502 = vmul.f32 %v4496, 1.442695
    %v4503 = vpow.pop %v4502
    %v4504 = vmul.f32 %v4497, 1.442695
    %v4505 = vpow.pop %v4504
    %v4506 = vmul.f32 %v4498, 1.442695
    %v4507 = vpow.pop %v4506
    %v4508 = vmul.f32 %v4499, 1.442695
    %v4509 = vpow.pop %v4508
    %v4510 = vmul.f32 %v4500, 1.442695
    %v4511 = vpow.pop %v4510
    %v4512 = vmul.f32 %v4501, 1.442695
    %v4513 = vpow.pop %v4512
    %v4514 = vsel %vm194, %v4503, 0.0
    %4515 = vadd.xlane.f32.xlu0 %v4514
    %v4516 = vpop.xlane.xlu0 %4515
    %v4517 = vsel %vm194, %v4505, 0.0
    %4518 = vadd.xlane.f32.xlu0 %v4517
    %v4519 = vpop.xlane.xlu0 %4518
    %v4520 = vsel %vm194, %v4507, 0.0
    %4521 = vadd.xlane.f32.xlu0 %v4520
    %v4522 = vpop.xlane.xlu0 %4521
    %v4523 = vsel %vm194, %v4509, 0.0
    %4524 = vadd.xlane.f32.xlu0 %v4523
    %v4525 = vpop.xlane.xlu0 %4524
    %v4526 = vsel %vm194, %v4511, 0.0
    %4527 = vadd.xlane.f32.xlu0 %v4526
    %v4528 = vpop.xlane.xlu0 %4527
    %v4529 = vsel %vm194, %v4513, 0.0
    %4530 = vadd.xlane.f32.xlu0 %v4529
    %v4531 = vpop.xlane.xlu0 %4530
    %v4532 = vrcp.pop %v4516
    %v4533 = vrcp.pop %v4519
    %v4534 = vrcp.pop %v4522
    %v4535 = vrcp.pop %v4525
    %v4536 = vrcp.pop %v4528
    %v4537 = vrcp.pop %v4531
    %v4538 = vmul.f32 %v4503, %v4532
    %v4539 = vmul.f32 %v4505, %v4533
    %v4540 = vmul.f32 %v4507, %v4534
    %v4541 = vmul.f32 %v4509, %v4535
    %v4542 = vmul.f32 %v4511, %v4536
    %v4543 = vmul.f32 %v4513, %v4537
    %v4544 = vpack.c.bf16 %v4538, %v4538
    %v4545 = vpack.c.bf16 %v4539, %v4539
    %v4546 = vpack.c.bf16 %v4540, %v4540
    %v4547 = vpack.c.bf16 %v4541, %v4541
    %v4548 = vpack.c.bf16 %v4542, %v4542
    %v4549 = vpack.c.bf16 %v4543, %v4543
    %v4553 = vunpack.c.l.b16 %v4544
    %v4554 = vunpack.c.l.b16 %v4545
    %v4555 = vunpack.c.l.b16 %v4546
    %v4556 = vpack.c.b16 %v4554, %v4553
    %v4557 = vpack.c.b16 %v4555, %v4555
    %4558 = vrot.lane.b32.xlu0 %v3668, 40
    %v4559 = vpop.permute.xlu0 %4558
    %4560 = vrot.lane.b32.xlu0 %v3669, 40
    %v4561 = vpop.permute.xlu0 %4560
    %v4564 = vsel %vm194, %v4556, 0
    %v4567 = vsel %vm194, %v4557, 0
    %v4570 = vsel %vm201, %v4561, 0
    %4572 = vmatpush.bf16.msra.mxu0 0
    %4573 = vmatpush.bf16.msra.mxu0 0
    %4574 = vmatpush.bf16.msra.mxu0 0
    %4575 = vmatpush.bf16.msra.mxu0 0
    %4576 = vmatpush.bf16.msra.mxu0 0
    %4577 = vmatpush.bf16.msra.mxu0 0
    %4578 = vmatpush.bf16.msra.mxu0 %v4570
    %4579 = vmatpush.bf16.msra.mxu0 %v4559
    %4580 = vmatmul.bf16.gmra.mxu0 %v4564
    %v4581 = vpop.f32.mrf.mxu0
    %v4582 = vadd.f32 0.0, %v4581
    %v4583 = vpop.f32.mrf.mxu0
    %v4584 = vadd.f32 0.0, %v4583
    %4585 = vmatmul.bf16.gmra.mxu0 %v4567
    %v4586 = vpop.f32.mrf.mxu0
    %v4587 = vadd.f32 0.0, %v4586
    %v4588 = vpop.f32.mrf.mxu0
    %4589 = vdwg.mxu0
    %v4593 = vunpack.c.l.b16 %v4547
    %v4594 = vunpack.c.l.b16 %v4548
    %v4595 = vunpack.c.l.b16 %v4549
    %v4596 = vpack.c.b16 %v4594, %v4593
    %v4597 = vpack.c.b16 %v4595, %v4595
    %4598 = vrot.lane.b32.xlu0 %v3710, 40
    %v4599 = vpop.permute.xlu0 %4598
    %4600 = vrot.lane.b32.xlu0 %v3711, 40
    %v4601 = vpop.permute.xlu0 %4600
    %v4604 = vsel %vm194, %v4596, 0
    %v4607 = vsel %vm194, %v4597, 0
    %v4610 = vsel %vm201, %v4601, 0
    %4612 = vmatpush.bf16.msra.mxu0 0
    %4613 = vmatpush.bf16.msra.mxu0 0
    %4614 = vmatpush.bf16.msra.mxu0 0
    %4615 = vmatpush.bf16.msra.mxu0 0
    %4616 = vmatpush.bf16.msra.mxu0 0
    %4617 = vmatpush.bf16.msra.mxu0 0
    %4618 = vmatpush.bf16.msra.mxu0 %v4610
    %4619 = vmatpush.bf16.msra.mxu0 %v4599
    %4620 = vmatmul.bf16.gmra.mxu0 %v4604
    %v4621 = vpop.f32.mrf.mxu0
    %v4622 = vadd.f32 0.0, %v4621
    %v4623 = vpop.f32.mrf.mxu0
    %v4624 = vadd.f32 0.0, %v4623
    %4625 = vmatmul.bf16.gmra.mxu0 %v4607
    %v4626 = vpop.f32.mrf.mxu0
    %v4627 = vadd.f32 0.0, %v4626
    %v4628 = vpop.f32.mrf.mxu0
    %4629 = vdwg.mxu0
    %4636 = vrot.lane.b32.xlu0 %v4102, 8
    %v4637 = vpop.permute.xlu0 %4636
    %4638 = vrot.lane.b32.xlu0 %v4104, 8
    %v4639 = vpop.permute.xlu0 %4638
    %4640 = vrot.lane.b32.xlu0 %v4107, 8
    %v4641 = vpop.permute.xlu0 %4640
    %4642 = vrot.lane.b32.xlu0 %v4142, 8
    %v4643 = vpop.permute.xlu0 %4642
    %4644 = vrot.lane.b32.xlu0 %v4144, 8
    %v4645 = vpop.permute.xlu0 %4644
    %4646 = vrot.lane.b32.xlu0 %v4147, 8
    %v4647 = vpop.permute.xlu0 %4646
    %4660 = vrot.lane.b32.xlu0 %v4342, 16
    %v4661 = vpop.permute.xlu0 %4660
    %4662 = vrot.lane.b32.xlu0 %v4344, 16
    %v4663 = vpop.permute.xlu0 %4662
    %4664 = vrot.lane.b32.xlu0 %v4347, 16
    %v4665 = vpop.permute.xlu0 %4664
    %4666 = vrot.lane.b32.xlu0 %v4382, 16
    %v4667 = vpop.permute.xlu0 %4666
    %4668 = vrot.lane.b32.xlu0 %v4384, 16
    %v4669 = vpop.permute.xlu0 %4668
    %4670 = vrot.lane.b32.xlu0 %v4387, 16
    %v4671 = vpop.permute.xlu0 %4670
    %4684 = vrot.lane.b32.xlu0 %v4582, 24
    %v4685 = vpop.permute.xlu0 %4684
    %4686 = vrot.lane.b32.xlu0 %v4584, 24
    %v4687 = vpop.permute.xlu0 %4686
    %4688 = vrot.lane.b32.xlu0 %v4587, 24
    %v4689 = vpop.permute.xlu0 %4688
    %4690 = vrot.lane.b32.xlu0 %v4622, 24
    %v4691 = vpop.permute.xlu0 %4690
    %4692 = vrot.lane.b32.xlu0 %v4624, 24
    %v4693 = vpop.permute.xlu0 %4692
    %4694 = vrot.lane.b32.xlu0 %v4627, 24
    %v4695 = vpop.permute.xlu0 %4694
    %v4702 = vsel %vm475, %v3862, %v4637
    %v4703 = vsel %vm475, %v3864, %v4639
    %v4704 = vsel %vm475, %v3867, %v4641
    %v4705 = vsel %vm475, %v3902, %v4643
    %v4706 = vsel %vm475, %v3904, %v4645
    %v4707 = vsel %vm475, %v3907, %v4647
    %v4708 = vsel %vm1514, %v4702, %v4661
    %v4709 = vsel %vm1514, %v4703, %v4663
    %v4710 = vsel %vm1514, %v4704, %v4665
    %v4711 = vsel %vm1514, %v4705, %v4667
    %v4712 = vsel %vm1514, %v4706, %v4669
    %v4713 = vsel %vm1514, %v4707, %v4671
    %v4714 = vsel %vm194, %v4708, %v4685
    %v4715 = vsel %vm194, %v4709, %v4687
    %v4716 = vsel %vm194, %v4710, %v4689
    %v4717 = vsel %vm194, %v4711, %v4691
    %v4718 = vsel %vm194, %v4712, %v4693
    %v4719 = vsel %vm194, %v4713, %v4695
    %v4720 = vpack.c.bf16 %v4715, %v4714
    %v4721 = vpack.c.bf16 %v4717, %v4716
    %v4722 = vpack.c.bf16 %v4719, %v4718
    %v4723 = vperm.slane %v3455, 1
    %4724 = vrot.lane.b32.xlu0 %v3619, 32
    %v4725 = vpop.permute.xlu0 %4724
    %4726 = vrot.lane.b32.xlu0 %v3620, 32
    %v4727 = vpop.permute.xlu0 %4726
    %v4731 = vsel %vm254, %v4720, 0
    %v4734 = vsel %vm254, %v4721, 0
    %v4737 = vsel %vm254, %v4722, 0
    %4739 = vmatpush.bf16.msra.mxu0 0
    %4740 = vmatpush.bf16.msra.mxu0 0
    %4741 = vmatpush.bf16.msra.mxu0 0
    %4742 = vmatpush.bf16.msra.mxu0 0
    %4743 = vmatpush.bf16.msra.mxu0 0
    %4744 = vmatpush.bf16.msra.mxu0 0
    %4745 = vmatpush.bf16.msra.mxu0 %v4727
    %4746 = vmatpush.bf16.msra.mxu0 %v4725
    %4747 = vmatmul.bf16.gmra.mxu0 %v4731
    %v4748 = vpop.f32.mrf.mxu0
    %v4749 = vadd.f32 %v4723, %v4748
    %v4750 = vpop.f32.mrf.mxu0
    %v4751 = vadd.f32 %v4723, %v4750
    %4752 = vmatmul.bf16.gmra.mxu0 %v4734
    %v4753 = vpop.f32.mrf.mxu0
    %v4754 = vadd.f32 %v4723, %v4753
    %v4755 = vpop.f32.mrf.mxu0
    %v4756 = vadd.f32 %v4723, %v4755
    %4757 = vmatmul.bf16.gmra.mxu0 %v4737
    %v4758 = vpop.f32.mrf.mxu0
    %v4759 = vadd.f32 %v4723, %v4758
    %v4760 = vpop.f32.mrf.mxu0
    %v4761 = vadd.f32 %v4723, %v4760
    %4762 = vdwg.mxu0
    %v4763 = vadd.f32 %v3448, %v4749
    %v4764 = vadd.f32 %v3449, %v4751
    %v4765 = vadd.f32 %v3450, %v4754
    %v4766 = vadd.f32 %v3451, %v4756
    %v4767 = vadd.f32 %v3452, %v4759
    %v4768 = vadd.f32 %v3453, %v4761
    %v4769 = vsel %vm254, %v4763, 0.0
    %4770 = vadd.xlane.f32.xlu0 %v4769
    %v4771 = vpop.xlane.xlu0 %4770
    %v4772 = vsel %vm254, %v4764, 0.0
    %4773 = vadd.xlane.f32.xlu0 %v4772
    %v4774 = vpop.xlane.xlu0 %4773
    %v4775 = vsel %vm254, %v4765, 0.0
    %4776 = vadd.xlane.f32.xlu0 %v4775
    %v4777 = vpop.xlane.xlu0 %4776
    %v4778 = vsel %vm254, %v4766, 0.0
    %4779 = vadd.xlane.f32.xlu0 %v4778
    %v4780 = vpop.xlane.xlu0 %4779
    %v4781 = vsel %vm254, %v4767, 0.0
    %4782 = vadd.xlane.f32.xlu0 %v4781
    %v4783 = vpop.xlane.xlu0 %4782
    %v4784 = vsel %vm254, %v4768, 0.0
    %4785 = vadd.xlane.f32.xlu0 %v4784
    %v4786 = vpop.xlane.xlu0 %4785
    %v4787 = vmul.f32 %v4771, %v279
    %v4788 = vmul.f32 %v4774, %v279
    %v4789 = vmul.f32 %v4777, %v279
    %v4790 = vmul.f32 %v4780, %v279
    %v4791 = vmul.f32 %v4783, %v279
    %v4792 = vmul.f32 %v4786, %v279
    %v4793 = vsub.f32 %v4763, %v4787
    %v4794 = vsub.f32 %v4764, %v4788
    %v4795 = vsub.f32 %v4765, %v4789
    %v4796 = vsub.f32 %v4766, %v4790
    %v4797 = vsub.f32 %v4767, %v4791
    %v4798 = vsub.f32 %v4768, %v4792
    %v4799 = vmul.f32 %v4793, %v4793
    %v4800 = vmul.f32 %v4794, %v4794
    %v4801 = vmul.f32 %v4795, %v4795
    %v4802 = vmul.f32 %v4796, %v4796
    %v4803 = vmul.f32 %v4797, %v4797
    %v4804 = vmul.f32 %v4798, %v4798
    %v4805 = vsel %vm254, %v4799, 0.0
    %4806 = vadd.xlane.f32.xlu0 %v4805
    %v4807 = vpop.xlane.xlu0 %4806
    %v4808 = vsel %vm254, %v4800, 0.0
    %4809 = vadd.xlane.f32.xlu0 %v4808
    %v4810 = vpop.xlane.xlu0 %4809
    %v4811 = vsel %vm254, %v4801, 0.0
    %4812 = vadd.xlane.f32.xlu0 %v4811
    %v4813 = vpop.xlane.xlu0 %4812
    %v4814 = vsel %vm254, %v4802, 0.0
    %4815 = vadd.xlane.f32.xlu0 %v4814
    %v4816 = vpop.xlane.xlu0 %4815
    %v4817 = vsel %vm254, %v4803, 0.0
    %4818 = vadd.xlane.f32.xlu0 %v4817
    %v4819 = vpop.xlane.xlu0 %4818
    %v4820 = vsel %vm254, %v4804, 0.0
    %4821 = vadd.xlane.f32.xlu0 %v4820
    %v4822 = vpop.xlane.xlu0 %4821
    %v4823 = vmul.f32 %v4807, %v279
    %v4824 = vmul.f32 %v4810, %v279
    %v4825 = vmul.f32 %v4813, %v279
    %v4826 = vmul.f32 %v4816, %v279
    %v4827 = vmul.f32 %v4819, %v279
    %v4828 = vmul.f32 %v4822, %v279
    %v4829 = vperm.slane %v3455, 6
    %v4830 = vmul.f32 %v4829, %v4793
    %v4831 = vmul.f32 %v4829, %v4794
    %v4832 = vmul.f32 %v4829, %v4795
    %v4833 = vmul.f32 %v4829, %v4796
    %v4834 = vmul.f32 %v4829, %v4797
    %v4835 = vmul.f32 %v4829, %v4798
    %v4836 = vadd.f32 %v4823, 1e-06
    %v4837 = vadd.f32 %v4824, 1e-06
    %v4838 = vadd.f32 %v4825, 1e-06
    %v4839 = vadd.f32 %v4826, 1e-06
    %v4840 = vadd.f32 %v4827, 1e-06
    %v4841 = vadd.f32 %v4828, 1e-06
    %v4842 = vrsqrt.pop %v4836
    %v4843 = vmul.f32 %v4842, %v4836
    %v4844 = vmul.f32 %v4843, %v4842
    %v4845 = vmul.f32 0.5, %v4844
    %v4846 = vsub.f32 1.5, %v4845
    %v4847 = vmul.f32 %v4842, %v4846
    %vm4848 = vweird.f32 %v4836
    %vm4849 = vweird.f32 %v4842
    %vm4850 = vmor %vm4848, %vm4849
    %v4851 = vsel %vm4850, %v4842, %v4847
    %v4852 = vrsqrt.pop %v4837
    %v4853 = vmul.f32 %v4852, %v4837
    %v4854 = vmul.f32 %v4853, %v4852
    %v4855 = vmul.f32 0.5, %v4854
    %v4856 = vsub.f32 1.5, %v4855
    %v4857 = vmul.f32 %v4852, %v4856
    %vm4858 = vweird.f32 %v4837
    %vm4859 = vweird.f32 %v4852
    %vm4860 = vmor %vm4858, %vm4859
    %v4861 = vsel %vm4860, %v4852, %v4857
    %v4862 = vrsqrt.pop %v4838
    %v4863 = vmul.f32 %v4862, %v4838
    %v4864 = vmul.f32 %v4863, %v4862
    %v4865 = vmul.f32 0.5, %v4864
    %v4866 = vsub.f32 1.5, %v4865
    %v4867 = vmul.f32 %v4862, %v4866
    %vm4868 = vweird.f32 %v4838
    %vm4869 = vweird.f32 %v4862
    %vm4870 = vmor %vm4868, %vm4869
    %v4871 = vsel %vm4870, %v4862, %v4867
    %v4872 = vrsqrt.pop %v4839
    %v4873 = vmul.f32 %v4872, %v4839
    %v4874 = vmul.f32 %v4873, %v4872
    %v4875 = vmul.f32 0.5, %v4874
    %v4876 = vsub.f32 1.5, %v4875
    %v4877 = vmul.f32 %v4872, %v4876
    %vm4878 = vweird.f32 %v4839
    %vm4879 = vweird.f32 %v4872
    %vm4880 = vmor %vm4878, %vm4879
    %v4881 = vsel %vm4880, %v4872, %v4877
    %v4882 = vrsqrt.pop %v4840
    %v4883 = vmul.f32 %v4882, %v4840
    %v4884 = vmul.f32 %v4883, %v4882
    %v4885 = vmul.f32 0.5, %v4884
    %v4886 = vsub.f32 1.5, %v4885
    %v4887 = vmul.f32 %v4882, %v4886
    %vm4888 = vweird.f32 %v4840
    %vm4889 = vweird.f32 %v4882
    %vm4890 = vmor %vm4888, %vm4889
    %v4891 = vsel %vm4890, %v4882, %v4887
    %v4892 = vrsqrt.pop %v4841
    %v4893 = vmul.f32 %v4892, %v4841
    %v4894 = vmul.f32 %v4893, %v4892
    %v4895 = vmul.f32 0.5, %v4894
    %v4896 = vsub.f32 1.5, %v4895
    %v4897 = vmul.f32 %v4892, %v4896
    %vm4898 = vweird.f32 %v4841
    %vm4899 = vweird.f32 %v4892
    %vm4900 = vmor %vm4898, %vm4899
    %v4901 = vsel %vm4900, %v4892, %v4897
    %v4902 = vmul.f32 %v4830, %v4851
    %v4903 = vmul.f32 %v4831, %v4861
    %v4904 = vmul.f32 %v4832, %v4871
    %v4905 = vmul.f32 %v4833, %v4881
    %v4906 = vmul.f32 %v4834, %v4891
    %v4907 = vmul.f32 %v4835, %v4901
    %v4908 = vperm.slane %v3455, 7
    %v4909 = vadd.f32 %v4902, %v4908
    %v4910 = vadd.f32 %v4903, %v4908
    %v4911 = vadd.f32 %v4904, %v4908
    %v4912 = vadd.f32 %v4905, %v4908
    %v4913 = vadd.f32 %v4906, %v4908
    %v4914 = vadd.f32 %v4907, %v4908
    %v4915 = vpack.c.bf16 %v4910, %v4909
    %v4916 = vpack.c.bf16 %v4912, %v4911
    %v4917 = vpack.c.bf16 %v4914, %v4913
    %s4918 = scalar_lea.vmem %s6, 32
    %v4919 = vld [vmem:[%s4918] sm:$0xf]
    %v4920 = vld [vmem:[%s4918 + $0x4] sm:$0xf]
    %v4921 = vld [vmem:[%s4918 + $0x8] sm:$0xf]
    %v4922 = vld [vmem:[%s4918 + $0xc] sm:$0xf]
    %v4923 = vperm.slane %v3455, 2
    %v4928 = vunpack.c.l.b16 %v4919
    %v4929 = vunpack.c.l.b16 %v4920
    %v4930 = vunpack.c.l.b16 %v4921
    %v4931 = vunpack.c.l.b16 %v4922
    %v4932 = vpack.c.b16 %v4929, %v4928
    %v4933 = vpack.c.b16 %v4931, %v4930
    %v4937 = vsel %vm254, %v4915, 0
    %v4940 = vsel %vm254, %v4916, 0
    %v4943 = vsel %vm254, %v4917, 0
    %4945 = vmatpush.bf16.msra.mxu0 0
    %4946 = vmatpush.bf16.msra.mxu0 0
    %4947 = vmatpush.bf16.msra.mxu0 0
    %4948 = vmatpush.bf16.msra.mxu0 0
    %4949 = vmatpush.bf16.msra.mxu0 0
    %4950 = vmatpush.bf16.msra.mxu0 0
    %4951 = vmatpush.bf16.msra.mxu0 %v4933
    %4952 = vmatpush.bf16.msra.mxu0 %v4932
    %4953 = vmatmul.bf16.gmra.mxu0 %v4937
    %v4954 = vpop.f32.mrf.mxu0
    %v4955 = vadd.f32 %v4923, %v4954
    %v4956 = vpop.f32.mrf.mxu0
    %v4957 = vadd.f32 %v4923, %v4956
    %4958 = vmatmul.bf16.gmra.mxu0 %v4940
    %v4959 = vpop.f32.mrf.mxu0
    %v4960 = vadd.f32 %v4923, %v4959
    %v4961 = vpop.f32.mrf.mxu0
    %v4962 = vadd.f32 %v4923, %v4961
    %4963 = vmatmul.bf16.gmra.mxu0 %v4943
    %v4964 = vpop.f32.mrf.mxu0
    %v4965 = vadd.f32 %v4923, %v4964
    %v4966 = vpop.f32.mrf.mxu0
    %v4967 = vadd.f32 %v4923, %v4966
    %4968 = vdwg.mxu0
    %v4969 = vmax.f32 %v4955, 0.0
    %v4970 = vmax.f32 %v4957, 0.0
    %v4971 = vmax.f32 %v4960, 0.0
    %v4972 = vmax.f32 %v4962, 0.0
    %v4973 = vmax.f32 %v4965, 0.0
    %v4974 = vmax.f32 %v4967, 0.0
    %v4975 = vpack.c.bf16 %v4970, %v4969
    %v4976 = vpack.c.bf16 %v4972, %v4971
    %v4977 = vpack.c.bf16 %v4974, %v4973
    %s4978 = scalar_lea.vmem %s7, 64
    %v4979 = vld [vmem:[%s4978] sm:$0xf]
    %v4980 = vld [vmem:[%s4978 + $0x4] sm:$0xf]
    %v4981 = vld [vmem:[%s4978 + $0x8] sm:$0xf]
    %v4982 = vld [vmem:[%s4978 + $0xc] sm:$0xf]
    %v4983 = vld [vmem:[%s4978 + $0x10] sm:$0xf]
    %v4984 = vld [vmem:[%s4978 + $0x14] sm:$0xf]
    %v4985 = vld [vmem:[%s4978 + $0x18] sm:$0xf]
    %v4986 = vld [vmem:[%s4978 + $0x1c] sm:$0xf]
    %v4987 = vperm.slane %v3455, 3
    %v4996 = vunpack.c.l.b16 %v4979
    %v4997 = vunpack.c.l.b16 %v4980
    %v4998 = vunpack.c.l.b16 %v4981
    %v4999 = vunpack.c.l.b16 %v4982
    %v5000 = vunpack.c.l.b16 %v4983
    %v5001 = vunpack.c.l.b16 %v4984
    %v5002 = vunpack.c.l.b16 %v4985
    %v5003 = vunpack.c.l.b16 %v4986
    %v5004 = vpack.c.b16 %v4997, %v4996
    %v5005 = vpack.c.b16 %v4999, %v4998
    %v5006 = vpack.c.b16 %v5001, %v5000
    %v5007 = vpack.c.b16 %v5003, %v5002
    %v5013 = vsel %vm1817, %v4975, 0
    %v5016 = vsel %vm1817, %v4976, 0
    %v5019 = vsel %vm1817, %v4977, 0
    %5021 = vmatpush.bf16.msra.mxu0 0
    %5022 = vmatpush.bf16.msra.mxu0 0
    %5023 = vmatpush.bf16.msra.mxu0 0
    %5024 = vmatpush.bf16.msra.mxu0 0
    %5025 = vmatpush.bf16.msra.mxu0 %v5007
    %5026 = vmatpush.bf16.msra.mxu0 %v5006
    %5027 = vmatpush.bf16.msra.mxu0 %v5005
    %5028 = vmatpush.bf16.msra.mxu0 %v5004
    %5029 = vmatmul.bf16.gmra.mxu0 %v5013
    %v5030 = vpop.f32.mrf.mxu0
    %v5031 = vadd.f32 %v4987, %v5030
    %v5032 = vpop.f32.mrf.mxu0
    %v5033 = vadd.f32 %v4987, %v5032
    %5034 = vmatmul.bf16.gmra.mxu0 %v5016
    %v5035 = vpop.f32.mrf.mxu0
    %v5036 = vadd.f32 %v4987, %v5035
    %v5037 = vpop.f32.mrf.mxu0
    %v5038 = vadd.f32 %v4987, %v5037
    %5039 = vmatmul.bf16.gmra.mxu0 %v5019
    %v5040 = vpop.f32.mrf.mxu0
    %v5041 = vadd.f32 %v4987, %v5040
    %v5042 = vpop.f32.mrf.mxu0
    %v5043 = vadd.f32 %v4987, %v5042
    %5044 = vdwg.mxu0
    %v5045 = vadd.f32 %v4763, %v5031
    %v5046 = vadd.f32 %v4764, %v5033
    %v5047 = vadd.f32 %v4765, %v5036
    %v5048 = vadd.f32 %v4766, %v5038
    %v5049 = vadd.f32 %v4767, %v5041
    %v5050 = vadd.f32 %v4768, %v5043
    %s5051 = scalar_lea.vmem %s8, 24
    %v5052 = vld [vmem:[%s5051] sm:$0xff]
    %s5053 = scalar_lea.vmem %s5, 48
    %v5054 = vld [vmem:[%s5053] sm:$0xf]
    %v5055 = vld [vmem:[%s5053 + $0x4] sm:$0xf]
    %v5056 = vld [vmem:[%s5053 + $0x8] sm:$0xf]
    %v5057 = vld [vmem:[%s5053 + $0xc] sm:$0xf]
    %v5058 = vsel %vm254, %v5045, 0.0
    %5059 = vadd.xlane.f32.xlu0 %v5058
    %v5060 = vpop.xlane.xlu0 %5059
    %v5061 = vsel %vm254, %v5046, 0.0
    %5062 = vadd.xlane.f32.xlu0 %v5061
    %v5063 = vpop.xlane.xlu0 %5062
    %v5064 = vsel %vm254, %v5047, 0.0
    %5065 = vadd.xlane.f32.xlu0 %v5064
    %v5066 = vpop.xlane.xlu0 %5065
    %v5067 = vsel %vm254, %v5048, 0.0
    %5068 = vadd.xlane.f32.xlu0 %v5067
    %v5069 = vpop.xlane.xlu0 %5068
    %v5070 = vsel %vm254, %v5049, 0.0
    %5071 = vadd.xlane.f32.xlu0 %v5070
    %v5072 = vpop.xlane.xlu0 %5071
    %v5073 = vsel %vm254, %v5050, 0.0
    %5074 = vadd.xlane.f32.xlu0 %v5073
    %v5075 = vpop.xlane.xlu0 %5074
    %v5076 = vmul.f32 %v5060, %v279
    %v5077 = vmul.f32 %v5063, %v279
    %v5078 = vmul.f32 %v5066, %v279
    %v5079 = vmul.f32 %v5069, %v279
    %v5080 = vmul.f32 %v5072, %v279
    %v5081 = vmul.f32 %v5075, %v279
    %v5082 = vsub.f32 %v5045, %v5076
    %v5083 = vsub.f32 %v5046, %v5077
    %v5084 = vsub.f32 %v5047, %v5078
    %v5085 = vsub.f32 %v5048, %v5079
    %v5086 = vsub.f32 %v5049, %v5080
    %v5087 = vsub.f32 %v5050, %v5081
    %v5088 = vmul.f32 %v5082, %v5082
    %v5089 = vmul.f32 %v5083, %v5083
    %v5090 = vmul.f32 %v5084, %v5084
    %v5091 = vmul.f32 %v5085, %v5085
    %v5092 = vmul.f32 %v5086, %v5086
    %v5093 = vmul.f32 %v5087, %v5087
    %v5094 = vsel %vm254, %v5088, 0.0
    %5095 = vadd.xlane.f32.xlu0 %v5094
    %v5096 = vpop.xlane.xlu0 %5095
    %v5097 = vsel %vm254, %v5089, 0.0
    %5098 = vadd.xlane.f32.xlu0 %v5097
    %v5099 = vpop.xlane.xlu0 %5098
    %v5100 = vsel %vm254, %v5090, 0.0
    %5101 = vadd.xlane.f32.xlu0 %v5100
    %v5102 = vpop.xlane.xlu0 %5101
    %v5103 = vsel %vm254, %v5091, 0.0
    %5104 = vadd.xlane.f32.xlu0 %v5103
    %v5105 = vpop.xlane.xlu0 %5104
    %v5106 = vsel %vm254, %v5092, 0.0
    %5107 = vadd.xlane.f32.xlu0 %v5106
    %v5108 = vpop.xlane.xlu0 %5107
    %v5109 = vsel %vm254, %v5093, 0.0
    %5110 = vadd.xlane.f32.xlu0 %v5109
    %v5111 = vpop.xlane.xlu0 %5110
    %v5112 = vmul.f32 %v5096, %v279
    %v5113 = vmul.f32 %v5099, %v279
    %v5114 = vmul.f32 %v5102, %v279
    %v5115 = vmul.f32 %v5105, %v279
    %v5116 = vmul.f32 %v5108, %v279
    %v5117 = vmul.f32 %v5111, %v279
    %v5118 = vperm.slane %v5052, 4
    %v5119 = vmul.f32 %v5118, %v5082
    %v5120 = vmul.f32 %v5118, %v5083
    %v5121 = vmul.f32 %v5118, %v5084
    %v5122 = vmul.f32 %v5118, %v5085
    %v5123 = vmul.f32 %v5118, %v5086
    %v5124 = vmul.f32 %v5118, %v5087
    %v5125 = vadd.f32 %v5112, 1e-06
    %v5126 = vadd.f32 %v5113, 1e-06
    %v5127 = vadd.f32 %v5114, 1e-06
    %v5128 = vadd.f32 %v5115, 1e-06
    %v5129 = vadd.f32 %v5116, 1e-06
    %v5130 = vadd.f32 %v5117, 1e-06
    %v5131 = vrsqrt.pop %v5125
    %v5132 = vmul.f32 %v5131, %v5125
    %v5133 = vmul.f32 %v5132, %v5131
    %v5134 = vmul.f32 0.5, %v5133
    %v5135 = vsub.f32 1.5, %v5134
    %v5136 = vmul.f32 %v5131, %v5135
    %vm5137 = vweird.f32 %v5125
    %vm5138 = vweird.f32 %v5131
    %vm5139 = vmor %vm5137, %vm5138
    %v5140 = vsel %vm5139, %v5131, %v5136
    %v5141 = vrsqrt.pop %v5126
    %v5142 = vmul.f32 %v5141, %v5126
    %v5143 = vmul.f32 %v5142, %v5141
    %v5144 = vmul.f32 0.5, %v5143
    %v5145 = vsub.f32 1.5, %v5144
    %v5146 = vmul.f32 %v5141, %v5145
    %vm5147 = vweird.f32 %v5126
    %vm5148 = vweird.f32 %v5141
    %vm5149 = vmor %vm5147, %vm5148
    %v5150 = vsel %vm5149, %v5141, %v5146
    %v5151 = vrsqrt.pop %v5127
    %v5152 = vmul.f32 %v5151, %v5127
    %v5153 = vmul.f32 %v5152, %v5151
    %v5154 = vmul.f32 0.5, %v5153
    %v5155 = vsub.f32 1.5, %v5154
    %v5156 = vmul.f32 %v5151, %v5155
    %vm5157 = vweird.f32 %v5127
    %vm5158 = vweird.f32 %v5151
    %vm5159 = vmor %vm5157, %vm5158
    %v5160 = vsel %vm5159, %v5151, %v5156
    %v5161 = vrsqrt.pop %v5128
    %v5162 = vmul.f32 %v5161, %v5128
    %v5163 = vmul.f32 %v5162, %v5161
    %v5164 = vmul.f32 0.5, %v5163
    %v5165 = vsub.f32 1.5, %v5164
    %v5166 = vmul.f32 %v5161, %v5165
    %vm5167 = vweird.f32 %v5128
    %vm5168 = vweird.f32 %v5161
    %vm5169 = vmor %vm5167, %vm5168
    %v5170 = vsel %vm5169, %v5161, %v5166
    %v5171 = vrsqrt.pop %v5129
    %v5172 = vmul.f32 %v5171, %v5129
    %v5173 = vmul.f32 %v5172, %v5171
    %v5174 = vmul.f32 0.5, %v5173
    %v5175 = vsub.f32 1.5, %v5174
    %v5176 = vmul.f32 %v5171, %v5175
    %vm5177 = vweird.f32 %v5129
    %vm5178 = vweird.f32 %v5171
    %vm5179 = vmor %vm5177, %vm5178
    %v5180 = vsel %vm5179, %v5171, %v5176
    %v5181 = vrsqrt.pop %v5130
    %v5182 = vmul.f32 %v5181, %v5130
    %v5183 = vmul.f32 %v5182, %v5181
    %v5184 = vmul.f32 0.5, %v5183
    %v5185 = vsub.f32 1.5, %v5184
    %v5186 = vmul.f32 %v5181, %v5185
    %vm5187 = vweird.f32 %v5130
    %vm5188 = vweird.f32 %v5181
    %vm5189 = vmor %vm5187, %vm5188
    %v5190 = vsel %vm5189, %v5181, %v5186
    %v5191 = vmul.f32 %v5119, %v5140
    %v5192 = vmul.f32 %v5120, %v5150
    %v5193 = vmul.f32 %v5121, %v5160
    %v5194 = vmul.f32 %v5122, %v5170
    %v5195 = vmul.f32 %v5123, %v5180
    %v5196 = vmul.f32 %v5124, %v5190
    %v5197 = vperm.slane %v5052, 5
    %v5198 = vadd.f32 %v5191, %v5197
    %v5199 = vadd.f32 %v5192, %v5197
    %v5200 = vadd.f32 %v5193, %v5197
    %v5201 = vadd.f32 %v5194, %v5197
    %v5202 = vadd.f32 %v5195, %v5197
    %v5203 = vadd.f32 %v5196, %v5197
    %v5204 = vpack.c.bf16 %v5199, %v5198
    %v5205 = vpack.c.bf16 %v5201, %v5200
    %v5206 = vpack.c.bf16 %v5203, %v5202
    %v5207 = vperm.slane %v5052, 0
    %v5212 = vunpack.c.l.b16 %v5054
    %v5213 = vunpack.c.l.b16 %v5055
    %v5214 = vunpack.c.l.b16 %v5056
    %v5215 = vunpack.c.l.b16 %v5057
    %v5216 = vpack.c.b16 %v5213, %v5212
    %v5217 = vpack.c.b16 %v5215, %v5214
    %v5221 = vsel %vm254, %v5204, 0
    %v5224 = vsel %vm254, %v5205, 0
    %v5227 = vsel %vm254, %v5206, 0
    %5229 = vmatpush.bf16.msra.mxu0 0
    %5230 = vmatpush.bf16.msra.mxu0 0
    %5231 = vmatpush.bf16.msra.mxu0 0
    %5232 = vmatpush.bf16.msra.mxu0 0
    %5233 = vmatpush.bf16.msra.mxu0 0
    %5234 = vmatpush.bf16.msra.mxu0 0
    %5235 = vmatpush.bf16.msra.mxu0 %v5217
    %5236 = vmatpush.bf16.msra.mxu0 %v5216
    %5237 = vmatmul.bf16.gmra.mxu0 %v5221
    %v5238 = vpop.f32.mrf.mxu0
    %v5239 = vadd.f32 %v5207, %v5238
    %v5240 = vpop.f32.mrf.mxu0
    %v5241 = vadd.f32 %v5207, %v5240
    %5242 = vmatmul.bf16.gmra.mxu0 %v5224
    %v5243 = vpop.f32.mrf.mxu0
    %v5244 = vadd.f32 %v5207, %v5243
    %v5245 = vpop.f32.mrf.mxu0
    %v5246 = vadd.f32 %v5207, %v5245
    %5247 = vmatmul.bf16.gmra.mxu0 %v5227
    %v5248 = vpop.f32.mrf.mxu0
    %v5249 = vadd.f32 %v5207, %v5248
    %v5250 = vpop.f32.mrf.mxu0
    %v5251 = vadd.f32 %v5207, %v5250
    %5252 = vdwg.mxu0
    %v5253 = vpack.c.bf16 %v5239, %v5239
    %v5254 = vpack.c.bf16 %v5241, %v5241
    %v5255 = vpack.c.bf16 %v5244, %v5244
    %v5256 = vpack.c.bf16 %v5246, %v5246
    %v5257 = vpack.c.bf16 %v5249, %v5249
    %v5258 = vpack.c.bf16 %v5251, %v5251
    %v5262 = vunpack.c.l.b16 %v5253
    %v5263 = vunpack.c.l.b16 %v5254
    %v5264 = vunpack.c.l.b16 %v5255
    %v5265 = vpack.c.b16 %v5263, %v5262
    %v5266 = vpack.c.b16 %v5264, %v5264
    %5267 = vrot.lane.b32.xlu0 %v5265, 96
    %v5268 = vpop.permute.xlu0 %5267
    %5269 = vrot.lane.b32.xlu0 %v5266, 96
    %v5270 = vpop.permute.xlu0 %5269
    %v5272 = vsel %vm475, %v5265, 0
    %v5275 = vsel %vm475, %v5266, 0
    %v5278 = vsel %vm475, %v5268, 0
    %v5281 = vsel %vm475, %v5270, 0
    %5283 = vmatpush.bf16.xpose.msra.mxu0 0
    %5284 = vmatpush.bf16.xpose.msra.mxu0 0
    %5285 = vmatpush.bf16.xpose.msra.mxu0 0
    %5286 = vmatpush.bf16.xpose.msra.mxu0 0
    %5287 = vmatpush.bf16.xpose.msra.mxu0 0
    %5288 = vmatpush.bf16.xpose.msra.mxu0 0
    %5289 = vmatpush.bf16.xpose.msra.mxu0 %v5281
    %5290 = vmatpush.bf16.xpose.msra.mxu0 %v5278
    %5291 = vmatmul.bf16.gmra.mxu0 %v5272
    %v5292 = vpop.f32.mrf.mxu0
    %v5293 = vadd.f32 0.0, %v5292
    %v5294 = vpop.f32.mrf.mxu0
    %v5295 = vadd.f32 0.0, %v5294
    %5296 = vmatmul.bf16.gmra.mxu0 %v5275
    %v5297 = vpop.f32.mrf.mxu0
    %v5298 = vadd.f32 0.0, %v5297
    %v5299 = vpop.f32.mrf.mxu0
    %5300 = vdwg.mxu0
    %v5304 = vunpack.c.l.b16 %v5256
    %v5305 = vunpack.c.l.b16 %v5257
    %v5306 = vunpack.c.l.b16 %v5258
    %v5307 = vpack.c.b16 %v5305, %v5304
    %v5308 = vpack.c.b16 %v5306, %v5306
    %5309 = vrot.lane.b32.xlu0 %v5307, 96
    %v5310 = vpop.permute.xlu0 %5309
    %5311 = vrot.lane.b32.xlu0 %v5308, 96
    %v5312 = vpop.permute.xlu0 %5311
    %v5314 = vsel %vm475, %v5307, 0
    %v5317 = vsel %vm475, %v5308, 0
    %v5320 = vsel %vm475, %v5310, 0
    %v5323 = vsel %vm475, %v5312, 0
    %5325 = vmatpush.bf16.xpose.msra.mxu0 0
    %5326 = vmatpush.bf16.xpose.msra.mxu0 0
    %5327 = vmatpush.bf16.xpose.msra.mxu0 0
    %5328 = vmatpush.bf16.xpose.msra.mxu0 0
    %5329 = vmatpush.bf16.xpose.msra.mxu0 0
    %5330 = vmatpush.bf16.xpose.msra.mxu0 0
    %5331 = vmatpush.bf16.xpose.msra.mxu0 %v5323
    %5332 = vmatpush.bf16.xpose.msra.mxu0 %v5320
    %5333 = vmatmul.bf16.gmra.mxu0 %v5314
    %v5334 = vpop.f32.mrf.mxu0
    %v5335 = vadd.f32 0.0, %v5334
    %v5336 = vpop.f32.mrf.mxu0
    %v5337 = vadd.f32 0.0, %v5336
    %5338 = vmatmul.bf16.gmra.mxu0 %v5317
    %v5339 = vpop.f32.mrf.mxu0
    %v5340 = vadd.f32 0.0, %v5339
    %v5341 = vpop.f32.mrf.mxu0
    %5342 = vdwg.mxu0
    %v5343 = vmul.f32 %v5293, 0.35355338
    %v5344 = vmul.f32 %v5295, 0.35355338
    %v5345 = vmul.f32 %v5298, 0.35355338
    %v5346 = vmul.f32 %v5335, 0.35355338
    %v5347 = vmul.f32 %v5337, 0.35355338
    %v5348 = vmul.f32 %v5340, 0.35355338
    %v5349 = vadd.f32 %v5343, %v554
    %v5350 = vadd.f32 %v5344, %v554
    %v5351 = vadd.f32 %v5345, %v554
    %v5352 = vadd.f32 %v5346, %v555
    %v5353 = vadd.f32 %v5347, %v555
    %v5354 = vadd.f32 %v5348, %v555
    %v5355 = vsel %vm194, %v5349, -inf
    %5356 = vmax.xlane.f32.xlu0 %v5355
    %v5357 = vpop.xlane.xlu0 %5356
    %v5358 = vsel %vm194, %v5350, -inf
    %5359 = vmax.xlane.f32.xlu0 %v5358
    %v5360 = vpop.xlane.xlu0 %5359
    %v5361 = vsel %vm194, %v5351, -inf
    %5362 = vmax.xlane.f32.xlu0 %v5361
    %v5363 = vpop.xlane.xlu0 %5362
    %v5364 = vsel %vm194, %v5352, -inf
    %5365 = vmax.xlane.f32.xlu0 %v5364
    %v5366 = vpop.xlane.xlu0 %5365
    %v5367 = vsel %vm194, %v5353, -inf
    %5368 = vmax.xlane.f32.xlu0 %v5367
    %v5369 = vpop.xlane.xlu0 %5368
    %v5370 = vsel %vm194, %v5354, -inf
    %5371 = vmax.xlane.f32.xlu0 %v5370
    %v5372 = vpop.xlane.xlu0 %5371
    %v5373 = vsub.f32 %v5349, %v5357
    %v5374 = vsub.f32 %v5350, %v5360
    %v5375 = vsub.f32 %v5351, %v5363
    %v5376 = vsub.f32 %v5352, %v5366
    %v5377 = vsub.f32 %v5353, %v5369
    %v5378 = vsub.f32 %v5354, %v5372
    %v5379 = vmul.f32 %v5373, 1.442695
    %v5380 = vpow.pop %v5379
    %v5381 = vmul.f32 %v5374, 1.442695
    %v5382 = vpow.pop %v5381
    %v5383 = vmul.f32 %v5375, 1.442695
    %v5384 = vpow.pop %v5383
    %v5385 = vmul.f32 %v5376, 1.442695
    %v5386 = vpow.pop %v5385
    %v5387 = vmul.f32 %v5377, 1.442695
    %v5388 = vpow.pop %v5387
    %v5389 = vmul.f32 %v5378, 1.442695
    %v5390 = vpow.pop %v5389
    %v5391 = vsel %vm194, %v5380, 0.0
    %5392 = vadd.xlane.f32.xlu0 %v5391
    %v5393 = vpop.xlane.xlu0 %5392
    %v5394 = vsel %vm194, %v5382, 0.0
    %5395 = vadd.xlane.f32.xlu0 %v5394
    %v5396 = vpop.xlane.xlu0 %5395
    %v5397 = vsel %vm194, %v5384, 0.0
    %5398 = vadd.xlane.f32.xlu0 %v5397
    %v5399 = vpop.xlane.xlu0 %5398
    %v5400 = vsel %vm194, %v5386, 0.0
    %5401 = vadd.xlane.f32.xlu0 %v5400
    %v5402 = vpop.xlane.xlu0 %5401
    %v5403 = vsel %vm194, %v5388, 0.0
    %5404 = vadd.xlane.f32.xlu0 %v5403
    %v5405 = vpop.xlane.xlu0 %5404
    %v5406 = vsel %vm194, %v5390, 0.0
    %5407 = vadd.xlane.f32.xlu0 %v5406
    %v5408 = vpop.xlane.xlu0 %5407
    %v5409 = vrcp.pop %v5393
    %v5410 = vrcp.pop %v5396
    %v5411 = vrcp.pop %v5399
    %v5412 = vrcp.pop %v5402
    %v5413 = vrcp.pop %v5405
    %v5414 = vrcp.pop %v5408
    %v5415 = vmul.f32 %v5380, %v5409
    %v5416 = vmul.f32 %v5382, %v5410
    %v5417 = vmul.f32 %v5384, %v5411
    %v5418 = vmul.f32 %v5386, %v5412
    %v5419 = vmul.f32 %v5388, %v5413
    %v5420 = vmul.f32 %v5390, %v5414
    %v5421 = vpack.c.bf16 %v5415, %v5415
    %v5422 = vpack.c.bf16 %v5416, %v5416
    %v5423 = vpack.c.bf16 %v5417, %v5417
    %v5424 = vpack.c.bf16 %v5418, %v5418
    %v5425 = vpack.c.bf16 %v5419, %v5419
    %v5426 = vpack.c.bf16 %v5420, %v5420
    %v5430 = vunpack.c.l.b16 %v5421
    %v5431 = vunpack.c.l.b16 %v5422
    %v5432 = vunpack.c.l.b16 %v5423
    %v5433 = vpack.c.b16 %v5431, %v5430
    %v5434 = vpack.c.b16 %v5432, %v5432
    %5435 = vrot.lane.b32.xlu0 %v5265, 64
    %v5436 = vpop.permute.xlu0 %5435
    %5437 = vrot.lane.b32.xlu0 %v5266, 64
    %v5438 = vpop.permute.xlu0 %5437
    %v5441 = vsel %vm194, %v5433, 0
    %v5444 = vsel %vm194, %v5434, 0
    %v5447 = vsel %vm201, %v5438, 0
    %5449 = vmatpush.bf16.msra.mxu0 0
    %5450 = vmatpush.bf16.msra.mxu0 0
    %5451 = vmatpush.bf16.msra.mxu0 0
    %5452 = vmatpush.bf16.msra.mxu0 0
    %5453 = vmatpush.bf16.msra.mxu0 0
    %5454 = vmatpush.bf16.msra.mxu0 0
    %5455 = vmatpush.bf16.msra.mxu0 %v5447
    %5456 = vmatpush.bf16.msra.mxu0 %v5436
    %5457 = vmatmul.bf16.gmra.mxu0 %v5441
    %v5458 = vpop.f32.mrf.mxu0
    %v5459 = vadd.f32 0.0, %v5458
    %v5460 = vpop.f32.mrf.mxu0
    %v5461 = vadd.f32 0.0, %v5460
    %5462 = vmatmul.bf16.gmra.mxu0 %v5444
    %v5463 = vpop.f32.mrf.mxu0
    %v5464 = vadd.f32 0.0, %v5463
    %v5465 = vpop.f32.mrf.mxu0
    %5466 = vdwg.mxu0
    %v5470 = vunpack.c.l.b16 %v5424
    %v5471 = vunpack.c.l.b16 %v5425
    %v5472 = vunpack.c.l.b16 %v5426
    %v5473 = vpack.c.b16 %v5471, %v5470
    %v5474 = vpack.c.b16 %v5472, %v5472
    %5475 = vrot.lane.b32.xlu0 %v5307, 64
    %v5476 = vpop.permute.xlu0 %5475
    %5477 = vrot.lane.b32.xlu0 %v5308, 64
    %v5478 = vpop.permute.xlu0 %5477
    %v5481 = vsel %vm194, %v5473, 0
    %v5484 = vsel %vm194, %v5474, 0
    %v5487 = vsel %vm201, %v5478, 0
    %5489 = vmatpush.bf16.msra.mxu0 0
    %5490 = vmatpush.bf16.msra.mxu0 0
    %5491 = vmatpush.bf16.msra.mxu0 0
    %5492 = vmatpush.bf16.msra.mxu0 0
    %5493 = vmatpush.bf16.msra.mxu0 0
    %5494 = vmatpush.bf16.msra.mxu0 0
    %5495 = vmatpush.bf16.msra.mxu0 %v5487
    %5496 = vmatpush.bf16.msra.mxu0 %v5476
    %5497 = vmatmul.bf16.gmra.mxu0 %v5481
    %v5498 = vpop.f32.mrf.mxu0
    %v5499 = vadd.f32 0.0, %v5498
    %v5500 = vpop.f32.mrf.mxu0
    %v5501 = vadd.f32 0.0, %v5500
    %5502 = vmatmul.bf16.gmra.mxu0 %v5484
    %v5503 = vpop.f32.mrf.mxu0
    %v5504 = vadd.f32 0.0, %v5503
    %v5505 = vpop.f32.mrf.mxu0
    %5506 = vdwg.mxu0
    %5507 = vrot.lane.b32.xlu0 %v5265, 120
    %v5508 = vpop.permute.xlu0 %5507
    %5509 = vrot.lane.b32.xlu0 %v5266, 120
    %v5510 = vpop.permute.xlu0 %5509
    %5511 = vrot.lane.b32.xlu0 %v5265, 88
    %v5512 = vpop.permute.xlu0 %5511
    %5513 = vrot.lane.b32.xlu0 %v5266, 88
    %v5514 = vpop.permute.xlu0 %5513
    %v5516 = vsel %vm475, %v5508, 0
    %v5519 = vsel %vm475, %v5510, 0
    %v5522 = vsel %vm475, %v5512, 0
    %v5525 = vsel %vm475, %v5514, 0
    %5527 = vmatpush.bf16.xpose.msra.mxu0 0
    %5528 = vmatpush.bf16.xpose.msra.mxu0 0
    %5529 = vmatpush.bf16.xpose.msra.mxu0 0
    %5530 = vmatpush.bf16.xpose.msra.mxu0 0
    %5531 = vmatpush.bf16.xpose.msra.mxu0 0
    %5532 = vmatpush.bf16.xpose.msra.mxu0 0
    %5533 = vmatpush.bf16.xpose.msra.mxu0 %v5525
    %5534 = vmatpush.bf16.xpose.msra.mxu0 %v5522
    %5535 = vmatmul.bf16.gmra.mxu0 %v5516
    %v5536 = vpop.f32.mrf.mxu0
    %v5537 = vadd.f32 0.0, %v5536
    %v5538 = vpop.f32.mrf.mxu0
    %v5539 = vadd.f32 0.0, %v5538
    %5540 = vmatmul.bf16.gmra.mxu0 %v5519
    %v5541 = vpop.f32.mrf.mxu0
    %v5542 = vadd.f32 0.0, %v5541
    %v5543 = vpop.f32.mrf.mxu0
    %5544 = vdwg.mxu0
    %5545 = vrot.lane.b32.xlu0 %v5307, 120
    %v5546 = vpop.permute.xlu0 %5545
    %5547 = vrot.lane.b32.xlu0 %v5308, 120
    %v5548 = vpop.permute.xlu0 %5547
    %5549 = vrot.lane.b32.xlu0 %v5307, 88
    %v5550 = vpop.permute.xlu0 %5549
    %5551 = vrot.lane.b32.xlu0 %v5308, 88
    %v5552 = vpop.permute.xlu0 %5551
    %v5554 = vsel %vm475, %v5546, 0
    %v5557 = vsel %vm475, %v5548, 0
    %v5560 = vsel %vm475, %v5550, 0
    %v5563 = vsel %vm475, %v5552, 0
    %5565 = vmatpush.bf16.xpose.msra.mxu0 0
    %5566 = vmatpush.bf16.xpose.msra.mxu0 0
    %5567 = vmatpush.bf16.xpose.msra.mxu0 0
    %5568 = vmatpush.bf16.xpose.msra.mxu0 0
    %5569 = vmatpush.bf16.xpose.msra.mxu0 0
    %5570 = vmatpush.bf16.xpose.msra.mxu0 0
    %5571 = vmatpush.bf16.xpose.msra.mxu0 %v5563
    %5572 = vmatpush.bf16.xpose.msra.mxu0 %v5560
    %5573 = vmatmul.bf16.gmra.mxu0 %v5554
    %v5574 = vpop.f32.mrf.mxu0
    %v5575 = vadd.f32 0.0, %v5574
    %v5576 = vpop.f32.mrf.mxu0
    %v5577 = vadd.f32 0.0, %v5576
    %5578 = vmatmul.bf16.gmra.mxu0 %v5557
    %v5579 = vpop.f32.mrf.mxu0
    %v5580 = vadd.f32 0.0, %v5579
    %v5581 = vpop.f32.mrf.mxu0
    %5582 = vdwg.mxu0
    %v5583 = vmul.f32 %v5537, 0.35355338
    %v5584 = vmul.f32 %v5539, 0.35355338
    %v5585 = vmul.f32 %v5542, 0.35355338
    %v5586 = vmul.f32 %v5575, 0.35355338
    %v5587 = vmul.f32 %v5577, 0.35355338
    %v5588 = vmul.f32 %v5580, 0.35355338
    %v5589 = vadd.f32 %v5583, %v554
    %v5590 = vadd.f32 %v5584, %v554
    %v5591 = vadd.f32 %v5585, %v554
    %v5592 = vadd.f32 %v5586, %v555
    %v5593 = vadd.f32 %v5587, %v555
    %v5594 = vadd.f32 %v5588, %v555
    %v5595 = vsel %vm194, %v5589, -inf
    %5596 = vmax.xlane.f32.xlu0 %v5595
    %v5597 = vpop.xlane.xlu0 %5596
    %v5598 = vsel %vm194, %v5590, -inf
    %5599 = vmax.xlane.f32.xlu0 %v5598
    %v5600 = vpop.xlane.xlu0 %5599
    %v5601 = vsel %vm194, %v5591, -inf
    %5602 = vmax.xlane.f32.xlu0 %v5601
    %v5603 = vpop.xlane.xlu0 %5602
    %v5604 = vsel %vm194, %v5592, -inf
    %5605 = vmax.xlane.f32.xlu0 %v5604
    %v5606 = vpop.xlane.xlu0 %5605
    %v5607 = vsel %vm194, %v5593, -inf
    %5608 = vmax.xlane.f32.xlu0 %v5607
    %v5609 = vpop.xlane.xlu0 %5608
    %v5610 = vsel %vm194, %v5594, -inf
    %5611 = vmax.xlane.f32.xlu0 %v5610
    %v5612 = vpop.xlane.xlu0 %5611
    %v5613 = vsub.f32 %v5589, %v5597
    %v5614 = vsub.f32 %v5590, %v5600
    %v5615 = vsub.f32 %v5591, %v5603
    %v5616 = vsub.f32 %v5592, %v5606
    %v5617 = vsub.f32 %v5593, %v5609
    %v5618 = vsub.f32 %v5594, %v5612
    %v5619 = vmul.f32 %v5613, 1.442695
    %v5620 = vpow.pop %v5619
    %v5621 = vmul.f32 %v5614, 1.442695
    %v5622 = vpow.pop %v5621
    %v5623 = vmul.f32 %v5615, 1.442695
    %v5624 = vpow.pop %v5623
    %v5625 = vmul.f32 %v5616, 1.442695
    %v5626 = vpow.pop %v5625
    %v5627 = vmul.f32 %v5617, 1.442695
    %v5628 = vpow.pop %v5627
    %v5629 = vmul.f32 %v5618, 1.442695
    %v5630 = vpow.pop %v5629
    %v5631 = vsel %vm194, %v5620, 0.0
    %5632 = vadd.xlane.f32.xlu0 %v5631
    %v5633 = vpop.xlane.xlu0 %5632
    %v5634 = vsel %vm194, %v5622, 0.0
    %5635 = vadd.xlane.f32.xlu0 %v5634
    %v5636 = vpop.xlane.xlu0 %5635
    %v5637 = vsel %vm194, %v5624, 0.0
    %5638 = vadd.xlane.f32.xlu0 %v5637
    %v5639 = vpop.xlane.xlu0 %5638
    %v5640 = vsel %vm194, %v5626, 0.0
    %5641 = vadd.xlane.f32.xlu0 %v5640
    %v5642 = vpop.xlane.xlu0 %5641
    %v5643 = vsel %vm194, %v5628, 0.0
    %5644 = vadd.xlane.f32.xlu0 %v5643
    %v5645 = vpop.xlane.xlu0 %5644
    %v5646 = vsel %vm194, %v5630, 0.0
    %5647 = vadd.xlane.f32.xlu0 %v5646
    %v5648 = vpop.xlane.xlu0 %5647
    %v5649 = vrcp.pop %v5633
    %v5650 = vrcp.pop %v5636
    %v5651 = vrcp.pop %v5639
    %v5652 = vrcp.pop %v5642
    %v5653 = vrcp.pop %v5645
    %v5654 = vrcp.pop %v5648
    %v5655 = vmul.f32 %v5620, %v5649
    %v5656 = vmul.f32 %v5622, %v5650
    %v5657 = vmul.f32 %v5624, %v5651
    %v5658 = vmul.f32 %v5626, %v5652
    %v5659 = vmul.f32 %v5628, %v5653
    %v5660 = vmul.f32 %v5630, %v5654
    %v5661 = vpack.c.bf16 %v5655, %v5655
    %v5662 = vpack.c.bf16 %v5656, %v5656
    %v5663 = vpack.c.bf16 %v5657, %v5657
    %v5664 = vpack.c.bf16 %v5658, %v5658
    %v5665 = vpack.c.bf16 %v5659, %v5659
    %v5666 = vpack.c.bf16 %v5660, %v5660
    %v5670 = vunpack.c.l.b16 %v5661
    %v5671 = vunpack.c.l.b16 %v5662
    %v5672 = vunpack.c.l.b16 %v5663
    %v5673 = vpack.c.b16 %v5671, %v5670
    %v5674 = vpack.c.b16 %v5672, %v5672
    %5675 = vrot.lane.b32.xlu0 %v5265, 56
    %v5676 = vpop.permute.xlu0 %5675
    %5677 = vrot.lane.b32.xlu0 %v5266, 56
    %v5678 = vpop.permute.xlu0 %5677
    %v5681 = vsel %vm194, %v5673, 0
    %v5684 = vsel %vm194, %v5674, 0
    %v5687 = vsel %vm201, %v5678, 0
    %5689 = vmatpush.bf16.msra.mxu0 0
    %5690 = vmatpush.bf16.msra.mxu0 0
    %5691 = vmatpush.bf16.msra.mxu0 0
    %5692 = vmatpush.bf16.msra.mxu0 0
    %5693 = vmatpush.bf16.msra.mxu0 0
    %5694 = vmatpush.bf16.msra.mxu0 0
    %5695 = vmatpush.bf16.msra.mxu0 %v5687
    %5696 = vmatpush.bf16.msra.mxu0 %v5676
    %5697 = vmatmul.bf16.gmra.mxu0 %v5681
    %v5698 = vpop.f32.mrf.mxu0
    %v5699 = vadd.f32 0.0, %v5698
    %v5700 = vpop.f32.mrf.mxu0
    %v5701 = vadd.f32 0.0, %v5700
    %5702 = vmatmul.bf16.gmra.mxu0 %v5684
    %v5703 = vpop.f32.mrf.mxu0
    %v5704 = vadd.f32 0.0, %v5703
    %v5705 = vpop.f32.mrf.mxu0
    %5706 = vdwg.mxu0
    %v5710 = vunpack.c.l.b16 %v5664
    %v5711 = vunpack.c.l.b16 %v5665
    %v5712 = vunpack.c.l.b16 %v5666
    %v5713 = vpack.c.b16 %v5711, %v5710
    %v5714 = vpack.c.b16 %v5712, %v5712
    %5715 = vrot.lane.b32.xlu0 %v5307, 56
    %v5716 = vpop.permute.xlu0 %5715
    %5717 = vrot.lane.b32.xlu0 %v5308, 56
    %v5718 = vpop.permute.xlu0 %5717
    %v5721 = vsel %vm194, %v5713, 0
    %v5724 = vsel %vm194, %v5714, 0
    %v5727 = vsel %vm201, %v5718, 0
    %5729 = vmatpush.bf16.msra.mxu0 0
    %5730 = vmatpush.bf16.msra.mxu0 0
    %5731 = vmatpush.bf16.msra.mxu0 0
    %5732 = vmatpush.bf16.msra.mxu0 0
    %5733 = vmatpush.bf16.msra.mxu0 0
    %5734 = vmatpush.bf16.msra.mxu0 0
    %5735 = vmatpush.bf16.msra.mxu0 %v5727
    %5736 = vmatpush.bf16.msra.mxu0 %v5716
    %5737 = vmatmul.bf16.gmra.mxu0 %v5721
    %v5738 = vpop.f32.mrf.mxu0
    %v5739 = vadd.f32 0.0, %v5738
    %v5740 = vpop.f32.mrf.mxu0
    %v5741 = vadd.f32 0.0, %v5740
    %5742 = vmatmul.bf16.gmra.mxu0 %v5724
    %v5743 = vpop.f32.mrf.mxu0
    %v5744 = vadd.f32 0.0, %v5743
    %v5745 = vpop.f32.mrf.mxu0
    %5746 = vdwg.mxu0
    %5747 = vrot.lane.b32.xlu0 %v5265, 112
    %v5748 = vpop.permute.xlu0 %5747
    %5749 = vrot.lane.b32.xlu0 %v5266, 112
    %v5750 = vpop.permute.xlu0 %5749
    %5751 = vrot.lane.b32.xlu0 %v5265, 80
    %v5752 = vpop.permute.xlu0 %5751
    %5753 = vrot.lane.b32.xlu0 %v5266, 80
    %v5754 = vpop.permute.xlu0 %5753
    %v5756 = vsel %vm475, %v5748, 0
    %v5759 = vsel %vm475, %v5750, 0
    %v5762 = vsel %vm475, %v5752, 0
    %v5765 = vsel %vm475, %v5754, 0
    %5767 = vmatpush.bf16.xpose.msra.mxu0 0
    %5768 = vmatpush.bf16.xpose.msra.mxu0 0
    %5769 = vmatpush.bf16.xpose.msra.mxu0 0
    %5770 = vmatpush.bf16.xpose.msra.mxu0 0
    %5771 = vmatpush.bf16.xpose.msra.mxu0 0
    %5772 = vmatpush.bf16.xpose.msra.mxu0 0
    %5773 = vmatpush.bf16.xpose.msra.mxu0 %v5765
    %5774 = vmatpush.bf16.xpose.msra.mxu0 %v5762
    %5775 = vmatmul.bf16.gmra.mxu0 %v5756
    %v5776 = vpop.f32.mrf.mxu0
    %v5777 = vadd.f32 0.0, %v5776
    %v5778 = vpop.f32.mrf.mxu0
    %v5779 = vadd.f32 0.0, %v5778
    %5780 = vmatmul.bf16.gmra.mxu0 %v5759
    %v5781 = vpop.f32.mrf.mxu0
    %v5782 = vadd.f32 0.0, %v5781
    %v5783 = vpop.f32.mrf.mxu0
    %5784 = vdwg.mxu0
    %5785 = vrot.lane.b32.xlu0 %v5307, 112
    %v5786 = vpop.permute.xlu0 %5785
    %5787 = vrot.lane.b32.xlu0 %v5308, 112
    %v5788 = vpop.permute.xlu0 %5787
    %5789 = vrot.lane.b32.xlu0 %v5307, 80
    %v5790 = vpop.permute.xlu0 %5789
    %5791 = vrot.lane.b32.xlu0 %v5308, 80
    %v5792 = vpop.permute.xlu0 %5791
    %v5794 = vsel %vm475, %v5786, 0
    %v5797 = vsel %vm475, %v5788, 0
    %v5800 = vsel %vm475, %v5790, 0
    %v5803 = vsel %vm475, %v5792, 0
    %5805 = vmatpush.bf16.xpose.msra.mxu0 0
    %5806 = vmatpush.bf16.xpose.msra.mxu0 0
    %5807 = vmatpush.bf16.xpose.msra.mxu0 0
    %5808 = vmatpush.bf16.xpose.msra.mxu0 0
    %5809 = vmatpush.bf16.xpose.msra.mxu0 0
    %5810 = vmatpush.bf16.xpose.msra.mxu0 0
    %5811 = vmatpush.bf16.xpose.msra.mxu0 %v5803
    %5812 = vmatpush.bf16.xpose.msra.mxu0 %v5800
    %5813 = vmatmul.bf16.gmra.mxu0 %v5794
    %v5814 = vpop.f32.mrf.mxu0
    %v5815 = vadd.f32 0.0, %v5814
    %v5816 = vpop.f32.mrf.mxu0
    %v5817 = vadd.f32 0.0, %v5816
    %5818 = vmatmul.bf16.gmra.mxu0 %v5797
    %v5819 = vpop.f32.mrf.mxu0
    %v5820 = vadd.f32 0.0, %v5819
    %v5821 = vpop.f32.mrf.mxu0
    %5822 = vdwg.mxu0
    %v5823 = vmul.f32 %v5777, 0.35355338
    %v5824 = vmul.f32 %v5779, 0.35355338
    %v5825 = vmul.f32 %v5782, 0.35355338
    %v5826 = vmul.f32 %v5815, 0.35355338
    %v5827 = vmul.f32 %v5817, 0.35355338
    %v5828 = vmul.f32 %v5820, 0.35355338
    %v5829 = vadd.f32 %v5823, %v554
    %v5830 = vadd.f32 %v5824, %v554
    %v5831 = vadd.f32 %v5825, %v554
    %v5832 = vadd.f32 %v5826, %v555
    %v5833 = vadd.f32 %v5827, %v555
    %v5834 = vadd.f32 %v5828, %v555
    %v5835 = vsel %vm194, %v5829, -inf
    %5836 = vmax.xlane.f32.xlu0 %v5835
    %v5837 = vpop.xlane.xlu0 %5836
    %v5838 = vsel %vm194, %v5830, -inf
    %5839 = vmax.xlane.f32.xlu0 %v5838
    %v5840 = vpop.xlane.xlu0 %5839
    %v5841 = vsel %vm194, %v5831, -inf
    %5842 = vmax.xlane.f32.xlu0 %v5841
    %v5843 = vpop.xlane.xlu0 %5842
    %v5844 = vsel %vm194, %v5832, -inf
    %5845 = vmax.xlane.f32.xlu0 %v5844
    %v5846 = vpop.xlane.xlu0 %5845
    %v5847 = vsel %vm194, %v5833, -inf
    %5848 = vmax.xlane.f32.xlu0 %v5847
    %v5849 = vpop.xlane.xlu0 %5848
    %v5850 = vsel %vm194, %v5834, -inf
    %5851 = vmax.xlane.f32.xlu0 %v5850
    %v5852 = vpop.xlane.xlu0 %5851
    %v5853 = vsub.f32 %v5829, %v5837
    %v5854 = vsub.f32 %v5830, %v5840
    %v5855 = vsub.f32 %v5831, %v5843
    %v5856 = vsub.f32 %v5832, %v5846
    %v5857 = vsub.f32 %v5833, %v5849
    %v5858 = vsub.f32 %v5834, %v5852
    %v5859 = vmul.f32 %v5853, 1.442695
    %v5860 = vpow.pop %v5859
    %v5861 = vmul.f32 %v5854, 1.442695
    %v5862 = vpow.pop %v5861
    %v5863 = vmul.f32 %v5855, 1.442695
    %v5864 = vpow.pop %v5863
    %v5865 = vmul.f32 %v5856, 1.442695
    %v5866 = vpow.pop %v5865
    %v5867 = vmul.f32 %v5857, 1.442695
    %v5868 = vpow.pop %v5867
    %v5869 = vmul.f32 %v5858, 1.442695
    %v5870 = vpow.pop %v5869
    %v5871 = vsel %vm194, %v5860, 0.0
    %5872 = vadd.xlane.f32.xlu0 %v5871
    %v5873 = vpop.xlane.xlu0 %5872
    %v5874 = vsel %vm194, %v5862, 0.0
    %5875 = vadd.xlane.f32.xlu0 %v5874
    %v5876 = vpop.xlane.xlu0 %5875
    %v5877 = vsel %vm194, %v5864, 0.0
    %5878 = vadd.xlane.f32.xlu0 %v5877
    %v5879 = vpop.xlane.xlu0 %5878
    %v5880 = vsel %vm194, %v5866, 0.0
    %5881 = vadd.xlane.f32.xlu0 %v5880
    %v5882 = vpop.xlane.xlu0 %5881
    %v5883 = vsel %vm194, %v5868, 0.0
    %5884 = vadd.xlane.f32.xlu0 %v5883
    %v5885 = vpop.xlane.xlu0 %5884
    %v5886 = vsel %vm194, %v5870, 0.0
    %5887 = vadd.xlane.f32.xlu0 %v5886
    %v5888 = vpop.xlane.xlu0 %5887
    %v5889 = vrcp.pop %v5873
    %v5890 = vrcp.pop %v5876
    %v5891 = vrcp.pop %v5879
    %v5892 = vrcp.pop %v5882
    %v5893 = vrcp.pop %v5885
    %v5894 = vrcp.pop %v5888
    %v5895 = vmul.f32 %v5860, %v5889
    %v5896 = vmul.f32 %v5862, %v5890
    %v5897 = vmul.f32 %v5864, %v5891
    %v5898 = vmul.f32 %v5866, %v5892
    %v5899 = vmul.f32 %v5868, %v5893
    %v5900 = vmul.f32 %v5870, %v5894
    %v5901 = vpack.c.bf16 %v5895, %v5895
    %v5902 = vpack.c.bf16 %v5896, %v5896
    %v5903 = vpack.c.bf16 %v5897, %v5897
    %v5904 = vpack.c.bf16 %v5898, %v5898
    %v5905 = vpack.c.bf16 %v5899, %v5899
    %v5906 = vpack.c.bf16 %v5900, %v5900
    %v5910 = vunpack.c.l.b16 %v5901
    %v5911 = vunpack.c.l.b16 %v5902
    %v5912 = vunpack.c.l.b16 %v5903
    %v5913 = vpack.c.b16 %v5911, %v5910
    %v5914 = vpack.c.b16 %v5912, %v5912
    %5915 = vrot.lane.b32.xlu0 %v5265, 48
    %v5916 = vpop.permute.xlu0 %5915
    %5917 = vrot.lane.b32.xlu0 %v5266, 48
    %v5918 = vpop.permute.xlu0 %5917
    %v5921 = vsel %vm194, %v5913, 0
    %v5924 = vsel %vm194, %v5914, 0
    %v5927 = vsel %vm201, %v5918, 0
    %5929 = vmatpush.bf16.msra.mxu0 0
    %5930 = vmatpush.bf16.msra.mxu0 0
    %5931 = vmatpush.bf16.msra.mxu0 0
    %5932 = vmatpush.bf16.msra.mxu0 0
    %5933 = vmatpush.bf16.msra.mxu0 0
    %5934 = vmatpush.bf16.msra.mxu0 0
    %5935 = vmatpush.bf16.msra.mxu0 %v5927
    %5936 = vmatpush.bf16.msra.mxu0 %v5916
    %5937 = vmatmul.bf16.gmra.mxu0 %v5921
    %v5938 = vpop.f32.mrf.mxu0
    %v5939 = vadd.f32 0.0, %v5938
    %v5940 = vpop.f32.mrf.mxu0
    %v5941 = vadd.f32 0.0, %v5940
    %5942 = vmatmul.bf16.gmra.mxu0 %v5924
    %v5943 = vpop.f32.mrf.mxu0
    %v5944 = vadd.f32 0.0, %v5943
    %v5945 = vpop.f32.mrf.mxu0
    %5946 = vdwg.mxu0
    %v5950 = vunpack.c.l.b16 %v5904
    %v5951 = vunpack.c.l.b16 %v5905
    %v5952 = vunpack.c.l.b16 %v5906
    %v5953 = vpack.c.b16 %v5951, %v5950
    %v5954 = vpack.c.b16 %v5952, %v5952
    %5955 = vrot.lane.b32.xlu0 %v5307, 48
    %v5956 = vpop.permute.xlu0 %5955
    %5957 = vrot.lane.b32.xlu0 %v5308, 48
    %v5958 = vpop.permute.xlu0 %5957
    %v5961 = vsel %vm194, %v5953, 0
    %v5964 = vsel %vm194, %v5954, 0
    %v5967 = vsel %vm201, %v5958, 0
    %5969 = vmatpush.bf16.msra.mxu0 0
    %5970 = vmatpush.bf16.msra.mxu0 0
    %5971 = vmatpush.bf16.msra.mxu0 0
    %5972 = vmatpush.bf16.msra.mxu0 0
    %5973 = vmatpush.bf16.msra.mxu0 0
    %5974 = vmatpush.bf16.msra.mxu0 0
    %5975 = vmatpush.bf16.msra.mxu0 %v5967
    %5976 = vmatpush.bf16.msra.mxu0 %v5956
    %5977 = vmatmul.bf16.gmra.mxu0 %v5961
    %v5978 = vpop.f32.mrf.mxu0
    %v5979 = vadd.f32 0.0, %v5978
    %v5980 = vpop.f32.mrf.mxu0
    %v5981 = vadd.f32 0.0, %v5980
    %5982 = vmatmul.bf16.gmra.mxu0 %v5964
    %v5983 = vpop.f32.mrf.mxu0
    %v5984 = vadd.f32 0.0, %v5983
    %v5985 = vpop.f32.mrf.mxu0
    %5986 = vdwg.mxu0
    %5987 = vrot.lane.b32.xlu0 %v5265, 104
    %v5988 = vpop.permute.xlu0 %5987
    %5989 = vrot.lane.b32.xlu0 %v5266, 104
    %v5990 = vpop.permute.xlu0 %5989
    %5991 = vrot.lane.b32.xlu0 %v5265, 72
    %v5992 = vpop.permute.xlu0 %5991
    %5993 = vrot.lane.b32.xlu0 %v5266, 72
    %v5994 = vpop.permute.xlu0 %5993
    %v5996 = vsel %vm475, %v5988, 0
    %v5999 = vsel %vm475, %v5990, 0
    %v6002 = vsel %vm475, %v5992, 0
    %v6005 = vsel %vm475, %v5994, 0
    %6007 = vmatpush.bf16.xpose.msra.mxu0 0
    %6008 = vmatpush.bf16.xpose.msra.mxu0 0
    %6009 = vmatpush.bf16.xpose.msra.mxu0 0
    %6010 = vmatpush.bf16.xpose.msra.mxu0 0
    %6011 = vmatpush.bf16.xpose.msra.mxu0 0
    %6012 = vmatpush.bf16.xpose.msra.mxu0 0
    %6013 = vmatpush.bf16.xpose.msra.mxu0 %v6005
    %6014 = vmatpush.bf16.xpose.msra.mxu0 %v6002
    %6015 = vmatmul.bf16.gmra.mxu0 %v5996
    %v6016 = vpop.f32.mrf.mxu0
    %v6017 = vadd.f32 0.0, %v6016
    %v6018 = vpop.f32.mrf.mxu0
    %v6019 = vadd.f32 0.0, %v6018
    %6020 = vmatmul.bf16.gmra.mxu0 %v5999
    %v6021 = vpop.f32.mrf.mxu0
    %v6022 = vadd.f32 0.0, %v6021
    %v6023 = vpop.f32.mrf.mxu0
    %6024 = vdwg.mxu0
    %6025 = vrot.lane.b32.xlu0 %v5307, 104
    %v6026 = vpop.permute.xlu0 %6025
    %6027 = vrot.lane.b32.xlu0 %v5308, 104
    %v6028 = vpop.permute.xlu0 %6027
    %6029 = vrot.lane.b32.xlu0 %v5307, 72
    %v6030 = vpop.permute.xlu0 %6029
    %6031 = vrot.lane.b32.xlu0 %v5308, 72
    %v6032 = vpop.permute.xlu0 %6031
    %v6034 = vsel %vm475, %v6026, 0
    %v6037 = vsel %vm475, %v6028, 0
    %v6040 = vsel %vm475, %v6030, 0
    %v6043 = vsel %vm475, %v6032, 0
    %6045 = vmatpush.bf16.xpose.msra.mxu0 0
    %6046 = vmatpush.bf16.xpose.msra.mxu0 0
    %6047 = vmatpush.bf16.xpose.msra.mxu0 0
    %6048 = vmatpush.bf16.xpose.msra.mxu0 0
    %6049 = vmatpush.bf16.xpose.msra.mxu0 0
    %6050 = vmatpush.bf16.xpose.msra.mxu0 0
    %6051 = vmatpush.bf16.xpose.msra.mxu0 %v6043
    %6052 = vmatpush.bf16.xpose.msra.mxu0 %v6040
    %6053 = vmatmul.bf16.gmra.mxu0 %v6034
    %v6054 = vpop.f32.mrf.mxu0
    %v6055 = vadd.f32 0.0, %v6054
    %v6056 = vpop.f32.mrf.mxu0
    %v6057 = vadd.f32 0.0, %v6056
    %6058 = vmatmul.bf16.gmra.mxu0 %v6037
    %v6059 = vpop.f32.mrf.mxu0
    %v6060 = vadd.f32 0.0, %v6059
    %v6061 = vpop.f32.mrf.mxu0
    %6062 = vdwg.mxu0
    %v6063 = vmul.f32 %v6017, 0.35355338
    %v6064 = vmul.f32 %v6019, 0.35355338
    %v6065 = vmul.f32 %v6022, 0.35355338
    %v6066 = vmul.f32 %v6055, 0.35355338
    %v6067 = vmul.f32 %v6057, 0.35355338
    %v6068 = vmul.f32 %v6060, 0.35355338
    %v6069 = vadd.f32 %v6063, %v554
    %v6070 = vadd.f32 %v6064, %v554
    %v6071 = vadd.f32 %v6065, %v554
    %v6072 = vadd.f32 %v6066, %v555
    %v6073 = vadd.f32 %v6067, %v555
    %v6074 = vadd.f32 %v6068, %v555
    %v6075 = vsel %vm194, %v6069, -inf
    %6076 = vmax.xlane.f32.xlu0 %v6075
    %v6077 = vpop.xlane.xlu0 %6076
    %v6078 = vsel %vm194, %v6070, -inf
    %6079 = vmax.xlane.f32.xlu0 %v6078
    %v6080 = vpop.xlane.xlu0 %6079
    %v6081 = vsel %vm194, %v6071, -inf
    %6082 = vmax.xlane.f32.xlu0 %v6081
    %v6083 = vpop.xlane.xlu0 %6082
    %v6084 = vsel %vm194, %v6072, -inf
    %6085 = vmax.xlane.f32.xlu0 %v6084
    %v6086 = vpop.xlane.xlu0 %6085
    %v6087 = vsel %vm194, %v6073, -inf
    %6088 = vmax.xlane.f32.xlu0 %v6087
    %v6089 = vpop.xlane.xlu0 %6088
    %v6090 = vsel %vm194, %v6074, -inf
    %6091 = vmax.xlane.f32.xlu0 %v6090
    %v6092 = vpop.xlane.xlu0 %6091
    %v6093 = vsub.f32 %v6069, %v6077
    %v6094 = vsub.f32 %v6070, %v6080
    %v6095 = vsub.f32 %v6071, %v6083
    %v6096 = vsub.f32 %v6072, %v6086
    %v6097 = vsub.f32 %v6073, %v6089
    %v6098 = vsub.f32 %v6074, %v6092
    %v6099 = vmul.f32 %v6093, 1.442695
    %v6100 = vpow.pop %v6099
    %v6101 = vmul.f32 %v6094, 1.442695
    %v6102 = vpow.pop %v6101
    %v6103 = vmul.f32 %v6095, 1.442695
    %v6104 = vpow.pop %v6103
    %v6105 = vmul.f32 %v6096, 1.442695
    %v6106 = vpow.pop %v6105
    %v6107 = vmul.f32 %v6097, 1.442695
    %v6108 = vpow.pop %v6107
    %v6109 = vmul.f32 %v6098, 1.442695
    %v6110 = vpow.pop %v6109
    %v6111 = vsel %vm194, %v6100, 0.0
    %6112 = vadd.xlane.f32.xlu0 %v6111
    %v6113 = vpop.xlane.xlu0 %6112
    %v6114 = vsel %vm194, %v6102, 0.0
    %6115 = vadd.xlane.f32.xlu0 %v6114
    %v6116 = vpop.xlane.xlu0 %6115
    %v6117 = vsel %vm194, %v6104, 0.0
    %6118 = vadd.xlane.f32.xlu0 %v6117
    %v6119 = vpop.xlane.xlu0 %6118
    %v6120 = vsel %vm194, %v6106, 0.0
    %6121 = vadd.xlane.f32.xlu0 %v6120
    %v6122 = vpop.xlane.xlu0 %6121
    %v6123 = vsel %vm194, %v6108, 0.0
    %6124 = vadd.xlane.f32.xlu0 %v6123
    %v6125 = vpop.xlane.xlu0 %6124
    %v6126 = vsel %vm194, %v6110, 0.0
    %6127 = vadd.xlane.f32.xlu0 %v6126
    %v6128 = vpop.xlane.xlu0 %6127
    %v6129 = vrcp.pop %v6113
    %v6130 = vrcp.pop %v6116
    %v6131 = vrcp.pop %v6119
    %v6132 = vrcp.pop %v6122
    %v6133 = vrcp.pop %v6125
    %v6134 = vrcp.pop %v6128
    %v6135 = vmul.f32 %v6100, %v6129
    %v6136 = vmul.f32 %v6102, %v6130
    %v6137 = vmul.f32 %v6104, %v6131
    %v6138 = vmul.f32 %v6106, %v6132
    %v6139 = vmul.f32 %v6108, %v6133
    %v6140 = vmul.f32 %v6110, %v6134
    %v6141 = vpack.c.bf16 %v6135, %v6135
    %v6142 = vpack.c.bf16 %v6136, %v6136
    %v6143 = vpack.c.bf16 %v6137, %v6137
    %v6144 = vpack.c.bf16 %v6138, %v6138
    %v6145 = vpack.c.bf16 %v6139, %v6139
    %v6146 = vpack.c.bf16 %v6140, %v6140
    %v6150 = vunpack.c.l.b16 %v6141
    %v6151 = vunpack.c.l.b16 %v6142
    %v6152 = vunpack.c.l.b16 %v6143
    %v6153 = vpack.c.b16 %v6151, %v6150
    %v6154 = vpack.c.b16 %v6152, %v6152
    %6155 = vrot.lane.b32.xlu0 %v5265, 40
    %v6156 = vpop.permute.xlu0 %6155
    %6157 = vrot.lane.b32.xlu0 %v5266, 40
    %v6158 = vpop.permute.xlu0 %6157
    %v6161 = vsel %vm194, %v6153, 0
    %v6164 = vsel %vm194, %v6154, 0
    %v6167 = vsel %vm201, %v6158, 0
    %6169 = vmatpush.bf16.msra.mxu0 0
    %6170 = vmatpush.bf16.msra.mxu0 0
    %6171 = vmatpush.bf16.msra.mxu0 0
    %6172 = vmatpush.bf16.msra.mxu0 0
    %6173 = vmatpush.bf16.msra.mxu0 0
    %6174 = vmatpush.bf16.msra.mxu0 0
    %6175 = vmatpush.bf16.msra.mxu0 %v6167
    %6176 = vmatpush.bf16.msra.mxu0 %v6156
    %6177 = vmatmul.bf16.gmra.mxu0 %v6161
    %v6178 = vpop.f32.mrf.mxu0
    %v6179 = vadd.f32 0.0, %v6178
    %v6180 = vpop.f32.mrf.mxu0
    %v6181 = vadd.f32 0.0, %v6180
    %6182 = vmatmul.bf16.gmra.mxu0 %v6164
    %v6183 = vpop.f32.mrf.mxu0
    %v6184 = vadd.f32 0.0, %v6183
    %v6185 = vpop.f32.mrf.mxu0
    %6186 = vdwg.mxu0
    %v6190 = vunpack.c.l.b16 %v6144
    %v6191 = vunpack.c.l.b16 %v6145
    %v6192 = vunpack.c.l.b16 %v6146
    %v6193 = vpack.c.b16 %v6191, %v6190
    %v6194 = vpack.c.b16 %v6192, %v6192
    %6195 = vrot.lane.b32.xlu0 %v5307, 40
    %v6196 = vpop.permute.xlu0 %6195
    %6197 = vrot.lane.b32.xlu0 %v5308, 40
    %v6198 = vpop.permute.xlu0 %6197
    %v6201 = vsel %vm194, %v6193, 0
    %v6204 = vsel %vm194, %v6194, 0
    %v6207 = vsel %vm201, %v6198, 0
    %6209 = vmatpush.bf16.msra.mxu0 0
    %6210 = vmatpush.bf16.msra.mxu0 0
    %6211 = vmatpush.bf16.msra.mxu0 0
    %6212 = vmatpush.bf16.msra.mxu0 0
    %6213 = vmatpush.bf16.msra.mxu0 0
    %6214 = vmatpush.bf16.msra.mxu0 0
    %6215 = vmatpush.bf16.msra.mxu0 %v6207
    %6216 = vmatpush.bf16.msra.mxu0 %v6196
    %6217 = vmatmul.bf16.gmra.mxu0 %v6201
    %v6218 = vpop.f32.mrf.mxu0
    %v6219 = vadd.f32 0.0, %v6218
    %v6220 = vpop.f32.mrf.mxu0
    %v6221 = vadd.f32 0.0, %v6220
    %6222 = vmatmul.bf16.gmra.mxu0 %v6204
    %v6223 = vpop.f32.mrf.mxu0
    %v6224 = vadd.f32 0.0, %v6223
    %v6225 = vpop.f32.mrf.mxu0
    %6226 = vdwg.mxu0
    %6233 = vrot.lane.b32.xlu0 %v5699, 8
    %v6234 = vpop.permute.xlu0 %6233
    %6235 = vrot.lane.b32.xlu0 %v5701, 8
    %v6236 = vpop.permute.xlu0 %6235
    %6237 = vrot.lane.b32.xlu0 %v5704, 8
    %v6238 = vpop.permute.xlu0 %6237
    %6239 = vrot.lane.b32.xlu0 %v5739, 8
    %v6240 = vpop.permute.xlu0 %6239
    %6241 = vrot.lane.b32.xlu0 %v5741, 8
    %v6242 = vpop.permute.xlu0 %6241
    %6243 = vrot.lane.b32.xlu0 %v5744, 8
    %v6244 = vpop.permute.xlu0 %6243
    %6257 = vrot.lane.b32.xlu0 %v5939, 16
    %v6258 = vpop.permute.xlu0 %6257
    %6259 = vrot.lane.b32.xlu0 %v5941, 16
    %v6260 = vpop.permute.xlu0 %6259
    %6261 = vrot.lane.b32.xlu0 %v5944, 16
    %v6262 = vpop.permute.xlu0 %6261
    %6263 = vrot.lane.b32.xlu0 %v5979, 16
    %v6264 = vpop.permute.xlu0 %6263
    %6265 = vrot.lane.b32.xlu0 %v5981, 16
    %v6266 = vpop.permute.xlu0 %6265
    %6267 = vrot.lane.b32.xlu0 %v5984, 16
    %v6268 = vpop.permute.xlu0 %6267
    %6281 = vrot.lane.b32.xlu0 %v6179, 24
    %v6282 = vpop.permute.xlu0 %6281
    %6283 = vrot.lane.b32.xlu0 %v6181, 24
    %v6284 = vpop.permute.xlu0 %6283
    %6285 = vrot.lane.b32.xlu0 %v6184, 24
    %v6286 = vpop.permute.xlu0 %6285
    %6287 = vrot.lane.b32.xlu0 %v6219, 24
    %v6288 = vpop.permute.xlu0 %6287
    %6289 = vrot.lane.b32.xlu0 %v6221, 24
    %v6290 = vpop.permute.xlu0 %6289
    %6291 = vrot.lane.b32.xlu0 %v6224, 24
    %v6292 = vpop.permute.xlu0 %6291
    %v6299 = vsel %vm475, %v5459, %v6234
    %v6300 = vsel %vm475, %v5461, %v6236
    %v6301 = vsel %vm475, %v5464, %v6238
    %v6302 = vsel %vm475, %v5499, %v6240
    %v6303 = vsel %vm475, %v5501, %v6242
    %v6304 = vsel %vm475, %v5504, %v6244
    %v6305 = vsel %vm1514, %v6299, %v6258
    %v6306 = vsel %vm1514, %v6300, %v6260
    %v6307 = vsel %vm1514, %v6301, %v6262
    %v6308 = vsel %vm1514, %v6302, %v6264
    %v6309 = vsel %vm1514, %v6303, %v6266
    %v6310 = vsel %vm1514, %v6304, %v6268
    %v6311 = vsel %vm194, %v6305, %v6282
    %v6312 = vsel %vm194, %v6306, %v6284
    %v6313 = vsel %vm194, %v6307, %v6286
    %v6314 = vsel %vm194, %v6308, %v6288
    %v6315 = vsel %vm194, %v6309, %v6290
    %v6316 = vsel %vm194, %v6310, %v6292
    %v6317 = vpack.c.bf16 %v6312, %v6311
    %v6318 = vpack.c.bf16 %v6314, %v6313
    %v6319 = vpack.c.bf16 %v6316, %v6315
    %v6320 = vperm.slane %v5052, 1
    %6321 = vrot.lane.b32.xlu0 %v5216, 32
    %v6322 = vpop.permute.xlu0 %6321
    %6323 = vrot.lane.b32.xlu0 %v5217, 32
    %v6324 = vpop.permute.xlu0 %6323
    %v6328 = vsel %vm254, %v6317, 0
    %v6331 = vsel %vm254, %v6318, 0
    %v6334 = vsel %vm254, %v6319, 0
    %6336 = vmatpush.bf16.msra.mxu0 0
    %6337 = vmatpush.bf16.msra.mxu0 0
    %6338 = vmatpush.bf16.msra.mxu0 0
    %6339 = vmatpush.bf16.msra.mxu0 0
    %6340 = vmatpush.bf16.msra.mxu0 0
    %6341 = vmatpush.bf16.msra.mxu0 0
    %6342 = vmatpush.bf16.msra.mxu0 %v6324
    %6343 = vmatpush.bf16.msra.mxu0 %v6322
    %6344 = vmatmul.bf16.gmra.mxu0 %v6328
    %v6345 = vpop.f32.mrf.mxu0
    %v6346 = vadd.f32 %v6320, %v6345
    %v6347 = vpop.f32.mrf.mxu0
    %v6348 = vadd.f32 %v6320, %v6347
    %6349 = vmatmul.bf16.gmra.mxu0 %v6331
    %v6350 = vpop.f32.mrf.mxu0
    %v6351 = vadd.f32 %v6320, %v6350
    %v6352 = vpop.f32.mrf.mxu0
    %v6353 = vadd.f32 %v6320, %v6352
    %6354 = vmatmul.bf16.gmra.mxu0 %v6334
    %v6355 = vpop.f32.mrf.mxu0
    %v6356 = vadd.f32 %v6320, %v6355
    %v6357 = vpop.f32.mrf.mxu0
    %v6358 = vadd.f32 %v6320, %v6357
    %6359 = vdwg.mxu0
    %v6360 = vadd.f32 %v5045, %v6346
    %v6361 = vadd.f32 %v5046, %v6348
    %v6362 = vadd.f32 %v5047, %v6351
    %v6363 = vadd.f32 %v5048, %v6353
    %v6364 = vadd.f32 %v5049, %v6356
    %v6365 = vadd.f32 %v5050, %v6358
    %v6366 = vsel %vm254, %v6360, 0.0
    %6367 = vadd.xlane.f32.xlu0 %v6366
    %v6368 = vpop.xlane.xlu0 %6367
    %v6369 = vsel %vm254, %v6361, 0.0
    %6370 = vadd.xlane.f32.xlu0 %v6369
    %v6371 = vpop.xlane.xlu0 %6370
    %v6372 = vsel %vm254, %v6362, 0.0
    %6373 = vadd.xlane.f32.xlu0 %v6372
    %v6374 = vpop.xlane.xlu0 %6373
    %v6375 = vsel %vm254, %v6363, 0.0
    %6376 = vadd.xlane.f32.xlu0 %v6375
    %v6377 = vpop.xlane.xlu0 %6376
    %v6378 = vsel %vm254, %v6364, 0.0
    %6379 = vadd.xlane.f32.xlu0 %v6378
    %v6380 = vpop.xlane.xlu0 %6379
    %v6381 = vsel %vm254, %v6365, 0.0
    %6382 = vadd.xlane.f32.xlu0 %v6381
    %v6383 = vpop.xlane.xlu0 %6382
    %v6384 = vmul.f32 %v6368, %v279
    %v6385 = vmul.f32 %v6371, %v279
    %v6386 = vmul.f32 %v6374, %v279
    %v6387 = vmul.f32 %v6377, %v279
    %v6388 = vmul.f32 %v6380, %v279
    %v6389 = vmul.f32 %v6383, %v279
    %v6390 = vsub.f32 %v6360, %v6384
    %v6391 = vsub.f32 %v6361, %v6385
    %v6392 = vsub.f32 %v6362, %v6386
    %v6393 = vsub.f32 %v6363, %v6387
    %v6394 = vsub.f32 %v6364, %v6388
    %v6395 = vsub.f32 %v6365, %v6389
    %v6396 = vmul.f32 %v6390, %v6390
    %v6397 = vmul.f32 %v6391, %v6391
    %v6398 = vmul.f32 %v6392, %v6392
    %v6399 = vmul.f32 %v6393, %v6393
    %v6400 = vmul.f32 %v6394, %v6394
    %v6401 = vmul.f32 %v6395, %v6395
    %v6402 = vsel %vm254, %v6396, 0.0
    %6403 = vadd.xlane.f32.xlu0 %v6402
    %v6404 = vpop.xlane.xlu0 %6403
    %v6405 = vsel %vm254, %v6397, 0.0
    %6406 = vadd.xlane.f32.xlu0 %v6405
    %v6407 = vpop.xlane.xlu0 %6406
    %v6408 = vsel %vm254, %v6398, 0.0
    %6409 = vadd.xlane.f32.xlu0 %v6408
    %v6410 = vpop.xlane.xlu0 %6409
    %v6411 = vsel %vm254, %v6399, 0.0
    %6412 = vadd.xlane.f32.xlu0 %v6411
    %v6413 = vpop.xlane.xlu0 %6412
    %v6414 = vsel %vm254, %v6400, 0.0
    %6415 = vadd.xlane.f32.xlu0 %v6414
    %v6416 = vpop.xlane.xlu0 %6415
    %v6417 = vsel %vm254, %v6401, 0.0
    %6418 = vadd.xlane.f32.xlu0 %v6417
    %v6419 = vpop.xlane.xlu0 %6418
    %v6420 = vmul.f32 %v6404, %v279
    %v6421 = vmul.f32 %v6407, %v279
    %v6422 = vmul.f32 %v6410, %v279
    %v6423 = vmul.f32 %v6413, %v279
    %v6424 = vmul.f32 %v6416, %v279
    %v6425 = vmul.f32 %v6419, %v279
    %v6426 = vperm.slane %v5052, 6
    %v6427 = vmul.f32 %v6426, %v6390
    %v6428 = vmul.f32 %v6426, %v6391
    %v6429 = vmul.f32 %v6426, %v6392
    %v6430 = vmul.f32 %v6426, %v6393
    %v6431 = vmul.f32 %v6426, %v6394
    %v6432 = vmul.f32 %v6426, %v6395
    %v6433 = vadd.f32 %v6420, 1e-06
    %v6434 = vadd.f32 %v6421, 1e-06
    %v6435 = vadd.f32 %v6422, 1e-06
    %v6436 = vadd.f32 %v6423, 1e-06
    %v6437 = vadd.f32 %v6424, 1e-06
    %v6438 = vadd.f32 %v6425, 1e-06
    %v6439 = vrsqrt.pop %v6433
    %v6440 = vmul.f32 %v6439, %v6433
    %v6441 = vmul.f32 %v6440, %v6439
    %v6442 = vmul.f32 0.5, %v6441
    %v6443 = vsub.f32 1.5, %v6442
    %v6444 = vmul.f32 %v6439, %v6443
    %vm6445 = vweird.f32 %v6433
    %vm6446 = vweird.f32 %v6439
    %vm6447 = vmor %vm6445, %vm6446
    %v6448 = vsel %vm6447, %v6439, %v6444
    %v6449 = vrsqrt.pop %v6434
    %v6450 = vmul.f32 %v6449, %v6434
    %v6451 = vmul.f32 %v6450, %v6449
    %v6452 = vmul.f32 0.5, %v6451
    %v6453 = vsub.f32 1.5, %v6452
    %v6454 = vmul.f32 %v6449, %v6453
    %vm6455 = vweird.f32 %v6434
    %vm6456 = vweird.f32 %v6449
    %vm6457 = vmor %vm6455, %vm6456
    %v6458 = vsel %vm6457, %v6449, %v6454
    %v6459 = vrsqrt.pop %v6435
    %v6460 = vmul.f32 %v6459, %v6435
    %v6461 = vmul.f32 %v6460, %v6459
    %v6462 = vmul.f32 0.5, %v6461
    %v6463 = vsub.f32 1.5, %v6462
    %v6464 = vmul.f32 %v6459, %v6463
    %vm6465 = vweird.f32 %v6435
    %vm6466 = vweird.f32 %v6459
    %vm6467 = vmor %vm6465, %vm6466
    %v6468 = vsel %vm6467, %v6459, %v6464
    %v6469 = vrsqrt.pop %v6436
    %v6470 = vmul.f32 %v6469, %v6436
    %v6471 = vmul.f32 %v6470, %v6469
    %v6472 = vmul.f32 0.5, %v6471
    %v6473 = vsub.f32 1.5, %v6472
    %v6474 = vmul.f32 %v6469, %v6473
    %vm6475 = vweird.f32 %v6436
    %vm6476 = vweird.f32 %v6469
    %vm6477 = vmor %vm6475, %vm6476
    %v6478 = vsel %vm6477, %v6469, %v6474
    %v6479 = vrsqrt.pop %v6437
    %v6480 = vmul.f32 %v6479, %v6437
    %v6481 = vmul.f32 %v6480, %v6479
    %v6482 = vmul.f32 0.5, %v6481
    %v6483 = vsub.f32 1.5, %v6482
    %v6484 = vmul.f32 %v6479, %v6483
    %vm6485 = vweird.f32 %v6437
    %vm6486 = vweird.f32 %v6479
    %vm6487 = vmor %vm6485, %vm6486
    %v6488 = vsel %vm6487, %v6479, %v6484
    %v6489 = vrsqrt.pop %v6438
    %v6490 = vmul.f32 %v6489, %v6438
    %v6491 = vmul.f32 %v6490, %v6489
    %v6492 = vmul.f32 0.5, %v6491
    %v6493 = vsub.f32 1.5, %v6492
    %v6494 = vmul.f32 %v6489, %v6493
    %vm6495 = vweird.f32 %v6438
    %vm6496 = vweird.f32 %v6489
    %vm6497 = vmor %vm6495, %vm6496
    %v6498 = vsel %vm6497, %v6489, %v6494
    %v6499 = vmul.f32 %v6427, %v6448
    %v6500 = vmul.f32 %v6428, %v6458
    %v6501 = vmul.f32 %v6429, %v6468
    %v6502 = vmul.f32 %v6430, %v6478
    %v6503 = vmul.f32 %v6431, %v6488
    %v6504 = vmul.f32 %v6432, %v6498
    %v6505 = vperm.slane %v5052, 7
    %v6506 = vadd.f32 %v6499, %v6505
    %v6507 = vadd.f32 %v6500, %v6505
    %v6508 = vadd.f32 %v6501, %v6505
    %v6509 = vadd.f32 %v6502, %v6505
    %v6510 = vadd.f32 %v6503, %v6505
    %v6511 = vadd.f32 %v6504, %v6505
    %v6512 = vpack.c.bf16 %v6507, %v6506
    %v6513 = vpack.c.bf16 %v6509, %v6508
    %v6514 = vpack.c.bf16 %v6511, %v6510
    %s6515 = scalar_lea.vmem %s6, 48
    %v6516 = vld [vmem:[%s6515] sm:$0xf]
    %v6517 = vld [vmem:[%s6515 + $0x4] sm:$0xf]
    %v6518 = vld [vmem:[%s6515 + $0x8] sm:$0xf]
    %v6519 = vld [vmem:[%s6515 + $0xc] sm:$0xf]
    %v6520 = vperm.slane %v5052, 2
    %v6525 = vunpack.c.l.b16 %v6516
    %v6526 = vunpack.c.l.b16 %v6517
    %v6527 = vunpack.c.l.b16 %v6518
    %v6528 = vunpack.c.l.b16 %v6519
    %v6529 = vpack.c.b16 %v6526, %v6525
    %v6530 = vpack.c.b16 %v6528, %v6527
    %v6534 = vsel %vm254, %v6512, 0
    %v6537 = vsel %vm254, %v6513, 0
    %v6540 = vsel %vm254, %v6514, 0
    %6542 = vmatpush.bf16.msra.mxu0 0
    %6543 = vmatpush.bf16.msra.mxu0 0
    %6544 = vmatpush.bf16.msra.mxu0 0
    %6545 = vmatpush.bf16.msra.mxu0 0
    %6546 = vmatpush.bf16.msra.mxu0 0
    %6547 = vmatpush.bf16.msra.mxu0 0
    %6548 = vmatpush.bf16.msra.mxu0 %v6530
    %6549 = vmatpush.bf16.msra.mxu0 %v6529
    %6550 = vmatmul.bf16.gmra.mxu0 %v6534
    %v6551 = vpop.f32.mrf.mxu0
    %v6552 = vadd.f32 %v6520, %v6551
    %v6553 = vpop.f32.mrf.mxu0
    %v6554 = vadd.f32 %v6520, %v6553
    %6555 = vmatmul.bf16.gmra.mxu0 %v6537
    %v6556 = vpop.f32.mrf.mxu0
    %v6557 = vadd.f32 %v6520, %v6556
    %v6558 = vpop.f32.mrf.mxu0
    %v6559 = vadd.f32 %v6520, %v6558
    %6560 = vmatmul.bf16.gmra.mxu0 %v6540
    %v6561 = vpop.f32.mrf.mxu0
    %v6562 = vadd.f32 %v6520, %v6561
    %v6563 = vpop.f32.mrf.mxu0
    %v6564 = vadd.f32 %v6520, %v6563
    %6565 = vdwg.mxu0
    %v6566 = vmax.f32 %v6552, 0.0
    %v6567 = vmax.f32 %v6554, 0.0
    %v6568 = vmax.f32 %v6557, 0.0
    %v6569 = vmax.f32 %v6559, 0.0
    %v6570 = vmax.f32 %v6562, 0.0
    %v6571 = vmax.f32 %v6564, 0.0
    %v6572 = vpack.c.bf16 %v6567, %v6566
    %v6573 = vpack.c.bf16 %v6569, %v6568
    %v6574 = vpack.c.bf16 %v6571, %v6570
    %s6575 = scalar_lea.vmem %s7, 96
    %v6576 = vld [vmem:[%s6575] sm:$0xf]
    %v6577 = vld [vmem:[%s6575 + $0x4] sm:$0xf]
    %v6578 = vld [vmem:[%s6575 + $0x8] sm:$0xf]
    %v6579 = vld [vmem:[%s6575 + $0xc] sm:$0xf]
    %v6580 = vld [vmem:[%s6575 + $0x10] sm:$0xf]
    %v6581 = vld [vmem:[%s6575 + $0x14] sm:$0xf]
    %v6582 = vld [vmem:[%s6575 + $0x18] sm:$0xf]
    %v6583 = vld [vmem:[%s6575 + $0x1c] sm:$0xf]
    %v6584 = vperm.slane %v5052, 3
    %v6593 = vunpack.c.l.b16 %v6576
    %v6594 = vunpack.c.l.b16 %v6577
    %v6595 = vunpack.c.l.b16 %v6578
    %v6596 = vunpack.c.l.b16 %v6579
    %v6597 = vunpack.c.l.b16 %v6580
    %v6598 = vunpack.c.l.b16 %v6581
    %v6599 = vunpack.c.l.b16 %v6582
    %v6600 = vunpack.c.l.b16 %v6583
    %v6601 = vpack.c.b16 %v6594, %v6593
    %v6602 = vpack.c.b16 %v6596, %v6595
    %v6603 = vpack.c.b16 %v6598, %v6597
    %v6604 = vpack.c.b16 %v6600, %v6599
    %v6610 = vsel %vm1817, %v6572, 0
    %v6613 = vsel %vm1817, %v6573, 0
    %v6616 = vsel %vm1817, %v6574, 0
    %6618 = vmatpush.bf16.msra.mxu0 0
    %6619 = vmatpush.bf16.msra.mxu0 0
    %6620 = vmatpush.bf16.msra.mxu0 0
    %6621 = vmatpush.bf16.msra.mxu0 0
    %6622 = vmatpush.bf16.msra.mxu0 %v6604
    %6623 = vmatpush.bf16.msra.mxu0 %v6603
    %6624 = vmatpush.bf16.msra.mxu0 %v6602
    %6625 = vmatpush.bf16.msra.mxu0 %v6601
    %6626 = vmatmul.bf16.gmra.mxu0 %v6610
    %v6627 = vpop.f32.mrf.mxu0
    %v6628 = vadd.f32 %v6584, %v6627
    %v6629 = vpop.f32.mrf.mxu0
    %v6630 = vadd.f32 %v6584, %v6629
    %6631 = vmatmul.bf16.gmra.mxu0 %v6613
    %v6632 = vpop.f32.mrf.mxu0
    %v6633 = vadd.f32 %v6584, %v6632
    %v6634 = vpop.f32.mrf.mxu0
    %v6635 = vadd.f32 %v6584, %v6634
    %6636 = vmatmul.bf16.gmra.mxu0 %v6616
    %v6637 = vpop.f32.mrf.mxu0
    %v6638 = vadd.f32 %v6584, %v6637
    %v6639 = vpop.f32.mrf.mxu0
    %v6640 = vadd.f32 %v6584, %v6639
    %6641 = vdwg.mxu0
    %v6642 = vadd.f32 %v6360, %v6628
    %v6643 = vadd.f32 %v6361, %v6630
    %v6644 = vadd.f32 %v6362, %v6633
    %v6645 = vadd.f32 %v6363, %v6635
    %v6646 = vadd.f32 %v6364, %v6638
    %v6647 = vadd.f32 %v6365, %v6640
    %v6648 = vld [vmem:[%s9 + $0x3] sm:$0x1]
    %v6649 = vld [vmem:[%s9 + $0x4] sm:$0x1]
    %v6650 = vsel %vm254, %v6642, 0.0
    %6651 = vadd.xlane.f32.xlu0 %v6650
    %v6652 = vpop.xlane.xlu0 %6651
    %v6653 = vsel %vm254, %v6643, 0.0
    %6654 = vadd.xlane.f32.xlu0 %v6653
    %v6655 = vpop.xlane.xlu0 %6654
    %v6656 = vsel %vm254, %v6644, 0.0
    %6657 = vadd.xlane.f32.xlu0 %v6656
    %v6658 = vpop.xlane.xlu0 %6657
    %v6659 = vsel %vm254, %v6645, 0.0
    %6660 = vadd.xlane.f32.xlu0 %v6659
    %v6661 = vpop.xlane.xlu0 %6660
    %v6662 = vsel %vm254, %v6646, 0.0
    %6663 = vadd.xlane.f32.xlu0 %v6662
    %v6664 = vpop.xlane.xlu0 %6663
    %v6665 = vsel %vm254, %v6647, 0.0
    %6666 = vadd.xlane.f32.xlu0 %v6665
    %v6667 = vpop.xlane.xlu0 %6666
    %v6668 = vmul.f32 %v6652, %v279
    %v6669 = vmul.f32 %v6655, %v279
    %v6670 = vmul.f32 %v6658, %v279
    %v6671 = vmul.f32 %v6661, %v279
    %v6672 = vmul.f32 %v6664, %v279
    %v6673 = vmul.f32 %v6667, %v279
    %v6674 = vsub.f32 %v6642, %v6668
    %v6675 = vsub.f32 %v6643, %v6669
    %v6676 = vsub.f32 %v6644, %v6670
    %v6677 = vsub.f32 %v6645, %v6671
    %v6678 = vsub.f32 %v6646, %v6672
    %v6679 = vsub.f32 %v6647, %v6673
    %v6680 = vmul.f32 %v6674, %v6674
    %v6681 = vmul.f32 %v6675, %v6675
    %v6682 = vmul.f32 %v6676, %v6676
    %v6683 = vmul.f32 %v6677, %v6677
    %v6684 = vmul.f32 %v6678, %v6678
    %v6685 = vmul.f32 %v6679, %v6679
    %v6686 = vsel %vm254, %v6680, 0.0
    %6687 = vadd.xlane.f32.xlu0 %v6686
    %v6688 = vpop.xlane.xlu0 %6687
    %v6689 = vsel %vm254, %v6681, 0.0
    %6690 = vadd.xlane.f32.xlu0 %v6689
    %v6691 = vpop.xlane.xlu0 %6690
    %v6692 = vsel %vm254, %v6682, 0.0
    %6693 = vadd.xlane.f32.xlu0 %v6692
    %v6694 = vpop.xlane.xlu0 %6693
    %v6695 = vsel %vm254, %v6683, 0.0
    %6696 = vadd.xlane.f32.xlu0 %v6695
    %v6697 = vpop.xlane.xlu0 %6696
    %v6698 = vsel %vm254, %v6684, 0.0
    %6699 = vadd.xlane.f32.xlu0 %v6698
    %v6700 = vpop.xlane.xlu0 %6699
    %v6701 = vsel %vm254, %v6685, 0.0
    %6702 = vadd.xlane.f32.xlu0 %v6701
    %v6703 = vpop.xlane.xlu0 %6702
    %v6704 = vmul.f32 %v6688, %v279
    %v6705 = vmul.f32 %v6691, %v279
    %v6706 = vmul.f32 %v6694, %v279
    %v6707 = vmul.f32 %v6697, %v279
    %v6708 = vmul.f32 %v6700, %v279
    %v6709 = vmul.f32 %v6703, %v279
    %v6710 = vperm.slane %v6648, 0
    %v6711 = vmul.f32 %v6710, %v6674
    %v6712 = vmul.f32 %v6710, %v6675
    %v6713 = vmul.f32 %v6710, %v6676
    %v6714 = vmul.f32 %v6710, %v6677
    %v6715 = vmul.f32 %v6710, %v6678
    %v6716 = vmul.f32 %v6710, %v6679
    %v6717 = vadd.f32 %v6704, 1e-06
    %v6718 = vadd.f32 %v6705, 1e-06
    %v6719 = vadd.f32 %v6706, 1e-06
    %v6720 = vadd.f32 %v6707, 1e-06
    %v6721 = vadd.f32 %v6708, 1e-06
    %v6722 = vadd.f32 %v6709, 1e-06
    %v6723 = vrsqrt.pop %v6717
    %v6724 = vmul.f32 %v6723, %v6717
    %v6725 = vmul.f32 %v6724, %v6723
    %v6726 = vmul.f32 0.5, %v6725
    %v6727 = vsub.f32 1.5, %v6726
    %v6728 = vmul.f32 %v6723, %v6727
    %vm6729 = vweird.f32 %v6717
    %vm6730 = vweird.f32 %v6723
    %vm6731 = vmor %vm6729, %vm6730
    %v6732 = vsel %vm6731, %v6723, %v6728
    %v6733 = vrsqrt.pop %v6718
    %v6734 = vmul.f32 %v6733, %v6718
    %v6735 = vmul.f32 %v6734, %v6733
    %v6736 = vmul.f32 0.5, %v6735
    %v6737 = vsub.f32 1.5, %v6736
    %v6738 = vmul.f32 %v6733, %v6737
    %vm6739 = vweird.f32 %v6718
    %vm6740 = vweird.f32 %v6733
    %vm6741 = vmor %vm6739, %vm6740
    %v6742 = vsel %vm6741, %v6733, %v6738
    %v6743 = vrsqrt.pop %v6719
    %v6744 = vmul.f32 %v6743, %v6719
    %v6745 = vmul.f32 %v6744, %v6743
    %v6746 = vmul.f32 0.5, %v6745
    %v6747 = vsub.f32 1.5, %v6746
    %v6748 = vmul.f32 %v6743, %v6747
    %vm6749 = vweird.f32 %v6719
    %vm6750 = vweird.f32 %v6743
    %vm6751 = vmor %vm6749, %vm6750
    %v6752 = vsel %vm6751, %v6743, %v6748
    %v6753 = vrsqrt.pop %v6720
    %v6754 = vmul.f32 %v6753, %v6720
    %v6755 = vmul.f32 %v6754, %v6753
    %v6756 = vmul.f32 0.5, %v6755
    %v6757 = vsub.f32 1.5, %v6756
    %v6758 = vmul.f32 %v6753, %v6757
    %vm6759 = vweird.f32 %v6720
    %vm6760 = vweird.f32 %v6753
    %vm6761 = vmor %vm6759, %vm6760
    %v6762 = vsel %vm6761, %v6753, %v6758
    %v6763 = vrsqrt.pop %v6721
    %v6764 = vmul.f32 %v6763, %v6721
    %v6765 = vmul.f32 %v6764, %v6763
    %v6766 = vmul.f32 0.5, %v6765
    %v6767 = vsub.f32 1.5, %v6766
    %v6768 = vmul.f32 %v6763, %v6767
    %vm6769 = vweird.f32 %v6721
    %vm6770 = vweird.f32 %v6763
    %vm6771 = vmor %vm6769, %vm6770
    %v6772 = vsel %vm6771, %v6763, %v6768
    %v6773 = vrsqrt.pop %v6722
    %v6774 = vmul.f32 %v6773, %v6722
    %v6775 = vmul.f32 %v6774, %v6773
    %v6776 = vmul.f32 0.5, %v6775
    %v6777 = vsub.f32 1.5, %v6776
    %v6778 = vmul.f32 %v6773, %v6777
    %vm6779 = vweird.f32 %v6722
    %vm6780 = vweird.f32 %v6773
    %vm6781 = vmor %vm6779, %vm6780
    %v6782 = vsel %vm6781, %v6773, %v6778
    %v6783 = vmul.f32 %v6711, %v6732
    %v6784 = vmul.f32 %v6712, %v6742
    %v6785 = vmul.f32 %v6713, %v6752
    %v6786 = vmul.f32 %v6714, %v6762
    %v6787 = vmul.f32 %v6715, %v6772
    %v6788 = vmul.f32 %v6716, %v6782
    %v6789 = vperm.slane %v6649, 0
    %v6790 = vadd.f32 %v6783, %v6789
    %v6791 = vadd.f32 %v6784, %v6789
    %v6792 = vadd.f32 %v6785, %v6789
    %v6793 = vadd.f32 %v6786, %v6789
    %v6794 = vadd.f32 %v6787, %v6789
    %v6795 = vadd.f32 %v6788, %v6789
    %v6796 = vperm.slane %v60, 0
    %v6797 = vlaneseq
    %v6798 = vshrl.u32 %v6797, 7
    %6800 = vset.pattern.permute.xlu0 %v6798
    %6801 = vperm.xlu0 %6800, %v6796
    %v6802 = vpop.permute.xlu0 %6801
    %v6803 = vlaneseq
    %v6804 = vshrl.u32 %v6803, 7
    %v6805 = vadd.s32 %v6804, 8
    %6806 = vset.pattern.permute.xlu0 %v6805
    %6807 = vperm.xlu0 %6806, %v6796
    %v6808 = vpop.permute.xlu0 %6807
    %v6809 = vlaneseq
    %v6810 = vshrl.u32 %v6809, 7
    %v6811 = vadd.s32 %v6810, 16
    %6812 = vset.pattern.permute.xlu0 %v6811
    %6813 = vperm.xlu0 %6812, %v6796
    %v6814 = vpop.permute.xlu0 %6813
    %v6815 = vperm.slane %v60, 1
    %v6816 = vlaneseq
    %v6817 = vshrl.u32 %v6816, 7
    %6819 = vset.pattern.permute.xlu0 %v6817
    %6820 = vperm.xlu0 %6819, %v6815
    %v6821 = vpop.permute.xlu0 %6820
    %v6822 = vlaneseq
    %v6823 = vshrl.u32 %v6822, 7
    %v6824 = vadd.s32 %v6823, 8
    %6825 = vset.pattern.permute.xlu0 %v6824
    %6826 = vperm.xlu0 %6825, %v6815
    %v6827 = vpop.permute.xlu0 %6826
    %v6828 = vlaneseq
    %v6829 = vshrl.u32 %v6828, 7
    %v6830 = vadd.s32 %v6829, 16
    %6831 = vset.pattern.permute.xlu0 %v6830
    %6832 = vperm.xlu0 %6831, %v6815
    %v6833 = vpop.permute.xlu0 %6832
    %v6834 = vmul.f32 %v6790, %v6802
    %v6835 = vmul.f32 %v6791, %v6808
    %v6836 = vmul.f32 %v6792, %v6814
    %v6837 = vmul.f32 %v6793, %v6821
    %v6838 = vmul.f32 %v6794, %v6827
    %v6839 = vmul.f32 %v6795, %v6833
    %v6840 = vsel %vm254, %v6834, 0.0
    %v6841 = vsel %vm254, %v6835, 0.0
    %v6842 = vadd.f32 %v6840, %v6841
    %v6843 = vsel %vm254, %v6836, 0.0
    %v6844 = vadd.f32 %v6842, %v6843
    %v6845 = vrot.slane %v6844, 4
    %v6846 = vadd.f32 %v6844, %v6845
    %v6847 = vrot.slane %v6846, 2
    %v6848 = vadd.f32 %v6846, %v6847
    %v6849 = vrot.slane %v6848, 1
    %v6850 = vadd.f32 %v6848, %v6849
    %v6851 = vsel %vm254, %v6837, 0.0
    %v6852 = vsel %vm254, %v6838, 0.0
    %v6853 = vadd.f32 %v6851, %v6852
    %v6854 = vsel %vm254, %v6839, 0.0
    %v6855 = vadd.f32 %v6853, %v6854
    %v6856 = vrot.slane %v6855, 4
    %v6857 = vadd.f32 %v6855, %v6856
    %v6858 = vrot.slane %v6857, 2
    %v6859 = vadd.f32 %v6857, %v6858
    %v6860 = vrot.slane %v6859, 1
    %v6861 = vadd.f32 %v6859, %v6860
    %vm6862 = vcmask 189440
    %v6863 = vsel %vm6862, %v60, 0.0
    %6864 = vadd.xlane.f32.xlu0 %v6863
    %v6865 = vpop.xlane.xlu0 %6864
    %v6866 = vrcp.pop %v6865
    %v6868 = vrot.slane %v6866, 1
    %v6871 = vmul.f32 %v6850, %v6866
    %v6872 = vmul.f32 %v6861, %v6868
    %v6873 = vld [vmem:[%s4 + $0x30] sm:$0xf]
    %v6874 = vld [vmem:[%s4 + $0x34] sm:$0xf]
    %v6875 = vld [vmem:[%s4 + $0x38] sm:$0xf]
    %v6876 = vld [vmem:[%s4 + $0x3c] sm:$0xf]
    %v6877 = vunpack.c.l.bf16 %v6873
    %v6878 = vunpack.c.l.bf16 %v6874
    %v6879 = vunpack.c.l.bf16 %v6875
    %v6880 = vunpack.c.l.bf16 %v6876
    %v6881 = vld [vmem:[%s9 + $0x5] sm:$0x1]
    %v6882 = vperm.slane %v6881, 0
    %v6885 = vrot.slane %v6872, 7
    %vm6886 = vcmask 1041409
    %v6887 = vsel %vm6886, %v6885, %v6871
    %v6888 = vsel %vm254, %v6887, 0
    %6890 = vmatpush.msra.mxu0 0.0
    %6891 = vmatpush.msra.mxu0 0.0
    %6892 = vmatpush.msra.mxu0 0.0
    %6893 = vmatpush.msra.mxu0 0.0
    %6894 = vmatpush.msra.mxu0 0.0
    %6895 = vmatpush.msra.mxu0 0.0
    %6896 = vmatpush.msra.mxu0 0.0
    %6897 = vmatpush.msra.mxu0 0.0
    %6898 = vmatpush.msra.mxu0 0.0
    %6899 = vmatpush.msra.mxu0 0.0
    %6900 = vmatpush.msra.mxu0 0.0
    %6901 = vmatpush.msra.mxu0 0.0
    %6902 = vmatpush.msra.mxu0 %v6880
    %6903 = vmatpush.msra.mxu0 %v6879
    %6904 = vmatpush.msra.mxu0 %v6878
    %6905 = vmatpush.msra.mxu0 %v6877
    %6906 = vmatmul.f32.gmra.mxu0 %v6888
    %v6907 = vpop.f32.mrf.mxu0
    %v6908 = vadd.f32 %v6882, %v6907
    %6909 = vdwg.mxu0
    %vm6910 = vcmask 17408
    %6911 = vst.msk [vmem:[#allocation2] sm:$0x3] %vm6910, %v6908
    // Predicated region
    $region42: #{tpu_custom_call.1} parent=1 // pred_check
      _
    $region43: #{tpu_custom_call.1} parent=1 // pred_check_branch
      %6913 = sbr.rel (0) target = $region45
    $region44: #{tpu_custom_call.1} parent=1 // pred_region
      %6915 = vsyncadd [#allocation3], 0
      %s6917 = sshll.u32 [#allocation2], 4
      %s6918 = int_to_ptr.vmem [resolvable:$true] %s6917
      %s6919 = sshll.u32 %s10, 4
      %s6920 = int_to_ptr.hbm [resolvable:$true] %s6919
      %6922 = dma.vmem_to_hbm [thread:$0]  %s6918, 32, %s6920, [#allocation3]
    $region45: #{tpu_custom_call.1} parent=1 // pred_fallthru
      _
    // Predicated region
    $region46: #{tpu_custom_call.1} parent=1 // pred_check
      _
    $region47: #{tpu_custom_call.1} parent=1 // pred_check_branch
      %6924 = sbr.rel (0) target = $region49
    $region48: #{tpu_custom_call.1} parent=1 // pred_region
      %6926 = dma.done [#allocation3], 32
    $region49: #{tpu_custom_call.1} parent=1 // pred_fallthru
      _
    %6927 = vsyncpa [#allocation3], 1

</llo_original>
